<compile_context>
chip_gen: v6e
topology: v6e:2x2x1
jax: 0.10.0
libtpu: 0.0.40
codegen_flags: <defaults>
</compile_context>

<pallas_src>
import numpy as np

import jax
import jax.numpy as jnp
from jax import lax
from jax.experimental import pallas as pl
from jax.experimental.pallas import tpu as pltpu


# Module config: subgroup_sizes_ls=[16,16], subspace_sizes_ls=[4,4], dense_dim=[256,256]
IN_SIZE = 8        # sum(subspace_sizes_ls)
OUT_SIZE = 32      # sum(subgroup_sizes_ls)
DENSE0 = 256       # dense_dim[0]; 4*DENSE0 = 1024 = 64*4*4

# ConvTranspose2d stack: (name, Cin, Cout, input spatial size)
CONV_LAYERS = (
    ("c1", 64, 64, 4),
    ("c2", 64, 32, 8),
    ("c3", 32, 32, 16),
    ("c4", 32, 1, 32),
)


# ----------------------------------------------------------------------------
# Kernel 1: fused MLP (fake_exp -> dense1 -> dense2), single grid step
# ----------------------------------------------------------------------------
def _mlp_kernel(x_ref, fe1w_ref, fe1b_ref, fe2w_ref, fe2b_ref,
                d1w_ref, d1b_ref, d2w_ref, d2b_ref, lie_ref, out_ref):
    x = x_ref[...]
    h = jnp.dot(x, fe1w_ref[...], preferred_element_type=jnp.float32) + fe1b_ref[...]
    h = jnp.maximum(h, 0.0)
    lie = jnp.dot(h, fe2w_ref[...], preferred_element_type=jnp.float32) + fe2b_ref[...]
    lie_ref[...] = lie
    o = jnp.dot(lie.astype(jnp.bfloat16), d1w_ref[...],
                preferred_element_type=jnp.float32) + d1b_ref[...]
    o = jnp.maximum(o, 0.0)
    o = jnp.dot(o.astype(jnp.bfloat16), d2w_ref[...],
                preferred_element_type=jnp.float32) + d2b_ref[...]
    out_ref[...] = jnp.maximum(o, 0.0).astype(out_ref.dtype)


def fused_mlp(params, latents):
    """Returns (lie_group_tensor (B, OUT_SIZE) f32, mlp_out (B, 1024) bf16)."""
    B, din = latents.shape
    bp = max(8, ((B + 7) // 8) * 8)
    x_p = jnp.zeros((bp, 128), jnp.float32).at[:B, :din].set(latents.astype(jnp.float32))
    args = (x_p, params["fe1_w"], params["fe1_b"], params["fe2_w"], params["fe2_b"],
            params["d1_w"], params["d1_b"], params["d2_w"], params["d2_b"])
    in_specs = [pl.BlockSpec(a.shape, lambda i: (0, 0)) for a in args]
    lie_p, out_p = pl.pallas_call(
        _mlp_kernel,
        out_shape=(jax.ShapeDtypeStruct((bp, 128), jnp.float32),
                   jax.ShapeDtypeStruct((bp, 4 * DENSE0), jnp.bfloat16)),
        grid_spec=pltpu.PrefetchScalarGridSpec(
            num_scalar_prefetch=0,
            grid=(1,),
            in_specs=in_specs,
            out_specs=[pl.BlockSpec((bp, 128), lambda i: (0, 0)),
                       pl.BlockSpec((bp, 4 * DENSE0), lambda i: (0, 0))],
        ),
        compiler_params=pltpu.CompilerParams(dimension_semantics=("arbitrary",)),
    )(*args)
    return lie_p[:B, :OUT_SIZE], out_p[:B]


# ----------------------------------------------------------------------------
# Kernel 2 helpers: phase-decomposed ConvTranspose2d on (C, H*W) "transposed" tiles
#
# ConvTranspose2d(k=4,s=2,p=1): output pixel (2m+ph, 2n+pw) only depends on the 2x2 input
# window at (m+ph+dh-1, n+pw+dw-1), dh,dw in {0,1}; kernel tap (3-ph-2dh, 3-pw-2dw).
# With flat spatial on lanes a tap is a static lane shift + image-edge mask.
# ----------------------------------------------------------------------------
def _shift_cols(x, d):
    """out[:, r] = x[:, r + d] (zero fill outside the flat range)."""
    if d == 0:
        return x
    c, m = x.shape
    z = jnp.zeros((c, abs(d)), x.dtype)
    if d > 0:
        return jnp.concatenate([x[:, d:], z], axis=1)
    return jnp.concatenate([z, x[:, :m + d]], axis=1)


def _edge_masks(height, width):
    """Per-(sy,sx) validity masks (1, H*W) over the flat per-batch spatial index."""
    total = height * width
    col = lax.broadcasted_iota(jnp.int32, (1, total), 1)
    n = col & (width - 1)                     # width is a power of two
    m = col >> int(np.log2(width))
    masks = {}
    for sy in (-1, 0, 1):
        ok_y = None
        if sy < 0:
            ok_y = m >= -sy
        elif sy > 0:
            ok_y = m < height - sy
        for sx in (-1, 0, 1):
            ok_x = None
            if sx < 0:
                ok_x = n >= -sx
            elif sx > 0:
                ok_x = n < width - sx
            if ok_y is None and ok_x is None:
                masks[(sy, sx)] = None
            elif ok_y is None:
                masks[(sy, sx)] = ok_x
            elif ok_x is None:
                masks[(sy, sx)] = ok_y
            else:
                masks[(sy, sx)] = ok_y & ok_x
    return masks


def _tap(x, sy, sx, width, masks):
    if sy == 0 and sx == 0:
        return x
    t = _shift_cols(x, sy * width + sx)
    return jnp.where(masks[(sy, sx)], t, jnp.zeros_like(t))


def _conv_phase_outputs(x, w_ref, b_ref, height, width):
    """x: (Cin, H*W) bf16 -> list of 4 phase outputs (Cout, H*W) f32 (ReLU applied)."""
    masks = _edge_masks(height, width)
    taps = {}
    for sy in (-1, 0, 1):
        for sx in (-1, 0, 1):
            taps[(sy, sx)] = _tap(x, sy, sx, width, masks)
    outs = []
    for ph in (0, 1):
        for pw in (0, 1):
            a = jnp.concatenate(
                [taps[(ph + dh - 1, pw + dw - 1)] for dh in (0, 1) for dw in (0, 1)],
                axis=0)                                       # (4*Cin, H*W)
            o = jnp.dot(w_ref[2 * ph + pw], a,
                        preferred_element_type=jnp.float32) + b_ref[...]
            outs.append(jnp.maximum(o, 0.0))
    return outs


def _assemble(outs, s_ref):
    """Interleave 4 phase outputs into the (Cout, 4*H*W) flat next-layer activation via a
    constant one-hot scatter matrix (exact: each output column copies one input column)."""
    p_all = jnp.concatenate([o.astype(jnp.bfloat16) for o in outs], axis=1)
    return jnp.dot(p_all, s_ref[...], preferred_element_type=jnp.float32).astype(jnp.bfloat16)


def _conv_stack_kernel(x_ref, w1, b1, w2, b2, w3, b3, w4, b4, s1, s2, out_ref):
    # ---- c1: 4x4, 64 -> 64 ----
    act = x_ref[...]                                             # (64, 16) bf16
    p1 = _conv_phase_outputs(act, w1, b1, 4, 4)                  # 4 x (64, 16)
    act = _assemble(p1, s1)                                      # (64, 64)
    # ---- c2: 8x8, 64 -> 32 ----
    p2 = _conv_phase_outputs(act, w2, b2, 8, 8)                  # 4 x (32, 64)
    act = _assemble(p2, s2)                                      # (32, 256)
    # ---- c3: 16x16, 32 -> 32 ; keep the 4 phase planes (parity planes of c4's input) ----
    p3 = _conv_phase_outputs(act, w3, b3, 16, 16)                # 4 x (32, 256)
    planes = [p.astype(jnp.bfloat16) for p in p3]                # index = 2*ph3 + pw3

    # ---- c4: 32x32 -> 64x64, 32 -> 1, sigmoid; parity-split so the 32x32 interleave is
    #      never materialized.  Pieces are indexed by (Y mod 4, X mod 4). ----
    hc = wc = 16
    masks4 = _edge_masks(hc, wc)
    cache = {}

    def _src(py, dy, px, dx):
        key = (py, dy, px, dx)
        if key not in cache:
            t = planes[2 * py + px]
            d = dy * wc + dx
            if d != 0:
                t = _shift_cols(t, d)
            if (dy, dx) != (0, 0):
                t = jnp.where(masks4[(dy, dx)], t, jnp.zeros_like(t))
            cache[key] = t
        return cache[key]

    pieces = [None] * 16
    for ph in (0, 1):
        for pw in (0, 1):
            wphase = w4[2 * ph + pw]                             # (1, 128)
            for ey in (0, 1):
                for ex in (0, 1):
                    taps = []
                    for dh in (0, 1):
                        ty = ey + ph + dh - 1
                        py, dy = ty % 2, ty // 2
                        for dw in (0, 1):
                            tx = ex + pw + dw - 1
                            px, dx = tx % 2, tx // 2
                            taps.append(_src(py, dy, px, dx))
                    a = jnp.concatenate(taps, axis=0)            # (128, 256)
                    o = jnp.dot(wphase, a, preferred_element_type=jnp.float32) + b4[...]
                    o = jax.nn.sigmoid(o)                        # (1, 256)
                    pieces[(2 * ey + ph) * 4 + (2 * ex + pw)] = o
    out_ref[...] = jnp.concatenate(pieces, axis=0)               # (16, 256) f32


def _const_spec(a):
    n = a.ndim
    return pl.BlockSpec(a.shape, (lambda nd: (lambda i: (0,) * nd))(n))


def conv_stack(params, act0):
    """act0: (B, 64, 16) bf16 (channel, flat 4x4 spatial).  Returns (B, 16, 256) f32 with
    rows = (Y%4)*4 + (X%4) and columns = (Y//4)*16 + (X//4)."""
    B = act0.shape[0]
    args = (act0,
            params["c1_w"], params["c1_b"], params["c2_w"], params["c2_b"],
            params["c3_w"], params["c3_b"], params["c4_w"], params["c4_b"],
            params["s1"], params["s2"])
    in_specs = [pl.BlockSpec((None, 64, 16), lambda i: (i, 0, 0))]
    in_specs += [_const_spec(a) for a in args[1:]]
    return pl.pallas_call(
        _conv_stack_kernel,
        out_shape=jax.ShapeDtypeStruct((B, 16, 256), jnp.float32),
        grid_spec=pltpu.PrefetchScalarGridSpec(
            num_scalar_prefetch=0,
            grid=(B,),
            in_specs=in_specs,
            out_specs=pl.BlockSpec((None, 16, 256), lambda i: (i, 0, 0)),
        ),
        compiler_params=pltpu.CompilerParams(dimension_semantics=("parallel",)),
    )(*args)


# ----------------------------------------------------------------------------
# Parameters: raw (PyTorch-like layouts) + one-time prepared (gathered / transposed / bf16)
# ----------------------------------------------------------------------------
def init_raw_params(key, scale=0.05):
    ks = jax.random.split(key, 16)

    def nrm(k, shape):
        return scale * jax.random.normal(k, shape, jnp.float32)

    p = {}
    p["fe1_w"] = nrm(ks[0], (IN_SIZE, 4 * IN_SIZE))
    p["fe1_b"] = nrm(ks[1], (4 * IN_SIZE,))
    p["fe2_w"] = nrm(ks[2], (4 * IN_SIZE, OUT_SIZE))
    p["fe2_b"] = nrm(ks[3], (OUT_SIZE,))
    p["d1_w"] = nrm(ks[4], (OUT_SIZE, DENSE0))
    p["d1_b"] = nrm(ks[5], (DENSE0,))
    p["d2_w"] = nrm(ks[6], (DENSE0, 4 * DENSE0))
    p["d2_b"] = nrm(ks[7], (4 * DENSE0,))
    for n, (name, ci, co, _) in enumerate(CONV_LAYERS):
        p[name + "_w"] = nrm(ks[8 + 2 * n], (ci, co, 4, 4))   # PyTorch ConvT layout
        p[name + "_b"] = nrm(ks[9 + 2 * n], (co,))
    return p


def _pad2d(w, rows, cols):
    return jnp.zeros((rows, cols), jnp.float32).at[:w.shape[0], :w.shape[1]].set(w)


def _pad_bias(b, cols):
    return jnp.zeros((1, cols), jnp.float32).at[0, :b.shape[0]].set(b)


def _prep_conv_weight_t(w_t, bias):
    """PyTorch ConvT weight (Cin,Cout,4,4) -> (4 phases, Cout, 4*Cin) bf16 + (Cout,1) f32."""
    cout = w_t.shape[1]
    phases = []
    for ph in (0, 1):
        for pw in (0, 1):
            taps = [w_t[:, :, 3 - ph - 2 * dh, 3 - pw - 2 * dw]
                    for dh in (0, 1) for dw in (0, 1)]              # each (Cin, Cout)
            phases.append(jnp.concatenate(taps, axis=0).T)          # (Cout, 4*Cin)
    w_stack = jnp.stack(phases, axis=0).astype(jnp.bfloat16)        # (4, Cout, 4*Cin)
    return w_stack, bias.reshape(cout, 1).astype(jnp.float32)


def _scatter_matrix(h, w):
    """One-hot (4*h*w, 4*h*w) matrix interleaving 4 phase outputs (phase-major, per-batch
    rows (m,n)) into the row-major (2h, 2w) flat layout."""
    m1 = h * w
    s = np.zeros((4 * m1, 4 * m1), np.float32)
    for y in range(2 * h):
        for x in range(2 * w):
            r2 = y * 2 * w + x
            j = ((y % 2) * 2 + (x % 2)) * m1 + (y // 2) * w + (x // 2)
            s[j, r2] = 1.0
    return jnp.asarray(s, jnp.bfloat16)


def prepare_params(raw):
    p = {}
    # MLP weights: zero-pad once to aligned shapes; d1/d2 in bf16 (fe1/fe2 stay f32 so the
    # lie_group_tensor output is full precision).
    p["fe1_w"] = _pad2d(raw["fe1_w"], 128, 128)
    p["fe1_b"] = _pad_bias(raw["fe1_b"], 128)
    p["fe2_w"] = _pad2d(raw["fe2_w"], 128, 128)
    p["fe2_b"] = _pad_bias(raw["fe2_b"], 128)
    p["d1_w"] = _pad2d(raw["d1_w"], 128, DENSE0).astype(jnp.bfloat16)
    p["d1_b"] = _pad_bias(raw["d1_b"], DENSE0)
    p["d2_w"] = raw["d2_w"].astype(jnp.bfloat16)
    p["d2_b"] = raw["d2_b"].reshape(1, 4 * DENSE0)
    # Conv weights: phase/tap-gathered, transposed to (Cout, 4*Cin), bf16.
    for name, _, _, _ in CONV_LAYERS:
        w_stack, b = _prep_conv_weight_t(raw[name + "_w"], raw[name + "_b"])
        p[name + "_w"] = w_stack
        p[name + "_b"] = b
    # Constant interleave matrices for the c1->c2 and c2->c3 boundaries (per-batch).
    p["s1"] = _scatter_matrix(4, 4)      # (64, 64)
    p["s2"] = _scatter_matrix(8, 8)      # (256, 256)
    return p


# ----------------------------------------------------------------------------
# Forward pass (mirrors CNN2DShapesLieDecoder.forward with no_exp=True)
# ----------------------------------------------------------------------------
def decoder_forward(params, latents_in):
    B = latents_in.shape[0]
    lie_group_tensor, mlp_out = fused_mlp(params, latents_in)
    # view(B, 64, 4, 4) NCHW -> channels on sublanes, flat 4x4 spatial on lanes (free reshape)
    act0 = mlp_out.reshape(B, 64, 16)
    pieces = conv_stack(params, act0)                       # (B, 16, 256) f32
    # Untangle the mod-4 phase-major layout: rows=(Y%4, X%4), cols=(Y//4, X//4).
    img = pieces.reshape(B, 4, 4, 16, 16)                   # (b, ay, ax, qy, qx)
    img = img.transpose(0, 3, 1, 4, 2).reshape(B, 1, 64, 64)
    return img, lie_group_tensor


# ----------------------------------------------------------------------------
# Pure-XLA f32 reference (numerical cross-check of the Pallas path)
# ----------------------------------------------------------------------------
def _ref_conv_transpose(x_nhwc, w_t, b):
    w_hwio = jnp.transpose(jnp.flip(w_t, (2, 3)), (2, 3, 0, 1))
    y = jax.lax.conv_general_dilated(
        x_nhwc, w_hwio, window_strides=(1, 1), padding=((2, 2), (2, 2)),
        lhs_dilation=(2, 2), dimension_numbers=("NHWC", "HWIO", "NHWC"))
    return y + b


def ref_forward(raw, latents):
    h = jnp.maximum(latents @ raw["fe1_w"] + raw["fe1_b"], 0.0)
    lie = h @ raw["fe2_w"] + raw["fe2_b"]
    o = jnp.maximum(lie @ raw["d1_w"] + raw["d1_b"], 0.0)
    o = jnp.maximum(o @ raw["d2_w"] + raw["d2_b"], 0.0)
    B = o.shape[0]
    o = jnp.transpose(o.reshape(B, 64, 4, 4), (0, 2, 3, 1))
    for i, (name, _, _, _) in enumerate(CONV_LAYERS):
        o = _ref_conv_transpose(o, raw[name + "_w"], raw[name + "_b"])
        o = jnp.maximum(o, 0.0) if i < len(CONV_LAYERS) - 1 else jax.nn.sigmoid(o)
    return jnp.transpose(o, (0, 3, 1, 2)), lie


if __name__ == "__main__":
    key = jax.random.PRNGKey(0)
    k_param, k_in = jax.random.split(key)
    raw_params = init_raw_params(k_param)
    params = prepare_params(raw_params)

    batch = 2
    latents_in = jax.random.normal(k_in, (batch, IN_SIZE), jnp.float32)

    fwd = jax.jit(decoder_forward)
    out, lie_group_tensor = fwd(params, latents_in)
    out = jax.block_until_ready(out)
    lie_group_tensor = jax.block_until_ready(lie_group_tensor)

    assert out.shape == (batch, 1, 64, 64), out.shape
    assert lie_group_tensor.shape == (batch, OUT_SIZE), lie_group_tensor.shape
    assert bool(jnp.all(jnp.isfinite(out)))
    assert bool(jnp.all((out >= 0.0) & (out <= 1.0)))   # sigmoid range

    # Numerical cross-check against the pure-XLA f32 reference (loose tol: bf16 conv path).
    ref_out, ref_lie = ref_forward(raw_params, latents_in)
    lie_err = float(jnp.max(jnp.abs(lie_group_tensor - ref_lie)))
    img_err = float(jnp.max(jnp.abs(out - ref_out)))
    assert lie_err < 5e-3, lie_err
    assert img_err < 3e-2, img_err

    print("KERNEL_OK")
</pallas_src>

<mosaic_0001>
module attributes {stable_mosaic.version = 11 : i64} {
  func.func @_mlp_kernel(%arg0: i32, %arg1: memref<8x128xf32, #tpu.memory_space<vmem>>, %arg2: memref<128x128xf32, #tpu.memory_space<vmem>>, %arg3: memref<1x128xf32, #tpu.memory_space<vmem>>, %arg4: memref<128x128xf32, #tpu.memory_space<vmem>>, %arg5: memref<1x128xf32, #tpu.memory_space<vmem>>, %arg6: memref<128x256xbf16, #tpu.memory_space<vmem>>, %arg7: memref<1x256xf32, #tpu.memory_space<vmem>>, %arg8: memref<256x1024xbf16, #tpu.memory_space<vmem>>, %arg9: memref<1x1024xf32, #tpu.memory_space<vmem>>, %arg10: memref<8x128xf32, #tpu.memory_space<vmem>>, %arg11: memref<8x1024xbf16, #tpu.memory_space<vmem>>) attributes {dimension_semantics = [#tpu.dimension_semantics<arbitrary>], iteration_bounds = array<i64: 1>, scalar_prefetch = 0 : i64, scratch_operands = 0 : i64, tpu.core_type = #tpu.core_type<tc>, window_params = [{pipeline_mode = #tpu.pipeline_mode<synchronous>, transform_indices = @transform_0, window_bounds = array<i64: 8, 128>}, {pipeline_mode = #tpu.pipeline_mode<synchronous>, transform_indices = @transform_1, window_bounds = array<i64: 128, 128>}, {pipeline_mode = #tpu.pipeline_mode<synchronous>, transform_indices = @transform_2, window_bounds = array<i64: 1, 128>}, {pipeline_mode = #tpu.pipeline_mode<synchronous>, transform_indices = @transform_3, window_bounds = array<i64: 128, 128>}, {pipeline_mode = #tpu.pipeline_mode<synchronous>, transform_indices = @transform_4, window_bounds = array<i64: 1, 128>}, {pipeline_mode = #tpu.pipeline_mode<synchronous>, transform_indices = @transform_5, window_bounds = array<i64: 128, 256>}, {pipeline_mode = #tpu.pipeline_mode<synchronous>, transform_indices = @transform_6, window_bounds = array<i64: 1, 256>}, {pipeline_mode = #tpu.pipeline_mode<synchronous>, transform_indices = @transform_7, window_bounds = array<i64: 256, 1024>}, {pipeline_mode = #tpu.pipeline_mode<synchronous>, transform_indices = @transform_8, window_bounds = array<i64: 1, 1024>}, {pipeline_mode = #tpu.pipeline_mode<synchronous>, transform_indices = @transform_9, window_bounds = array<i64: 8, 128>}, {pipeline_mode = #tpu.pipeline_mode<synchronous>, transform_indices = @transform_10, window_bounds = array<i64: 8, 1024>}]} {
    %c0 = arith.constant 0 : index
    %c0_0 = arith.constant 0 : index
    %0 = vector.load %arg1[%c0, %c0_0] : memref<8x128xf32, #tpu.memory_space<vmem>>, vector<8x128xf32>
    %c0_1 = arith.constant 0 : index
    %c0_2 = arith.constant 0 : index
    %1 = vector.load %arg2[%c0_1, %c0_2] : memref<128x128xf32, #tpu.memory_space<vmem>>, vector<128x128xf32>
    %cst = arith.constant dense<0.000000e+00> : vector<8x128xf32>
    %2 = tpu.matmul %0, %1, %cst {dimension_numbers = #tpu.dot_dimension_numbers<[1], [0], [0], [1], [0, 0, 1, 1], [], []>} : vector<8x128xf32>, vector<128x128xf32>, vector<8x128xf32> -> vector<8x128xf32>
    %c0_3 = arith.constant 0 : index
    %c0_4 = arith.constant 0 : index
    %3 = vector.load %arg3[%c0_3, %c0_4] : memref<1x128xf32, #tpu.memory_space<vmem>>, vector<1x128xf32>
    %4 = vector.broadcast %3 : vector<1x128xf32> to vector<8x128xf32>
    %5 = arith.addf %2, %4 : vector<8x128xf32>
    %cst_5 = arith.constant 0.000000e+00 : f32
    %6 = vector.broadcast %cst_5 : f32 to vector<8x128xf32>
    %7 = arith.maximumf %5, %6 : vector<8x128xf32>
    %c0_6 = arith.constant 0 : index
    %c0_7 = arith.constant 0 : index
    %8 = vector.load %arg4[%c0_6, %c0_7] : memref<128x128xf32, #tpu.memory_space<vmem>>, vector<128x128xf32>
    %cst_8 = arith.constant dense<0.000000e+00> : vector<8x128xf32>
    %9 = tpu.matmul %7, %8, %cst_8 {dimension_numbers = #tpu.dot_dimension_numbers<[1], [0], [0], [1], [0, 0, 1, 1], [], []>} : vector<8x128xf32>, vector<128x128xf32>, vector<8x128xf32> -> vector<8x128xf32>
    %c0_9 = arith.constant 0 : index
    %c0_10 = arith.constant 0 : index
    %10 = vector.load %arg5[%c0_9, %c0_10] : memref<1x128xf32, #tpu.memory_space<vmem>>, vector<1x128xf32>
    %11 = vector.broadcast %10 : vector<1x128xf32> to vector<8x128xf32>
    %12 = arith.addf %9, %11 : vector<8x128xf32>
    %c0_11 = arith.constant 0 : index
    %c0_12 = arith.constant 0 : index
    %13 = vector.load %arg10[%c0_11, %c0_12] : memref<8x128xf32, #tpu.memory_space<vmem>>, vector<8x128xf32>
    tpu.vector_store %arg10[%c0_11, %c0_12], %12 {strides = array<i32>} : memref<8x128xf32, #tpu.memory_space<vmem>>, vector<8x128xf32>,
    %14 = arith.truncf %12 : vector<8x128xf32> to vector<8x128xbf16>
    %c0_13 = arith.constant 0 : index
    %c0_14 = arith.constant 0 : index
    %15 = vector.load %arg6[%c0_13, %c0_14] : memref<128x256xbf16, #tpu.memory_space<vmem>>, vector<128x256xbf16>
    %cst_15 = arith.constant dense<0.000000e+00> : vector<8x256xf32>
    %16 = tpu.matmul %14, %15, %cst_15 {dimension_numbers = #tpu.dot_dimension_numbers<[1], [0], [0], [1], [0, 0, 1, 1], [], []>} : vector<8x128xbf16>, vector<128x256xbf16>, vector<8x256xf32> -> vector<8x256xf32>
    %c0_16 = arith.constant 0 : index
    %c0_17 = arith.constant 0 : index
    %17 = vector.load %arg7[%c0_16, %c0_17] : memref<1x256xf32, #tpu.memory_space<vmem>>, vector<1x256xf32>
    %18 = vector.broadcast %17 : vector<1x256xf32> to vector<8x256xf32>
    %19 = arith.addf %16, %18 : vector<8x256xf32>
    %cst_18 = arith.constant 0.000000e+00 : f32
    %20 = vector.broadcast %cst_18 : f32 to vector<8x256xf32>
    %21 = arith.maximumf %19, %20 : vector<8x256xf32>
    %22 = arith.truncf %21 : vector<8x256xf32> to vector<8x256xbf16>
    %c0_19 = arith.constant 0 : index
    %c0_20 = arith.constant 0 : index
    %23 = vector.load %arg8[%c0_19, %c0_20] : memref<256x1024xbf16, #tpu.memory_space<vmem>>, vector<256x1024xbf16>
    %cst_21 = arith.constant dense<0.000000e+00> : vector<8x1024xf32>
    %24 = tpu.matmul %22, %23, %cst_21 {dimension_numbers = #tpu.dot_dimension_numbers<[1], [0], [0], [1], [0, 0, 1, 1], [], []>} : vector<8x256xbf16>, vector<256x1024xbf16>, vector<8x1024xf32> -> vector<8x1024xf32>
    %c0_22 = arith.constant 0 : index
    %c0_23 = arith.constant 0 : index
    %25 = vector.load %arg9[%c0_22, %c0_23] : memref<1x1024xf32, #tpu.memory_space<vmem>>, vector<1x1024xf32>
    %26 = vector.broadcast %25 : vector<1x1024xf32> to vector<8x1024xf32>
    %27 = arith.addf %24, %26 : vector<8x1024xf32>
    %cst_24 = arith.constant 0.000000e+00 : f32
    %28 = vector.broadcast %cst_24 : f32 to vector<8x1024xf32>
    %29 = arith.maximumf %27, %28 : vector<8x1024xf32>
    %30 = arith.truncf %29 : vector<8x1024xf32> to vector<8x1024xbf16>
    %c0_25 = arith.constant 0 : index
    %c0_26 = arith.constant 0 : index
    %31 = vector.load %arg11[%c0_25, %c0_26] : memref<8x1024xbf16, #tpu.memory_space<vmem>>, vector<8x1024xbf16>
    tpu.vector_store %arg11[%c0_25, %c0_26], %30 {strides = array<i32>} : memref<8x1024xbf16, #tpu.memory_space<vmem>>, vector<8x1024xbf16>,
    return
  }
  func.func @transform_0(%arg0: i32) -> (i32, i32) {
    %c0_i32 = arith.constant 0 : i32
    %c0_i32_0 = arith.constant 0 : i32
    %c0_i32_1 = arith.constant 0 : i32
    return %c0_i32, %c0_i32_0 : i32, i32
  }
  func.func @transform_1(%arg0: i32) -> (i32, i32) {
    %c0_i32 = arith.constant 0 : i32
    %c0_i32_0 = arith.constant 0 : i32
    %c0_i32_1 = arith.constant 0 : i32
    return %c0_i32, %c0_i32_0 : i32, i32
  }
  func.func @transform_2(%arg0: i32) -> (i32, i32) {
    %c0_i32 = arith.constant 0 : i32
    %c0_i32_0 = arith.constant 0 : i32
    %c0_i32_1 = arith.constant 0 : i32
    return %c0_i32, %c0_i32_0 : i32, i32
  }
  func.func @transform_3(%arg0: i32) -> (i32, i32) {
    %c0_i32 = arith.constant 0 : i32
    %c0_i32_0 = arith.constant 0 : i32
    %c0_i32_1 = arith.constant 0 : i32
    return %c0_i32, %c0_i32_0 : i32, i32
  }
  func.func @transform_4(%arg0: i32) -> (i32, i32) {
    %c0_i32 = arith.constant 0 : i32
    %c0_i32_0 = arith.constant 0 : i32
    %c0_i32_1 = arith.constant 0 : i32
    return %c0_i32, %c0_i32_0 : i32, i32
  }
  func.func @transform_5(%arg0: i32) -> (i32, i32) {
    %c0_i32 = arith.constant 0 : i32
    %c0_i32_0 = arith.constant 0 : i32
    %c0_i32_1 = arith.constant 0 : i32
    return %c0_i32, %c0_i32_0 : i32, i32
  }
  func.func @transform_6(%arg0: i32) -> (i32, i32) {
    %c0_i32 = arith.constant 0 : i32
    %c0_i32_0 = arith.constant 0 : i32
    %c0_i32_1 = arith.constant 0 : i32
    return %c0_i32, %c0_i32_0 : i32, i32
  }
  func.func @transform_7(%arg0: i32) -> (i32, i32) {
    %c0_i32 = arith.constant 0 : i32
    %c0_i32_0 = arith.constant 0 : i32
    %c0_i32_1 = arith.constant 0 : i32
    return %c0_i32, %c0_i32_0 : i32, i32
  }
  func.func @transform_8(%arg0: i32) -> (i32, i32) {
    %c0_i32 = arith.constant 0 : i32
    %c0_i32_0 = arith.constant 0 : i32
    %c0_i32_1 = arith.constant 0 : i32
    return %c0_i32, %c0_i32_0 : i32, i32
  }
  func.func @transform_9(%arg0: i32) -> (i32, i32) {
    %c0_i32 = arith.constant 0 : i32
    %c0_i32_0 = arith.constant 0 : i32
    %c0_i32_1 = arith.constant 0 : i32
    return %c0_i32, %c0_i32_0 : i32, i32
  }
  func.func @transform_10(%arg0: i32) -> (i32, i32) {
    %c0_i32 = arith.constant 0 : i32
    %c0_i32_0 = arith.constant 0 : i32
    %c0_i32_1 = arith.constant 0 : i32
    return %c0_i32, %c0_i32_0 : i32, i32
  }
}

module attributes {stable_mosaic.version = 11 : i64} {
  func.func @_conv_stack_kernel(%arg0: i32, %arg1: memref<1x64x16xbf16, #tpu.memory_space<vmem>>, %arg2: memref<4x64x256xbf16, #tpu.memory_space<vmem>>, %arg3: memref<64x1xf32, #tpu.memory_space<vmem>>, %arg4: memref<4x32x256xbf16, #tpu.memory_space<vmem>>, %arg5: memref<32x1xf32, #tpu.memory_space<vmem>>, %arg6: memref<4x32x128xbf16, #tpu.memory_space<vmem>>, %arg7: memref<32x1xf32, #tpu.memory_space<vmem>>, %arg8: memref<4x1x128xbf16, #tpu.memory_space<vmem>>, %arg9: memref<1x1xf32, #tpu.memory_space<vmem>>, %arg10: memref<64x64xbf16, #tpu.memory_space<vmem>>, %arg11: memref<256x256xbf16, #tpu.memory_space<vmem>>, %arg12: memref<1x16x256xf32, #tpu.memory_space<vmem>>) attributes {dimension_semantics = [#tpu.dimension_semantics<parallel>], iteration_bounds = array<i64: 2>, scalar_prefetch = 0 : i64, scratch_operands = 0 : i64, tpu.core_type = #tpu.core_type<tc>, window_params = [{transform_indices = @transform_0, window_bounds = array<i64: 1, 64, 16>}, {pipeline_mode = #tpu.pipeline_mode<synchronous>, transform_indices = @transform_1, window_bounds = array<i64: 4, 64, 256>}, {pipeline_mode = #tpu.pipeline_mode<synchronous>, transform_indices = @transform_2, window_bounds = array<i64: 64, 1>}, {pipeline_mode = #tpu.pipeline_mode<synchronous>, transform_indices = @transform_3, window_bounds = array<i64: 4, 32, 256>}, {pipeline_mode = #tpu.pipeline_mode<synchronous>, transform_indices = @transform_4, window_bounds = array<i64: 32, 1>}, {pipeline_mode = #tpu.pipeline_mode<synchronous>, transform_indices = @transform_5, window_bounds = array<i64: 4, 32, 128>}, {pipeline_mode = #tpu.pipeline_mode<synchronous>, transform_indices = @transform_6, window_bounds = array<i64: 32, 1>}, {pipeline_mode = #tpu.pipeline_mode<synchronous>, transform_indices = @transform_7, window_bounds = array<i64: 4, 1, 128>}, {pipeline_mode = #tpu.pipeline_mode<synchronous>, transform_indices = @transform_8, window_bounds = array<i64: 1, 1>}, {pipeline_mode = #tpu.pipeline_mode<synchronous>, transform_indices = @transform_9, window_bounds = array<i64: 64, 64>}, {pipeline_mode = #tpu.pipeline_mode<synchronous>, transform_indices = @transform_10, window_bounds = array<i64: 256, 256>}, {transform_indices = @transform_11, window_bounds = array<i64: 1, 16, 256>}]} {
    %c0 = arith.constant 0 : index
    %c0_0 = arith.constant 0 : index
    %c0_1 = arith.constant 0 : index
    %0 = vector.load %arg1[%c0, %c0_0, %c0_1] : memref<1x64x16xbf16, #tpu.memory_space<vmem>>, vector<1x64x16xbf16>
    %1 = vector.shape_cast %0 : vector<1x64x16xbf16> to vector<64x16xbf16>
    %2 = tpu.iota {dimensions = array<i32: 1>} : vector<1x16xi32>
    %c3_i32 = arith.constant 3 : i32
    %3 = vector.broadcast %c3_i32 : i32 to vector<1x16xi32>
    %4 = arith.andi %2, %3 : vector<1x16xi32>
    %c2_i32 = arith.constant 2 : i32
    %5 = vector.broadcast %c2_i32 : i32 to vector<1x16xi32>
    %6 = arith.shrsi %2, %5 : vector<1x16xi32>
    %c1_i32 = arith.constant 1 : i32
    %7 = vector.broadcast %c1_i32 : i32 to vector<1x16xi32>
    %8 = arith.cmpi sge, %6, %7 : vector<1x16xi32>
    %c1_i32_2 = arith.constant 1 : i32
    %9 = vector.broadcast %c1_i32_2 : i32 to vector<1x16xi32>
    %10 = arith.cmpi sge, %4, %9 : vector<1x16xi32>
    %11 = arith.andi %8, %10 : vector<1x16xi1>
    %c3_i32_3 = arith.constant 3 : i32
    %12 = vector.broadcast %c3_i32_3 : i32 to vector<1x16xi32>
    %13 = arith.cmpi slt, %4, %12 : vector<1x16xi32>
    %14 = arith.andi %8, %13 : vector<1x16xi1>
    %c1_i32_4 = arith.constant 1 : i32
    %15 = vector.broadcast %c1_i32_4 : i32 to vector<1x16xi32>
    %16 = arith.cmpi sge, %4, %15 : vector<1x16xi32>
    %c3_i32_5 = arith.constant 3 : i32
    %17 = vector.broadcast %c3_i32_5 : i32 to vector<1x16xi32>
    %18 = arith.cmpi slt, %4, %17 : vector<1x16xi32>
    %c3_i32_6 = arith.constant 3 : i32
    %19 = vector.broadcast %c3_i32_6 : i32 to vector<1x16xi32>
    %20 = arith.cmpi slt, %6, %19 : vector<1x16xi32>
    %c1_i32_7 = arith.constant 1 : i32
    %21 = vector.broadcast %c1_i32_7 : i32 to vector<1x16xi32>
    %22 = arith.cmpi sge, %4, %21 : vector<1x16xi32>
    %23 = arith.andi %20, %22 : vector<1x16xi1>
    %c3_i32_8 = arith.constant 3 : i32
    %24 = vector.broadcast %c3_i32_8 : i32 to vector<1x16xi32>
    %25 = arith.cmpi slt, %4, %24 : vector<1x16xi32>
    %26 = arith.andi %20, %25 : vector<1x16xi1>
    %cst = arith.constant 0.000000e+00 : bf16
    %27 = vector.broadcast %cst : bf16 to vector<64x5xbf16>
    %28 = vector.extract_strided_slice %1 {offsets = [0, 0], sizes = [64, 11], strides = [1, 1]} : vector<64x16xbf16> to vector<64x11xbf16>
    %29 = tpu.concatenate %27, %28 in 1 : vector<64x5xbf16>, vector<64x11xbf16> -> vector<64x16xbf16>
    %cst_9 = arith.constant 0.000000e+00 : bf16
    %30 = vector.broadcast %cst_9 : bf16 to vector<64x16xbf16>
    %31 = vector.shape_cast %11 : vector<1x16xi1> to vector<1x16xi1>
    %32 = vector.broadcast %31 : vector<1x16xi1> to vector<64x16xi1>
    %33 = arith.select %32, %29, %30 : vector<64x16xi1>, vector<64x16xbf16>
    %cst_10 = arith.constant 0.000000e+00 : bf16
    %34 = vector.broadcast %cst_10 : bf16 to vector<64x4xbf16>
    %35 = vector.extract_strided_slice %1 {offsets = [0, 0], sizes = [64, 12], strides = [1, 1]} : vector<64x16xbf16> to vector<64x12xbf16>
    %36 = tpu.concatenate %34, %35 in 1 : vector<64x4xbf16>, vector<64x12xbf16> -> vector<64x16xbf16>
    %cst_11 = arith.constant 0.000000e+00 : bf16
    %37 = vector.broadcast %cst_11 : bf16 to vector<64x16xbf16>
    %38 = vector.shape_cast %8 : vector<1x16xi1> to vector<1x16xi1>
    %39 = vector.broadcast %38 : vector<1x16xi1> to vector<64x16xi1>
    %40 = arith.select %39, %36, %37 : vector<64x16xi1>, vector<64x16xbf16>
    %cst_12 = arith.constant 0.000000e+00 : bf16
    %41 = vector.broadcast %cst_12 : bf16 to vector<64x3xbf16>
    %42 = vector.extract_strided_slice %1 {offsets = [0, 0], sizes = [64, 13], strides = [1, 1]} : vector<64x16xbf16> to vector<64x13xbf16>
    %43 = tpu.concatenate %41, %42 in 1 : vector<64x3xbf16>, vector<64x13xbf16> -> vector<64x16xbf16>
    %cst_13 = arith.constant 0.000000e+00 : bf16
    %44 = vector.broadcast %cst_13 : bf16 to vector<64x16xbf16>
    %45 = vector.shape_cast %14 : vector<1x16xi1> to vector<1x16xi1>
    %46 = vector.broadcast %45 : vector<1x16xi1> to vector<64x16xi1>
    %47 = arith.select %46, %43, %44 : vector<64x16xi1>, vector<64x16xbf16>
    %cst_14 = arith.constant 0.000000e+00 : bf16
    %48 = vector.broadcast %cst_14 : bf16 to vector<64x1xbf16>
    %49 = vector.extract_strided_slice %1 {offsets = [0, 0], sizes = [64, 15], strides = [1, 1]} : vector<64x16xbf16> to vector<64x15xbf16>
    %50 = tpu.concatenate %48, %49 in 1 : vector<64x1xbf16>, vector<64x15xbf16> -> vector<64x16xbf16>
    %cst_15 = arith.constant 0.000000e+00 : bf16
    %51 = vector.broadcast %cst_15 : bf16 to vector<64x16xbf16>
    %52 = vector.shape_cast %16 : vector<1x16xi1> to vector<1x16xi1>
    %53 = vector.broadcast %52 : vector<1x16xi1> to vector<64x16xi1>
    %54 = arith.select %53, %50, %51 : vector<64x16xi1>, vector<64x16xbf16>
    %cst_16 = arith.constant 0.000000e+00 : bf16
    %55 = vector.broadcast %cst_16 : bf16 to vector<64x1xbf16>
    %56 = vector.extract_strided_slice %1 {offsets = [0, 1], sizes = [64, 15], strides = [1, 1]} : vector<64x16xbf16> to vector<64x15xbf16>
    %57 = tpu.concatenate %56, %55 in 1 : vector<64x15xbf16>, vector<64x1xbf16> -> vector<64x16xbf16>
    %cst_17 = arith.constant 0.000000e+00 : bf16
    %58 = vector.broadcast %cst_17 : bf16 to vector<64x16xbf16>
    %59 = vector.shape_cast %18 : vector<1x16xi1> to vector<1x16xi1>
    %60 = vector.broadcast %59 : vector<1x16xi1> to vector<64x16xi1>
    %61 = arith.select %60, %57, %58 : vector<64x16xi1>, vector<64x16xbf16>
    %cst_18 = arith.constant 0.000000e+00 : bf16
    %62 = vector.broadcast %cst_18 : bf16 to vector<64x3xbf16>
    %63 = vector.extract_strided_slice %1 {offsets = [0, 3], sizes = [64, 13], strides = [1, 1]} : vector<64x16xbf16> to vector<64x13xbf16>
    %64 = tpu.concatenate %63, %62 in 1 : vector<64x13xbf16>, vector<64x3xbf16> -> vector<64x16xbf16>
    %cst_19 = arith.constant 0.000000e+00 : bf16
    %65 = vector.broadcast %cst_19 : bf16 to vector<64x16xbf16>
    %66 = vector.shape_cast %23 : vector<1x16xi1> to vector<1x16xi1>
    %67 = vector.broadcast %66 : vector<1x16xi1> to vector<64x16xi1>
    %68 = arith.select %67, %64, %65 : vector<64x16xi1>, vector<64x16xbf16>
    %cst_20 = arith.constant 0.000000e+00 : bf16
    %69 = vector.broadcast %cst_20 : bf16 to vector<64x4xbf16>
    %70 = vector.extract_strided_slice %1 {offsets = [0, 4], sizes = [64, 12], strides = [1, 1]} : vector<64x16xbf16> to vector<64x12xbf16>
    %71 = tpu.concatenate %70, %69 in 1 : vector<64x12xbf16>, vector<64x4xbf16> -> vector<64x16xbf16>
    %cst_21 = arith.constant 0.000000e+00 : bf16
    %72 = vector.broadcast %cst_21 : bf16 to vector<64x16xbf16>
    %73 = vector.shape_cast %20 : vector<1x16xi1> to vector<1x16xi1>
    %74 = vector.broadcast %73 : vector<1x16xi1> to vector<64x16xi1>
    %75 = arith.select %74, %71, %72 : vector<64x16xi1>, vector<64x16xbf16>
    %cst_22 = arith.constant 0.000000e+00 : bf16
    %76 = vector.broadcast %cst_22 : bf16 to vector<64x5xbf16>
    %77 = vector.extract_strided_slice %1 {offsets = [0, 5], sizes = [64, 11], strides = [1, 1]} : vector<64x16xbf16> to vector<64x11xbf16>
    %78 = tpu.concatenate %77, %76 in 1 : vector<64x11xbf16>, vector<64x5xbf16> -> vector<64x16xbf16>
    %cst_23 = arith.constant 0.000000e+00 : bf16
    %79 = vector.broadcast %cst_23 : bf16 to vector<64x16xbf16>
    %80 = vector.shape_cast %26 : vector<1x16xi1> to vector<1x16xi1>
    %81 = vector.broadcast %80 : vector<1x16xi1> to vector<64x16xi1>
    %82 = arith.select %81, %78, %79 : vector<64x16xi1>, vector<64x16xbf16>
    %83 = tpu.concatenate %33, %40, %54, %1 in 0 : vector<64x16xbf16>, vector<64x16xbf16>, vector<64x16xbf16>, vector<64x16xbf16> -> vector<256x16xbf16>
    %c0_24 = arith.constant 0 : index
    %c0_25 = arith.constant 0 : index
    %c0_26 = arith.constant 0 : index
    %84 = vector.load %arg2[%c0_24, %c0_25, %c0_26] : memref<4x64x256xbf16, #tpu.memory_space<vmem>>, vector<1x64x256xbf16>
    %85 = vector.shape_cast %84 : vector<1x64x256xbf16> to vector<64x256xbf16>
    %cst_27 = arith.constant dense<0.000000e+00> : vector<64x16xf32>
    %86 = tpu.matmul %85, %83, %cst_27 {dimension_numbers = #tpu.dot_dimension_numbers<[1], [0], [0], [1], [0, 0, 1, 1], [], []>} : vector<64x256xbf16>, vector<256x16xbf16>, vector<64x16xf32> -> vector<64x16xf32>
    %c0_28 = arith.constant 0 : index
    %c0_29 = arith.constant 0 : index
    %87 = vector.load %arg3[%c0_28, %c0_29] : memref<64x1xf32, #tpu.memory_space<vmem>>, vector<64x1xf32>
    %88 = vector.broadcast %87 : vector<64x1xf32> to vector<64x16xf32>
    %89 = arith.addf %86, %88 : vector<64x16xf32>
    %cst_30 = arith.constant 0.000000e+00 : f32
    %90 = vector.broadcast %cst_30 : f32 to vector<64x16xf32>
    %91 = arith.maximumf %89, %90 : vector<64x16xf32>
    %92 = tpu.concatenate %40, %47, %1, %61 in 0 : vector<64x16xbf16>, vector<64x16xbf16>, vector<64x16xbf16>, vector<64x16xbf16> -> vector<256x16xbf16>
    %c1 = arith.constant 1 : index
    %c0_31 = arith.constant 0 : index
    %c0_32 = arith.constant 0 : index
    %93 = vector.load %arg2[%c1, %c0_31, %c0_32] : memref<4x64x256xbf16, #tpu.memory_space<vmem>>, vector<1x64x256xbf16>
    %94 = vector.shape_cast %93 : vector<1x64x256xbf16> to vector<64x256xbf16>
    %cst_33 = arith.constant dense<0.000000e+00> : vector<64x16xf32>
    %95 = tpu.matmul %94, %92, %cst_33 {dimension_numbers = #tpu.dot_dimension_numbers<[1], [0], [0], [1], [0, 0, 1, 1], [], []>} : vector<64x256xbf16>, vector<256x16xbf16>, vector<64x16xf32> -> vector<64x16xf32>
    %c0_34 = arith.constant 0 : index
    %c0_35 = arith.constant 0 : index
    %96 = vector.load %arg3[%c0_34, %c0_35] : memref<64x1xf32, #tpu.memory_space<vmem>>, vector<64x1xf32>
    %97 = vector.broadcast %96 : vector<64x1xf32> to vector<64x16xf32>
    %98 = arith.addf %95, %97 : vector<64x16xf32>
    %cst_36 = arith.constant 0.000000e+00 : f32
    %99 = vector.broadcast %cst_36 : f32 to vector<64x16xf32>
    %100 = arith.maximumf %98, %99 : vector<64x16xf32>
    %101 = tpu.concatenate %54, %1, %68, %75 in 0 : vector<64x16xbf16>, vector<64x16xbf16>, vector<64x16xbf16>, vector<64x16xbf16> -> vector<256x16xbf16>
    %c2 = arith.constant 2 : index
    %c0_37 = arith.constant 0 : index
    %c0_38 = arith.constant 0 : index
    %102 = vector.load %arg2[%c2, %c0_37, %c0_38] : memref<4x64x256xbf16, #tpu.memory_space<vmem>>, vector<1x64x256xbf16>
    %103 = vector.shape_cast %102 : vector<1x64x256xbf16> to vector<64x256xbf16>
    %cst_39 = arith.constant dense<0.000000e+00> : vector<64x16xf32>
    %104 = tpu.matmul %103, %101, %cst_39 {dimension_numbers = #tpu.dot_dimension_numbers<[1], [0], [0], [1], [0, 0, 1, 1], [], []>} : vector<64x256xbf16>, vector<256x16xbf16>, vector<64x16xf32> -> vector<64x16xf32>
    %c0_40 = arith.constant 0 : index
    %c0_41 = arith.constant 0 : index
    %105 = vector.load %arg3[%c0_40, %c0_41] : memref<64x1xf32, #tpu.memory_space<vmem>>, vector<64x1xf32>
    %106 = vector.broadcast %105 : vector<64x1xf32> to vector<64x16xf32>
    %107 = arith.addf %104, %106 : vector<64x16xf32>
    %cst_42 = arith.constant 0.000000e+00 : f32
    %108 = vector.broadcast %cst_42 : f32 to vector<64x16xf32>
    %109 = arith.maximumf %107, %108 : vector<64x16xf32>
    %110 = tpu.concatenate %1, %61, %75, %82 in 0 : vector<64x16xbf16>, vector<64x16xbf16>, vector<64x16xbf16>, vector<64x16xbf16> -> vector<256x16xbf16>
    %c3 = arith.constant 3 : index
    %c0_43 = arith.constant 0 : index
    %c0_44 = arith.constant 0 : index
    %111 = vector.load %arg2[%c3, %c0_43, %c0_44] : memref<4x64x256xbf16, #tpu.memory_space<vmem>>, vector<1x64x256xbf16>
    %112 = vector.shape_cast %111 : vector<1x64x256xbf16> to vector<64x256xbf16>
    %cst_45 = arith.constant dense<0.000000e+00> : vector<64x16xf32>
    %113 = tpu.matmul %112, %110, %cst_45 {dimension_numbers = #tpu.dot_dimension_numbers<[1], [0], [0], [1], [0, 0, 1, 1], [], []>} : vector<64x256xbf16>, vector<256x16xbf16>, vector<64x16xf32> -> vector<64x16xf32>
    %c0_46 = arith.constant 0 : index
    %c0_47 = arith.constant 0 : index
    %114 = vector.load %arg3[%c0_46, %c0_47] : memref<64x1xf32, #tpu.memory_space<vmem>>, vector<64x1xf32>
    %115 = vector.broadcast %114 : vector<64x1xf32> to vector<64x16xf32>
    %116 = arith.addf %113, %115 : vector<64x16xf32>
    %cst_48 = arith.constant 0.000000e+00 : f32
    %117 = vector.broadcast %cst_48 : f32 to vector<64x16xf32>
    %118 = arith.maximumf %116, %117 : vector<64x16xf32>
    %119 = arith.truncf %91 : vector<64x16xf32> to vector<64x16xbf16>
    %120 = arith.truncf %100 : vector<64x16xf32> to vector<64x16xbf16>
    %121 = arith.truncf %109 : vector<64x16xf32> to vector<64x16xbf16>
    %122 = arith.truncf %118 : vector<64x16xf32> to vector<64x16xbf16>
    %123 = tpu.concatenate %119, %120, %121, %122 in 1 : vector<64x16xbf16>, vector<64x16xbf16>, vector<64x16xbf16>, vector<64x16xbf16> -> vector<64x64xbf16>
    %c0_49 = arith.constant 0 : index
    %c0_50 = arith.constant 0 : index
    %124 = vector.load %arg10[%c0_49, %c0_50] : memref<64x64xbf16, #tpu.memory_space<vmem>>, vector<64x64xbf16>
    %cst_51 = arith.constant dense<0.000000e+00> : vector<64x64xf32>
    %125 = tpu.matmul %123, %124, %cst_51 {dimension_numbers = #tpu.dot_dimension_numbers<[1], [0], [0], [1], [0, 0, 1, 1], [], []>} : vector<64x64xbf16>, vector<64x64xbf16>, vector<64x64xf32> -> vector<64x64xf32>
    %126 = arith.truncf %125 : vector<64x64xf32> to vector<64x64xbf16>
    %127 = tpu.iota {dimensions = array<i32: 1>} : vector<1x64xi32>
    %c7_i32 = arith.constant 7 : i32
    %128 = vector.broadcast %c7_i32 : i32 to vector<1x64xi32>
    %129 = arith.andi %127, %128 : vector<1x64xi32>
    %c3_i32_52 = arith.constant 3 : i32
    %130 = vector.broadcast %c3_i32_52 : i32 to vector<1x64xi32>
    %131 = arith.shrsi %127, %130 : vector<1x64xi32>
    %c1_i32_53 = arith.constant 1 : i32
    %132 = vector.broadcast %c1_i32_53 : i32 to vector<1x64xi32>
    %133 = arith.cmpi sge, %131, %132 : vector<1x64xi32>
    %c1_i32_54 = arith.constant 1 : i32
    %134 = vector.broadcast %c1_i32_54 : i32 to vector<1x64xi32>
    %135 = arith.cmpi sge, %129, %134 : vector<1x64xi32>
    %136 = arith.andi %133, %135 : vector<1x64xi1>
    %c7_i32_55 = arith.constant 7 : i32
    %137 = vector.broadcast %c7_i32_55 : i32 to vector<1x64xi32>
    %138 = arith.cmpi slt, %129, %137 : vector<1x64xi32>
    %139 = arith.andi %133, %138 : vector<1x64xi1>
    %c1_i32_56 = arith.constant 1 : i32
    %140 = vector.broadcast %c1_i32_56 : i32 to vector<1x64xi32>
    %141 = arith.cmpi sge, %129, %140 : vector<1x64xi32>
    %c7_i32_57 = arith.constant 7 : i32
    %142 = vector.broadcast %c7_i32_57 : i32 to vector<1x64xi32>
    %143 = arith.cmpi slt, %129, %142 : vector<1x64xi32>
    %c7_i32_58 = arith.constant 7 : i32
    %144 = vector.broadcast %c7_i32_58 : i32 to vector<1x64xi32>
    %145 = arith.cmpi slt, %131, %144 : vector<1x64xi32>
    %c1_i32_59 = arith.constant 1 : i32
    %146 = vector.broadcast %c1_i32_59 : i32 to vector<1x64xi32>
    %147 = arith.cmpi sge, %129, %146 : vector<1x64xi32>
    %148 = arith.andi %145, %147 : vector<1x64xi1>
    %c7_i32_60 = arith.constant 7 : i32
    %149 = vector.broadcast %c7_i32_60 : i32 to vector<1x64xi32>
    %150 = arith.cmpi slt, %129, %149 : vector<1x64xi32>
    %151 = arith.andi %145, %150 : vector<1x64xi1>
    %cst_61 = arith.constant 0.000000e+00 : bf16
    %152 = vector.broadcast %cst_61 : bf16 to vector<64x9xbf16>
    %153 = vector.extract_strided_slice %126 {offsets = [0, 0], sizes = [64, 55], strides = [1, 1]} : vector<64x64xbf16> to vector<64x55xbf16>
    %154 = tpu.concatenate %152, %153 in 1 : vector<64x9xbf16>, vector<64x55xbf16> -> vector<64x64xbf16>
    %cst_62 = arith.constant 0.000000e+00 : bf16
    %155 = vector.broadcast %cst_62 : bf16 to vector<64x64xbf16>
    %156 = vector.shape_cast %136 : vector<1x64xi1> to vector<1x64xi1>
    %157 = vector.broadcast %156 : vector<1x64xi1> to vector<64x64xi1>
    %158 = arith.select %157, %154, %155 : vector<64x64xi1>, vector<64x64xbf16>
    %cst_63 = arith.constant 0.000000e+00 : bf16
    %159 = vector.broadcast %cst_63 : bf16 to vector<64x8xbf16>
    %160 = vector.extract_strided_slice %126 {offsets = [0, 0], sizes = [64, 56], strides = [1, 1]} : vector<64x64xbf16> to vector<64x56xbf16>
    %161 = tpu.concatenate %159, %160 in 1 : vector<64x8xbf16>, vector<64x56xbf16> -> vector<64x64xbf16>
    %cst_64 = arith.constant 0.000000e+00 : bf16
    %162 = vector.broadcast %cst_64 : bf16 to vector<64x64xbf16>
    %163 = vector.shape_cast %133 : vector<1x64xi1> to vector<1x64xi1>
    %164 = vector.broadcast %163 : vector<1x64xi1> to vector<64x64xi1>
    %165 = arith.select %164, %161, %162 : vector<64x64xi1>, vector<64x64xbf16>
    %cst_65 = arith.constant 0.000000e+00 : bf16
    %166 = vector.broadcast %cst_65 : bf16 to vector<64x7xbf16>
    %167 = vector.extract_strided_slice %126 {offsets = [0, 0], sizes = [64, 57], strides = [1, 1]} : vector<64x64xbf16> to vector<64x57xbf16>
    %168 = tpu.concatenate %166, %167 in 1 : vector<64x7xbf16>, vector<64x57xbf16> -> vector<64x64xbf16>
    %cst_66 = arith.constant 0.000000e+00 : bf16
    %169 = vector.broadcast %cst_66 : bf16 to vector<64x64xbf16>
    %170 = vector.shape_cast %139 : vector<1x64xi1> to vector<1x64xi1>
    %171 = vector.broadcast %170 : vector<1x64xi1> to vector<64x64xi1>
    %172 = arith.select %171, %168, %169 : vector<64x64xi1>, vector<64x64xbf16>
    %cst_67 = arith.constant 0.000000e+00 : bf16
    %173 = vector.broadcast %cst_67 : bf16 to vector<64x1xbf16>
    %174 = vector.extract_strided_slice %126 {offsets = [0, 0], sizes = [64, 63], strides = [1, 1]} : vector<64x64xbf16> to vector<64x63xbf16>
    %175 = tpu.concatenate %173, %174 in 1 : vector<64x1xbf16>, vector<64x63xbf16> -> vector<64x64xbf16>
    %cst_68 = arith.constant 0.000000e+00 : bf16
    %176 = vector.broadcast %cst_68 : bf16 to vector<64x64xbf16>
    %177 = vector.shape_cast %141 : vector<1x64xi1> to vector<1x64xi1>
    %178 = vector.broadcast %177 : vector<1x64xi1> to vector<64x64xi1>
    %179 = arith.select %178, %175, %176 : vector<64x64xi1>, vector<64x64xbf16>
    %cst_69 = arith.constant 0.000000e+00 : bf16
    %180 = vector.broadcast %cst_69 : bf16 to vector<64x1xbf16>
    %181 = vector.extract_strided_slice %126 {offsets = [0, 1], sizes = [64, 63], strides = [1, 1]} : vector<64x64xbf16> to vector<64x63xbf16>
    %182 = tpu.concatenate %181, %180 in 1 : vector<64x63xbf16>, vector<64x1xbf16> -> vector<64x64xbf16>
    %cst_70 = arith.constant 0.000000e+00 : bf16
    %183 = vector.broadcast %cst_70 : bf16 to vector<64x64xbf16>
    %184 = vector.shape_cast %143 : vector<1x64xi1> to vector<1x64xi1>
    %185 = vector.broadcast %184 : vector<1x64xi1> to vector<64x64xi1>
    %186 = arith.select %185, %182, %183 : vector<64x64xi1>, vector<64x64xbf16>
    %cst_71 = arith.constant 0.000000e+00 : bf16
    %187 = vector.broadcast %cst_71 : bf16 to vector<64x7xbf16>
    %188 = vector.extract_strided_slice %126 {offsets = [0, 7], sizes = [64, 57], strides = [1, 1]} : vector<64x64xbf16> to vector<64x57xbf16>
    %189 = tpu.concatenate %188, %187 in 1 : vector<64x57xbf16>, vector<64x7xbf16> -> vector<64x64xbf16>
    %cst_72 = arith.constant 0.000000e+00 : bf16
    %190 = vector.broadcast %cst_72 : bf16 to vector<64x64xbf16>
    %191 = vector.shape_cast %148 : vector<1x64xi1> to vector<1x64xi1>
    %192 = vector.broadcast %191 : vector<1x64xi1> to vector<64x64xi1>
    %193 = arith.select %192, %189, %190 : vector<64x64xi1>, vector<64x64xbf16>
    %cst_73 = arith.constant 0.000000e+00 : bf16
    %194 = vector.broadcast %cst_73 : bf16 to vector<64x8xbf16>
    %195 = vector.extract_strided_slice %126 {offsets = [0, 8], sizes = [64, 56], strides = [1, 1]} : vector<64x64xbf16> to vector<64x56xbf16>
    %196 = tpu.concatenate %195, %194 in 1 : vector<64x56xbf16>, vector<64x8xbf16> -> vector<64x64xbf16>
    %cst_74 = arith.constant 0.000000e+00 : bf16
    %197 = vector.broadcast %cst_74 : bf16 to vector<64x64xbf16>
    %198 = vector.shape_cast %145 : vector<1x64xi1> to vector<1x64xi1>
    %199 = vector.broadcast %198 : vector<1x64xi1> to vector<64x64xi1>
    %200 = arith.select %199, %196, %197 : vector<64x64xi1>, vector<64x64xbf16>
    %cst_75 = arith.constant 0.000000e+00 : bf16
    %201 = vector.broadcast %cst_75 : bf16 to vector<64x9xbf16>
    %202 = vector.extract_strided_slice %126 {offsets = [0, 9], sizes = [64, 55], strides = [1, 1]} : vector<64x64xbf16> to vector<64x55xbf16>
    %203 = tpu.concatenate %202, %201 in 1 : vector<64x55xbf16>, vector<64x9xbf16> -> vector<64x64xbf16>
    %cst_76 = arith.constant 0.000000e+00 : bf16
    %204 = vector.broadcast %cst_76 : bf16 to vector<64x64xbf16>
    %205 = vector.shape_cast %151 : vector<1x64xi1> to vector<1x64xi1>
    %206 = vector.broadcast %205 : vector<1x64xi1> to vector<64x64xi1>
    %207 = arith.select %206, %203, %204 : vector<64x64xi1>, vector<64x64xbf16>
    %208 = tpu.concatenate %158, %165, %179, %126 in 0 : vector<64x64xbf16>, vector<64x64xbf16>, vector<64x64xbf16>, vector<64x64xbf16> -> vector<256x64xbf16>
    %c0_77 = arith.constant 0 : index
    %c0_78 = arith.constant 0 : index
    %c0_79 = arith.constant 0 : index
    %209 = vector.load %arg4[%c0_77, %c0_78, %c0_79] : memref<4x32x256xbf16, #tpu.memory_space<vmem>>, vector<1x32x256xbf16>
    %210 = vector.shape_cast %209 : vector<1x32x256xbf16> to vector<32x256xbf16>
    %cst_80 = arith.constant dense<0.000000e+00> : vector<32x64xf32>
    %211 = tpu.matmul %210, %208, %cst_80 {dimension_numbers = #tpu.dot_dimension_numbers<[1], [0], [0], [1], [0, 0, 1, 1], [], []>} : vector<32x256xbf16>, vector<256x64xbf16>, vector<32x64xf32> -> vector<32x64xf32>
    %c0_81 = arith.constant 0 : index
    %c0_82 = arith.constant 0 : index
    %212 = vector.load %arg5[%c0_81, %c0_82] : memref<32x1xf32, #tpu.memory_space<vmem>>, vector<32x1xf32>
    %213 = vector.broadcast %212 : vector<32x1xf32> to vector<32x64xf32>
    %214 = arith.addf %211, %213 : vector<32x64xf32>
    %cst_83 = arith.constant 0.000000e+00 : f32
    %215 = vector.broadcast %cst_83 : f32 to vector<32x64xf32>
    %216 = arith.maximumf %214, %215 : vector<32x64xf32>
    %217 = tpu.concatenate %165, %172, %126, %186 in 0 : vector<64x64xbf16>, vector<64x64xbf16>, vector<64x64xbf16>, vector<64x64xbf16> -> vector<256x64xbf16>
    %c1_84 = arith.constant 1 : index
    %c0_85 = arith.constant 0 : index
    %c0_86 = arith.constant 0 : index
    %218 = vector.load %arg4[%c1_84, %c0_85, %c0_86] : memref<4x32x256xbf16, #tpu.memory_space<vmem>>, vector<1x32x256xbf16>
    %219 = vector.shape_cast %218 : vector<1x32x256xbf16> to vector<32x256xbf16>
    %cst_87 = arith.constant dense<0.000000e+00> : vector<32x64xf32>
    %220 = tpu.matmul %219, %217, %cst_87 {dimension_numbers = #tpu.dot_dimension_numbers<[1], [0], [0], [1], [0, 0, 1, 1], [], []>} : vector<32x256xbf16>, vector<256x64xbf16>, vector<32x64xf32> -> vector<32x64xf32>
    %c0_88 = arith.constant 0 : index
    %c0_89 = arith.constant 0 : index
    %221 = vector.load %arg5[%c0_88, %c0_89] : memref<32x1xf32, #tpu.memory_space<vmem>>, vector<32x1xf32>
    %222 = vector.broadcast %221 : vector<32x1xf32> to vector<32x64xf32>
    %223 = arith.addf %220, %222 : vector<32x64xf32>
    %cst_90 = arith.constant 0.000000e+00 : f32
    %224 = vector.broadcast %cst_90 : f32 to vector<32x64xf32>
    %225 = arith.maximumf %223, %224 : vector<32x64xf32>
    %226 = tpu.concatenate %179, %126, %193, %200 in 0 : vector<64x64xbf16>, vector<64x64xbf16>, vector<64x64xbf16>, vector<64x64xbf16> -> vector<256x64xbf16>
    %c2_91 = arith.constant 2 : index
    %c0_92 = arith.constant 0 : index
    %c0_93 = arith.constant 0 : index
    %227 = vector.load %arg4[%c2_91, %c0_92, %c0_93] : memref<4x32x256xbf16, #tpu.memory_space<vmem>>, vector<1x32x256xbf16>
    %228 = vector.shape_cast %227 : vector<1x32x256xbf16> to vector<32x256xbf16>
    %cst_94 = arith.constant dense<0.000000e+00> : vector<32x64xf32>
    %229 = tpu.matmul %228, %226, %cst_94 {dimension_numbers = #tpu.dot_dimension_numbers<[1], [0], [0], [1], [0, 0, 1, 1], [], []>} : vector<32x256xbf16>, vector<256x64xbf16>, vector<32x64xf32> -> vector<32x64xf32>
    %c0_95 = arith.constant 0 : index
    %c0_96 = arith.constant 0 : index
    %230 = vector.load %arg5[%c0_95, %c0_96] : memref<32x1xf32, #tpu.memory_space<vmem>>, vector<32x1xf32>
    %231 = vector.broadcast %230 : vector<32x1xf32> to vector<32x64xf32>
    %232 = arith.addf %229, %231 : vector<32x64xf32>
    %cst_97 = arith.constant 0.000000e+00 : f32
    %233 = vector.broadcast %cst_97 : f32 to vector<32x64xf32>
    %234 = arith.maximumf %232, %233 : vector<32x64xf32>
    %235 = tpu.concatenate %126, %186, %200, %207 in 0 : vector<64x64xbf16>, vector<64x64xbf16>, vector<64x64xbf16>, vector<64x64xbf16> -> vector<256x64xbf16>
    %c3_98 = arith.constant 3 : index
    %c0_99 = arith.constant 0 : index
    %c0_100 = arith.constant 0 : index
    %236 = vector.load %arg4[%c3_98, %c0_99, %c0_100] : memref<4x32x256xbf16, #tpu.memory_space<vmem>>, vector<1x32x256xbf16>
    %237 = vector.shape_cast %236 : vector<1x32x256xbf16> to vector<32x256xbf16>
    %cst_101 = arith.constant dense<0.000000e+00> : vector<32x64xf32>
    %238 = tpu.matmul %237, %235, %cst_101 {dimension_numbers = #tpu.dot_dimension_numbers<[1], [0], [0], [1], [0, 0, 1, 1], [], []>} : vector<32x256xbf16>, vector<256x64xbf16>, vector<32x64xf32> -> vector<32x64xf32>
    %c0_102 = arith.constant 0 : index
    %c0_103 = arith.constant 0 : index
    %239 = vector.load %arg5[%c0_102, %c0_103] : memref<32x1xf32, #tpu.memory_space<vmem>>, vector<32x1xf32>
    %240 = vector.broadcast %239 : vector<32x1xf32> to vector<32x64xf32>
    %241 = arith.addf %238, %240 : vector<32x64xf32>
    %cst_104 = arith.constant 0.000000e+00 : f32
    %242 = vector.broadcast %cst_104 : f32 to vector<32x64xf32>
    %243 = arith.maximumf %241, %242 : vector<32x64xf32>
    %244 = arith.truncf %216 : vector<32x64xf32> to vector<32x64xbf16>
    %245 = arith.truncf %225 : vector<32x64xf32> to vector<32x64xbf16>
    %246 = arith.truncf %234 : vector<32x64xf32> to vector<32x64xbf16>
    %247 = arith.truncf %243 : vector<32x64xf32> to vector<32x64xbf16>
    %248 = tpu.concatenate %244, %245, %246, %247 in 1 : vector<32x64xbf16>, vector<32x64xbf16>, vector<32x64xbf16>, vector<32x64xbf16> -> vector<32x256xbf16>
    %c0_105 = arith.constant 0 : index
    %c0_106 = arith.constant 0 : index
    %249 = vector.load %arg11[%c0_105, %c0_106] : memref<256x256xbf16, #tpu.memory_space<vmem>>, vector<256x256xbf16>
    %cst_107 = arith.constant dense<0.000000e+00> : vector<32x256xf32>
    %250 = tpu.matmul %248, %249, %cst_107 {dimension_numbers = #tpu.dot_dimension_numbers<[1], [0], [0], [1], [0, 0, 1, 1], [], []>} : vector<32x256xbf16>, vector<256x256xbf16>, vector<32x256xf32> -> vector<32x256xf32>
    %251 = arith.truncf %250 : vector<32x256xf32> to vector<32x256xbf16>
    %252 = tpu.iota {dimensions = array<i32: 1>} : vector<1x256xi32>
    %c15_i32 = arith.constant 15 : i32
    %253 = vector.broadcast %c15_i32 : i32 to vector<1x256xi32>
    %254 = arith.andi %252, %253 : vector<1x256xi32>
    %c4_i32 = arith.constant 4 : i32
    %255 = vector.broadcast %c4_i32 : i32 to vector<1x256xi32>
    %256 = arith.shrsi %252, %255 : vector<1x256xi32>
    %c1_i32_108 = arith.constant 1 : i32
    %257 = vector.broadcast %c1_i32_108 : i32 to vector<1x256xi32>
    %258 = arith.cmpi sge, %256, %257 : vector<1x256xi32>
    %c1_i32_109 = arith.constant 1 : i32
    %259 = vector.broadcast %c1_i32_109 : i32 to vector<1x256xi32>
    %260 = arith.cmpi sge, %254, %259 : vector<1x256xi32>
    %261 = arith.andi %258, %260 : vector<1x256xi1>
    %c15_i32_110 = arith.constant 15 : i32
    %262 = vector.broadcast %c15_i32_110 : i32 to vector<1x256xi32>
    %263 = arith.cmpi slt, %254, %262 : vector<1x256xi32>
    %264 = arith.andi %258, %263 : vector<1x256xi1>
    %c1_i32_111 = arith.constant 1 : i32
    %265 = vector.broadcast %c1_i32_111 : i32 to vector<1x256xi32>
    %266 = arith.cmpi sge, %254, %265 : vector<1x256xi32>
    %c15_i32_112 = arith.constant 15 : i32
    %267 = vector.broadcast %c15_i32_112 : i32 to vector<1x256xi32>
    %268 = arith.cmpi slt, %254, %267 : vector<1x256xi32>
    %c15_i32_113 = arith.constant 15 : i32
    %269 = vector.broadcast %c15_i32_113 : i32 to vector<1x256xi32>
    %270 = arith.cmpi slt, %256, %269 : vector<1x256xi32>
    %c1_i32_114 = arith.constant 1 : i32
    %271 = vector.broadcast %c1_i32_114 : i32 to vector<1x256xi32>
    %272 = arith.cmpi sge, %254, %271 : vector<1x256xi32>
    %273 = arith.andi %270, %272 : vector<1x256xi1>
    %c15_i32_115 = arith.constant 15 : i32
    %274 = vector.broadcast %c15_i32_115 : i32 to vector<1x256xi32>
    %275 = arith.cmpi slt, %254, %274 : vector<1x256xi32>
    %276 = arith.andi %270, %275 : vector<1x256xi1>
    %cst_116 = arith.constant 0.000000e+00 : bf16
    %277 = vector.broadcast %cst_116 : bf16 to vector<32x17xbf16>
    %278 = vector.extract_strided_slice %251 {offsets = [0, 0], sizes = [32, 239], strides = [1, 1]} : vector<32x256xbf16> to vector<32x239xbf16>
    %279 = tpu.concatenate %277, %278 in 1 : vector<32x17xbf16>, vector<32x239xbf16> -> vector<32x256xbf16>
    %cst_117 = arith.constant 0.000000e+00 : bf16
    %280 = vector.broadcast %cst_117 : bf16 to vector<32x256xbf16>
    %281 = vector.shape_cast %261 : vector<1x256xi1> to vector<1x256xi1>
    %282 = vector.broadcast %281 : vector<1x256xi1> to vector<32x256xi1>
    %283 = arith.select %282, %279, %280 : vector<32x256xi1>, vector<32x256xbf16>
    %cst_118 = arith.constant 0.000000e+00 : bf16
    %284 = vector.broadcast %cst_118 : bf16 to vector<32x16xbf16>
    %285 = vector.extract_strided_slice %251 {offsets = [0, 0], sizes = [32, 240], strides = [1, 1]} : vector<32x256xbf16> to vector<32x240xbf16>
    %286 = tpu.concatenate %284, %285 in 1 : vector<32x16xbf16>, vector<32x240xbf16> -> vector<32x256xbf16>
    %cst_119 = arith.constant 0.000000e+00 : bf16
    %287 = vector.broadcast %cst_119 : bf16 to vector<32x256xbf16>
    %288 = vector.shape_cast %258 : vector<1x256xi1> to vector<1x256xi1>
    %289 = vector.broadcast %288 : vector<1x256xi1> to vector<32x256xi1>
    %290 = arith.select %289, %286, %287 : vector<32x256xi1>, vector<32x256xbf16>
    %cst_120 = arith.constant 0.000000e+00 : bf16
    %291 = vector.broadcast %cst_120 : bf16 to vector<32x15xbf16>
    %292 = vector.extract_strided_slice %251 {offsets = [0, 0], sizes = [32, 241], strides = [1, 1]} : vector<32x256xbf16> to vector<32x241xbf16>
    %293 = tpu.concatenate %291, %292 in 1 : vector<32x15xbf16>, vector<32x241xbf16> -> vector<32x256xbf16>
    %cst_121 = arith.constant 0.000000e+00 : bf16
    %294 = vector.broadcast %cst_121 : bf16 to vector<32x256xbf16>
    %295 = vector.shape_cast %264 : vector<1x256xi1> to vector<1x256xi1>
    %296 = vector.broadcast %295 : vector<1x256xi1> to vector<32x256xi1>
    %297 = arith.select %296, %293, %294 : vector<32x256xi1>, vector<32x256xbf16>
    %cst_122 = arith.constant 0.000000e+00 : bf16
    %298 = vector.broadcast %cst_122 : bf16 to vector<32x1xbf16>
    %299 = vector.extract_strided_slice %251 {offsets = [0, 0], sizes = [32, 255], strides = [1, 1]} : vector<32x256xbf16> to vector<32x255xbf16>
    %300 = tpu.concatenate %298, %299 in 1 : vector<32x1xbf16>, vector<32x255xbf16> -> vector<32x256xbf16>
    %cst_123 = arith.constant 0.000000e+00 : bf16
    %301 = vector.broadcast %cst_123 : bf16 to vector<32x256xbf16>
    %302 = vector.shape_cast %266 : vector<1x256xi1> to vector<1x256xi1>
    %303 = vector.broadcast %302 : vector<1x256xi1> to vector<32x256xi1>
    %304 = arith.select %303, %300, %301 : vector<32x256xi1>, vector<32x256xbf16>
    %cst_124 = arith.constant 0.000000e+00 : bf16
    %305 = vector.broadcast %cst_124 : bf16 to vector<32x1xbf16>
    %306 = vector.extract_strided_slice %251 {offsets = [0, 1], sizes = [32, 255], strides = [1, 1]} : vector<32x256xbf16> to vector<32x255xbf16>
    %307 = tpu.concatenate %306, %305 in 1 : vector<32x255xbf16>, vector<32x1xbf16> -> vector<32x256xbf16>
    %cst_125 = arith.constant 0.000000e+00 : bf16
    %308 = vector.broadcast %cst_125 : bf16 to vector<32x256xbf16>
    %309 = vector.shape_cast %268 : vector<1x256xi1> to vector<1x256xi1>
    %310 = vector.broadcast %309 : vector<1x256xi1> to vector<32x256xi1>
    %311 = arith.select %310, %307, %308 : vector<32x256xi1>, vector<32x256xbf16>
    %cst_126 = arith.constant 0.000000e+00 : bf16
    %312 = vector.broadcast %cst_126 : bf16 to vector<32x15xbf16>
    %313 = vector.extract_strided_slice %251 {offsets = [0, 15], sizes = [32, 241], strides = [1, 1]} : vector<32x256xbf16> to vector<32x241xbf16>
    %314 = tpu.concatenate %313, %312 in 1 : vector<32x241xbf16>, vector<32x15xbf16> -> vector<32x256xbf16>
    %cst_127 = arith.constant 0.000000e+00 : bf16
    %315 = vector.broadcast %cst_127 : bf16 to vector<32x256xbf16>
    %316 = vector.shape_cast %273 : vector<1x256xi1> to vector<1x256xi1>
    %317 = vector.broadcast %316 : vector<1x256xi1> to vector<32x256xi1>
    %318 = arith.select %317, %314, %315 : vector<32x256xi1>, vector<32x256xbf16>
    %cst_128 = arith.constant 0.000000e+00 : bf16
    %319 = vector.broadcast %cst_128 : bf16 to vector<32x16xbf16>
    %320 = vector.extract_strided_slice %251 {offsets = [0, 16], sizes = [32, 240], strides = [1, 1]} : vector<32x256xbf16> to vector<32x240xbf16>
    %321 = tpu.concatenate %320, %319 in 1 : vector<32x240xbf16>, vector<32x16xbf16> -> vector<32x256xbf16>
    %cst_129 = arith.constant 0.000000e+00 : bf16
    %322 = vector.broadcast %cst_129 : bf16 to vector<32x256xbf16>
    %323 = vector.shape_cast %270 : vector<1x256xi1> to vector<1x256xi1>
    %324 = vector.broadcast %323 : vector<1x256xi1> to vector<32x256xi1>
    %325 = arith.select %324, %321, %322 : vector<32x256xi1>, vector<32x256xbf16>
    %cst_130 = arith.constant 0.000000e+00 : bf16
    %326 = vector.broadcast %cst_130 : bf16 to vector<32x17xbf16>
    %327 = vector.extract_strided_slice %251 {offsets = [0, 17], sizes = [32, 239], strides = [1, 1]} : vector<32x256xbf16> to vector<32x239xbf16>
    %328 = tpu.concatenate %327, %326 in 1 : vector<32x239xbf16>, vector<32x17xbf16> -> vector<32x256xbf16>
    %cst_131 = arith.constant 0.000000e+00 : bf16
    %329 = vector.broadcast %cst_131 : bf16 to vector<32x256xbf16>
    %330 = vector.shape_cast %276 : vector<1x256xi1> to vector<1x256xi1>
    %331 = vector.broadcast %330 : vector<1x256xi1> to vector<32x256xi1>
    %332 = arith.select %331, %328, %329 : vector<32x256xi1>, vector<32x256xbf16>
    %333 = tpu.concatenate %283, %290, %304, %251 in 0 : vector<32x256xbf16>, vector<32x256xbf16>, vector<32x256xbf16>, vector<32x256xbf16> -> vector<128x256xbf16>
    %c0_132 = arith.constant 0 : index
    %c0_133 = arith.constant 0 : index
    %c0_134 = arith.constant 0 : index
    %334 = vector.load %arg6[%c0_132, %c0_133, %c0_134] : memref<4x32x128xbf16, #tpu.memory_space<vmem>>, vector<1x32x128xbf16>
    %335 = vector.shape_cast %334 : vector<1x32x128xbf16> to vector<32x128xbf16>
    %cst_135 = arith.constant dense<0.000000e+00> : vector<32x256xf32>
    %336 = tpu.matmul %335, %333, %cst_135 {dimension_numbers = #tpu.dot_dimension_numbers<[1], [0], [0], [1], [0, 0, 1, 1], [], []>} : vector<32x128xbf16>, vector<128x256xbf16>, vector<32x256xf32> -> vector<32x256xf32>
    %c0_136 = arith.constant 0 : index
    %c0_137 = arith.constant 0 : index
    %337 = vector.load %arg7[%c0_136, %c0_137] : memref<32x1xf32, #tpu.memory_space<vmem>>, vector<32x1xf32>
    %338 = vector.broadcast %337 : vector<32x1xf32> to vector<32x256xf32>
    %339 = arith.addf %336, %338 : vector<32x256xf32>
    %cst_138 = arith.constant 0.000000e+00 : f32
    %340 = vector.broadcast %cst_138 : f32 to vector<32x256xf32>
    %341 = arith.maximumf %339, %340 : vector<32x256xf32>
    %342 = tpu.concatenate %290, %297, %251, %311 in 0 : vector<32x256xbf16>, vector<32x256xbf16>, vector<32x256xbf16>, vector<32x256xbf16> -> vector<128x256xbf16>
    %c1_139 = arith.constant 1 : index
    %c0_140 = arith.constant 0 : index
    %c0_141 = arith.constant 0 : index
    %343 = vector.load %arg6[%c1_139, %c0_140, %c0_141] : memref<4x32x128xbf16, #tpu.memory_space<vmem>>, vector<1x32x128xbf16>
    %344 = vector.shape_cast %343 : vector<1x32x128xbf16> to vector<32x128xbf16>
    %cst_142 = arith.constant dense<0.000000e+00> : vector<32x256xf32>
    %345 = tpu.matmul %344, %342, %cst_142 {dimension_numbers = #tpu.dot_dimension_numbers<[1], [0], [0], [1], [0, 0, 1, 1], [], []>} : vector<32x128xbf16>, vector<128x256xbf16>, vector<32x256xf32> -> vector<32x256xf32>
    %c0_143 = arith.constant 0 : index
    %c0_144 = arith.constant 0 : index
    %346 = vector.load %arg7[%c0_143, %c0_144] : memref<32x1xf32, #tpu.memory_space<vmem>>, vector<32x1xf32>
    %347 = vector.broadcast %346 : vector<32x1xf32> to vector<32x256xf32>
    %348 = arith.addf %345, %347 : vector<32x256xf32>
    %cst_145 = arith.constant 0.000000e+00 : f32
    %349 = vector.broadcast %cst_145 : f32 to vector<32x256xf32>
    %350 = arith.maximumf %348, %349 : vector<32x256xf32>
    %351 = tpu.concatenate %304, %251, %318, %325 in 0 : vector<32x256xbf16>, vector<32x256xbf16>, vector<32x256xbf16>, vector<32x256xbf16> -> vector<128x256xbf16>
    %c2_146 = arith.constant 2 : index
    %c0_147 = arith.constant 0 : index
    %c0_148 = arith.constant 0 : index
    %352 = vector.load %arg6[%c2_146, %c0_147, %c0_148] : memref<4x32x128xbf16, #tpu.memory_space<vmem>>, vector<1x32x128xbf16>
    %353 = vector.shape_cast %352 : vector<1x32x128xbf16> to vector<32x128xbf16>
    %cst_149 = arith.constant dense<0.000000e+00> : vector<32x256xf32>
    %354 = tpu.matmul %353, %351, %cst_149 {dimension_numbers = #tpu.dot_dimension_numbers<[1], [0], [0], [1], [0, 0, 1, 1], [], []>} : vector<32x128xbf16>, vector<128x256xbf16>, vector<32x256xf32> -> vector<32x256xf32>
    %c0_150 = arith.constant 0 : index
    %c0_151 = arith.constant 0 : index
    %355 = vector.load %arg7[%c0_150, %c0_151] : memref<32x1xf32, #tpu.memory_space<vmem>>, vector<32x1xf32>
    %356 = vector.broadcast %355 : vector<32x1xf32> to vector<32x256xf32>
    %357 = arith.addf %354, %356 : vector<32x256xf32>
    %cst_152 = arith.constant 0.000000e+00 : f32
    %358 = vector.broadcast %cst_152 : f32 to vector<32x256xf32>
    %359 = arith.maximumf %357, %358 : vector<32x256xf32>
    %360 = tpu.concatenate %251, %311, %325, %332 in 0 : vector<32x256xbf16>, vector<32x256xbf16>, vector<32x256xbf16>, vector<32x256xbf16> -> vector<128x256xbf16>
    %c3_153 = arith.constant 3 : index
    %c0_154 = arith.constant 0 : index
    %c0_155 = arith.constant 0 : index
    %361 = vector.load %arg6[%c3_153, %c0_154, %c0_155] : memref<4x32x128xbf16, #tpu.memory_space<vmem>>, vector<1x32x128xbf16>
    %362 = vector.shape_cast %361 : vector<1x32x128xbf16> to vector<32x128xbf16>
    %cst_156 = arith.constant dense<0.000000e+00> : vector<32x256xf32>
    %363 = tpu.matmul %362, %360, %cst_156 {dimension_numbers = #tpu.dot_dimension_numbers<[1], [0], [0], [1], [0, 0, 1, 1], [], []>} : vector<32x128xbf16>, vector<128x256xbf16>, vector<32x256xf32> -> vector<32x256xf32>
    %c0_157 = arith.constant 0 : index
    %c0_158 = arith.constant 0 : index
    %364 = vector.load %arg7[%c0_157, %c0_158] : memref<32x1xf32, #tpu.memory_space<vmem>>, vector<32x1xf32>
    %365 = vector.broadcast %364 : vector<32x1xf32> to vector<32x256xf32>
    %366 = arith.addf %363, %365 : vector<32x256xf32>
    %cst_159 = arith.constant 0.000000e+00 : f32
    %367 = vector.broadcast %cst_159 : f32 to vector<32x256xf32>
    %368 = arith.maximumf %366, %367 : vector<32x256xf32>
    %369 = arith.truncf %341 : vector<32x256xf32> to vector<32x256xbf16>
    %370 = arith.truncf %350 : vector<32x256xf32> to vector<32x256xbf16>
    %371 = arith.truncf %359 : vector<32x256xf32> to vector<32x256xbf16>
    %372 = arith.truncf %368 : vector<32x256xf32> to vector<32x256xbf16>
    %373 = tpu.iota {dimensions = array<i32: 1>} : vector<1x256xi32>
    %c15_i32_160 = arith.constant 15 : i32
    %374 = vector.broadcast %c15_i32_160 : i32 to vector<1x256xi32>
    %375 = arith.andi %373, %374 : vector<1x256xi32>
    %c4_i32_161 = arith.constant 4 : i32
    %376 = vector.broadcast %c4_i32_161 : i32 to vector<1x256xi32>
    %377 = arith.shrsi %373, %376 : vector<1x256xi32>
    %c1_i32_162 = arith.constant 1 : i32
    %378 = vector.broadcast %c1_i32_162 : i32 to vector<1x256xi32>
    %379 = arith.cmpi sge, %377, %378 : vector<1x256xi32>
    %c1_i32_163 = arith.constant 1 : i32
    %380 = vector.broadcast %c1_i32_163 : i32 to vector<1x256xi32>
    %381 = arith.cmpi sge, %375, %380 : vector<1x256xi32>
    %382 = arith.andi %379, %381 : vector<1x256xi1>
    %c15_i32_164 = arith.constant 15 : i32
    %383 = vector.broadcast %c15_i32_164 : i32 to vector<1x256xi32>
    %384 = arith.cmpi slt, %375, %383 : vector<1x256xi32>
    %385 = arith.andi %379, %384 : vector<1x256xi1>
    %c1_i32_165 = arith.constant 1 : i32
    %386 = vector.broadcast %c1_i32_165 : i32 to vector<1x256xi32>
    %387 = arith.cmpi sge, %375, %386 : vector<1x256xi32>
    %c15_i32_166 = arith.constant 15 : i32
    %388 = vector.broadcast %c15_i32_166 : i32 to vector<1x256xi32>
    %389 = arith.cmpi slt, %375, %388 : vector<1x256xi32>
    %c15_i32_167 = arith.constant 15 : i32
    %390 = vector.broadcast %c15_i32_167 : i32 to vector<1x256xi32>
    %391 = arith.cmpi slt, %377, %390 : vector<1x256xi32>
    %c1_i32_168 = arith.constant 1 : i32
    %392 = vector.broadcast %c1_i32_168 : i32 to vector<1x256xi32>
    %393 = arith.cmpi sge, %375, %392 : vector<1x256xi32>
    %394 = arith.andi %391, %393 : vector<1x256xi1>
    %c15_i32_169 = arith.constant 15 : i32
    %395 = vector.broadcast %c15_i32_169 : i32 to vector<1x256xi32>
    %396 = arith.cmpi slt, %375, %395 : vector<1x256xi32>
    %397 = arith.andi %391, %396 : vector<1x256xi1>
    %c0_170 = arith.constant 0 : index
    %c0_171 = arith.constant 0 : index
    %c0_172 = arith.constant 0 : index
    %398 = vector.load %arg8[%c0_170, %c0_171, %c0_172] : memref<4x1x128xbf16, #tpu.memory_space<vmem>>, vector<1x1x128xbf16>
    %399 = vector.shape_cast %398 : vector<1x1x128xbf16> to vector<1x128xbf16>
    %cst_173 = arith.constant 0.000000e+00 : bf16
    %400 = vector.broadcast %cst_173 : bf16 to vector<32x17xbf16>
    %401 = vector.extract_strided_slice %372 {offsets = [0, 0], sizes = [32, 239], strides = [1, 1]} : vector<32x256xbf16> to vector<32x239xbf16>
    %402 = tpu.concatenate %400, %401 in 1 : vector<32x17xbf16>, vector<32x239xbf16> -> vector<32x256xbf16>
    %cst_174 = arith.constant 0.000000e+00 : bf16
    %403 = vector.broadcast %cst_174 : bf16 to vector<32x256xbf16>
    %404 = vector.shape_cast %382 : vector<1x256xi1> to vector<1x256xi1>
    %405 = vector.broadcast %404 : vector<1x256xi1> to vector<32x256xi1>
    %406 = arith.select %405, %402, %403 : vector<32x256xi1>, vector<32x256xbf16>
    %cst_175 = arith.constant 0.000000e+00 : bf16
    %407 = vector.broadcast %cst_175 : bf16 to vector<32x16xbf16>
    %408 = vector.extract_strided_slice %371 {offsets = [0, 0], sizes = [32, 240], strides = [1, 1]} : vector<32x256xbf16> to vector<32x240xbf16>
    %409 = tpu.concatenate %407, %408 in 1 : vector<32x16xbf16>, vector<32x240xbf16> -> vector<32x256xbf16>
    %cst_176 = arith.constant 0.000000e+00 : bf16
    %410 = vector.broadcast %cst_176 : bf16 to vector<32x256xbf16>
    %411 = vector.shape_cast %379 : vector<1x256xi1> to vector<1x256xi1>
    %412 = vector.broadcast %411 : vector<1x256xi1> to vector<32x256xi1>
    %413 = arith.select %412, %409, %410 : vector<32x256xi1>, vector<32x256xbf16>
    %cst_177 = arith.constant 0.000000e+00 : bf16
    %414 = vector.broadcast %cst_177 : bf16 to vector<32x1xbf16>
    %415 = vector.extract_strided_slice %370 {offsets = [0, 0], sizes = [32, 255], strides = [1, 1]} : vector<32x256xbf16> to vector<32x255xbf16>
    %416 = tpu.concatenate %414, %415 in 1 : vector<32x1xbf16>, vector<32x255xbf16> -> vector<32x256xbf16>
    %cst_178 = arith.constant 0.000000e+00 : bf16
    %417 = vector.broadcast %cst_178 : bf16 to vector<32x256xbf16>
    %418 = vector.shape_cast %387 : vector<1x256xi1> to vector<1x256xi1>
    %419 = vector.broadcast %418 : vector<1x256xi1> to vector<32x256xi1>
    %420 = arith.select %419, %416, %417 : vector<32x256xi1>, vector<32x256xbf16>
    %421 = tpu.concatenate %406, %413, %420, %369 in 0 : vector<32x256xbf16>, vector<32x256xbf16>, vector<32x256xbf16>, vector<32x256xbf16> -> vector<128x256xbf16>
    %cst_179 = arith.constant dense<0.000000e+00> : vector<1x256xf32>
    %422 = tpu.matmul %399, %421, %cst_179 {dimension_numbers = #tpu.dot_dimension_numbers<[1], [0], [0], [1], [0, 0, 1, 1], [], []>} : vector<1x128xbf16>, vector<128x256xbf16>, vector<1x256xf32> -> vector<1x256xf32>
    %c0_180 = arith.constant 0 : index
    %c0_181 = arith.constant 0 : index
    %423 = vector.load %arg9[%c0_180, %c0_181] : memref<1x1xf32, #tpu.memory_space<vmem>>, vector<1x1xf32>
    %424 = vector.broadcast %423 : vector<1x1xf32> to vector<1x256xf32>
    %425 = arith.addf %422, %424 : vector<1x256xf32>
    %426 = arith.negf %425 : vector<1x256xf32>
    %427 = math.exp %426 : vector<1x256xf32>
    %cst_182 = arith.constant 1.000000e+00 : f32
    %428 = vector.broadcast %cst_182 : f32 to vector<1x256xf32>
    %429 = arith.addf %428, %427 : vector<1x256xf32>
    %430 = arith.divf %428, %429 : vector<1x256xf32>
    %cst_183 = arith.constant 0.000000e+00 : bf16
    %431 = vector.broadcast %cst_183 : bf16 to vector<32x16xbf16>
    %432 = vector.extract_strided_slice %372 {offsets = [0, 0], sizes = [32, 240], strides = [1, 1]} : vector<32x256xbf16> to vector<32x240xbf16>
    %433 = tpu.concatenate %431, %432 in 1 : vector<32x16xbf16>, vector<32x240xbf16> -> vector<32x256xbf16>
    %cst_184 = arith.constant 0.000000e+00 : bf16
    %434 = vector.broadcast %cst_184 : bf16 to vector<32x256xbf16>
    %435 = vector.shape_cast %379 : vector<1x256xi1> to vector<1x256xi1>
    %436 = vector.broadcast %435 : vector<1x256xi1> to vector<32x256xi1>
    %437 = arith.select %436, %433, %434 : vector<32x256xi1>, vector<32x256xbf16>
    %438 = tpu.concatenate %413, %437, %369, %370 in 0 : vector<32x256xbf16>, vector<32x256xbf16>, vector<32x256xbf16>, vector<32x256xbf16> -> vector<128x256xbf16>
    %cst_185 = arith.constant dense<0.000000e+00> : vector<1x256xf32>
    %439 = tpu.matmul %399, %438, %cst_185 {dimension_numbers = #tpu.dot_dimension_numbers<[1], [0], [0], [1], [0, 0, 1, 1], [], []>} : vector<1x128xbf16>, vector<128x256xbf16>, vector<1x256xf32> -> vector<1x256xf32>
    %c0_186 = arith.constant 0 : index
    %c0_187 = arith.constant 0 : index
    %440 = vector.load %arg9[%c0_186, %c0_187] : memref<1x1xf32, #tpu.memory_space<vmem>>, vector<1x1xf32>
    %441 = vector.broadcast %440 : vector<1x1xf32> to vector<1x256xf32>
    %442 = arith.addf %439, %441 : vector<1x256xf32>
    %443 = arith.negf %442 : vector<1x256xf32>
    %444 = math.exp %443 : vector<1x256xf32>
    %cst_188 = arith.constant 1.000000e+00 : f32
    %445 = vector.broadcast %cst_188 : f32 to vector<1x256xf32>
    %446 = arith.addf %445, %444 : vector<1x256xf32>
    %447 = arith.divf %445, %446 : vector<1x256xf32>
    %cst_189 = arith.constant 0.000000e+00 : bf16
    %448 = vector.broadcast %cst_189 : bf16 to vector<32x1xbf16>
    %449 = vector.extract_strided_slice %372 {offsets = [0, 0], sizes = [32, 255], strides = [1, 1]} : vector<32x256xbf16> to vector<32x255xbf16>
    %450 = tpu.concatenate %448, %449 in 1 : vector<32x1xbf16>, vector<32x255xbf16> -> vector<32x256xbf16>
    %cst_190 = arith.constant 0.000000e+00 : bf16
    %451 = vector.broadcast %cst_190 : bf16 to vector<32x256xbf16>
    %452 = vector.shape_cast %387 : vector<1x256xi1> to vector<1x256xi1>
    %453 = vector.broadcast %452 : vector<1x256xi1> to vector<32x256xi1>
    %454 = arith.select %453, %450, %451 : vector<32x256xi1>, vector<32x256xbf16>
    %455 = tpu.concatenate %420, %369, %454, %371 in 0 : vector<32x256xbf16>, vector<32x256xbf16>, vector<32x256xbf16>, vector<32x256xbf16> -> vector<128x256xbf16>
    %cst_191 = arith.constant dense<0.000000e+00> : vector<1x256xf32>
    %456 = tpu.matmul %399, %455, %cst_191 {dimension_numbers = #tpu.dot_dimension_numbers<[1], [0], [0], [1], [0, 0, 1, 1], [], []>} : vector<1x128xbf16>, vector<128x256xbf16>, vector<1x256xf32> -> vector<1x256xf32>
    %c0_192 = arith.constant 0 : index
    %c0_193 = arith.constant 0 : index
    %457 = vector.load %arg9[%c0_192, %c0_193] : memref<1x1xf32, #tpu.memory_space<vmem>>, vector<1x1xf32>
    %458 = vector.broadcast %457 : vector<1x1xf32> to vector<1x256xf32>
    %459 = arith.addf %456, %458 : vector<1x256xf32>
    %460 = arith.negf %459 : vector<1x256xf32>
    %461 = math.exp %460 : vector<1x256xf32>
    %cst_194 = arith.constant 1.000000e+00 : f32
    %462 = vector.broadcast %cst_194 : f32 to vector<1x256xf32>
    %463 = arith.addf %462, %461 : vector<1x256xf32>
    %464 = arith.divf %462, %463 : vector<1x256xf32>
    %465 = tpu.concatenate %369, %370, %371, %372 in 0 : vector<32x256xbf16>, vector<32x256xbf16>, vector<32x256xbf16>, vector<32x256xbf16> -> vector<128x256xbf16>
    %cst_195 = arith.constant dense<0.000000e+00> : vector<1x256xf32>
    %466 = tpu.matmul %399, %465, %cst_195 {dimension_numbers = #tpu.dot_dimension_numbers<[1], [0], [0], [1], [0, 0, 1, 1], [], []>} : vector<1x128xbf16>, vector<128x256xbf16>, vector<1x256xf32> -> vector<1x256xf32>
    %c0_196 = arith.constant 0 : index
    %c0_197 = arith.constant 0 : index
    %467 = vector.load %arg9[%c0_196, %c0_197] : memref<1x1xf32, #tpu.memory_space<vmem>>, vector<1x1xf32>
    %468 = vector.broadcast %467 : vector<1x1xf32> to vector<1x256xf32>
    %469 = arith.addf %466, %468 : vector<1x256xf32>
    %470 = arith.negf %469 : vector<1x256xf32>
    %471 = math.exp %470 : vector<1x256xf32>
    %cst_198 = arith.constant 1.000000e+00 : f32
    %472 = vector.broadcast %cst_198 : f32 to vector<1x256xf32>
    %473 = arith.addf %472, %471 : vector<1x256xf32>
    %474 = arith.divf %472, %473 : vector<1x256xf32>
    %c1_199 = arith.constant 1 : index
    %c0_200 = arith.constant 0 : index
    %c0_201 = arith.constant 0 : index
    %475 = vector.load %arg8[%c1_199, %c0_200, %c0_201] : memref<4x1x128xbf16, #tpu.memory_space<vmem>>, vector<1x1x128xbf16>
    %476 = vector.shape_cast %475 : vector<1x1x128xbf16> to vector<1x128xbf16>
    %477 = tpu.concatenate %413, %437, %369, %370 in 0 : vector<32x256xbf16>, vector<32x256xbf16>, vector<32x256xbf16>, vector<32x256xbf16> -> vector<128x256xbf16>
    %cst_202 = arith.constant dense<0.000000e+00> : vector<1x256xf32>
    %478 = tpu.matmul %476, %477, %cst_202 {dimension_numbers = #tpu.dot_dimension_numbers<[1], [0], [0], [1], [0, 0, 1, 1], [], []>} : vector<1x128xbf16>, vector<128x256xbf16>, vector<1x256xf32> -> vector<1x256xf32>
    %c0_203 = arith.constant 0 : index
    %c0_204 = arith.constant 0 : index
    %479 = vector.load %arg9[%c0_203, %c0_204] : memref<1x1xf32, #tpu.memory_space<vmem>>, vector<1x1xf32>
    %480 = vector.broadcast %479 : vector<1x1xf32> to vector<1x256xf32>
    %481 = arith.addf %478, %480 : vector<1x256xf32>
    %482 = arith.negf %481 : vector<1x256xf32>
    %483 = math.exp %482 : vector<1x256xf32>
    %cst_205 = arith.constant 1.000000e+00 : f32
    %484 = vector.broadcast %cst_205 : f32 to vector<1x256xf32>
    %485 = arith.addf %484, %483 : vector<1x256xf32>
    %486 = arith.divf %484, %485 : vector<1x256xf32>
    %cst_206 = arith.constant 0.000000e+00 : bf16
    %487 = vector.broadcast %cst_206 : bf16 to vector<32x15xbf16>
    %488 = vector.extract_strided_slice %371 {offsets = [0, 0], sizes = [32, 241], strides = [1, 1]} : vector<32x256xbf16> to vector<32x241xbf16>
    %489 = tpu.concatenate %487, %488 in 1 : vector<32x15xbf16>, vector<32x241xbf16> -> vector<32x256xbf16>
    %cst_207 = arith.constant 0.000000e+00 : bf16
    %490 = vector.broadcast %cst_207 : bf16 to vector<32x256xbf16>
    %491 = vector.shape_cast %385 : vector<1x256xi1> to vector<1x256xi1>
    %492 = vector.broadcast %491 : vector<1x256xi1> to vector<32x256xi1>
    %493 = arith.select %492, %489, %490 : vector<32x256xi1>, vector<32x256xbf16>
    %cst_208 = arith.constant 0.000000e+00 : bf16
    %494 = vector.broadcast %cst_208 : bf16 to vector<32x1xbf16>
    %495 = vector.extract_strided_slice %369 {offsets = [0, 1], sizes = [32, 255], strides = [1, 1]} : vector<32x256xbf16> to vector<32x255xbf16>
    %496 = tpu.concatenate %495, %494 in 1 : vector<32x255xbf16>, vector<32x1xbf16> -> vector<32x256xbf16>
    %cst_209 = arith.constant 0.000000e+00 : bf16
    %497 = vector.broadcast %cst_209 : bf16 to vector<32x256xbf16>
    %498 = vector.shape_cast %389 : vector<1x256xi1> to vector<1x256xi1>
    %499 = vector.broadcast %498 : vector<1x256xi1> to vector<32x256xi1>
    %500 = arith.select %499, %496, %497 : vector<32x256xi1>, vector<32x256xbf16>
    %501 = tpu.concatenate %437, %493, %370, %500 in 0 : vector<32x256xbf16>, vector<32x256xbf16>, vector<32x256xbf16>, vector<32x256xbf16> -> vector<128x256xbf16>
    %cst_210 = arith.constant dense<0.000000e+00> : vector<1x256xf32>
    %502 = tpu.matmul %476, %501, %cst_210 {dimension_numbers = #tpu.dot_dimension_numbers<[1], [0], [0], [1], [0, 0, 1, 1], [], []>} : vector<1x128xbf16>, vector<128x256xbf16>, vector<1x256xf32> -> vector<1x256xf32>
    %c0_211 = arith.constant 0 : index
    %c0_212 = arith.constant 0 : index
    %503 = vector.load %arg9[%c0_211, %c0_212] : memref<1x1xf32, #tpu.memory_space<vmem>>, vector<1x1xf32>
    %504 = vector.broadcast %503 : vector<1x1xf32> to vector<1x256xf32>
    %505 = arith.addf %502, %504 : vector<1x256xf32>
    %506 = arith.negf %505 : vector<1x256xf32>
    %507 = math.exp %506 : vector<1x256xf32>
    %cst_213 = arith.constant 1.000000e+00 : f32
    %508 = vector.broadcast %cst_213 : f32 to vector<1x256xf32>
    %509 = arith.addf %508, %507 : vector<1x256xf32>
    %510 = arith.divf %508, %509 : vector<1x256xf32>
    %511 = tpu.concatenate %369, %370, %371, %372 in 0 : vector<32x256xbf16>, vector<32x256xbf16>, vector<32x256xbf16>, vector<32x256xbf16> -> vector<128x256xbf16>
    %cst_214 = arith.constant dense<0.000000e+00> : vector<1x256xf32>
    %512 = tpu.matmul %476, %511, %cst_214 {dimension_numbers = #tpu.dot_dimension_numbers<[1], [0], [0], [1], [0, 0, 1, 1], [], []>} : vector<1x128xbf16>, vector<128x256xbf16>, vector<1x256xf32> -> vector<1x256xf32>
    %c0_215 = arith.constant 0 : index
    %c0_216 = arith.constant 0 : index
    %513 = vector.load %arg9[%c0_215, %c0_216] : memref<1x1xf32, #tpu.memory_space<vmem>>, vector<1x1xf32>
    %514 = vector.broadcast %513 : vector<1x1xf32> to vector<1x256xf32>
    %515 = arith.addf %512, %514 : vector<1x256xf32>
    %516 = arith.negf %515 : vector<1x256xf32>
    %517 = math.exp %516 : vector<1x256xf32>
    %cst_217 = arith.constant 1.000000e+00 : f32
    %518 = vector.broadcast %cst_217 : f32 to vector<1x256xf32>
    %519 = arith.addf %518, %517 : vector<1x256xf32>
    %520 = arith.divf %518, %519 : vector<1x256xf32>
    %cst_218 = arith.constant 0.000000e+00 : bf16
    %521 = vector.broadcast %cst_218 : bf16 to vector<32x1xbf16>
    %522 = vector.extract_strided_slice %371 {offsets = [0, 1], sizes = [32, 255], strides = [1, 1]} : vector<32x256xbf16> to vector<32x255xbf16>
    %523 = tpu.concatenate %522, %521 in 1 : vector<32x255xbf16>, vector<32x1xbf16> -> vector<32x256xbf16>
    %cst_219 = arith.constant 0.000000e+00 : bf16
    %524 = vector.broadcast %cst_219 : bf16 to vector<32x256xbf16>
    %525 = vector.shape_cast %389 : vector<1x256xi1> to vector<1x256xi1>
    %526 = vector.broadcast %525 : vector<1x256xi1> to vector<32x256xi1>
    %527 = arith.select %526, %523, %524 : vector<32x256xi1>, vector<32x256xbf16>
    %528 = tpu.concatenate %370, %500, %372, %527 in 0 : vector<32x256xbf16>, vector<32x256xbf16>, vector<32x256xbf16>, vector<32x256xbf16> -> vector<128x256xbf16>
    %cst_220 = arith.constant dense<0.000000e+00> : vector<1x256xf32>
    %529 = tpu.matmul %476, %528, %cst_220 {dimension_numbers = #tpu.dot_dimension_numbers<[1], [0], [0], [1], [0, 0, 1, 1], [], []>} : vector<1x128xbf16>, vector<128x256xbf16>, vector<1x256xf32> -> vector<1x256xf32>
    %c0_221 = arith.constant 0 : index
    %c0_222 = arith.constant 0 : index
    %530 = vector.load %arg9[%c0_221, %c0_222] : memref<1x1xf32, #tpu.memory_space<vmem>>, vector<1x1xf32>
    %531 = vector.broadcast %530 : vector<1x1xf32> to vector<1x256xf32>
    %532 = arith.addf %529, %531 : vector<1x256xf32>
    %533 = arith.negf %532 : vector<1x256xf32>
    %534 = math.exp %533 : vector<1x256xf32>
    %cst_223 = arith.constant 1.000000e+00 : f32
    %535 = vector.broadcast %cst_223 : f32 to vector<1x256xf32>
    %536 = arith.addf %535, %534 : vector<1x256xf32>
    %537 = arith.divf %535, %536 : vector<1x256xf32>
    %c2_224 = arith.constant 2 : index
    %c0_225 = arith.constant 0 : index
    %c0_226 = arith.constant 0 : index
    %538 = vector.load %arg8[%c2_224, %c0_225, %c0_226] : memref<4x1x128xbf16, #tpu.memory_space<vmem>>, vector<1x1x128xbf16>
    %539 = vector.shape_cast %538 : vector<1x1x128xbf16> to vector<1x128xbf16>
    %540 = tpu.concatenate %420, %369, %454, %371 in 0 : vector<32x256xbf16>, vector<32x256xbf16>, vector<32x256xbf16>, vector<32x256xbf16> -> vector<128x256xbf16>
    %cst_227 = arith.constant dense<0.000000e+00> : vector<1x256xf32>
    %541 = tpu.matmul %539, %540, %cst_227 {dimension_numbers = #tpu.dot_dimension_numbers<[1], [0], [0], [1], [0, 0, 1, 1], [], []>} : vector<1x128xbf16>, vector<128x256xbf16>, vector<1x256xf32> -> vector<1x256xf32>
    %c0_228 = arith.constant 0 : index
    %c0_229 = arith.constant 0 : index
    %542 = vector.load %arg9[%c0_228, %c0_229] : memref<1x1xf32, #tpu.memory_space<vmem>>, vector<1x1xf32>
    %543 = vector.broadcast %542 : vector<1x1xf32> to vector<1x256xf32>
    %544 = arith.addf %541, %543 : vector<1x256xf32>
    %545 = arith.negf %544 : vector<1x256xf32>
    %546 = math.exp %545 : vector<1x256xf32>
    %cst_230 = arith.constant 1.000000e+00 : f32
    %547 = vector.broadcast %cst_230 : f32 to vector<1x256xf32>
    %548 = arith.addf %547, %546 : vector<1x256xf32>
    %549 = arith.divf %547, %548 : vector<1x256xf32>
    %550 = tpu.concatenate %369, %370, %371, %372 in 0 : vector<32x256xbf16>, vector<32x256xbf16>, vector<32x256xbf16>, vector<32x256xbf16> -> vector<128x256xbf16>
    %cst_231 = arith.constant dense<0.000000e+00> : vector<1x256xf32>
    %551 = tpu.matmul %539, %550, %cst_231 {dimension_numbers = #tpu.dot_dimension_numbers<[1], [0], [0], [1], [0, 0, 1, 1], [], []>} : vector<1x128xbf16>, vector<128x256xbf16>, vector<1x256xf32> -> vector<1x256xf32>
    %c0_232 = arith.constant 0 : index
    %c0_233 = arith.constant 0 : index
    %552 = vector.load %arg9[%c0_232, %c0_233] : memref<1x1xf32, #tpu.memory_space<vmem>>, vector<1x1xf32>
    %553 = vector.broadcast %552 : vector<1x1xf32> to vector<1x256xf32>
    %554 = arith.addf %551, %553 : vector<1x256xf32>
    %555 = arith.negf %554 : vector<1x256xf32>
    %556 = math.exp %555 : vector<1x256xf32>
    %cst_234 = arith.constant 1.000000e+00 : f32
    %557 = vector.broadcast %cst_234 : f32 to vector<1x256xf32>
    %558 = arith.addf %557, %556 : vector<1x256xf32>
    %559 = arith.divf %557, %558 : vector<1x256xf32>
    %cst_235 = arith.constant 0.000000e+00 : bf16
    %560 = vector.broadcast %cst_235 : bf16 to vector<32x15xbf16>
    %561 = vector.extract_strided_slice %370 {offsets = [0, 15], sizes = [32, 241], strides = [1, 1]} : vector<32x256xbf16> to vector<32x241xbf16>
    %562 = tpu.concatenate %561, %560 in 1 : vector<32x241xbf16>, vector<32x15xbf16> -> vector<32x256xbf16>
    %cst_236 = arith.constant 0.000000e+00 : bf16
    %563 = vector.broadcast %cst_236 : bf16 to vector<32x256xbf16>
    %564 = vector.shape_cast %394 : vector<1x256xi1> to vector<1x256xi1>
    %565 = vector.broadcast %564 : vector<1x256xi1> to vector<32x256xi1>
    %566 = arith.select %565, %562, %563 : vector<32x256xi1>, vector<32x256xbf16>
    %cst_237 = arith.constant 0.000000e+00 : bf16
    %567 = vector.broadcast %cst_237 : bf16 to vector<32x16xbf16>
    %568 = vector.extract_strided_slice %369 {offsets = [0, 16], sizes = [32, 240], strides = [1, 1]} : vector<32x256xbf16> to vector<32x240xbf16>
    %569 = tpu.concatenate %568, %567 in 1 : vector<32x240xbf16>, vector<32x16xbf16> -> vector<32x256xbf16>
    %cst_238 = arith.constant 0.000000e+00 : bf16
    %570 = vector.broadcast %cst_238 : bf16 to vector<32x256xbf16>
    %571 = vector.shape_cast %391 : vector<1x256xi1> to vector<1x256xi1>
    %572 = vector.broadcast %571 : vector<1x256xi1> to vector<32x256xi1>
    %573 = arith.select %572, %569, %570 : vector<32x256xi1>, vector<32x256xbf16>
    %574 = tpu.concatenate %454, %371, %566, %573 in 0 : vector<32x256xbf16>, vector<32x256xbf16>, vector<32x256xbf16>, vector<32x256xbf16> -> vector<128x256xbf16>
    %cst_239 = arith.constant dense<0.000000e+00> : vector<1x256xf32>
    %575 = tpu.matmul %539, %574, %cst_239 {dimension_numbers = #tpu.dot_dimension_numbers<[1], [0], [0], [1], [0, 0, 1, 1], [], []>} : vector<1x128xbf16>, vector<128x256xbf16>, vector<1x256xf32> -> vector<1x256xf32>
    %c0_240 = arith.constant 0 : index
    %c0_241 = arith.constant 0 : index
    %576 = vector.load %arg9[%c0_240, %c0_241] : memref<1x1xf32, #tpu.memory_space<vmem>>, vector<1x1xf32>
    %577 = vector.broadcast %576 : vector<1x1xf32> to vector<1x256xf32>
    %578 = arith.addf %575, %577 : vector<1x256xf32>
    %579 = arith.negf %578 : vector<1x256xf32>
    %580 = math.exp %579 : vector<1x256xf32>
    %cst_242 = arith.constant 1.000000e+00 : f32
    %581 = vector.broadcast %cst_242 : f32 to vector<1x256xf32>
    %582 = arith.addf %581, %580 : vector<1x256xf32>
    %583 = arith.divf %581, %582 : vector<1x256xf32>
    %cst_243 = arith.constant 0.000000e+00 : bf16
    %584 = vector.broadcast %cst_243 : bf16 to vector<32x16xbf16>
    %585 = vector.extract_strided_slice %370 {offsets = [0, 16], sizes = [32, 240], strides = [1, 1]} : vector<32x256xbf16> to vector<32x240xbf16>
    %586 = tpu.concatenate %585, %584 in 1 : vector<32x240xbf16>, vector<32x16xbf16> -> vector<32x256xbf16>
    %cst_244 = arith.constant 0.000000e+00 : bf16
    %587 = vector.broadcast %cst_244 : bf16 to vector<32x256xbf16>
    %588 = vector.shape_cast %391 : vector<1x256xi1> to vector<1x256xi1>
    %589 = vector.broadcast %588 : vector<1x256xi1> to vector<32x256xi1>
    %590 = arith.select %589, %586, %587 : vector<32x256xi1>, vector<32x256xbf16>
    %591 = tpu.concatenate %371, %372, %573, %590 in 0 : vector<32x256xbf16>, vector<32x256xbf16>, vector<32x256xbf16>, vector<32x256xbf16> -> vector<128x256xbf16>
    %cst_245 = arith.constant dense<0.000000e+00> : vector<1x256xf32>
    %592 = tpu.matmul %539, %591, %cst_245 {dimension_numbers = #tpu.dot_dimension_numbers<[1], [0], [0], [1], [0, 0, 1, 1], [], []>} : vector<1x128xbf16>, vector<128x256xbf16>, vector<1x256xf32> -> vector<1x256xf32>
    %c0_246 = arith.constant 0 : index
    %c0_247 = arith.constant 0 : index
    %593 = vector.load %arg9[%c0_246, %c0_247] : memref<1x1xf32, #tpu.memory_space<vmem>>, vector<1x1xf32>
    %594 = vector.broadcast %593 : vector<1x1xf32> to vector<1x256xf32>
    %595 = arith.addf %592, %594 : vector<1x256xf32>
    %596 = arith.negf %595 : vector<1x256xf32>
    %597 = math.exp %596 : vector<1x256xf32>
    %cst_248 = arith.constant 1.000000e+00 : f32
    %598 = vector.broadcast %cst_248 : f32 to vector<1x256xf32>
    %599 = arith.addf %598, %597 : vector<1x256xf32>
    %600 = arith.divf %598, %599 : vector<1x256xf32>
    %c3_249 = arith.constant 3 : index
    %c0_250 = arith.constant 0 : index
    %c0_251 = arith.constant 0 : index
    %601 = vector.load %arg8[%c3_249, %c0_250, %c0_251] : memref<4x1x128xbf16, #tpu.memory_space<vmem>>, vector<1x1x128xbf16>
    %602 = vector.shape_cast %601 : vector<1x1x128xbf16> to vector<1x128xbf16>
    %603 = tpu.concatenate %369, %370, %371, %372 in 0 : vector<32x256xbf16>, vector<32x256xbf16>, vector<32x256xbf16>, vector<32x256xbf16> -> vector<128x256xbf16>
    %cst_252 = arith.constant dense<0.000000e+00> : vector<1x256xf32>
    %604 = tpu.matmul %602, %603, %cst_252 {dimension_numbers = #tpu.dot_dimension_numbers<[1], [0], [0], [1], [0, 0, 1, 1], [], []>} : vector<1x128xbf16>, vector<128x256xbf16>, vector<1x256xf32> -> vector<1x256xf32>
    %c0_253 = arith.constant 0 : index
    %c0_254 = arith.constant 0 : index
    %605 = vector.load %arg9[%c0_253, %c0_254] : memref<1x1xf32, #tpu.memory_space<vmem>>, vector<1x1xf32>
    %606 = vector.broadcast %605 : vector<1x1xf32> to vector<1x256xf32>
    %607 = arith.addf %604, %606 : vector<1x256xf32>
    %608 = arith.negf %607 : vector<1x256xf32>
    %609 = math.exp %608 : vector<1x256xf32>
    %cst_255 = arith.constant 1.000000e+00 : f32
    %610 = vector.broadcast %cst_255 : f32 to vector<1x256xf32>
    %611 = arith.addf %610, %609 : vector<1x256xf32>
    %612 = arith.divf %610, %611 : vector<1x256xf32>
    %613 = tpu.concatenate %370, %500, %372, %527 in 0 : vector<32x256xbf16>, vector<32x256xbf16>, vector<32x256xbf16>, vector<32x256xbf16> -> vector<128x256xbf16>
    %cst_256 = arith.constant dense<0.000000e+00> : vector<1x256xf32>
    %614 = tpu.matmul %602, %613, %cst_256 {dimension_numbers = #tpu.dot_dimension_numbers<[1], [0], [0], [1], [0, 0, 1, 1], [], []>} : vector<1x128xbf16>, vector<128x256xbf16>, vector<1x256xf32> -> vector<1x256xf32>
    %c0_257 = arith.constant 0 : index
    %c0_258 = arith.constant 0 : index
    %615 = vector.load %arg9[%c0_257, %c0_258] : memref<1x1xf32, #tpu.memory_space<vmem>>, vector<1x1xf32>
    %616 = vector.broadcast %615 : vector<1x1xf32> to vector<1x256xf32>
    %617 = arith.addf %614, %616 : vector<1x256xf32>
    %618 = arith.negf %617 : vector<1x256xf32>
    %619 = math.exp %618 : vector<1x256xf32>
    %cst_259 = arith.constant 1.000000e+00 : f32
    %620 = vector.broadcast %cst_259 : f32 to vector<1x256xf32>
    %621 = arith.addf %620, %619 : vector<1x256xf32>
    %622 = arith.divf %620, %621 : vector<1x256xf32>
    %623 = tpu.concatenate %371, %372, %573, %590 in 0 : vector<32x256xbf16>, vector<32x256xbf16>, vector<32x256xbf16>, vector<32x256xbf16> -> vector<128x256xbf16>
    %cst_260 = arith.constant dense<0.000000e+00> : vector<1x256xf32>
    %624 = tpu.matmul %602, %623, %cst_260 {dimension_numbers = #tpu.dot_dimension_numbers<[1], [0], [0], [1], [0, 0, 1, 1], [], []>} : vector<1x128xbf16>, vector<128x256xbf16>, vector<1x256xf32> -> vector<1x256xf32>
    %c0_261 = arith.constant 0 : index
    %c0_262 = arith.constant 0 : index
    %625 = vector.load %arg9[%c0_261, %c0_262] : memref<1x1xf32, #tpu.memory_space<vmem>>, vector<1x1xf32>
    %626 = vector.broadcast %625 : vector<1x1xf32> to vector<1x256xf32>
    %627 = arith.addf %624, %626 : vector<1x256xf32>
    %628 = arith.negf %627 : vector<1x256xf32>
    %629 = math.exp %628 : vector<1x256xf32>
    %cst_263 = arith.constant 1.000000e+00 : f32
    %630 = vector.broadcast %cst_263 : f32 to vector<1x256xf32>
    %631 = arith.addf %630, %629 : vector<1x256xf32>
    %632 = arith.divf %630, %631 : vector<1x256xf32>
    %cst_264 = arith.constant 0.000000e+00 : bf16
    %633 = vector.broadcast %cst_264 : bf16 to vector<32x17xbf16>
    %634 = vector.extract_strided_slice %369 {offsets = [0, 17], sizes = [32, 239], strides = [1, 1]} : vector<32x256xbf16> to vector<32x239xbf16>
    %635 = tpu.concatenate %634, %633 in 1 : vector<32x239xbf16>, vector<32x17xbf16> -> vector<32x256xbf16>
    %cst_265 = arith.constant 0.000000e+00 : bf16
    %636 = vector.broadcast %cst_265 : bf16 to vector<32x256xbf16>
    %637 = vector.shape_cast %397 : vector<1x256xi1> to vector<1x256xi1>
    %638 = vector.broadcast %637 : vector<1x256xi1> to vector<32x256xi1>
    %639 = arith.select %638, %635, %636 : vector<32x256xi1>, vector<32x256xbf16>
    %640 = tpu.concatenate %372, %527, %590, %639 in 0 : vector<32x256xbf16>, vector<32x256xbf16>, vector<32x256xbf16>, vector<32x256xbf16> -> vector<128x256xbf16>
    %cst_266 = arith.constant dense<0.000000e+00> : vector<1x256xf32>
    %641 = tpu.matmul %602, %640, %cst_266 {dimension_numbers = #tpu.dot_dimension_numbers<[1], [0], [0], [1], [0, 0, 1, 1], [], []>} : vector<1x128xbf16>, vector<128x256xbf16>, vector<1x256xf32> -> vector<1x256xf32>
    %c0_267 = arith.constant 0 : index
    %c0_268 = arith.constant 0 : index
    %642 = vector.load %arg9[%c0_267, %c0_268] : memref<1x1xf32, #tpu.memory_space<vmem>>, vector<1x1xf32>
    %643 = vector.broadcast %642 : vector<1x1xf32> to vector<1x256xf32>
    %644 = arith.addf %641, %643 : vector<1x256xf32>
    %645 = arith.negf %644 : vector<1x256xf32>
    %646 = math.exp %645 : vector<1x256xf32>
    %cst_269 = arith.constant 1.000000e+00 : f32
    %647 = vector.broadcast %cst_269 : f32 to vector<1x256xf32>
    %648 = arith.addf %647, %646 : vector<1x256xf32>
    %649 = arith.divf %647, %648 : vector<1x256xf32>
    %650 = tpu.concatenate %430, %486, %447, %510, %549, %612, %559, %622, %464, %520, %474, %537, %583, %632, %600, %649 in 0 : vector<1x256xf32>, vector<1x256xf32>, vector<1x256xf32>, vector<1x256xf32>, vector<1x256xf32>, vector<1x256xf32>, vector<1x256xf32>, vector<1x256xf32>, vector<1x256xf32>, vector<1x256xf32>, vector<1x256xf32>, vector<1x256xf32>, vector<1x256xf32>, vector<1x256xf32>, vector<1x256xf32>, vector<1x256xf32> -> vector<16x256xf32>
    %c0_270 = arith.constant 0 : index
    %c0_271 = arith.constant 0 : index
    %c0_272 = arith.constant 0 : index
    %651 = vector.load %arg12[%c0_270, %c0_271, %c0_272] : memref<1x16x256xf32, #tpu.memory_space<vmem>>, vector<1x16x256xf32>
    %652 = vector.shape_cast %651 : vector<1x16x256xf32> to vector<16x256xf32>
    %653 = vector.shape_cast %650 : vector<16x256xf32> to vector<1x16x256xf32>
    tpu.vector_store %arg12[%c0_270, %c0_271, %c0_272], %653 {strides = array<i32>} : memref<1x16x256xf32, #tpu.memory_space<vmem>>, vector<1x16x256xf32>,
    return
  }
  func.func @transform_0(%arg0: i32) -> (i32, i32, i32) {
    %c0_i32 = arith.constant 0 : i32
    %c0_i32_0 = arith.constant 0 : i32
    %c0_i32_1 = arith.constant 0 : i32
    return %arg0, %c0_i32, %c0_i32_0 : i32, i32, i32
  }
  func.func @transform_1(%arg0: i32) -> (i32, i32, i32) {
    %c0_i32 = arith.constant 0 : i32
    %c0_i32_0 = arith.constant 0 : i32
    %c0_i32_1 = arith.constant 0 : i32
    %c0_i32_2 = arith.constant 0 : i32
    return %c0_i32, %c0_i32_0, %c0_i32_1 : i32, i32, i32
  }
  func.func @transform_2(%arg0: i32) -> (i32, i32) {
    %c0_i32 = arith.constant 0 : i32
    %c0_i32_0 = arith.constant 0 : i32
    %c0_i32_1 = arith.constant 0 : i32
    return %c0_i32, %c0_i32_0 : i32, i32
  }
  func.func @transform_3(%arg0: i32) -> (i32, i32, i32) {
    %c0_i32 = arith.constant 0 : i32
    %c0_i32_0 = arith.constant 0 : i32
    %c0_i32_1 = arith.constant 0 : i32
    %c0_i32_2 = arith.constant 0 : i32
    return %c0_i32, %c0_i32_0, %c0_i32_1 : i32, i32, i32
  }
  func.func @transform_4(%arg0: i32) -> (i32, i32) {
    %c0_i32 = arith.constant 0 : i32
    %c0_i32_0 = arith.constant 0 : i32
    %c0_i32_1 = arith.constant 0 : i32
    return %c0_i32, %c0_i32_0 : i32, i32
  }
  func.func @transform_5(%arg0: i32) -> (i32, i32, i32) {
    %c0_i32 = arith.constant 0 : i32
    %c0_i32_0 = arith.constant 0 : i32
    %c0_i32_1 = arith.constant 0 : i32
    %c0_i32_2 = arith.constant 0 : i32
    return %c0_i32, %c0_i32_0, %c0_i32_1 : i32, i32, i32
  }
  func.func @transform_6(%arg0: i32) -> (i32, i32) {
    %c0_i32 = arith.constant 0 : i32
    %c0_i32_0 = arith.constant 0 : i32
    %c0_i32_1 = arith.constant 0 : i32
    return %c0_i32, %c0_i32_0 : i32, i32
  }
  func.func @transform_7(%arg0: i32) -> (i32, i32, i32) {
    %c0_i32 = arith.constant 0 : i32
    %c0_i32_0 = arith.constant 0 : i32
    %c0_i32_1 = arith.constant 0 : i32
    %c0_i32_2 = arith.constant 0 : i32
    return %c0_i32, %c0_i32_0, %c0_i32_1 : i32, i32, i32
  }
  func.func @transform_8(%arg0: i32) -> (i32, i32) {
    %c0_i32 = arith.constant 0 : i32
    %c0_i32_0 = arith.constant 0 : i32
    %c0_i32_1 = arith.constant 0 : i32
    return %c0_i32, %c0_i32_0 : i32, i32
  }
  func.func @transform_9(%arg0: i32) -> (i32, i32) {
    %c0_i32 = arith.constant 0 : i32
    %c0_i32_0 = arith.constant 0 : i32
    %c0_i32_1 = arith.constant 0 : i32
    return %c0_i32, %c0_i32_0 : i32, i32
  }
  func.func @transform_10(%arg0: i32) -> (i32, i32) {
    %c0_i32 = arith.constant 0 : i32
    %c0_i32_0 = arith.constant 0 : i32
    %c0_i32_1 = arith.constant 0 : i32
    return %c0_i32, %c0_i32_0 : i32, i32
  }
  func.func @transform_11(%arg0: i32) -> (i32, i32, i32) {
    %c0_i32 = arith.constant 0 : i32
    %c0_i32_0 = arith.constant 0 : i32
    %c0_i32_1 = arith.constant 0 : i32
    return %arg0, %c0_i32, %c0_i32_0 : i32, i32, i32
  }
}

</mosaic_0001>

<llo_original>
// kernel: decoder_forward.2
$region0: #{decoder_forward.2}
  #allocation0 [shape = 'u32[]', space=smem, size = 0x4, offset = 0x4, fixed_abs, tag = 'smem constant byte address 0x4 - core index']
  #allocation1 [shape = 'u32[144,128]{1,0:T(1,128)}', space=vmem, size = 0x12000, scoped, tag = 'internal scratch']
  %s0 = inlined_call_operand.vmem [shape: f32[8,128], index: 0, kind: input, shape index: {}]
  %s1 = inlined_call_operand.hbm [shape: f32[128,128], index: 1, kind: input, shape index: {}]
  %s2 = inlined_call_operand.vmem [shape: f32[1,128], index: 2, kind: input, shape index: {}]
  %s3 = inlined_call_operand.hbm [shape: f32[128,128], index: 3, kind: input, shape index: {}]
  %s4 = inlined_call_operand.vmem [shape: f32[1,128], index: 4, kind: input, shape index: {}]
  %s5 = inlined_call_operand.hbm [shape: bf16[128,256], index: 5, kind: input, shape index: {}]
  %s6 = inlined_call_operand.vmem [shape: f32[1,256], index: 6, kind: input, shape index: {}]
  %s7 = inlined_call_operand.hbm [shape: bf16[256,1024], index: 7, kind: input, shape index: {}]
  %s8 = inlined_call_operand.vmem [shape: f32[1,1024], index: 8, kind: input, shape index: {}]
  %s9 = inlined_call_operand.vmem [shape: f32[8,128], index: 9, kind: output, shape index: {0}]
  %s10 = inlined_call_operand.vmem [shape: bf16[8,1024], index: 10, kind: output, shape index: {1}]
  %11 = xla_tuple %s9, %s10
  %s12 = sld [smem:[#allocation0]]
  $region70: #{decoder_forward.2} parent=0
    _
  %s14 = ssub.s32 1, %s12
  %s15 = scalar_select 0, %s14, %s12
  $region1: #{decoder_forward.2} parent=0
    #allocation2 [shape = 'u8[65536]{0}', space=vmem, size = 0x10000, scoped, tag = 'input window, operand 1, single buffered']
    #allocation3 [shape = 's32[1]{0}', space=sflag, size = 0x4, scoped, tag = 'scoped memory for decoder_forward.2']
    #allocation4 [shape = 'u8[65536]{0}', space=vmem, size = 0x10000, scoped, tag = 'input window, operand 3, single buffered']
    #allocation5 [shape = 's32[1]{0}', space=sflag, size = 0x4, scoped, tag = 'scoped memory for decoder_forward.2']
    #allocation6 [shape = 'u8[65536]{0}', space=vmem, size = 0x10000, scoped, tag = 'input window, operand 5, single buffered']
    #allocation7 [shape = 'u8[524288]{0}', space=vmem, size = 0x80000, scoped, tag = 'input window, operand 7, single buffered']
    #allocation8 [shape = 's32[1]{0}', space=sflag, size = 0x4, scoped, tag = 'scoped memory for decoder_forward.2']
    %16 = vsyncpa [#allocation3], 0
    %17 = vsyncpa [#allocation5], 0
    %18 = vsyncpa [#allocation8], 0
    // Predicated region
    $region2: #{decoder_forward.2} parent=1 // pred_check
      _
    $region3: #{decoder_forward.2} parent=1 // pred_check_branch
      %20 = sbr.rel (0) target = $region5
    $region4: #{decoder_forward.2} parent=1 // pred_region
      _
    $region5: #{decoder_forward.2} parent=1 // pred_fallthru
      _
    // Predicated region
    $region6: #{decoder_forward.2} parent=1 // pred_check
      _
    $region7: #{decoder_forward.2} parent=1 // pred_check_branch
      %22 = sbr.rel (0) target = $region9
    $region8: #{decoder_forward.2} parent=1 // pred_region
      %s24 = ssub.s32 2048, 2048
      %25 = vsyncadd [#allocation3], %s24
      %s26 = sshll.u32 [#allocation2], 4
      %s27 = int_to_ptr.vmem [resolvable:$true] %s26
      %32 = dma.hbm_to_vmem [thread:$0]  %s1, 2048, %s27, [#allocation3], 128, 128, 8
    $region9: #{decoder_forward.2} parent=1 // pred_fallthru
      _
    // Predicated region
    $region10: #{decoder_forward.2} parent=1 // pred_check
      _
    $region11: #{decoder_forward.2} parent=1 // pred_check_branch
      %34 = sbr.rel (0) target = $region13
    $region12: #{decoder_forward.2} parent=1 // pred_region
      _
    $region13: #{decoder_forward.2} parent=1 // pred_fallthru
      _
    // Predicated region
    $region14: #{decoder_forward.2} parent=1 // pred_check
      _
    $region15: #{decoder_forward.2} parent=1 // pred_check_branch
      %36 = sbr.rel (0) target = $region17
    $region16: #{decoder_forward.2} parent=1 // pred_region
      %s38 = ssub.s32 2048, 2048
      %39 = vsyncadd [#allocation5], %s38
      %s40 = sshll.u32 [#allocation4], 4
      %s41 = int_to_ptr.vmem [resolvable:$true] %s40
      %46 = dma.hbm_to_vmem [thread:$0]  %s3, 2048, %s41, [#allocation5], 128, 128, 8
    $region17: #{decoder_forward.2} parent=1 // pred_fallthru
      _
    // Predicated region
    $region18: #{decoder_forward.2} parent=1 // pred_check
      _
    $region19: #{decoder_forward.2} parent=1 // pred_check_branch
      %48 = sbr.rel (0) target = $region21
    $region20: #{decoder_forward.2} parent=1 // pred_region
      _
    $region21: #{decoder_forward.2} parent=1 // pred_fallthru
      _
    // Predicated region
    $region22: #{decoder_forward.2} parent=1 // pred_check
      _
    $region23: #{decoder_forward.2} parent=1 // pred_check_branch
      %50 = sbr.rel (0) target = $region25
    $region24: #{decoder_forward.2} parent=1 // pred_region
      %s52 = ssub.s32 2048, 2048
      %53 = vsyncadd [#allocation5], %s52
      %s54 = sshll.u32 [#allocation6], 4
      %s55 = int_to_ptr.vmem [resolvable:$true] %s54
      %60 = dma.hbm_to_vmem [thread:$0]  %s5, 2048, %s55, [#allocation5], 128, 128, 8
    $region25: #{decoder_forward.2} parent=1 // pred_fallthru
      _
    // Predicated region
    $region26: #{decoder_forward.2} parent=1 // pred_check
      _
    $region27: #{decoder_forward.2} parent=1 // pred_check_branch
      %62 = sbr.rel (0) target = $region29
    $region28: #{decoder_forward.2} parent=1 // pred_region
      _
    $region29: #{decoder_forward.2} parent=1 // pred_fallthru
      _
    // Predicated region
    $region30: #{decoder_forward.2} parent=1 // pred_check
      _
    $region31: #{decoder_forward.2} parent=1 // pred_check_branch
      %64 = sbr.rel (0) target = $region33
    $region32: #{decoder_forward.2} parent=1 // pred_region
      %s66 = ssub.s32 16384, 16384
      %67 = vsyncadd [#allocation8], %s66
      %s68 = sshll.u32 [#allocation7], 4
      %s69 = int_to_ptr.vmem [resolvable:$true] %s68
      %74 = dma.hbm_to_vmem [thread:$0]  %s7, 16384, %s69, [#allocation8], 512, 512, 32
    $region33: #{decoder_forward.2} parent=1 // pred_fallthru
      _
    // Predicated region
    $region34: #{decoder_forward.2} parent=1 // pred_check
      _
    $region35: #{decoder_forward.2} parent=1 // pred_check_branch
      %76 = sbr.rel (0) target = $region37
    $region36: #{decoder_forward.2} parent=1 // pred_region
      _
    $region37: #{decoder_forward.2} parent=1 // pred_fallthru
      _
    // Predicated region
    $region38: #{decoder_forward.2} parent=1 // pred_check
      _
    $region39: #{decoder_forward.2} parent=1 // pred_check_branch
      %78 = sbr.rel (0) target = $region41
    $region40: #{decoder_forward.2} parent=1 // pred_region
      %79 = dma.done [#allocation3], 2048
    $region41: #{decoder_forward.2} parent=1 // pred_fallthru
      _
    // Predicated region
    $region42: #{decoder_forward.2} parent=1 // pred_check
      _
    $region43: #{decoder_forward.2} parent=1 // pred_check_branch
      %81 = sbr.rel (0) target = $region45
    $region44: #{decoder_forward.2} parent=1 // pred_region
      %82 = dma.done [#allocation5], 2048
    $region45: #{decoder_forward.2} parent=1 // pred_fallthru
      _
    // Predicated region
    $region46: #{decoder_forward.2} parent=1 // pred_check
      _
    $region47: #{decoder_forward.2} parent=1 // pred_check_branch
      %84 = sbr.rel (0) target = $region49
    $region48: #{decoder_forward.2} parent=1 // pred_region
      %85 = dma.done [#allocation5], 2048
    $region49: #{decoder_forward.2} parent=1 // pred_fallthru
      _
    // Predicated region
    $region50: #{decoder_forward.2} parent=1 // pred_check
      _
    $region51: #{decoder_forward.2} parent=1 // pred_check_branch
      %87 = sbr.rel (0) target = $region53
    $region52: #{decoder_forward.2} parent=1 // pred_region
      %88 = dma.done [#allocation8], 16384
    $region53: #{decoder_forward.2} parent=1 // pred_fallthru
      _
    %v90 = vld [vmem:[%s0] sm:$0xff]
    %v91 = vld [vmem:[#allocation2] sm:$0xff]
    %v92 = vld [vmem:[#allocation2 + $0x8] sm:$0xff]
    %v93 = vld [vmem:[#allocation2 + $0x10] sm:$0xff]
    %v94 = vld [vmem:[#allocation2 + $0x18] sm:$0xff]
    %v95 = vld [vmem:[#allocation2 + $0x20] sm:$0xff]
    %v96 = vld [vmem:[#allocation2 + $0x28] sm:$0xff]
    %v97 = vld [vmem:[#allocation2 + $0x30] sm:$0xff]
    %v98 = vld [vmem:[#allocation2 + $0x38] sm:$0xff]
    %v99 = vld [vmem:[#allocation2 + $0x40] sm:$0xff]
    %v100 = vld [vmem:[#allocation2 + $0x48] sm:$0xff]
    %v101 = vld [vmem:[#allocation2 + $0x50] sm:$0xff]
    %v102 = vld [vmem:[#allocation2 + $0x58] sm:$0xff]
    %v103 = vld [vmem:[#allocation2 + $0x60] sm:$0xff]
    %v104 = vld [vmem:[#allocation2 + $0x68] sm:$0xff]
    %v105 = vld [vmem:[#allocation2 + $0x70] sm:$0xff]
    %v106 = vld [vmem:[#allocation2 + $0x78] sm:$0xff]
    %v107 = vld [vmem:[%s2] sm:$0x1]
    %v109 = vlaneseq
    %v110 = vshrl.u32 %v109, 7
    %v111 = vsub.s32 0, %v110
    %v112 = vrot.slane %v107, %v111
    %114 = vmatprep.subr.mxu0 0.0
    %115 = vmatpush1.msra.mxu0 %v106
    %116 = vmatprep.subr.mxu0 0.0
    %117 = vmatpush1.msra.mxu0 %v105
    %118 = vmatprep.subr.mxu0 0.0
    %119 = vmatpush1.msra.mxu0 %v104
    %120 = vmatprep.subr.mxu0 0.0
    %121 = vmatpush1.msra.mxu0 %v103
    %122 = vmatprep.subr.mxu0 0.0
    %123 = vmatpush1.msra.mxu0 %v102
    %124 = vmatprep.subr.mxu0 0.0
    %125 = vmatpush1.msra.mxu0 %v101
    %126 = vmatprep.subr.mxu0 0.0
    %127 = vmatpush1.msra.mxu0 %v100
    %128 = vmatprep.subr.mxu0 0.0
    %129 = vmatpush1.msra.mxu0 %v99
    %130 = vmatprep.subr.mxu0 0.0
    %131 = vmatpush1.msra.mxu0 %v98
    %132 = vmatprep.subr.mxu0 0.0
    %133 = vmatpush1.msra.mxu0 %v97
    %134 = vmatprep.subr.mxu0 0.0
    %135 = vmatpush1.msra.mxu0 %v96
    %136 = vmatprep.subr.mxu0 0.0
    %137 = vmatpush1.msra.mxu0 %v95
    %138 = vmatprep.subr.mxu0 0.0
    %139 = vmatpush1.msra.mxu0 %v94
    %140 = vmatprep.subr.mxu0 0.0
    %141 = vmatpush1.msra.mxu0 %v93
    %142 = vmatprep.subr.mxu0 0.0
    %143 = vmatpush1.msra.mxu0 %v92
    %144 = vmatprep.subr.mxu0 0.0
    %145 = vmatpush1.msra.mxu0 %v91
    %146 = vmatprep.subr.mxu0 0.0
    %147 = vmatpush2.msra.mxu0 0.0
    %148 = vmatprep.subr.mxu0 0.0
    %149 = vmatpush2.msra.mxu0 0.0
    %150 = vmatprep.subr.mxu0 0.0
    %151 = vmatpush2.msra.mxu0 0.0
    %152 = vmatprep.subr.mxu0 0.0
    %153 = vmatpush2.msra.mxu0 0.0
    %154 = vmatprep.subr.mxu0 0.0
    %155 = vmatpush2.msra.mxu0 0.0
    %156 = vmatprep.subr.mxu0 0.0
    %157 = vmatpush2.msra.mxu0 0.0
    %158 = vmatprep.subr.mxu0 0.0
    %159 = vmatpush2.msra.mxu0 0.0
    %160 = vmatprep.subr.mxu0 0.0
    %161 = vmatpush2.msra.mxu0 0.0
    %162 = vmatprep.subr.mxu0 0.0
    %163 = vmatpush2.msra.mxu0 0.0
    %164 = vmatprep.subr.mxu0 0.0
    %165 = vmatpush2.msra.mxu0 0.0
    %166 = vmatprep.subr.mxu0 0.0
    %167 = vmatpush2.msra.mxu0 0.0
    %168 = vmatprep.subr.mxu0 0.0
    %169 = vmatpush2.msra.mxu0 0.0
    %170 = vmatprep.subr.mxu0 0.0
    %171 = vmatpush2.msra.mxu0 0.0
    %172 = vmatprep.subr.mxu0 0.0
    %173 = vmatpush2.msra.mxu0 0.0
    %174 = vmatprep.subr.mxu0 0.0
    %175 = vmatpush2.msra.mxu0 0.0
    %176 = vmatprep.subr.mxu0 0.0
    %177 = vmatpush2.msra.mxu0 0.0
    %178 = vmatprep.mubr.f32.mxu0 0.0
    %179 = vmatmul.mubr.f32.gmra.mxu0 %v90
    %v180 = vpop.f32.mrf.mxu0
    %v181 = vadd.f32 %v112, %v180
    %v182 = vpop.f32.mrf.mxu0
    %183 = vdwg.mxu0
    %v184 = vmax.f32 %v181, 0.0
    %v185 = vld [vmem:[#allocation4] sm:$0xff]
    %v186 = vld [vmem:[#allocation4 + $0x8] sm:$0xff]
    %v187 = vld [vmem:[#allocation4 + $0x10] sm:$0xff]
    %v188 = vld [vmem:[#allocation4 + $0x18] sm:$0xff]
    %v189 = vld [vmem:[#allocation4 + $0x20] sm:$0xff]
    %v190 = vld [vmem:[#allocation4 + $0x28] sm:$0xff]
    %v191 = vld [vmem:[#allocation4 + $0x30] sm:$0xff]
    %v192 = vld [vmem:[#allocation4 + $0x38] sm:$0xff]
    %v193 = vld [vmem:[#allocation4 + $0x40] sm:$0xff]
    %v194 = vld [vmem:[#allocation4 + $0x48] sm:$0xff]
    %v195 = vld [vmem:[#allocation4 + $0x50] sm:$0xff]
    %v196 = vld [vmem:[#allocation4 + $0x58] sm:$0xff]
    %v197 = vld [vmem:[#allocation4 + $0x60] sm:$0xff]
    %v198 = vld [vmem:[#allocation4 + $0x68] sm:$0xff]
    %v199 = vld [vmem:[#allocation4 + $0x70] sm:$0xff]
    %v200 = vld [vmem:[#allocation4 + $0x78] sm:$0xff]
    %v201 = vld [vmem:[%s4] sm:$0x1]
    %v203 = vlaneseq
    %v204 = vshrl.u32 %v203, 7
    %v205 = vsub.s32 0, %v204
    %v206 = vrot.slane %v201, %v205
    %208 = vmatprep.subr.mxu0 0.0
    %209 = vmatpush1.msra.mxu0 %v200
    %210 = vmatprep.subr.mxu0 0.0
    %211 = vmatpush1.msra.mxu0 %v199
    %212 = vmatprep.subr.mxu0 0.0
    %213 = vmatpush1.msra.mxu0 %v198
    %214 = vmatprep.subr.mxu0 0.0
    %215 = vmatpush1.msra.mxu0 %v197
    %216 = vmatprep.subr.mxu0 0.0
    %217 = vmatpush1.msra.mxu0 %v196
    %218 = vmatprep.subr.mxu0 0.0
    %219 = vmatpush1.msra.mxu0 %v195
    %220 = vmatprep.subr.mxu0 0.0
    %221 = vmatpush1.msra.mxu0 %v194
    %222 = vmatprep.subr.mxu0 0.0
    %223 = vmatpush1.msra.mxu0 %v193
    %224 = vmatprep.subr.mxu0 0.0
    %225 = vmatpush1.msra.mxu0 %v192
    %226 = vmatprep.subr.mxu0 0.0
    %227 = vmatpush1.msra.mxu0 %v191
    %228 = vmatprep.subr.mxu0 0.0
    %229 = vmatpush1.msra.mxu0 %v190
    %230 = vmatprep.subr.mxu0 0.0
    %231 = vmatpush1.msra.mxu0 %v189
    %232 = vmatprep.subr.mxu0 0.0
    %233 = vmatpush1.msra.mxu0 %v188
    %234 = vmatprep.subr.mxu0 0.0
    %235 = vmatpush1.msra.mxu0 %v187
    %236 = vmatprep.subr.mxu0 0.0
    %237 = vmatpush1.msra.mxu0 %v186
    %238 = vmatprep.subr.mxu0 0.0
    %239 = vmatpush1.msra.mxu0 %v185
    %240 = vmatprep.subr.mxu0 0.0
    %241 = vmatpush2.msra.mxu0 0.0
    %242 = vmatprep.subr.mxu0 0.0
    %243 = vmatpush2.msra.mxu0 0.0
    %244 = vmatprep.subr.mxu0 0.0
    %245 = vmatpush2.msra.mxu0 0.0
    %246 = vmatprep.subr.mxu0 0.0
    %247 = vmatpush2.msra.mxu0 0.0
    %248 = vmatprep.subr.mxu0 0.0
    %249 = vmatpush2.msra.mxu0 0.0
    %250 = vmatprep.subr.mxu0 0.0
    %251 = vmatpush2.msra.mxu0 0.0
    %252 = vmatprep.subr.mxu0 0.0
    %253 = vmatpush2.msra.mxu0 0.0
    %254 = vmatprep.subr.mxu0 0.0
    %255 = vmatpush2.msra.mxu0 0.0
    %256 = vmatprep.subr.mxu0 0.0
    %257 = vmatpush2.msra.mxu0 0.0
    %258 = vmatprep.subr.mxu0 0.0
    %259 = vmatpush2.msra.mxu0 0.0
    %260 = vmatprep.subr.mxu0 0.0
    %261 = vmatpush2.msra.mxu0 0.0
    %262 = vmatprep.subr.mxu0 0.0
    %263 = vmatpush2.msra.mxu0 0.0
    %264 = vmatprep.subr.mxu0 0.0
    %265 = vmatpush2.msra.mxu0 0.0
    %266 = vmatprep.subr.mxu0 0.0
    %267 = vmatpush2.msra.mxu0 0.0
    %268 = vmatprep.subr.mxu0 0.0
    %269 = vmatpush2.msra.mxu0 0.0
    %270 = vmatprep.subr.mxu0 0.0
    %271 = vmatpush2.msra.mxu0 0.0
    %272 = vmatprep.mubr.f32.mxu0 0.0
    %273 = vmatmul.mubr.f32.gmra.mxu0 %v184
    %v274 = vpop.f32.mrf.mxu0
    %v275 = vadd.f32 %v206, %v274
    %v276 = vpop.f32.mrf.mxu0
    %277 = vdwg.mxu0
    %278 = vst [vmem:[%s9] sm:$0xff] %v275
    %v279 = vpack.c.bf16 %v275, %v275
    %v280 = vld [vmem:[#allocation6] sm:$0xff]
    %v281 = vld [vmem:[#allocation6 + $0x8] sm:$0xff]
    %v282 = vld [vmem:[#allocation6 + $0x10] sm:$0xff]
    %v283 = vld [vmem:[#allocation6 + $0x18] sm:$0xff]
    %v284 = vld [vmem:[#allocation6 + $0x20] sm:$0xff]
    %v285 = vld [vmem:[#allocation6 + $0x28] sm:$0xff]
    %v286 = vld [vmem:[#allocation6 + $0x30] sm:$0xff]
    %v287 = vld [vmem:[#allocation6 + $0x38] sm:$0xff]
    %v288 = vld [vmem:[#allocation6 + $0x40] sm:$0xff]
    %v289 = vld [vmem:[#allocation6 + $0x48] sm:$0xff]
    %v290 = vld [vmem:[#allocation6 + $0x50] sm:$0xff]
    %v291 = vld [vmem:[#allocation6 + $0x58] sm:$0xff]
    %v292 = vld [vmem:[#allocation6 + $0x60] sm:$0xff]
    %v293 = vld [vmem:[#allocation6 + $0x68] sm:$0xff]
    %v294 = vld [vmem:[#allocation6 + $0x70] sm:$0xff]
    %v295 = vld [vmem:[#allocation6 + $0x78] sm:$0xff]
    %v296 = vld [vmem:[%s6] sm:$0x3]
    %v298 = vlaneseq
    %v299 = vshrl.u32 %v298, 7
    %v300 = vsub.s32 0, %v299
    %v301 = vrot.slane %v296, %v300
    %v302 = vlaneseq
    %v303 = vshrl.u32 %v302, 7
    %v304 = vsub.s32 1, %v303
    %v305 = vrot.slane %v296, %v304
    %v324 = vunpack.c.l.b16 %v280
    %v325 = vunpack.c.h.b16 %v280
    %v326 = vunpack.c.l.b16 %v281
    %v327 = vunpack.c.h.b16 %v281
    %v328 = vunpack.c.l.b16 %v282
    %v329 = vunpack.c.h.b16 %v282
    %v330 = vunpack.c.l.b16 %v283
    %v331 = vunpack.c.h.b16 %v283
    %v332 = vunpack.c.l.b16 %v284
    %v333 = vunpack.c.h.b16 %v284
    %v334 = vunpack.c.l.b16 %v285
    %v335 = vunpack.c.h.b16 %v285
    %v336 = vunpack.c.l.b16 %v286
    %v337 = vunpack.c.h.b16 %v286
    %v338 = vunpack.c.l.b16 %v287
    %v339 = vunpack.c.h.b16 %v287
    %v340 = vunpack.c.l.b16 %v288
    %v341 = vunpack.c.h.b16 %v288
    %v342 = vunpack.c.l.b16 %v289
    %v343 = vunpack.c.h.b16 %v289
    %v344 = vunpack.c.l.b16 %v290
    %v345 = vunpack.c.h.b16 %v290
    %v346 = vunpack.c.l.b16 %v291
    %v347 = vunpack.c.h.b16 %v291
    %v348 = vunpack.c.l.b16 %v292
    %v349 = vunpack.c.h.b16 %v292
    %v350 = vunpack.c.l.b16 %v293
    %v351 = vunpack.c.h.b16 %v293
    %v352 = vunpack.c.l.b16 %v294
    %v353 = vunpack.c.h.b16 %v294
    %v354 = vunpack.c.l.b16 %v295
    %v355 = vunpack.c.h.b16 %v295
    %v356 = vpack.c.b16 %v326, %v324
    %v357 = vpack.c.b16 %v327, %v325
    %v358 = vpack.c.b16 %v330, %v328
    %v359 = vpack.c.b16 %v331, %v329
    %v360 = vpack.c.b16 %v334, %v332
    %v361 = vpack.c.b16 %v335, %v333
    %v362 = vpack.c.b16 %v338, %v336
    %v363 = vpack.c.b16 %v339, %v337
    %v364 = vpack.c.b16 %v342, %v340
    %v365 = vpack.c.b16 %v343, %v341
    %v366 = vpack.c.b16 %v346, %v344
    %v367 = vpack.c.b16 %v347, %v345
    %v368 = vpack.c.b16 %v350, %v348
    %v369 = vpack.c.b16 %v351, %v349
    %v370 = vpack.c.b16 %v354, %v352
    %v371 = vpack.c.b16 %v355, %v353
    %388 = vmatprep.subr.bf16.mxu0 %v371
    %389 = vmatpush1.bf16.msra.mxu0 %v370
    %390 = vmatprep.subr.bf16.mxu0 %v369
    %391 = vmatpush1.bf16.msra.mxu0 %v368
    %392 = vmatprep.subr.bf16.mxu0 %v367
    %393 = vmatpush1.bf16.msra.mxu0 %v366
    %394 = vmatprep.subr.bf16.mxu0 %v365
    %395 = vmatpush1.bf16.msra.mxu0 %v364
    %396 = vmatprep.subr.bf16.mxu0 %v363
    %397 = vmatpush1.bf16.msra.mxu0 %v362
    %398 = vmatprep.subr.bf16.mxu0 %v361
    %399 = vmatpush1.bf16.msra.mxu0 %v360
    %400 = vmatprep.subr.bf16.mxu0 %v359
    %401 = vmatpush1.bf16.msra.mxu0 %v358
    %402 = vmatprep.subr.bf16.mxu0 %v357
    %403 = vmatpush1.bf16.msra.mxu0 %v356
    %404 = vmatprep.subr.bf16.mxu0 0
    %405 = vmatpush2.bf16.msra.mxu0 0
    %406 = vmatprep.subr.bf16.mxu0 0
    %407 = vmatpush2.bf16.msra.mxu0 0
    %408 = vmatprep.subr.bf16.mxu0 0
    %409 = vmatpush2.bf16.msra.mxu0 0
    %410 = vmatprep.subr.bf16.mxu0 0
    %411 = vmatpush2.bf16.msra.mxu0 0
    %412 = vmatprep.subr.bf16.mxu0 0
    %413 = vmatpush2.bf16.msra.mxu0 0
    %414 = vmatprep.subr.bf16.mxu0 0
    %415 = vmatpush2.bf16.msra.mxu0 0
    %416 = vmatprep.subr.bf16.mxu0 0
    %417 = vmatpush2.bf16.msra.mxu0 0
    %418 = vmatprep.subr.bf16.mxu0 0
    %419 = vmatpush2.bf16.msra.mxu0 0
    %420 = vmatprep.mubr.bf16.mxu0 0
    %421 = vmatmul.mubr.bf16.gmra.mxu0 %v279
    %v422 = vpop.f32.mrf.mxu0
    %v423 = vadd.f32 %v301, %v422
    %v424 = vpop.f32.mrf.mxu0
    %v425 = vadd.f32 %v305, %v424
    %v426 = vpop.f32.mrf.mxu0
    %v427 = vpop.f32.mrf.mxu0
    %428 = vdwg.mxu0
    %v429 = vmax.f32 %v423, 0.0
    %v430 = vmax.f32 %v425, 0.0
    %v431 = vpack.c.bf16 %v429, %v429
    %v432 = vpack.c.bf16 %v430, %v430
    %v433 = vld [vmem:[#allocation7] sm:$0xff]
    %v434 = vld [vmem:[#allocation7 + $0x8] sm:$0xff]
    %v435 = vld [vmem:[#allocation7 + $0x10] sm:$0xff]
    %v436 = vld [vmem:[#allocation7 + $0x18] sm:$0xff]
    %v437 = vld [vmem:[#allocation7 + $0x20] sm:$0xff]
    %v438 = vld [vmem:[#allocation7 + $0x28] sm:$0xff]
    %v439 = vld [vmem:[#allocation7 + $0x30] sm:$0xff]
    %v440 = vld [vmem:[#allocation7 + $0x38] sm:$0xff]
    %v441 = vld [vmem:[#allocation7 + $0x40] sm:$0xff]
    %v442 = vld [vmem:[#allocation7 + $0x48] sm:$0xff]
    %v443 = vld [vmem:[#allocation7 + $0x50] sm:$0xff]
    %v444 = vld [vmem:[#allocation7 + $0x58] sm:$0xff]
    %v445 = vld [vmem:[#allocation7 + $0x60] sm:$0xff]
    %v446 = vld [vmem:[#allocation7 + $0x68] sm:$0xff]
    %v447 = vld [vmem:[#allocation7 + $0x70] sm:$0xff]
    %v448 = vld [vmem:[#allocation7 + $0x78] sm:$0xff]
    %v449 = vld [vmem:[#allocation7 + $0x80] sm:$0xff]
    %v450 = vld [vmem:[#allocation7 + $0x88] sm:$0xff]
    %v451 = vld [vmem:[#allocation7 + $0x90] sm:$0xff]
    %v452 = vld [vmem:[#allocation7 + $0x98] sm:$0xff]
    %v453 = vld [vmem:[#allocation7 + $0xa0] sm:$0xff]
    %v454 = vld [vmem:[#allocation7 + $0xa8] sm:$0xff]
    %v455 = vld [vmem:[#allocation7 + $0xb0] sm:$0xff]
    %v456 = vld [vmem:[#allocation7 + $0xb8] sm:$0xff]
    %v457 = vld [vmem:[#allocation7 + $0xc0] sm:$0xff]
    %v458 = vld [vmem:[#allocation7 + $0xc8] sm:$0xff]
    %v459 = vld [vmem:[#allocation7 + $0xd0] sm:$0xff]
    %v460 = vld [vmem:[#allocation7 + $0xd8] sm:$0xff]
    %v461 = vld [vmem:[#allocation7 + $0xe0] sm:$0xff]
    %v462 = vld [vmem:[#allocation7 + $0xe8] sm:$0xff]
    %v463 = vld [vmem:[#allocation7 + $0xf0] sm:$0xff]
    %v464 = vld [vmem:[#allocation7 + $0xf8] sm:$0xff]
    %v465 = vld [vmem:[#allocation7 + $0x100] sm:$0xff]
    %v466 = vld [vmem:[#allocation7 + $0x108] sm:$0xff]
    %v467 = vld [vmem:[#allocation7 + $0x110] sm:$0xff]
    %v468 = vld [vmem:[#allocation7 + $0x118] sm:$0xff]
    %v469 = vld [vmem:[#allocation7 + $0x120] sm:$0xff]
    %v470 = vld [vmem:[#allocation7 + $0x128] sm:$0xff]
    %v471 = vld [vmem:[#allocation7 + $0x130] sm:$0xff]
    %v472 = vld [vmem:[#allocation7 + $0x138] sm:$0xff]
    %v473 = vld [vmem:[#allocation7 + $0x140] sm:$0xff]
    %v474 = vld [vmem:[#allocation7 + $0x148] sm:$0xff]
    %v475 = vld [vmem:[#allocation7 + $0x150] sm:$0xff]
    %v476 = vld [vmem:[#allocation7 + $0x158] sm:$0xff]
    %v477 = vld [vmem:[#allocation7 + $0x160] sm:$0xff]
    %v478 = vld [vmem:[#allocation7 + $0x168] sm:$0xff]
    %v479 = vld [vmem:[#allocation7 + $0x170] sm:$0xff]
    %v480 = vld [vmem:[#allocation7 + $0x178] sm:$0xff]
    %v481 = vld [vmem:[#allocation7 + $0x180] sm:$0xff]
    %v482 = vld [vmem:[#allocation7 + $0x188] sm:$0xff]
    %v483 = vld [vmem:[#allocation7 + $0x190] sm:$0xff]
    %v484 = vld [vmem:[#allocation7 + $0x198] sm:$0xff]
    %v485 = vld [vmem:[#allocation7 + $0x1a0] sm:$0xff]
    %v486 = vld [vmem:[#allocation7 + $0x1a8] sm:$0xff]
    %v487 = vld [vmem:[#allocation7 + $0x1b0] sm:$0xff]
    %v488 = vld [vmem:[#allocation7 + $0x1b8] sm:$0xff]
    %v489 = vld [vmem:[#allocation7 + $0x1c0] sm:$0xff]
    %v490 = vld [vmem:[#allocation7 + $0x1c8] sm:$0xff]
    %v491 = vld [vmem:[#allocation7 + $0x1d0] sm:$0xff]
    %v492 = vld [vmem:[#allocation7 + $0x1d8] sm:$0xff]
    %v493 = vld [vmem:[#allocation7 + $0x1e0] sm:$0xff]
    %v494 = vld [vmem:[#allocation7 + $0x1e8] sm:$0xff]
    %v495 = vld [vmem:[#allocation7 + $0x1f0] sm:$0xff]
    %v496 = vld [vmem:[#allocation7 + $0x1f8] sm:$0xff]
    %v497 = vld [vmem:[#allocation7 + $0x200] sm:$0xff]
    %v498 = vld [vmem:[#allocation7 + $0x208] sm:$0xff]
    %v499 = vld [vmem:[#allocation7 + $0x210] sm:$0xff]
    %v500 = vld [vmem:[#allocation7 + $0x218] sm:$0xff]
    %v501 = vld [vmem:[#allocation7 + $0x220] sm:$0xff]
    %v502 = vld [vmem:[#allocation7 + $0x228] sm:$0xff]
    %v503 = vld [vmem:[#allocation7 + $0x230] sm:$0xff]
    %v504 = vld [vmem:[#allocation7 + $0x238] sm:$0xff]
    %v505 = vld [vmem:[#allocation7 + $0x240] sm:$0xff]
    %v506 = vld [vmem:[#allocation7 + $0x248] sm:$0xff]
    %v507 = vld [vmem:[#allocation7 + $0x250] sm:$0xff]
    %v508 = vld [vmem:[#allocation7 + $0x258] sm:$0xff]
    %v509 = vld [vmem:[#allocation7 + $0x260] sm:$0xff]
    %v510 = vld [vmem:[#allocation7 + $0x268] sm:$0xff]
    %v511 = vld [vmem:[#allocation7 + $0x270] sm:$0xff]
    %v512 = vld [vmem:[#allocation7 + $0x278] sm:$0xff]
    %v513 = vld [vmem:[#allocation7 + $0x280] sm:$0xff]
    %v514 = vld [vmem:[#allocation7 + $0x288] sm:$0xff]
    %v515 = vld [vmem:[#allocation7 + $0x290] sm:$0xff]
    %v516 = vld [vmem:[#allocation7 + $0x298] sm:$0xff]
    %v517 = vld [vmem:[#allocation7 + $0x2a0] sm:$0xff]
    %v518 = vld [vmem:[#allocation7 + $0x2a8] sm:$0xff]
    %v519 = vld [vmem:[#allocation7 + $0x2b0] sm:$0xff]
    %v520 = vld [vmem:[#allocation7 + $0x2b8] sm:$0xff]
    %v521 = vld [vmem:[#allocation7 + $0x2c0] sm:$0xff]
    %v522 = vld [vmem:[#allocation7 + $0x2c8] sm:$0xff]
    %v523 = vld [vmem:[#allocation7 + $0x2d0] sm:$0xff]
    %v524 = vld [vmem:[#allocation7 + $0x2d8] sm:$0xff]
    %v525 = vld [vmem:[#allocation7 + $0x2e0] sm:$0xff]
    %v526 = vld [vmem:[#allocation7 + $0x2e8] sm:$0xff]
    %v527 = vld [vmem:[#allocation7 + $0x2f0] sm:$0xff]
    %v528 = vld [vmem:[#allocation7 + $0x2f8] sm:$0xff]
    %v529 = vld [vmem:[#allocation7 + $0x300] sm:$0xff]
    %v530 = vld [vmem:[#allocation7 + $0x308] sm:$0xff]
    %v531 = vld [vmem:[#allocation7 + $0x310] sm:$0xff]
    %v532 = vld [vmem:[#allocation7 + $0x318] sm:$0xff]
    %v533 = vld [vmem:[#allocation7 + $0x320] sm:$0xff]
    %v534 = vld [vmem:[#allocation7 + $0x328] sm:$0xff]
    %v535 = vld [vmem:[#allocation7 + $0x330] sm:$0xff]
    %v536 = vld [vmem:[#allocation7 + $0x338] sm:$0xff]
    %v537 = vld [vmem:[#allocation7 + $0x340] sm:$0xff]
    %v538 = vld [vmem:[#allocation7 + $0x348] sm:$0xff]
    %v539 = vld [vmem:[#allocation7 + $0x350] sm:$0xff]
    %v540 = vld [vmem:[#allocation7 + $0x358] sm:$0xff]
    %v541 = vld [vmem:[#allocation7 + $0x360] sm:$0xff]
    %v542 = vld [vmem:[#allocation7 + $0x368] sm:$0xff]
    %v543 = vld [vmem:[#allocation7 + $0x370] sm:$0xff]
    %v544 = vld [vmem:[#allocation7 + $0x378] sm:$0xff]
    %v545 = vld [vmem:[#allocation7 + $0x380] sm:$0xff]
    %v546 = vld [vmem:[#allocation7 + $0x388] sm:$0xff]
    %v547 = vld [vmem:[#allocation7 + $0x390] sm:$0xff]
    %v548 = vld [vmem:[#allocation7 + $0x398] sm:$0xff]
    %v549 = vld [vmem:[#allocation7 + $0x3a0] sm:$0xff]
    %v550 = vld [vmem:[#allocation7 + $0x3a8] sm:$0xff]
    %v551 = vld [vmem:[#allocation7 + $0x3b0] sm:$0xff]
    %v552 = vld [vmem:[#allocation7 + $0x3b8] sm:$0xff]
    %v553 = vld [vmem:[#allocation7 + $0x3c0] sm:$0xff]
    %v554 = vld [vmem:[#allocation7 + $0x3c8] sm:$0xff]
    %v555 = vld [vmem:[#allocation7 + $0x3d0] sm:$0xff]
    %v556 = vld [vmem:[#allocation7 + $0x3d8] sm:$0xff]
    %v557 = vld [vmem:[#allocation7 + $0x3e0] sm:$0xff]
    %v558 = vld [vmem:[#allocation7 + $0x3e8] sm:$0xff]
    %v559 = vld [vmem:[#allocation7 + $0x3f0] sm:$0xff]
    %v560 = vld [vmem:[#allocation7 + $0x3f8] sm:$0xff]
    %v561 = vld [vmem:[%s8] sm:$0xff]
    %v563 = vlaneseq
    %v564 = vshrl.u32 %v563, 7
    %v565 = vsub.s32 0, %v564
    %v566 = vrot.slane %v561, %v565
    %v567 = vlaneseq
    %v568 = vshrl.u32 %v567, 7
    %v569 = vsub.s32 1, %v568
    %v570 = vrot.slane %v561, %v569
    %v571 = vlaneseq
    %v572 = vshrl.u32 %v571, 7
    %v573 = vsub.s32 2, %v572
    %v574 = vrot.slane %v561, %v573
    %v575 = vlaneseq
    %v576 = vshrl.u32 %v575, 7
    %v577 = vsub.s32 3, %v576
    %v578 = vrot.slane %v561, %v577
    %v579 = vlaneseq
    %v580 = vshrl.u32 %v579, 7
    %v581 = vsub.s32 4, %v580
    %v582 = vrot.slane %v561, %v581
    %v583 = vlaneseq
    %v584 = vshrl.u32 %v583, 7
    %v585 = vsub.s32 5, %v584
    %v586 = vrot.slane %v561, %v585
    %v587 = vlaneseq
    %v588 = vshrl.u32 %v587, 7
    %v589 = vsub.s32 6, %v588
    %v590 = vrot.slane %v561, %v589
    %v591 = vlaneseq
    %v592 = vshrl.u32 %v591, 7
    %v593 = vsub.s32 7, %v592
    %v594 = vrot.slane %v561, %v593
    %v731 = vunpack.c.l.b16 %v433
    %v732 = vunpack.c.h.b16 %v433
    %v733 = vunpack.c.l.b16 %v434
    %v734 = vunpack.c.h.b16 %v434
    %v735 = vunpack.c.l.b16 %v435
    %v736 = vunpack.c.h.b16 %v435
    %v737 = vunpack.c.l.b16 %v436
    %v738 = vunpack.c.h.b16 %v436
    %v739 = vunpack.c.l.b16 %v437
    %v740 = vunpack.c.h.b16 %v437
    %v741 = vunpack.c.l.b16 %v438
    %v742 = vunpack.c.h.b16 %v438
    %v743 = vunpack.c.l.b16 %v439
    %v744 = vunpack.c.h.b16 %v439
    %v745 = vunpack.c.l.b16 %v440
    %v746 = vunpack.c.h.b16 %v440
    %v747 = vunpack.c.l.b16 %v441
    %v748 = vunpack.c.h.b16 %v441
    %v749 = vunpack.c.l.b16 %v442
    %v750 = vunpack.c.h.b16 %v442
    %v751 = vunpack.c.l.b16 %v443
    %v752 = vunpack.c.h.b16 %v443
    %v753 = vunpack.c.l.b16 %v444
    %v754 = vunpack.c.h.b16 %v444
    %v755 = vunpack.c.l.b16 %v445
    %v756 = vunpack.c.h.b16 %v445
    %v757 = vunpack.c.l.b16 %v446
    %v758 = vunpack.c.h.b16 %v446
    %v759 = vunpack.c.l.b16 %v447
    %v760 = vunpack.c.h.b16 %v447
    %v761 = vunpack.c.l.b16 %v448
    %v762 = vunpack.c.h.b16 %v448
    %v763 = vunpack.c.l.b16 %v449
    %v764 = vunpack.c.h.b16 %v449
    %v765 = vunpack.c.l.b16 %v450
    %v766 = vunpack.c.h.b16 %v450
    %v767 = vunpack.c.l.b16 %v451
    %v768 = vunpack.c.h.b16 %v451
    %v769 = vunpack.c.l.b16 %v452
    %v770 = vunpack.c.h.b16 %v452
    %v771 = vunpack.c.l.b16 %v453
    %v772 = vunpack.c.h.b16 %v453
    %v773 = vunpack.c.l.b16 %v454
    %v774 = vunpack.c.h.b16 %v454
    %v775 = vunpack.c.l.b16 %v455
    %v776 = vunpack.c.h.b16 %v455
    %v777 = vunpack.c.l.b16 %v456
    %v778 = vunpack.c.h.b16 %v456
    %v779 = vunpack.c.l.b16 %v457
    %v780 = vunpack.c.h.b16 %v457
    %v781 = vunpack.c.l.b16 %v458
    %v782 = vunpack.c.h.b16 %v458
    %v783 = vunpack.c.l.b16 %v459
    %v784 = vunpack.c.h.b16 %v459
    %v785 = vunpack.c.l.b16 %v460
    %v786 = vunpack.c.h.b16 %v460
    %v787 = vunpack.c.l.b16 %v461
    %v788 = vunpack.c.h.b16 %v461
    %v789 = vunpack.c.l.b16 %v462
    %v790 = vunpack.c.h.b16 %v462
    %v791 = vunpack.c.l.b16 %v463
    %v792 = vunpack.c.h.b16 %v463
    %v793 = vunpack.c.l.b16 %v464
    %v794 = vunpack.c.h.b16 %v464
    %v795 = vunpack.c.l.b16 %v465
    %v796 = vunpack.c.h.b16 %v465
    %v797 = vunpack.c.l.b16 %v466
    %v798 = vunpack.c.h.b16 %v466
    %v799 = vunpack.c.l.b16 %v467
    %v800 = vunpack.c.h.b16 %v467
    %v801 = vunpack.c.l.b16 %v468
    %v802 = vunpack.c.h.b16 %v468
    %v803 = vunpack.c.l.b16 %v469
    %v804 = vunpack.c.h.b16 %v469
    %v805 = vunpack.c.l.b16 %v470
    %v806 = vunpack.c.h.b16 %v470
    %v807 = vunpack.c.l.b16 %v471
    %v808 = vunpack.c.h.b16 %v471
    %v809 = vunpack.c.l.b16 %v472
    %v810 = vunpack.c.h.b16 %v472
    %v811 = vunpack.c.l.b16 %v473
    %v812 = vunpack.c.h.b16 %v473
    %v813 = vunpack.c.l.b16 %v474
    %v814 = vunpack.c.h.b16 %v474
    %v815 = vunpack.c.l.b16 %v475
    %v816 = vunpack.c.h.b16 %v475
    %v817 = vunpack.c.l.b16 %v476
    %v818 = vunpack.c.h.b16 %v476
    %v819 = vunpack.c.l.b16 %v477
    %v820 = vunpack.c.h.b16 %v477
    %v821 = vunpack.c.l.b16 %v478
    %v822 = vunpack.c.h.b16 %v478
    %v823 = vunpack.c.l.b16 %v479
    %v824 = vunpack.c.h.b16 %v479
    %v825 = vunpack.c.l.b16 %v480
    %v826 = vunpack.c.h.b16 %v480
    %v827 = vunpack.c.l.b16 %v481
    %v828 = vunpack.c.h.b16 %v481
    %v829 = vunpack.c.l.b16 %v482
    %v830 = vunpack.c.h.b16 %v482
    %v831 = vunpack.c.l.b16 %v483
    %v832 = vunpack.c.h.b16 %v483
    %v833 = vunpack.c.l.b16 %v484
    %v834 = vunpack.c.h.b16 %v484
    %v835 = vunpack.c.l.b16 %v485
    %v836 = vunpack.c.h.b16 %v485
    %v837 = vunpack.c.l.b16 %v486
    %v838 = vunpack.c.h.b16 %v486
    %v839 = vunpack.c.l.b16 %v487
    %v840 = vunpack.c.h.b16 %v487
    %v841 = vunpack.c.l.b16 %v488
    %v842 = vunpack.c.h.b16 %v488
    %v843 = vunpack.c.l.b16 %v489
    %v844 = vunpack.c.h.b16 %v489
    %v845 = vunpack.c.l.b16 %v490
    %v846 = vunpack.c.h.b16 %v490
    %v847 = vunpack.c.l.b16 %v491
    %v848 = vunpack.c.h.b16 %v491
    %v849 = vunpack.c.l.b16 %v492
    %v850 = vunpack.c.h.b16 %v492
    %v851 = vunpack.c.l.b16 %v493
    %v852 = vunpack.c.h.b16 %v493
    %v853 = vunpack.c.l.b16 %v494
    %v854 = vunpack.c.h.b16 %v494
    %v855 = vunpack.c.l.b16 %v495
    %v856 = vunpack.c.h.b16 %v495
    %v857 = vunpack.c.l.b16 %v496
    %v858 = vunpack.c.h.b16 %v496
    %v859 = vunpack.c.l.b16 %v497
    %v860 = vunpack.c.h.b16 %v497
    %v861 = vunpack.c.l.b16 %v498
    %v862 = vunpack.c.h.b16 %v498
    %v863 = vunpack.c.l.b16 %v499
    %v864 = vunpack.c.h.b16 %v499
    %v865 = vunpack.c.l.b16 %v500
    %v866 = vunpack.c.h.b16 %v500
    %v867 = vunpack.c.l.b16 %v501
    %v868 = vunpack.c.h.b16 %v501
    %v869 = vunpack.c.l.b16 %v502
    %v870 = vunpack.c.h.b16 %v502
    %v871 = vunpack.c.l.b16 %v503
    %v872 = vunpack.c.h.b16 %v503
    %v873 = vunpack.c.l.b16 %v504
    %v874 = vunpack.c.h.b16 %v504
    %v875 = vunpack.c.l.b16 %v505
    %v876 = vunpack.c.h.b16 %v505
    %v877 = vunpack.c.l.b16 %v506
    %v878 = vunpack.c.h.b16 %v506
    %v879 = vunpack.c.l.b16 %v507
    %v880 = vunpack.c.h.b16 %v507
    %v881 = vunpack.c.l.b16 %v508
    %v882 = vunpack.c.h.b16 %v508
    %v883 = vunpack.c.l.b16 %v509
    %v884 = vunpack.c.h.b16 %v509
    %v885 = vunpack.c.l.b16 %v510
    %v886 = vunpack.c.h.b16 %v510
    %v887 = vunpack.c.l.b16 %v511
    %v888 = vunpack.c.h.b16 %v511
    %v889 = vunpack.c.l.b16 %v512
    %v890 = vunpack.c.h.b16 %v512
    %v891 = vunpack.c.l.b16 %v513
    %v892 = vunpack.c.h.b16 %v513
    %v893 = vunpack.c.l.b16 %v514
    %v894 = vunpack.c.h.b16 %v514
    %v895 = vunpack.c.l.b16 %v515
    %v896 = vunpack.c.h.b16 %v515
    %v897 = vunpack.c.l.b16 %v516
    %v898 = vunpack.c.h.b16 %v516
    %v899 = vunpack.c.l.b16 %v517
    %v900 = vunpack.c.h.b16 %v517
    %v901 = vunpack.c.l.b16 %v518
    %v902 = vunpack.c.h.b16 %v518
    %v903 = vunpack.c.l.b16 %v519
    %v904 = vunpack.c.h.b16 %v519
    %v905 = vunpack.c.l.b16 %v520
    %v906 = vunpack.c.h.b16 %v520
    %v907 = vunpack.c.l.b16 %v521
    %v908 = vunpack.c.h.b16 %v521
    %v909 = vunpack.c.l.b16 %v522
    %v910 = vunpack.c.h.b16 %v522
    %v911 = vunpack.c.l.b16 %v523
    %v912 = vunpack.c.h.b16 %v523
    %v913 = vunpack.c.l.b16 %v524
    %v914 = vunpack.c.h.b16 %v524
    %v915 = vunpack.c.l.b16 %v525
    %v916 = vunpack.c.h.b16 %v525
    %v917 = vunpack.c.l.b16 %v526
    %v918 = vunpack.c.h.b16 %v526
    %v919 = vunpack.c.l.b16 %v527
    %v920 = vunpack.c.h.b16 %v527
    %v921 = vunpack.c.l.b16 %v528
    %v922 = vunpack.c.h.b16 %v528
    %v923 = vunpack.c.l.b16 %v529
    %v924 = vunpack.c.h.b16 %v529
    %v925 = vunpack.c.l.b16 %v530
    %v926 = vunpack.c.h.b16 %v530
    %v927 = vunpack.c.l.b16 %v531
    %v928 = vunpack.c.h.b16 %v531
    %v929 = vunpack.c.l.b16 %v532
    %v930 = vunpack.c.h.b16 %v532
    %v931 = vunpack.c.l.b16 %v533
    %v932 = vunpack.c.h.b16 %v533
    %v933 = vunpack.c.l.b16 %v534
    %v934 = vunpack.c.h.b16 %v534
    %v935 = vunpack.c.l.b16 %v535
    %v936 = vunpack.c.h.b16 %v535
    %v937 = vunpack.c.l.b16 %v536
    %v938 = vunpack.c.h.b16 %v536
    %v939 = vunpack.c.l.b16 %v537
    %v940 = vunpack.c.h.b16 %v537
    %v941 = vunpack.c.l.b16 %v538
    %v942 = vunpack.c.h.b16 %v538
    %v943 = vunpack.c.l.b16 %v539
    %v944 = vunpack.c.h.b16 %v539
    %v945 = vunpack.c.l.b16 %v540
    %v946 = vunpack.c.h.b16 %v540
    %v947 = vunpack.c.l.b16 %v541
    %v948 = vunpack.c.h.b16 %v541
    %v949 = vunpack.c.l.b16 %v542
    %v950 = vunpack.c.h.b16 %v542
    %v951 = vunpack.c.l.b16 %v543
    %v952 = vunpack.c.h.b16 %v543
    %v953 = vunpack.c.l.b16 %v544
    %v954 = vunpack.c.h.b16 %v544
    %v955 = vunpack.c.l.b16 %v545
    %v956 = vunpack.c.h.b16 %v545
    %v957 = vunpack.c.l.b16 %v546
    %v958 = vunpack.c.h.b16 %v546
    %v959 = vunpack.c.l.b16 %v547
    %v960 = vunpack.c.h.b16 %v547
    %v961 = vunpack.c.l.b16 %v548
    %v962 = vunpack.c.h.b16 %v548
    %v963 = vunpack.c.l.b16 %v549
    %v964 = vunpack.c.h.b16 %v549
    %v965 = vunpack.c.l.b16 %v550
    %v966 = vunpack.c.h.b16 %v550
    %v967 = vunpack.c.l.b16 %v551
    %v968 = vunpack.c.h.b16 %v551
    %v969 = vunpack.c.l.b16 %v552
    %v970 = vunpack.c.h.b16 %v552
    %v971 = vunpack.c.l.b16 %v553
    %v972 = vunpack.c.h.b16 %v553
    %v973 = vunpack.c.l.b16 %v554
    %v974 = vunpack.c.h.b16 %v554
    %v975 = vunpack.c.l.b16 %v555
    %v976 = vunpack.c.h.b16 %v555
    %v977 = vunpack.c.l.b16 %v556
    %v978 = vunpack.c.h.b16 %v556
    %v979 = vunpack.c.l.b16 %v557
    %v980 = vunpack.c.h.b16 %v557
    %v981 = vunpack.c.l.b16 %v558
    %v982 = vunpack.c.h.b16 %v558
    %v983 = vunpack.c.l.b16 %v559
    %v984 = vunpack.c.h.b16 %v559
    %v985 = vunpack.c.l.b16 %v560
    %v986 = vunpack.c.h.b16 %v560
    %v987 = vpack.c.b16 %v739, %v731
    %v988 = vpack.c.b16 %v740, %v732
    %v989 = vpack.c.b16 %v741, %v733
    %v990 = vpack.c.b16 %v742, %v734
    %v991 = vpack.c.b16 %v743, %v735
    %v992 = vpack.c.b16 %v744, %v736
    %v993 = vpack.c.b16 %v745, %v737
    %v994 = vpack.c.b16 %v746, %v738
    %v995 = vpack.c.b16 %v755, %v747
    %v996 = vpack.c.b16 %v756, %v748
    %v997 = vpack.c.b16 %v757, %v749
    %v998 = vpack.c.b16 %v758, %v750
    %v999 = vpack.c.b16 %v759, %v751
    %v1000 = vpack.c.b16 %v760, %v752
    %v1001 = vpack.c.b16 %v761, %v753
    %v1002 = vpack.c.b16 %v762, %v754
    %v1003 = vpack.c.b16 %v771, %v763
    %v1004 = vpack.c.b16 %v772, %v764
    %v1005 = vpack.c.b16 %v773, %v765
    %v1006 = vpack.c.b16 %v774, %v766
    %v1007 = vpack.c.b16 %v775, %v767
    %v1008 = vpack.c.b16 %v776, %v768
    %v1009 = vpack.c.b16 %v777, %v769
    %v1010 = vpack.c.b16 %v778, %v770
    %v1011 = vpack.c.b16 %v787, %v779
    %v1012 = vpack.c.b16 %v788, %v780
    %v1013 = vpack.c.b16 %v789, %v781
    %v1014 = vpack.c.b16 %v790, %v782
    %v1015 = vpack.c.b16 %v791, %v783
    %v1016 = vpack.c.b16 %v792, %v784
    %v1017 = vpack.c.b16 %v793, %v785
    %v1018 = vpack.c.b16 %v794, %v786
    %v1019 = vpack.c.b16 %v803, %v795
    %v1020 = vpack.c.b16 %v804, %v796
    %v1021 = vpack.c.b16 %v805, %v797
    %v1022 = vpack.c.b16 %v806, %v798
    %v1023 = vpack.c.b16 %v807, %v799
    %v1024 = vpack.c.b16 %v808, %v800
    %v1025 = vpack.c.b16 %v809, %v801
    %v1026 = vpack.c.b16 %v810, %v802
    %v1027 = vpack.c.b16 %v819, %v811
    %v1028 = vpack.c.b16 %v820, %v812
    %v1029 = vpack.c.b16 %v821, %v813
    %v1030 = vpack.c.b16 %v822, %v814
    %v1031 = vpack.c.b16 %v823, %v815
    %v1032 = vpack.c.b16 %v824, %v816
    %v1033 = vpack.c.b16 %v825, %v817
    %v1034 = vpack.c.b16 %v826, %v818
    %v1035 = vpack.c.b16 %v835, %v827
    %v1036 = vpack.c.b16 %v836, %v828
    %v1037 = vpack.c.b16 %v837, %v829
    %v1038 = vpack.c.b16 %v838, %v830
    %v1039 = vpack.c.b16 %v839, %v831
    %v1040 = vpack.c.b16 %v840, %v832
    %v1041 = vpack.c.b16 %v841, %v833
    %v1042 = vpack.c.b16 %v842, %v834
    %v1043 = vpack.c.b16 %v851, %v843
    %v1044 = vpack.c.b16 %v852, %v844
    %v1045 = vpack.c.b16 %v853, %v845
    %v1046 = vpack.c.b16 %v854, %v846
    %v1047 = vpack.c.b16 %v855, %v847
    %v1048 = vpack.c.b16 %v856, %v848
    %v1049 = vpack.c.b16 %v857, %v849
    %v1050 = vpack.c.b16 %v858, %v850
    %v1051 = vpack.c.b16 %v867, %v859
    %v1052 = vpack.c.b16 %v868, %v860
    %v1053 = vpack.c.b16 %v869, %v861
    %v1054 = vpack.c.b16 %v870, %v862
    %v1055 = vpack.c.b16 %v871, %v863
    %v1056 = vpack.c.b16 %v872, %v864
    %v1057 = vpack.c.b16 %v873, %v865
    %v1058 = vpack.c.b16 %v874, %v866
    %v1059 = vpack.c.b16 %v883, %v875
    %v1060 = vpack.c.b16 %v884, %v876
    %v1061 = vpack.c.b16 %v885, %v877
    %v1062 = vpack.c.b16 %v886, %v878
    %v1063 = vpack.c.b16 %v887, %v879
    %v1064 = vpack.c.b16 %v888, %v880
    %v1065 = vpack.c.b16 %v889, %v881
    %v1066 = vpack.c.b16 %v890, %v882
    %v1067 = vpack.c.b16 %v899, %v891
    %v1068 = vpack.c.b16 %v900, %v892
    %v1069 = vpack.c.b16 %v901, %v893
    %v1070 = vpack.c.b16 %v902, %v894
    %v1071 = vpack.c.b16 %v903, %v895
    %v1072 = vpack.c.b16 %v904, %v896
    %v1073 = vpack.c.b16 %v905, %v897
    %v1074 = vpack.c.b16 %v906, %v898
    %v1075 = vpack.c.b16 %v915, %v907
    %v1076 = vpack.c.b16 %v916, %v908
    %v1077 = vpack.c.b16 %v917, %v909
    %v1078 = vpack.c.b16 %v918, %v910
    %v1079 = vpack.c.b16 %v919, %v911
    %v1080 = vpack.c.b16 %v920, %v912
    %v1081 = vpack.c.b16 %v921, %v913
    %v1082 = vpack.c.b16 %v922, %v914
    %v1083 = vpack.c.b16 %v931, %v923
    %v1084 = vpack.c.b16 %v932, %v924
    %v1085 = vpack.c.b16 %v933, %v925
    %v1086 = vpack.c.b16 %v934, %v926
    %v1087 = vpack.c.b16 %v935, %v927
    %v1088 = vpack.c.b16 %v936, %v928
    %v1089 = vpack.c.b16 %v937, %v929
    %v1090 = vpack.c.b16 %v938, %v930
    %v1091 = vpack.c.b16 %v947, %v939
    %v1092 = vpack.c.b16 %v948, %v940
    %v1093 = vpack.c.b16 %v949, %v941
    %v1094 = vpack.c.b16 %v950, %v942
    %v1095 = vpack.c.b16 %v951, %v943
    %v1096 = vpack.c.b16 %v952, %v944
    %v1097 = vpack.c.b16 %v953, %v945
    %v1098 = vpack.c.b16 %v954, %v946
    %v1099 = vpack.c.b16 %v963, %v955
    %v1100 = vpack.c.b16 %v964, %v956
    %v1101 = vpack.c.b16 %v965, %v957
    %v1102 = vpack.c.b16 %v966, %v958
    %v1103 = vpack.c.b16 %v967, %v959
    %v1104 = vpack.c.b16 %v968, %v960
    %v1105 = vpack.c.b16 %v969, %v961
    %v1106 = vpack.c.b16 %v970, %v962
    %v1107 = vpack.c.b16 %v979, %v971
    %v1108 = vpack.c.b16 %v980, %v972
    %v1109 = vpack.c.b16 %v981, %v973
    %v1110 = vpack.c.b16 %v982, %v974
    %v1111 = vpack.c.b16 %v983, %v975
    %v1112 = vpack.c.b16 %v984, %v976
    %v1113 = vpack.c.b16 %v985, %v977
    %v1114 = vpack.c.b16 %v986, %v978
    %1243 = vmatprep.subr.bf16.mxu0 %v1044
    %1244 = vmatpush1.bf16.msra.mxu0 %v1043
    %1245 = vmatprep.subr.bf16.mxu0 %v1036
    %1246 = vmatpush1.bf16.msra.mxu0 %v1035
    %1247 = vmatprep.subr.bf16.mxu0 %v1028
    %1248 = vmatpush1.bf16.msra.mxu0 %v1027
    %1249 = vmatprep.subr.bf16.mxu0 %v1020
    %1250 = vmatpush1.bf16.msra.mxu0 %v1019
    %1251 = vmatprep.subr.bf16.mxu0 %v1012
    %1252 = vmatpush1.bf16.msra.mxu0 %v1011
    %1253 = vmatprep.subr.bf16.mxu0 %v1004
    %1254 = vmatpush1.bf16.msra.mxu0 %v1003
    %1255 = vmatprep.subr.bf16.mxu0 %v996
    %1256 = vmatpush1.bf16.msra.mxu0 %v995
    %1257 = vmatprep.subr.bf16.mxu0 %v988
    %1258 = vmatpush1.bf16.msra.mxu0 %v987
    %1259 = vmatprep.subr.bf16.mxu0 %v1108
    %1260 = vmatpush2.bf16.msra.mxu0 %v1107
    %1261 = vmatprep.subr.bf16.mxu0 %v1100
    %1262 = vmatpush2.bf16.msra.mxu0 %v1099
    %1263 = vmatprep.subr.bf16.mxu0 %v1092
    %1264 = vmatpush2.bf16.msra.mxu0 %v1091
    %1265 = vmatprep.subr.bf16.mxu0 %v1084
    %1266 = vmatpush2.bf16.msra.mxu0 %v1083
    %1267 = vmatprep.subr.bf16.mxu0 %v1076
    %1268 = vmatpush2.bf16.msra.mxu0 %v1075
    %1269 = vmatprep.subr.bf16.mxu0 %v1068
    %1270 = vmatpush2.bf16.msra.mxu0 %v1067
    %1271 = vmatprep.subr.bf16.mxu0 %v1060
    %1272 = vmatpush2.bf16.msra.mxu0 %v1059
    %1273 = vmatprep.subr.bf16.mxu0 %v1052
    %1274 = vmatpush2.bf16.msra.mxu0 %v1051
    %1275 = vmatprep.mubr.bf16.mxu0 %v432
    %1276 = vmatmul.mubr.bf16.gmra.mxu0 %v431
    %v1277 = vpop.f32.mrf.mxu0
    %v1278 = vadd.f32 %v566, %v1277
    %v1279 = vpop.f32.mrf.mxu0
    %v1280 = vadd.f32 %v570, %v1279
    %v1281 = vpop.f32.mrf.mxu0
    %v1282 = vpop.f32.mrf.mxu0
    %1283 = vdwg.mxu0
    %1284 = vmatprep.subr.bf16.mxu0 %v1046
    %1285 = vmatpush1.bf16.msra.mxu0 %v1045
    %1286 = vmatprep.subr.bf16.mxu0 %v1038
    %1287 = vmatpush1.bf16.msra.mxu0 %v1037
    %1288 = vmatprep.subr.bf16.mxu0 %v1030
    %1289 = vmatpush1.bf16.msra.mxu0 %v1029
    %1290 = vmatprep.subr.bf16.mxu0 %v1022
    %1291 = vmatpush1.bf16.msra.mxu0 %v1021
    %1292 = vmatprep.subr.bf16.mxu0 %v1014
    %1293 = vmatpush1.bf16.msra.mxu0 %v1013
    %1294 = vmatprep.subr.bf16.mxu0 %v1006
    %1295 = vmatpush1.bf16.msra.mxu0 %v1005
    %1296 = vmatprep.subr.bf16.mxu0 %v998
    %1297 = vmatpush1.bf16.msra.mxu0 %v997
    %1298 = vmatprep.subr.bf16.mxu0 %v990
    %1299 = vmatpush1.bf16.msra.mxu0 %v989
    %1300 = vmatprep.subr.bf16.mxu0 %v1110
    %1301 = vmatpush2.bf16.msra.mxu0 %v1109
    %1302 = vmatprep.subr.bf16.mxu0 %v1102
    %1303 = vmatpush2.bf16.msra.mxu0 %v1101
    %1304 = vmatprep.subr.bf16.mxu0 %v1094
    %1305 = vmatpush2.bf16.msra.mxu0 %v1093
    %1306 = vmatprep.subr.bf16.mxu0 %v1086
    %1307 = vmatpush2.bf16.msra.mxu0 %v1085
    %1308 = vmatprep.subr.bf16.mxu0 %v1078
    %1309 = vmatpush2.bf16.msra.mxu0 %v1077
    %1310 = vmatprep.subr.bf16.mxu0 %v1070
    %1311 = vmatpush2.bf16.msra.mxu0 %v1069
    %1312 = vmatprep.subr.bf16.mxu0 %v1062
    %1313 = vmatpush2.bf16.msra.mxu0 %v1061
    %1314 = vmatprep.subr.bf16.mxu0 %v1054
    %1315 = vmatpush2.bf16.msra.mxu0 %v1053
    %1316 = vmatprep.mubr.bf16.mxu0 %v432
    %1317 = vmatmul.mubr.bf16.gmra.mxu0 %v431
    %v1318 = vpop.f32.mrf.mxu0
    %v1319 = vadd.f32 %v574, %v1318
    %v1320 = vpop.f32.mrf.mxu0
    %v1321 = vadd.f32 %v578, %v1320
    %v1322 = vpop.f32.mrf.mxu0
    %v1323 = vpop.f32.mrf.mxu0
    %1324 = vdwg.mxu0
    %1325 = vmatprep.subr.bf16.mxu0 %v1048
    %1326 = vmatpush1.bf16.msra.mxu0 %v1047
    %1327 = vmatprep.subr.bf16.mxu0 %v1040
    %1328 = vmatpush1.bf16.msra.mxu0 %v1039
    %1329 = vmatprep.subr.bf16.mxu0 %v1032
    %1330 = vmatpush1.bf16.msra.mxu0 %v1031
    %1331 = vmatprep.subr.bf16.mxu0 %v1024
    %1332 = vmatpush1.bf16.msra.mxu0 %v1023
    %1333 = vmatprep.subr.bf16.mxu0 %v1016
    %1334 = vmatpush1.bf16.msra.mxu0 %v1015
    %1335 = vmatprep.subr.bf16.mxu0 %v1008
    %1336 = vmatpush1.bf16.msra.mxu0 %v1007
    %1337 = vmatprep.subr.bf16.mxu0 %v1000
    %1338 = vmatpush1.bf16.msra.mxu0 %v999
    %1339 = vmatprep.subr.bf16.mxu0 %v992
    %1340 = vmatpush1.bf16.msra.mxu0 %v991
    %1341 = vmatprep.subr.bf16.mxu0 %v1112
    %1342 = vmatpush2.bf16.msra.mxu0 %v1111
    %1343 = vmatprep.subr.bf16.mxu0 %v1104
    %1344 = vmatpush2.bf16.msra.mxu0 %v1103
    %1345 = vmatprep.subr.bf16.mxu0 %v1096
    %1346 = vmatpush2.bf16.msra.mxu0 %v1095
    %1347 = vmatprep.subr.bf16.mxu0 %v1088
    %1348 = vmatpush2.bf16.msra.mxu0 %v1087
    %1349 = vmatprep.subr.bf16.mxu0 %v1080
    %1350 = vmatpush2.bf16.msra.mxu0 %v1079
    %1351 = vmatprep.subr.bf16.mxu0 %v1072
    %1352 = vmatpush2.bf16.msra.mxu0 %v1071
    %1353 = vmatprep.subr.bf16.mxu0 %v1064
    %1354 = vmatpush2.bf16.msra.mxu0 %v1063
    %1355 = vmatprep.subr.bf16.mxu0 %v1056
    %1356 = vmatpush2.bf16.msra.mxu0 %v1055
    %1357 = vmatprep.mubr.bf16.mxu0 %v432
    %1358 = vmatmul.mubr.bf16.gmra.mxu0 %v431
    %v1359 = vpop.f32.mrf.mxu0
    %v1360 = vadd.f32 %v582, %v1359
    %v1361 = vpop.f32.mrf.mxu0
    %v1362 = vadd.f32 %v586, %v1361
    %v1363 = vpop.f32.mrf.mxu0
    %v1364 = vpop.f32.mrf.mxu0
    %1365 = vdwg.mxu0
    %1366 = vmatprep.subr.bf16.mxu0 %v1050
    %1367 = vmatpush1.bf16.msra.mxu0 %v1049
    %1368 = vmatprep.subr.bf16.mxu0 %v1042
    %1369 = vmatpush1.bf16.msra.mxu0 %v1041
    %1370 = vmatprep.subr.bf16.mxu0 %v1034
    %1371 = vmatpush1.bf16.msra.mxu0 %v1033
    %1372 = vmatprep.subr.bf16.mxu0 %v1026
    %1373 = vmatpush1.bf16.msra.mxu0 %v1025
    %1374 = vmatprep.subr.bf16.mxu0 %v1018
    %1375 = vmatpush1.bf16.msra.mxu0 %v1017
    %1376 = vmatprep.subr.bf16.mxu0 %v1010
    %1377 = vmatpush1.bf16.msra.mxu0 %v1009
    %1378 = vmatprep.subr.bf16.mxu0 %v1002
    %1379 = vmatpush1.bf16.msra.mxu0 %v1001
    %1380 = vmatprep.subr.bf16.mxu0 %v994
    %1381 = vmatpush1.bf16.msra.mxu0 %v993
    %1382 = vmatprep.subr.bf16.mxu0 %v1114
    %1383 = vmatpush2.bf16.msra.mxu0 %v1113
    %1384 = vmatprep.subr.bf16.mxu0 %v1106
    %1385 = vmatpush2.bf16.msra.mxu0 %v1105
    %1386 = vmatprep.subr.bf16.mxu0 %v1098
    %1387 = vmatpush2.bf16.msra.mxu0 %v1097
    %1388 = vmatprep.subr.bf16.mxu0 %v1090
    %1389 = vmatpush2.bf16.msra.mxu0 %v1089
    %1390 = vmatprep.subr.bf16.mxu0 %v1082
    %1391 = vmatpush2.bf16.msra.mxu0 %v1081
    %1392 = vmatprep.subr.bf16.mxu0 %v1074
    %1393 = vmatpush2.bf16.msra.mxu0 %v1073
    %1394 = vmatprep.subr.bf16.mxu0 %v1066
    %1395 = vmatpush2.bf16.msra.mxu0 %v1065
    %1396 = vmatprep.subr.bf16.mxu0 %v1058
    %1397 = vmatpush2.bf16.msra.mxu0 %v1057
    %1398 = vmatprep.mubr.bf16.mxu0 %v432
    %1399 = vmatmul.mubr.bf16.gmra.mxu0 %v431
    %v1400 = vpop.f32.mrf.mxu0
    %v1401 = vadd.f32 %v590, %v1400
    %v1402 = vpop.f32.mrf.mxu0
    %v1403 = vadd.f32 %v594, %v1402
    %v1404 = vpop.f32.mrf.mxu0
    %v1405 = vpop.f32.mrf.mxu0
    %1406 = vdwg.mxu0
    %v1407 = vmax.f32 %v1278, 0.0
    %v1408 = vmax.f32 %v1280, 0.0
    %v1409 = vmax.f32 %v1319, 0.0
    %v1410 = vmax.f32 %v1321, 0.0
    %v1411 = vmax.f32 %v1360, 0.0
    %v1412 = vmax.f32 %v1362, 0.0
    %v1413 = vmax.f32 %v1401, 0.0
    %v1414 = vmax.f32 %v1403, 0.0
    %v1415 = vpack.c.bf16 %v1407, %v1407
    %v1416 = vpack.c.bf16 %v1408, %v1408
    %v1417 = vpack.c.bf16 %v1409, %v1409
    %v1418 = vpack.c.bf16 %v1410, %v1410
    %v1419 = vpack.c.bf16 %v1411, %v1411
    %v1420 = vpack.c.bf16 %v1412, %v1412
    %v1421 = vpack.c.bf16 %v1413, %v1413
    %v1422 = vpack.c.bf16 %v1414, %v1414
    %v1431 = vunpack.c.l.b16 %v1415
    %v1432 = vunpack.c.l.b16 %v1416
    %v1433 = vunpack.c.l.b16 %v1417
    %v1434 = vunpack.c.l.b16 %v1418
    %v1435 = vunpack.c.l.b16 %v1419
    %v1436 = vunpack.c.l.b16 %v1420
    %v1437 = vunpack.c.l.b16 %v1421
    %v1438 = vunpack.c.l.b16 %v1422
    %v1439 = vpack.c.b16 %v1432, %v1431
    %v1440 = vpack.c.b16 %v1434, %v1433
    %v1441 = vpack.c.b16 %v1436, %v1435
    %v1442 = vpack.c.b16 %v1438, %v1437
    %1447 = vst [vmem:[%s10] sm:$0xff] %v1439
    %1448 = vst [vmem:[%s10 + $0x8] sm:$0xff] %v1440
    %1449 = vst [vmem:[%s10 + $0x10] sm:$0xff] %v1441
    %1450 = vst [vmem:[%s10 + $0x18] sm:$0xff] %v1442
    // Predicated region
    $region54: #{decoder_forward.2} parent=1 // pred_check
      _
    $region55: #{decoder_forward.2} parent=1 // pred_check_branch
      %1452 = sbr.rel (0) target = $region57
    $region56: #{decoder_forward.2} parent=1 // pred_region
      _
    $region57: #{decoder_forward.2} parent=1 // pred_fallthru
      _
    // Predicated region
    $region58: #{decoder_forward.2} parent=1 // pred_check
      _
    $region59: #{decoder_forward.2} parent=1 // pred_check_branch
      %1454 = sbr.rel (0) target = $region61
    $region60: #{decoder_forward.2} parent=1 // pred_region
      _
    $region61: #{decoder_forward.2} parent=1 // pred_fallthru
      _
    // Predicated region
    $region62: #{decoder_forward.2} parent=1 // pred_check
      _
    $region63: #{decoder_forward.2} parent=1 // pred_check_branch
      %1456 = sbr.rel (0) target = $region65
    $region64: #{decoder_forward.2} parent=1 // pred_region
      _
    $region65: #{decoder_forward.2} parent=1 // pred_fallthru
      _
    // Predicated region
    $region66: #{decoder_forward.2} parent=1 // pred_check
      _
    $region67: #{decoder_forward.2} parent=1 // pred_check_branch
      %1458 = sbr.rel (0) target = $region69
    $region68: #{decoder_forward.2} parent=1 // pred_region
      _
    $region69: #{decoder_forward.2} parent=1 // pred_fallthru
      _
    %1459 = vsyncpa [#allocation3], 1
    %1460 = vsyncpa [#allocation5], 1
    %1461 = vsyncpa [#allocation8], 1

// kernel: decoder_forward.3
$region0: #{decoder_forward.3}
  #allocation0 [shape = 'u32[]', space=smem, size = 0x4, offset = 0x4, fixed_abs, tag = 'smem constant byte address 0x4 - core index']
  #allocation1 [shape = 'u32[144,128]{1,0:T(1,128)}', space=vmem, size = 0x12000, scoped, tag = 'internal scratch']
  #allocation2 [shape = 'f32[1,1]{1,0:T(1,128)S(1)}', space=vmem, size = 0x200, scoped, tag = 'scoped memory for decoder_forward.3']
  %s0 = inlined_call_operand.vmem [shape: bf16[2,64,16], index: 0, kind: input, shape index: {}]
  %s1 = inlined_call_operand.vmem [shape: bf16[4,64,256], index: 1, kind: input, shape index: {}]
  %s2 = inlined_call_operand.vmem [shape: f32[64,1], index: 2, kind: input, shape index: {}]
  %s3 = inlined_call_operand.vmem [shape: bf16[4,32,256], index: 3, kind: input, shape index: {}]
  %s4 = inlined_call_operand.vmem [shape: f32[32,1], index: 4, kind: input, shape index: {}]
  %s5 = inlined_call_operand.vmem [shape: bf16[4,32,128], index: 5, kind: input, shape index: {}]
  %s6 = inlined_call_operand.vmem [shape: f32[32,1], index: 6, kind: input, shape index: {}]
  %s7 = inlined_call_operand.vmem [shape: bf16[4,1,128], index: 7, kind: input, shape index: {}]
  %s8 = inlined_call_operand.<no memory space> [shape: f32[1,1], index: 8, kind: input, shape index: {}]
  %s9 = inlined_call_operand.vmem [shape: bf16[64,64], index: 9, kind: input, shape index: {}]
  %s10 = inlined_call_operand.vmem [shape: bf16[256,256], index: 10, kind: input, shape index: {}]
  %s11 = inlined_call_operand.vmem [shape: f32[2,16,256], index: 11, kind: output, shape index: {}]
  %s12 = sld [smem:[#allocation0]]
  $region77: #{decoder_forward.3} parent=0
    _
  %s14 = ssub.s32 1, %s12
  %s15 = scalar_select 0, %s14, %s12
  %v16 = vstv %s8
  %17 = vst [vmem:[#allocation2] sm:$0x1] %v16
  loop: start=0, step=1, limit=4
  $region2: #{decoder_forward.3} parent=0 // loop_pre_header
    _
  $region3: #{decoder_forward.3} parent=0 // loop_header
    %s19 = sphi 0, %s23
    %p20 = scmp.ge.s32.totalorder %s19, 4
    %s29 = sphi 0, %s31
    %s32 = sphi 0, %s29
    %s33 = sphi 0, %s32
    %s49 = sphi 0, %s33
    %s53 = sphi 0, %s53
    %s55 = sphi 0, %s53
    %s56 = sphi 0, %s55
    %s70 = sphi 0, %s56
    %s74 = sphi 0, %s74
    %s76 = sphi 0, %s74
    %s77 = sphi 0, %s76
    %s91 = sphi 0, %s77
    %s95 = sphi 0, %s95
    %s97 = sphi 0, %s95
    %s98 = sphi 0, %s97
    %s112 = sphi 0, %s98
    %s116 = sphi 0, %s116
    %s118 = sphi 0, %s116
    %s119 = sphi 0, %s118
    %s133 = sphi 0, %s119
    %s137 = sphi 0, %s137
    %s139 = sphi 0, %s137
    %s140 = sphi 0, %s139
    %s154 = sphi 0, %s140
    %s158 = sphi 0, %s158
    %s160 = sphi 0, %s158
    %s161 = sphi 0, %s160
    %s175 = sphi 0, %s161
    %s179 = sphi 0, %s179
    %s181 = sphi 0, %s179
    %s182 = sphi 0, %s181
    %s196 = sphi 0, %s182
    %s200 = sphi 0, %s200
    %s202 = sphi 0, %s200
    %s203 = sphi 0, %s202
    %s217 = sphi 0, %s203
    %s221 = sphi 0, %s221
    %s223 = sphi 0, %s221
    %s224 = sphi 0, %s223
    %s238 = sphi 0, %s224
    %s242 = sphi 0, %s242
    %s244 = sphi 0, %s242
    %s245 = sphi 0, %s244
    %s259 = sphi 0, %s245
    %s265 = sphi 0, %s267
    %s268 = sphi 0, %s265
    %s269 = sphi 0, %s268
    %s285 = sphi 0, %s269
  $region4: #{decoder_forward.3} parent=0 // loop_header_branch
    %22 = sbr.rel (%p20) target = $region8
  $region5: #{decoder_forward.3} parent=0 // loop_body
    %s24 = ssub.s32 %s19, 1
    %s25 = ssub.s32 %s19, 2
    %s26 = sadd.s32 %s19, 1
    %s27 = ssub.s32 %s19, %s26
    %p28 = scmp.eq.s32.totalorder %s27, 0
    %s30 = sadd.s32 %s29, 1
    %s31 = scalar_select %p28, %s29, %s30
    %p34 = pneg %p28
    %p35 = scmp.eq.s32.totalorder %s19, 1
    %p36 = por %p34, %p35
    %p37 = scmp.ne.s32.totalorder %s29, %s32
    %p38 = scmp.eq.s32.totalorder %s19, 0
    %p39 = por %p37, %p38
    %p40 = scmp.ne.s32.totalorder %s29, %s32
    %p41 = scmp.eq.s32.totalorder %s24, 1
    %p42 = por %p40, %p41
    %p43 = scmp.ne.s32.totalorder %s32, %s33
    %p44 = scmp.eq.s32.totalorder %s24, 0
    %p45 = por %p43, %p44
    %p46 = scmp.ne.s32.totalorder %s32, %s33
    %p47 = scmp.eq.s32.totalorder %s25, 1
    %p48 = por %p46, %p47
    %p50 = scmp.ne.s32.totalorder %s33, %s49
    %p51 = scmp.eq.s32.totalorder %s25, 0
    %p52 = por %p50, %p51
    %s54 = sadd.s32 %s53, 1
    %p57 = scmp.eq.s32.totalorder %s19, 1
    %p58 = scmp.ne.s32.totalorder %s53, %s55
    %p59 = scmp.eq.s32.totalorder %s19, 0
    %p60 = por %p58, %p59
    %p61 = scmp.ne.s32.totalorder %s53, %s55
    %p62 = scmp.eq.s32.totalorder %s24, 1
    %p63 = por %p61, %p62
    %p64 = scmp.ne.s32.totalorder %s55, %s56
    %p65 = scmp.eq.s32.totalorder %s24, 0
    %p66 = por %p64, %p65
    %p67 = scmp.ne.s32.totalorder %s55, %s56
    %p68 = scmp.eq.s32.totalorder %s25, 1
    %p69 = por %p67, %p68
    %p71 = scmp.ne.s32.totalorder %s56, %s70
    %p72 = scmp.eq.s32.totalorder %s25, 0
    %p73 = por %p71, %p72
    %s75 = sadd.s32 %s74, 1
    %p78 = scmp.eq.s32.totalorder %s19, 1
    %p79 = scmp.ne.s32.totalorder %s74, %s76
    %p80 = scmp.eq.s32.totalorder %s19, 0
    %p81 = por %p79, %p80
    %p82 = scmp.ne.s32.totalorder %s74, %s76
    %p83 = scmp.eq.s32.totalorder %s24, 1
    %p84 = por %p82, %p83
    %p85 = scmp.ne.s32.totalorder %s76, %s77
    %p86 = scmp.eq.s32.totalorder %s24, 0
    %p87 = por %p85, %p86
    %p88 = scmp.ne.s32.totalorder %s76, %s77
    %p89 = scmp.eq.s32.totalorder %s25, 1
    %p90 = por %p88, %p89
    %p92 = scmp.ne.s32.totalorder %s77, %s91
    %p93 = scmp.eq.s32.totalorder %s25, 0
    %p94 = por %p92, %p93
    %s96 = sadd.s32 %s95, 1
    %p99 = scmp.eq.s32.totalorder %s19, 1
    %p100 = scmp.ne.s32.totalorder %s95, %s97
    %p101 = scmp.eq.s32.totalorder %s19, 0
    %p102 = por %p100, %p101
    %p103 = scmp.ne.s32.totalorder %s95, %s97
    %p104 = scmp.eq.s32.totalorder %s24, 1
    %p105 = por %p103, %p104
    %p106 = scmp.ne.s32.totalorder %s97, %s98
    %p107 = scmp.eq.s32.totalorder %s24, 0
    %p108 = por %p106, %p107
    %p109 = scmp.ne.s32.totalorder %s97, %s98
    %p110 = scmp.eq.s32.totalorder %s25, 1
    %p111 = por %p109, %p110
    %p113 = scmp.ne.s32.totalorder %s98, %s112
    %p114 = scmp.eq.s32.totalorder %s25, 0
    %p115 = por %p113, %p114
    %s117 = sadd.s32 %s116, 1
    %p120 = scmp.eq.s32.totalorder %s19, 1
    %p121 = scmp.ne.s32.totalorder %s116, %s118
    %p122 = scmp.eq.s32.totalorder %s19, 0
    %p123 = por %p121, %p122
    %p124 = scmp.ne.s32.totalorder %s116, %s118
    %p125 = scmp.eq.s32.totalorder %s24, 1
    %p126 = por %p124, %p125
    %p127 = scmp.ne.s32.totalorder %s118, %s119
    %p128 = scmp.eq.s32.totalorder %s24, 0
    %p129 = por %p127, %p128
    %p130 = scmp.ne.s32.totalorder %s118, %s119
    %p131 = scmp.eq.s32.totalorder %s25, 1
    %p132 = por %p130, %p131
    %p134 = scmp.ne.s32.totalorder %s119, %s133
    %p135 = scmp.eq.s32.totalorder %s25, 0
    %p136 = por %p134, %p135
    %s138 = sadd.s32 %s137, 1
    %p141 = scmp.eq.s32.totalorder %s19, 1
    %p142 = scmp.ne.s32.totalorder %s137, %s139
    %p143 = scmp.eq.s32.totalorder %s19, 0
    %p144 = por %p142, %p143
    %p145 = scmp.ne.s32.totalorder %s137, %s139
    %p146 = scmp.eq.s32.totalorder %s24, 1
    %p147 = por %p145, %p146
    %p148 = scmp.ne.s32.totalorder %s139, %s140
    %p149 = scmp.eq.s32.totalorder %s24, 0
    %p150 = por %p148, %p149
    %p151 = scmp.ne.s32.totalorder %s139, %s140
    %p152 = scmp.eq.s32.totalorder %s25, 1
    %p153 = por %p151, %p152
    %p155 = scmp.ne.s32.totalorder %s140, %s154
    %p156 = scmp.eq.s32.totalorder %s25, 0
    %p157 = por %p155, %p156
    %s159 = sadd.s32 %s158, 1
    %p162 = scmp.eq.s32.totalorder %s19, 1
    %p163 = scmp.ne.s32.totalorder %s158, %s160
    %p164 = scmp.eq.s32.totalorder %s19, 0
    %p165 = por %p163, %p164
    %p166 = scmp.ne.s32.totalorder %s158, %s160
    %p167 = scmp.eq.s32.totalorder %s24, 1
    %p168 = por %p166, %p167
    %p169 = scmp.ne.s32.totalorder %s160, %s161
    %p170 = scmp.eq.s32.totalorder %s24, 0
    %p171 = por %p169, %p170
    %p172 = scmp.ne.s32.totalorder %s160, %s161
    %p173 = scmp.eq.s32.totalorder %s25, 1
    %p174 = por %p172, %p173
    %p176 = scmp.ne.s32.totalorder %s161, %s175
    %p177 = scmp.eq.s32.totalorder %s25, 0
    %p178 = por %p176, %p177
    %s180 = sadd.s32 %s179, 1
    %p183 = scmp.eq.s32.totalorder %s19, 1
    %p184 = scmp.ne.s32.totalorder %s179, %s181
    %p185 = scmp.eq.s32.totalorder %s19, 0
    %p186 = por %p184, %p185
    %p187 = scmp.ne.s32.totalorder %s179, %s181
    %p188 = scmp.eq.s32.totalorder %s24, 1
    %p189 = por %p187, %p188
    %p190 = scmp.ne.s32.totalorder %s181, %s182
    %p191 = scmp.eq.s32.totalorder %s24, 0
    %p192 = por %p190, %p191
    %p193 = scmp.ne.s32.totalorder %s181, %s182
    %p194 = scmp.eq.s32.totalorder %s25, 1
    %p195 = por %p193, %p194
    %p197 = scmp.ne.s32.totalorder %s182, %s196
    %p198 = scmp.eq.s32.totalorder %s25, 0
    %p199 = por %p197, %p198
    %s201 = sadd.s32 %s200, 1
    %p204 = scmp.eq.s32.totalorder %s19, 1
    %p205 = scmp.ne.s32.totalorder %s200, %s202
    %p206 = scmp.eq.s32.totalorder %s19, 0
    %p207 = por %p205, %p206
    %p208 = scmp.ne.s32.totalorder %s200, %s202
    %p209 = scmp.eq.s32.totalorder %s24, 1
    %p210 = por %p208, %p209
    %p211 = scmp.ne.s32.totalorder %s202, %s203
    %p212 = scmp.eq.s32.totalorder %s24, 0
    %p213 = por %p211, %p212
    %p214 = scmp.ne.s32.totalorder %s202, %s203
    %p215 = scmp.eq.s32.totalorder %s25, 1
    %p216 = por %p214, %p215
    %p218 = scmp.ne.s32.totalorder %s203, %s217
    %p219 = scmp.eq.s32.totalorder %s25, 0
    %p220 = por %p218, %p219
    %s222 = sadd.s32 %s221, 1
    %p225 = scmp.eq.s32.totalorder %s19, 1
    %p226 = scmp.ne.s32.totalorder %s221, %s223
    %p227 = scmp.eq.s32.totalorder %s19, 0
    %p228 = por %p226, %p227
    %p229 = scmp.ne.s32.totalorder %s221, %s223
    %p230 = scmp.eq.s32.totalorder %s24, 1
    %p231 = por %p229, %p230
    %p232 = scmp.ne.s32.totalorder %s223, %s224
    %p233 = scmp.eq.s32.totalorder %s24, 0
    %p234 = por %p232, %p233
    %p235 = scmp.ne.s32.totalorder %s223, %s224
    %p236 = scmp.eq.s32.totalorder %s25, 1
    %p237 = por %p235, %p236
    %p239 = scmp.ne.s32.totalorder %s224, %s238
    %p240 = scmp.eq.s32.totalorder %s25, 0
    %p241 = por %p239, %p240
    %s243 = sadd.s32 %s242, 1
    %p246 = scmp.eq.s32.totalorder %s19, 1
    %p247 = scmp.ne.s32.totalorder %s242, %s244
    %p248 = scmp.eq.s32.totalorder %s19, 0
    %p249 = por %p247, %p248
    %p250 = scmp.ne.s32.totalorder %s242, %s244
    %p251 = scmp.eq.s32.totalorder %s24, 1
    %p252 = por %p250, %p251
    %p253 = scmp.ne.s32.totalorder %s244, %s245
    %p254 = scmp.eq.s32.totalorder %s24, 0
    %p255 = por %p253, %p254
    %p256 = scmp.ne.s32.totalorder %s244, %s245
    %p257 = scmp.eq.s32.totalorder %s25, 1
    %p258 = por %p256, %p257
    %p260 = scmp.ne.s32.totalorder %s245, %s259
    %p261 = scmp.eq.s32.totalorder %s25, 0
    %p262 = por %p260, %p261
    %s263 = ssub.s32 %s19, %s26
    %p264 = scmp.eq.s32.totalorder %s263, 0
    %s266 = sadd.s32 %s265, 1
    %s267 = scalar_select %p264, %s265, %s266
    %p270 = pneg %p264
    %p271 = scmp.eq.s32.totalorder %s19, 1
    %p272 = por %p270, %p271
    %p273 = scmp.ne.s32.totalorder %s265, %s268
    %p274 = scmp.eq.s32.totalorder %s19, 0
    %p275 = por %p273, %p274
    %p276 = scmp.ne.s32.totalorder %s265, %s268
    %p277 = scmp.eq.s32.totalorder %s24, 1
    %p278 = por %p276, %p277
    %p279 = scmp.ne.s32.totalorder %s268, %s269
    %p280 = scmp.eq.s32.totalorder %s24, 0
    %p281 = por %p279, %p280
    %p282 = scmp.ne.s32.totalorder %s268, %s269
    %p283 = scmp.eq.s32.totalorder %s25, 1
    %p284 = por %p282, %p283
    %p286 = scmp.ne.s32.totalorder %s269, %s285
    %p287 = scmp.eq.s32.totalorder %s25, 0
    %p288 = por %p286, %p287
    %p289 = scmp.le.s32.totalorder 1, %s19
    %p290 = scmp.lt.s32.totalorder %s19, 3
    %p291 = pnand %p289, %p290
    %p292 = pneg %p291
    // Predicated region
    $region9: #{decoder_forward.3} parent=5 // pred_check
      _
    $region10: #{decoder_forward.3} parent=5 // pred_check_branch
      %294 = sbr.rel (%p291) target = $region12
    $region11: #{decoder_forward.3} parent=5 // pred_region
      %s295 = ssub.s32 %s19, 1
      // Predicated region
      $region13: #{decoder_forward.3} parent=11 // pred_check
        %p296 = pneg %p66
      $region14: #{decoder_forward.3} parent=11 // pred_check_branch
        %298 = sbr.rel (%p296) target = $region16
      $region15: #{decoder_forward.3} parent=11 // pred_region
        _
      $region16: #{decoder_forward.3} parent=11 // pred_fallthru
        _
      // Predicated region
      $region17: #{decoder_forward.3} parent=11 // pred_check
        %p299 = pneg %p87
      $region18: #{decoder_forward.3} parent=11 // pred_check_branch
        %301 = sbr.rel (%p299) target = $region20
      $region19: #{decoder_forward.3} parent=11 // pred_region
        _
      $region20: #{decoder_forward.3} parent=11 // pred_fallthru
        _
      // Predicated region
      $region21: #{decoder_forward.3} parent=11 // pred_check
        %p302 = pneg %p108
      $region22: #{decoder_forward.3} parent=11 // pred_check_branch
        %304 = sbr.rel (%p302) target = $region24
      $region23: #{decoder_forward.3} parent=11 // pred_region
        _
      $region24: #{decoder_forward.3} parent=11 // pred_fallthru
        _
      // Predicated region
      $region25: #{decoder_forward.3} parent=11 // pred_check
        %p305 = pneg %p129
      $region26: #{decoder_forward.3} parent=11 // pred_check_branch
        %307 = sbr.rel (%p305) target = $region28
      $region27: #{decoder_forward.3} parent=11 // pred_region
        _
      $region28: #{decoder_forward.3} parent=11 // pred_fallthru
        _
      // Predicated region
      $region29: #{decoder_forward.3} parent=11 // pred_check
        %p308 = pneg %p150
      $region30: #{decoder_forward.3} parent=11 // pred_check_branch
        %310 = sbr.rel (%p308) target = $region32
      $region31: #{decoder_forward.3} parent=11 // pred_region
        _
      $region32: #{decoder_forward.3} parent=11 // pred_fallthru
        _
      // Predicated region
      $region33: #{decoder_forward.3} parent=11 // pred_check
        %p311 = pneg %p171
      $region34: #{decoder_forward.3} parent=11 // pred_check_branch
        %313 = sbr.rel (%p311) target = $region36
      $region35: #{decoder_forward.3} parent=11 // pred_region
        _
      $region36: #{decoder_forward.3} parent=11 // pred_fallthru
        _
      // Predicated region
      $region37: #{decoder_forward.3} parent=11 // pred_check
        %p314 = pneg %p192
      $region38: #{decoder_forward.3} parent=11 // pred_check_branch
        %316 = sbr.rel (%p314) target = $region40
      $region39: #{decoder_forward.3} parent=11 // pred_region
        _
      $region40: #{decoder_forward.3} parent=11 // pred_fallthru
        _
      // Predicated region
      $region41: #{decoder_forward.3} parent=11 // pred_check
        %p317 = pneg %p213
      $region42: #{decoder_forward.3} parent=11 // pred_check_branch
        %319 = sbr.rel (%p317) target = $region44
      $region43: #{decoder_forward.3} parent=11 // pred_region
        _
      $region44: #{decoder_forward.3} parent=11 // pred_fallthru
        _
      // Predicated region
      $region45: #{decoder_forward.3} parent=11 // pred_check
        %p320 = pneg %p234
      $region46: #{decoder_forward.3} parent=11 // pred_check_branch
        %322 = sbr.rel (%p320) target = $region48
      $region47: #{decoder_forward.3} parent=11 // pred_region
        _
      $region48: #{decoder_forward.3} parent=11 // pred_fallthru
        _
      // Predicated region
      $region49: #{decoder_forward.3} parent=11 // pred_check
        %p323 = pneg %p255
      $region50: #{decoder_forward.3} parent=11 // pred_check_branch
        %325 = sbr.rel (%p323) target = $region52
      $region51: #{decoder_forward.3} parent=11 // pred_region
        _
      $region52: #{decoder_forward.3} parent=11 // pred_fallthru
        _
    $region12: #{decoder_forward.3} parent=5 // pred_fallthru
      _
    %p326 = scmp.lt.s32.totalorder %s19, 2
    // Predicated region
    $region53: #{decoder_forward.3} parent=5 // pred_check
      %p327 = pneg %p326
    $region54: #{decoder_forward.3} parent=5 // pred_check_branch
      %329 = sbr.rel (%p327) target = $region56
    $region55: #{decoder_forward.3} parent=5 // pred_region
      // Predicated region
      $region57: #{decoder_forward.3} parent=55 // pred_check
        %p330 = pneg %p39
      $region58: #{decoder_forward.3} parent=55 // pred_check_branch
        %332 = sbr.rel (%p330) target = $region60
      $region59: #{decoder_forward.3} parent=55 // pred_region
        %p333 = scmp.lt.s32.totalorder %s19, 1
        %s334 = scalar_select %p333, %s19, 1
        %s335 = smul.addr %s334, 8
        %s336 = smul.addr %s335, 4
        %s337 = scalar_lea.vmem %s0, %s336
      $region60: #{decoder_forward.3} parent=55 // pred_fallthru
        _
    $region56: #{decoder_forward.3} parent=5 // pred_fallthru
      _
    %p338 = scmp.le.s32.totalorder 1, %s19
    %p339 = scmp.lt.s32.totalorder %s19, 3
    %p340 = pnand %p338, %p339
    %p341 = pneg %p340
    // Predicated region
    $region61: #{decoder_forward.3} parent=5 // pred_check
      _
    $region62: #{decoder_forward.3} parent=5 // pred_check_branch
      %343 = sbr.rel (%p340) target = $region64
    $region63: #{decoder_forward.3} parent=5 // pred_region
      %s344 = ssub.s32 %s19, 1
      %p345 = scmp.lt.s32.totalorder %s24, 1
      %s346 = scalar_select %p345, %s24, 1
      %s347 = smul.addr %s346, 8
      %s348 = smul.addr %s347, 4
      %s349 = scalar_lea.vmem %s0, %s348
      %p350 = pneg %p45
      %p351 = pneg %p42
      %p352 = pneg %p66
      %p353 = pneg %p63
      %p354 = pneg %p87
      %p355 = pneg %p84
      %p356 = pneg %p108
      %p357 = pneg %p105
      %p358 = pneg %p129
      %p359 = pneg %p126
      %p360 = pneg %p150
      %p361 = pneg %p147
      %p362 = pneg %p171
      %p363 = pneg %p168
      %p364 = pneg %p192
      %p365 = pneg %p189
      %p366 = pneg %p213
      %p367 = pneg %p210
      %p368 = pneg %p234
      %p369 = pneg %p231
      %p370 = pneg %p255
      %p371 = pneg %p252
      %p372 = pneg %p281
      %p373 = pneg %p278
      %p374 = scmp.lt.s32.totalorder %s24, 1
      %s375 = scalar_select %p374, %s24, 1
      %s376 = smul.addr %s375, 4
      %s377 = smul.addr %s376, 8
      %s378 = scalar_lea.vmem %s11, %s377
      %p379 = scmp.lt.s32.totalorder %s24, 1
      %s380 = scalar_select %p379, %s24, 1
      %s381 = smul.addr %s380, 8
      %s382 = smul.addr %s381, 4
      %s383 = scalar_lea.vmem %s0, %s382
      %p384 = scmp.lt.s32.totalorder %s24, 1
      %s385 = scalar_select %p384, %s24, 1
      %s386 = smul.addr %s385, 4
      %s387 = smul.addr %s386, 8
      %s388 = scalar_lea.vmem %s11, %s387
      %v392 = vld [vmem:[%s383] sm:$0xf]
      %v393 = vld [vmem:[%s383 + $0x4] sm:$0xf]
      %v394 = vld [vmem:[%s383 + $0x8] sm:$0xf]
      %v395 = vld [vmem:[%s383 + $0xc] sm:$0xf]
      %v396 = vld [vmem:[%s383 + $0x10] sm:$0xf]
      %v397 = vld [vmem:[%s383 + $0x14] sm:$0xf]
      %v398 = vld [vmem:[%s383 + $0x18] sm:$0xf]
      %v399 = vld [vmem:[%s383 + $0x1c] sm:$0xf]
      %v400 = vlaneseq
      %v401 = vand.u32 %v400, 127
      %v402 = vand.u32 %v401, 3
      %v403 = vshra.s32 %v401, 2
      %vm404 = vcmp.ge.s32.totalorder %v403, 1
      %vm405 = vcmp.ge.s32.totalorder %v402, 1
      %vm406 = vmand %vm404, %vm405
      %vm407 = vcmp.lt.s32.totalorder %v402, 3
      %vm408 = vmand %vm404, %vm407
      %vm409 = vcmp.lt.s32.totalorder %v403, 3
      %vm410 = vmand %vm409, %vm405
      %vm411 = vmand %vm409, %vm407
      %v420 = vunpack.c.l.b16 %v392
      %v421 = vunpack.c.l.b16 %v393
      %v422 = vunpack.c.l.b16 %v394
      %v423 = vunpack.c.l.b16 %v395
      %v424 = vunpack.c.l.b16 %v396
      %v425 = vunpack.c.l.b16 %v397
      %v426 = vunpack.c.l.b16 %v398
      %v427 = vunpack.c.l.b16 %v399
      %v428 = vpack.c.b16 %v421, %v420
      %v429 = vpack.c.b16 %v423, %v422
      %v430 = vpack.c.b16 %v425, %v424
      %v431 = vpack.c.b16 %v427, %v426
      %432 = vrot.lane.b32.xlu0 %v428, 5
      %v433 = vpop.permute.xlu0 %432
      %434 = vrot.lane.b32.xlu0 %v429, 5
      %v435 = vpop.permute.xlu0 %434
      %436 = vrot.lane.b32.xlu0 %v430, 5
      %v437 = vpop.permute.xlu0 %436
      %438 = vrot.lane.b32.xlu0 %v431, 5
      %v439 = vpop.permute.xlu0 %438
      %vm440 = vcmask 39936
      %v443 = vsel %vm440, 0, %v433
      %v446 = vsel %vm440, 0, %v435
      %v449 = vsel %vm440, 0, %v437
      %v452 = vsel %vm440, 0, %v439
      %v454 = vsel %vm406, 1, 0
      %vm455 = vcmp.eq.s32.totalorder %v454, 1
      %vm456 = vmpackc.low %vm455, %vm455
      %v457 = vsel %vm456, 65537, 0
      %v458 = vlaneseq
      %v459 = vshrl.u32 %v458, 7
      %v460 = vsub.s32 0, %v459
      %v461 = vrot.slane %v457, %v460
      %vm462 = vcmp.ne.s16.totalorder %v461, 0
      %v463 = vsel %vm462, %v443, 0
      %v464 = vsel %vm462, %v446, 0
      %v465 = vsel %vm462, %v449, 0
      %v466 = vsel %vm462, %v452, 0
      %467 = vrot.lane.b32.xlu0 %v428, 4
      %v468 = vpop.permute.xlu0 %467
      %469 = vrot.lane.b32.xlu0 %v429, 4
      %v470 = vpop.permute.xlu0 %469
      %471 = vrot.lane.b32.xlu0 %v430, 4
      %v472 = vpop.permute.xlu0 %471
      %473 = vrot.lane.b32.xlu0 %v431, 4
      %v474 = vpop.permute.xlu0 %473
      %vm475 = vcmask 31744
      %v477 = vsel %vm475, 0, %v468
      %v480 = vsel %vm475, 0, %v470
      %v483 = vsel %vm475, 0, %v472
      %v486 = vsel %vm475, 0, %v474
      %v488 = vsel %vm404, 1, 0
      %vm489 = vcmp.eq.s32.totalorder %v488, 1
      %vm490 = vmpackc.low %vm489, %vm489
      %v491 = vsel %vm490, 65537, 0
      %v492 = vlaneseq
      %v493 = vshrl.u32 %v492, 7
      %v494 = vsub.s32 0, %v493
      %v495 = vrot.slane %v491, %v494
      %vm496 = vcmp.ne.s16.totalorder %v495, 0
      %v497 = vsel %vm496, %v477, 0
      %v498 = vsel %vm496, %v480, 0
      %v499 = vsel %vm496, %v483, 0
      %v500 = vsel %vm496, %v486, 0
      %501 = vrot.lane.b32.xlu0 %v428, 3
      %v502 = vpop.permute.xlu0 %501
      %503 = vrot.lane.b32.xlu0 %v429, 3
      %v504 = vpop.permute.xlu0 %503
      %505 = vrot.lane.b32.xlu0 %v430, 3
      %v506 = vpop.permute.xlu0 %505
      %507 = vrot.lane.b32.xlu0 %v431, 3
      %v508 = vpop.permute.xlu0 %507
      %vm509 = vcmask 23552
      %v511 = vsel %vm509, 0, %v502
      %v514 = vsel %vm509, 0, %v504
      %v517 = vsel %vm509, 0, %v506
      %v520 = vsel %vm509, 0, %v508
      %v522 = vsel %vm408, 1, 0
      %vm523 = vcmp.eq.s32.totalorder %v522, 1
      %vm524 = vmpackc.low %vm523, %vm523
      %v525 = vsel %vm524, 65537, 0
      %v526 = vlaneseq
      %v527 = vshrl.u32 %v526, 7
      %v528 = vsub.s32 0, %v527
      %v529 = vrot.slane %v525, %v528
      %vm530 = vcmp.ne.s16.totalorder %v529, 0
      %v531 = vsel %vm530, %v511, 0
      %v532 = vsel %vm530, %v514, 0
      %v533 = vsel %vm530, %v517, 0
      %v534 = vsel %vm530, %v520, 0
      %535 = vrot.lane.b32.xlu0 %v428, 1
      %v536 = vpop.permute.xlu0 %535
      %537 = vrot.lane.b32.xlu0 %v429, 1
      %v538 = vpop.permute.xlu0 %537
      %539 = vrot.lane.b32.xlu0 %v430, 1
      %v540 = vpop.permute.xlu0 %539
      %541 = vrot.lane.b32.xlu0 %v431, 1
      %v542 = vpop.permute.xlu0 %541
      %vm543 = vcmask 7168
      %v545 = vsel %vm543, 0, %v536
      %v548 = vsel %vm543, 0, %v538
      %v551 = vsel %vm543, 0, %v540
      %v554 = vsel %vm543, 0, %v542
      %v556 = vsel %vm405, 1, 0
      %vm557 = vcmp.eq.s32.totalorder %v556, 1
      %vm558 = vmpackc.low %vm557, %vm557
      %v559 = vsel %vm558, 65537, 0
      %v560 = vlaneseq
      %v561 = vshrl.u32 %v560, 7
      %v562 = vsub.s32 0, %v561
      %v563 = vrot.slane %v559, %v562
      %vm564 = vcmp.ne.s16.totalorder %v563, 0
      %v565 = vsel %vm564, %v545, 0
      %v566 = vsel %vm564, %v548, 0
      %v567 = vsel %vm564, %v551, 0
      %v568 = vsel %vm564, %v554, 0
      %569 = vrot.lane.b32.xlu0 %v428, 127
      %v570 = vpop.permute.xlu0 %569
      %571 = vrot.lane.b32.xlu0 %v429, 127
      %v572 = vpop.permute.xlu0 %571
      %573 = vrot.lane.b32.xlu0 %v430, 127
      %v574 = vpop.permute.xlu0 %573
      %575 = vrot.lane.b32.xlu0 %v431, 127
      %v576 = vpop.permute.xlu0 %575
      %vm577 = vcmask 121856
      %v579 = vsel %vm577, %v570, 0
      %v582 = vsel %vm577, %v572, 0
      %v585 = vsel %vm577, %v574, 0
      %v588 = vsel %vm577, %v576, 0
      %v590 = vsel %vm407, 1, 0
      %vm591 = vcmp.eq.s32.totalorder %v590, 1
      %vm592 = vmpackc.low %vm591, %vm591
      %v593 = vsel %vm592, 65537, 0
      %v594 = vlaneseq
      %v595 = vshrl.u32 %v594, 7
      %v596 = vsub.s32 0, %v595
      %v597 = vrot.slane %v593, %v596
      %vm598 = vcmp.ne.s16.totalorder %v597, 0
      %v599 = vsel %vm598, %v579, 0
      %v600 = vsel %vm598, %v582, 0
      %v601 = vsel %vm598, %v585, 0
      %v602 = vsel %vm598, %v588, 0
      %603 = vrot.lane.b32.xlu0 %v428, 125
      %v604 = vpop.permute.xlu0 %603
      %605 = vrot.lane.b32.xlu0 %v429, 125
      %v606 = vpop.permute.xlu0 %605
      %607 = vrot.lane.b32.xlu0 %v430, 125
      %v608 = vpop.permute.xlu0 %607
      %609 = vrot.lane.b32.xlu0 %v431, 125
      %v610 = vpop.permute.xlu0 %609
      %vm611 = vcmask 105472
      %v613 = vsel %vm611, %v604, 0
      %v616 = vsel %vm611, %v606, 0
      %v619 = vsel %vm611, %v608, 0
      %v622 = vsel %vm611, %v610, 0
      %v624 = vsel %vm410, 1, 0
      %vm625 = vcmp.eq.s32.totalorder %v624, 1
      %vm626 = vmpackc.low %vm625, %vm625
      %v627 = vsel %vm626, 65537, 0
      %v628 = vlaneseq
      %v629 = vshrl.u32 %v628, 7
      %v630 = vsub.s32 0, %v629
      %v631 = vrot.slane %v627, %v630
      %vm632 = vcmp.ne.s16.totalorder %v631, 0
      %v633 = vsel %vm632, %v613, 0
      %v634 = vsel %vm632, %v616, 0
      %v635 = vsel %vm632, %v619, 0
      %v636 = vsel %vm632, %v622, 0
      %637 = vrot.lane.b32.xlu0 %v428, 124
      %v638 = vpop.permute.xlu0 %637
      %639 = vrot.lane.b32.xlu0 %v429, 124
      %v640 = vpop.permute.xlu0 %639
      %641 = vrot.lane.b32.xlu0 %v430, 124
      %v642 = vpop.permute.xlu0 %641
      %643 = vrot.lane.b32.xlu0 %v431, 124
      %v644 = vpop.permute.xlu0 %643
      %vm645 = vcmask 97280
      %v647 = vsel %vm645, %v638, 0
      %v650 = vsel %vm645, %v640, 0
      %v653 = vsel %vm645, %v642, 0
      %v656 = vsel %vm645, %v644, 0
      %v658 = vsel %vm409, 1, 0
      %vm659 = vcmp.eq.s32.totalorder %v658, 1
      %vm660 = vmpackc.low %vm659, %vm659
      %v661 = vsel %vm660, 65537, 0
      %v662 = vlaneseq
      %v663 = vshrl.u32 %v662, 7
      %v664 = vsub.s32 0, %v663
      %v665 = vrot.slane %v661, %v664
      %vm666 = vcmp.ne.s16.totalorder %v665, 0
      %v667 = vsel %vm666, %v647, 0
      %v668 = vsel %vm666, %v650, 0
      %v669 = vsel %vm666, %v653, 0
      %v670 = vsel %vm666, %v656, 0
      %671 = vrot.lane.b32.xlu0 %v428, 123
      %v672 = vpop.permute.xlu0 %671
      %673 = vrot.lane.b32.xlu0 %v429, 123
      %v674 = vpop.permute.xlu0 %673
      %675 = vrot.lane.b32.xlu0 %v430, 123
      %v676 = vpop.permute.xlu0 %675
      %677 = vrot.lane.b32.xlu0 %v431, 123
      %v678 = vpop.permute.xlu0 %677
      %vm679 = vcmask 89088
      %v681 = vsel %vm679, %v672, 0
      %v684 = vsel %vm679, %v674, 0
      %v687 = vsel %vm679, %v676, 0
      %v690 = vsel %vm679, %v678, 0
      %v692 = vsel %vm411, 1, 0
      %vm693 = vcmp.eq.s32.totalorder %v692, 1
      %vm694 = vmpackc.low %vm693, %vm693
      %v695 = vsel %vm694, 65537, 0
      %v696 = vlaneseq
      %v697 = vshrl.u32 %v696, 7
      %v698 = vsub.s32 0, %v697
      %v699 = vrot.slane %v695, %v698
      %vm700 = vcmp.ne.s16.totalorder %v699, 0
      %v701 = vsel %vm700, %v681, 0
      %v702 = vsel %vm700, %v684, 0
      %v703 = vsel %vm700, %v687, 0
      %v704 = vsel %vm700, %v690, 0
      %v709 = vld [vmem:[%s1] sm:$0xff]
      %v710 = vld [vmem:[%s1 + $0x8] sm:$0xff]
      %v711 = vld [vmem:[%s1 + $0x10] sm:$0xff]
      %v712 = vld [vmem:[%s1 + $0x18] sm:$0xff]
      %v713 = vld [vmem:[%s1 + $0x20] sm:$0xff]
      %v714 = vld [vmem:[%s1 + $0x28] sm:$0xff]
      %v715 = vld [vmem:[%s1 + $0x30] sm:$0xff]
      %v716 = vld [vmem:[%s1 + $0x38] sm:$0xff]
      %v717 = vld [vmem:[%s2] sm:$0xff]
      %v718 = vld [vmem:[%s2 + $0x8] sm:$0xff]
      %v719 = vld [vmem:[%s2 + $0x10] sm:$0xff]
      %v720 = vld [vmem:[%s2 + $0x18] sm:$0xff]
      %v721 = vld [vmem:[%s2 + $0x20] sm:$0xff]
      %v722 = vld [vmem:[%s2 + $0x28] sm:$0xff]
      %v723 = vld [vmem:[%s2 + $0x30] sm:$0xff]
      %v724 = vld [vmem:[%s2 + $0x38] sm:$0xff]
      %726 = vset.pattern.permute.xlu0 0
      %727 = vperm.xlu0 %726, %v717
      %v728 = vpop.permute.xlu0 %727
      %731 = vset.pattern.permute.xlu0 0
      %732 = vperm.xlu0 %731, %v718
      %v733 = vpop.permute.xlu0 %732
      %736 = vset.pattern.permute.xlu0 0
      %737 = vperm.xlu0 %736, %v719
      %v738 = vpop.permute.xlu0 %737
      %741 = vset.pattern.permute.xlu0 0
      %742 = vperm.xlu0 %741, %v720
      %v743 = vpop.permute.xlu0 %742
      %746 = vset.pattern.permute.xlu0 0
      %747 = vperm.xlu0 %746, %v721
      %v748 = vpop.permute.xlu0 %747
      %751 = vset.pattern.permute.xlu0 0
      %752 = vperm.xlu0 %751, %v722
      %v753 = vpop.permute.xlu0 %752
      %756 = vset.pattern.permute.xlu0 0
      %757 = vperm.xlu0 %756, %v723
      %v758 = vpop.permute.xlu0 %757
      %761 = vset.pattern.permute.xlu0 0
      %762 = vperm.xlu0 %761, %v724
      %v763 = vpop.permute.xlu0 %762
      %v773 = vunpack.c.l.b16 %v709
      %v774 = vunpack.c.h.b16 %v709
      %v775 = vunpack.c.l.b16 %v710
      %v776 = vunpack.c.h.b16 %v710
      %v777 = vunpack.c.l.b16 %v711
      %v778 = vunpack.c.h.b16 %v711
      %v779 = vunpack.c.l.b16 %v712
      %v780 = vunpack.c.h.b16 %v712
      %v781 = vunpack.c.l.b16 %v713
      %v782 = vunpack.c.h.b16 %v713
      %v783 = vunpack.c.l.b16 %v714
      %v784 = vunpack.c.h.b16 %v714
      %v785 = vunpack.c.l.b16 %v715
      %v786 = vunpack.c.h.b16 %v715
      %v787 = vunpack.c.l.b16 %v716
      %v788 = vunpack.c.h.b16 %v716
      %v789 = vpack.c.b16 %v775, %v773
      %v790 = vpack.c.b16 %v776, %v774
      %v791 = vpack.c.b16 %v779, %v777
      %v792 = vpack.c.b16 %v780, %v778
      %v793 = vpack.c.b16 %v783, %v781
      %v794 = vpack.c.b16 %v784, %v782
      %v795 = vpack.c.b16 %v787, %v785
      %v796 = vpack.c.b16 %v788, %v786
      %805 = vmatprep.subr.bf16.mxu0 0
      %806 = vmatpush1.bf16.msra.mxu0 %v500
      %807 = vmatprep.subr.bf16.mxu0 0
      %808 = vmatpush1.bf16.msra.mxu0 %v499
      %809 = vmatprep.subr.bf16.mxu0 0
      %810 = vmatpush1.bf16.msra.mxu0 %v498
      %811 = vmatprep.subr.bf16.mxu0 0
      %812 = vmatpush1.bf16.msra.mxu0 %v497
      %813 = vmatprep.subr.bf16.mxu0 0
      %814 = vmatpush1.bf16.msra.mxu0 %v466
      %815 = vmatprep.subr.bf16.mxu0 0
      %816 = vmatpush1.bf16.msra.mxu0 %v465
      %817 = vmatprep.subr.bf16.mxu0 0
      %818 = vmatpush1.bf16.msra.mxu0 %v464
      %819 = vmatprep.subr.bf16.mxu0 0
      %820 = vmatpush1.bf16.msra.mxu0 %v463
      %821 = vmatprep.subr.bf16.mxu0 0
      %822 = vmatpush2.bf16.msra.mxu0 %v431
      %823 = vmatprep.subr.bf16.mxu0 0
      %824 = vmatpush2.bf16.msra.mxu0 %v430
      %825 = vmatprep.subr.bf16.mxu0 0
      %826 = vmatpush2.bf16.msra.mxu0 %v429
      %827 = vmatprep.subr.bf16.mxu0 0
      %828 = vmatpush2.bf16.msra.mxu0 %v428
      %829 = vmatprep.subr.bf16.mxu0 0
      %830 = vmatpush2.bf16.msra.mxu0 %v568
      %831 = vmatprep.subr.bf16.mxu0 0
      %832 = vmatpush2.bf16.msra.mxu0 %v567
      %833 = vmatprep.subr.bf16.mxu0 0
      %834 = vmatpush2.bf16.msra.mxu0 %v566
      %835 = vmatprep.subr.bf16.mxu0 0
      %836 = vmatpush2.bf16.msra.mxu0 %v565
      %837 = vmatprep.mubr.bf16.mxu0 %v790
      %838 = vmatmul.mubr.bf16.gmra.mxu0 %v789
      %v839 = vpop.f32.mrf.mxu0
      %v840 = vadd.f32 %v728, %v839
      %v841 = vpop.f32.mrf.mxu0
      %v842 = vpop.f32.mrf.mxu0
      %v843 = vadd.f32 %v733, %v842
      %v844 = vpop.f32.mrf.mxu0
      %845 = vmatprep.mubr.bf16.mxu0 %v792
      %846 = vmatmul.mubr.bf16.gmra.mxu0 %v791
      %v847 = vpop.f32.mrf.mxu0
      %v848 = vadd.f32 %v738, %v847
      %v849 = vpop.f32.mrf.mxu0
      %v850 = vpop.f32.mrf.mxu0
      %v851 = vadd.f32 %v743, %v850
      %v852 = vpop.f32.mrf.mxu0
      %853 = vmatprep.mubr.bf16.mxu0 %v794
      %854 = vmatmul.mubr.bf16.gmra.mxu0 %v793
      %v855 = vpop.f32.mrf.mxu0
      %v856 = vadd.f32 %v748, %v855
      %v857 = vpop.f32.mrf.mxu0
      %v858 = vpop.f32.mrf.mxu0
      %v859 = vadd.f32 %v753, %v858
      %v860 = vpop.f32.mrf.mxu0
      %861 = vmatprep.mubr.bf16.mxu0 %v796
      %862 = vmatmul.mubr.bf16.gmra.mxu0 %v795
      %v863 = vpop.f32.mrf.mxu0
      %v864 = vadd.f32 %v758, %v863
      %v865 = vpop.f32.mrf.mxu0
      %v866 = vpop.f32.mrf.mxu0
      %v867 = vadd.f32 %v763, %v866
      %v868 = vpop.f32.mrf.mxu0
      %869 = vdwg.mxu0
      %v870 = vmax.f32 %v840, 0.0
      %v871 = vmax.f32 %v843, 0.0
      %v872 = vmax.f32 %v848, 0.0
      %v873 = vmax.f32 %v851, 0.0
      %v874 = vmax.f32 %v856, 0.0
      %v875 = vmax.f32 %v859, 0.0
      %v876 = vmax.f32 %v864, 0.0
      %v877 = vmax.f32 %v867, 0.0
      %s878 = scalar_lea.vmem %s1, 64
      %v879 = vld [vmem:[%s878] sm:$0xff]
      %v880 = vld [vmem:[%s878 + $0x8] sm:$0xff]
      %v881 = vld [vmem:[%s878 + $0x10] sm:$0xff]
      %v882 = vld [vmem:[%s878 + $0x18] sm:$0xff]
      %v883 = vld [vmem:[%s878 + $0x20] sm:$0xff]
      %v884 = vld [vmem:[%s878 + $0x28] sm:$0xff]
      %v885 = vld [vmem:[%s878 + $0x30] sm:$0xff]
      %v886 = vld [vmem:[%s878 + $0x38] sm:$0xff]
      %v895 = vunpack.c.l.b16 %v879
      %v896 = vunpack.c.h.b16 %v879
      %v897 = vunpack.c.l.b16 %v880
      %v898 = vunpack.c.h.b16 %v880
      %v899 = vunpack.c.l.b16 %v881
      %v900 = vunpack.c.h.b16 %v881
      %v901 = vunpack.c.l.b16 %v882
      %v902 = vunpack.c.h.b16 %v882
      %v903 = vunpack.c.l.b16 %v883
      %v904 = vunpack.c.h.b16 %v883
      %v905 = vunpack.c.l.b16 %v884
      %v906 = vunpack.c.h.b16 %v884
      %v907 = vunpack.c.l.b16 %v885
      %v908 = vunpack.c.h.b16 %v885
      %v909 = vunpack.c.l.b16 %v886
      %v910 = vunpack.c.h.b16 %v886
      %v911 = vpack.c.b16 %v897, %v895
      %v912 = vpack.c.b16 %v898, %v896
      %v913 = vpack.c.b16 %v901, %v899
      %v914 = vpack.c.b16 %v902, %v900
      %v915 = vpack.c.b16 %v905, %v903
      %v916 = vpack.c.b16 %v906, %v904
      %v917 = vpack.c.b16 %v909, %v907
      %v918 = vpack.c.b16 %v910, %v908
      %927 = vmatprep.subr.bf16.mxu0 0
      %928 = vmatpush1.bf16.msra.mxu0 %v534
      %929 = vmatprep.subr.bf16.mxu0 0
      %930 = vmatpush1.bf16.msra.mxu0 %v533
      %931 = vmatprep.subr.bf16.mxu0 0
      %932 = vmatpush1.bf16.msra.mxu0 %v532
      %933 = vmatprep.subr.bf16.mxu0 0
      %934 = vmatpush1.bf16.msra.mxu0 %v531
      %935 = vmatprep.subr.bf16.mxu0 0
      %936 = vmatpush1.bf16.msra.mxu0 %v500
      %937 = vmatprep.subr.bf16.mxu0 0
      %938 = vmatpush1.bf16.msra.mxu0 %v499
      %939 = vmatprep.subr.bf16.mxu0 0
      %940 = vmatpush1.bf16.msra.mxu0 %v498
      %941 = vmatprep.subr.bf16.mxu0 0
      %942 = vmatpush1.bf16.msra.mxu0 %v497
      %943 = vmatprep.subr.bf16.mxu0 0
      %944 = vmatpush2.bf16.msra.mxu0 %v602
      %945 = vmatprep.subr.bf16.mxu0 0
      %946 = vmatpush2.bf16.msra.mxu0 %v601
      %947 = vmatprep.subr.bf16.mxu0 0
      %948 = vmatpush2.bf16.msra.mxu0 %v600
      %949 = vmatprep.subr.bf16.mxu0 0
      %950 = vmatpush2.bf16.msra.mxu0 %v599
      %951 = vmatprep.subr.bf16.mxu0 0
      %952 = vmatpush2.bf16.msra.mxu0 %v431
      %953 = vmatprep.subr.bf16.mxu0 0
      %954 = vmatpush2.bf16.msra.mxu0 %v430
      %955 = vmatprep.subr.bf16.mxu0 0
      %956 = vmatpush2.bf16.msra.mxu0 %v429
      %957 = vmatprep.subr.bf16.mxu0 0
      %958 = vmatpush2.bf16.msra.mxu0 %v428
      %959 = vmatprep.mubr.bf16.mxu0 %v912
      %960 = vmatmul.mubr.bf16.gmra.mxu0 %v911
      %v961 = vpop.f32.mrf.mxu0
      %v962 = vadd.f32 %v728, %v961
      %v963 = vpop.f32.mrf.mxu0
      %v964 = vpop.f32.mrf.mxu0
      %v965 = vadd.f32 %v733, %v964
      %v966 = vpop.f32.mrf.mxu0
      %967 = vmatprep.mubr.bf16.mxu0 %v914
      %968 = vmatmul.mubr.bf16.gmra.mxu0 %v913
      %v969 = vpop.f32.mrf.mxu0
      %v970 = vadd.f32 %v738, %v969
      %v971 = vpop.f32.mrf.mxu0
      %v972 = vpop.f32.mrf.mxu0
      %v973 = vadd.f32 %v743, %v972
      %v974 = vpop.f32.mrf.mxu0
      %975 = vmatprep.mubr.bf16.mxu0 %v916
      %976 = vmatmul.mubr.bf16.gmra.mxu0 %v915
      %v977 = vpop.f32.mrf.mxu0
      %v978 = vadd.f32 %v748, %v977
      %v979 = vpop.f32.mrf.mxu0
      %v980 = vpop.f32.mrf.mxu0
      %v981 = vadd.f32 %v753, %v980
      %v982 = vpop.f32.mrf.mxu0
      %983 = vmatprep.mubr.bf16.mxu0 %v918
      %984 = vmatmul.mubr.bf16.gmra.mxu0 %v917
      %v985 = vpop.f32.mrf.mxu0
      %v986 = vadd.f32 %v758, %v985
      %v987 = vpop.f32.mrf.mxu0
      %v988 = vpop.f32.mrf.mxu0
      %v989 = vadd.f32 %v763, %v988
      %v990 = vpop.f32.mrf.mxu0
      %991 = vdwg.mxu0
      %v992 = vmax.f32 %v962, 0.0
      %v993 = vmax.f32 %v965, 0.0
      %v994 = vmax.f32 %v970, 0.0
      %v995 = vmax.f32 %v973, 0.0
      %v996 = vmax.f32 %v978, 0.0
      %v997 = vmax.f32 %v981, 0.0
      %v998 = vmax.f32 %v986, 0.0
      %v999 = vmax.f32 %v989, 0.0
      %s1000 = scalar_lea.vmem %s1, 128
      %v1001 = vld [vmem:[%s1000] sm:$0xff]
      %v1002 = vld [vmem:[%s1000 + $0x8] sm:$0xff]
      %v1003 = vld [vmem:[%s1000 + $0x10] sm:$0xff]
      %v1004 = vld [vmem:[%s1000 + $0x18] sm:$0xff]
      %v1005 = vld [vmem:[%s1000 + $0x20] sm:$0xff]
      %v1006 = vld [vmem:[%s1000 + $0x28] sm:$0xff]
      %v1007 = vld [vmem:[%s1000 + $0x30] sm:$0xff]
      %v1008 = vld [vmem:[%s1000 + $0x38] sm:$0xff]
      %v1017 = vunpack.c.l.b16 %v1001
      %v1018 = vunpack.c.h.b16 %v1001
      %v1019 = vunpack.c.l.b16 %v1002
      %v1020 = vunpack.c.h.b16 %v1002
      %v1021 = vunpack.c.l.b16 %v1003
      %v1022 = vunpack.c.h.b16 %v1003
      %v1023 = vunpack.c.l.b16 %v1004
      %v1024 = vunpack.c.h.b16 %v1004
      %v1025 = vunpack.c.l.b16 %v1005
      %v1026 = vunpack.c.h.b16 %v1005
      %v1027 = vunpack.c.l.b16 %v1006
      %v1028 = vunpack.c.h.b16 %v1006
      %v1029 = vunpack.c.l.b16 %v1007
      %v1030 = vunpack.c.h.b16 %v1007
      %v1031 = vunpack.c.l.b16 %v1008
      %v1032 = vunpack.c.h.b16 %v1008
      %v1033 = vpack.c.b16 %v1019, %v1017
      %v1034 = vpack.c.b16 %v1020, %v1018
      %v1035 = vpack.c.b16 %v1023, %v1021
      %v1036 = vpack.c.b16 %v1024, %v1022
      %v1037 = vpack.c.b16 %v1027, %v1025
      %v1038 = vpack.c.b16 %v1028, %v1026
      %v1039 = vpack.c.b16 %v1031, %v1029
      %v1040 = vpack.c.b16 %v1032, %v1030
      %1049 = vmatprep.subr.bf16.mxu0 0
      %1050 = vmatpush1.bf16.msra.mxu0 %v431
      %1051 = vmatprep.subr.bf16.mxu0 0
      %1052 = vmatpush1.bf16.msra.mxu0 %v430
      %1053 = vmatprep.subr.bf16.mxu0 0
      %1054 = vmatpush1.bf16.msra.mxu0 %v429
      %1055 = vmatprep.subr.bf16.mxu0 0
      %1056 = vmatpush1.bf16.msra.mxu0 %v428
      %1057 = vmatprep.subr.bf16.mxu0 0
      %1058 = vmatpush1.bf16.msra.mxu0 %v568
      %1059 = vmatprep.subr.bf16.mxu0 0
      %1060 = vmatpush1.bf16.msra.mxu0 %v567
      %1061 = vmatprep.subr.bf16.mxu0 0
      %1062 = vmatpush1.bf16.msra.mxu0 %v566
      %1063 = vmatprep.subr.bf16.mxu0 0
      %1064 = vmatpush1.bf16.msra.mxu0 %v565
      %1065 = vmatprep.subr.bf16.mxu0 0
      %1066 = vmatpush2.bf16.msra.mxu0 %v670
      %1067 = vmatprep.subr.bf16.mxu0 0
      %1068 = vmatpush2.bf16.msra.mxu0 %v669
      %1069 = vmatprep.subr.bf16.mxu0 0
      %1070 = vmatpush2.bf16.msra.mxu0 %v668
      %1071 = vmatprep.subr.bf16.mxu0 0
      %1072 = vmatpush2.bf16.msra.mxu0 %v667
      %1073 = vmatprep.subr.bf16.mxu0 0
      %1074 = vmatpush2.bf16.msra.mxu0 %v636
      %1075 = vmatprep.subr.bf16.mxu0 0
      %1076 = vmatpush2.bf16.msra.mxu0 %v635
      %1077 = vmatprep.subr.bf16.mxu0 0
      %1078 = vmatpush2.bf16.msra.mxu0 %v634
      %1079 = vmatprep.subr.bf16.mxu0 0
      %1080 = vmatpush2.bf16.msra.mxu0 %v633
      %1081 = vmatprep.mubr.bf16.mxu0 %v1034
      %1082 = vmatmul.mubr.bf16.gmra.mxu0 %v1033
      %v1083 = vpop.f32.mrf.mxu0
      %v1084 = vadd.f32 %v728, %v1083
      %v1085 = vpop.f32.mrf.mxu0
      %v1086 = vpop.f32.mrf.mxu0
      %v1087 = vadd.f32 %v733, %v1086
      %v1088 = vpop.f32.mrf.mxu0
      %1089 = vmatprep.mubr.bf16.mxu0 %v1036
      %1090 = vmatmul.mubr.bf16.gmra.mxu0 %v1035
      %v1091 = vpop.f32.mrf.mxu0
      %v1092 = vadd.f32 %v738, %v1091
      %v1093 = vpop.f32.mrf.mxu0
      %v1094 = vpop.f32.mrf.mxu0
      %v1095 = vadd.f32 %v743, %v1094
      %v1096 = vpop.f32.mrf.mxu0
      %1097 = vmatprep.mubr.bf16.mxu0 %v1038
      %1098 = vmatmul.mubr.bf16.gmra.mxu0 %v1037
      %v1099 = vpop.f32.mrf.mxu0
      %v1100 = vadd.f32 %v748, %v1099
      %v1101 = vpop.f32.mrf.mxu0
      %v1102 = vpop.f32.mrf.mxu0
      %v1103 = vadd.f32 %v753, %v1102
      %v1104 = vpop.f32.mrf.mxu0
      %1105 = vmatprep.mubr.bf16.mxu0 %v1040
      %1106 = vmatmul.mubr.bf16.gmra.mxu0 %v1039
      %v1107 = vpop.f32.mrf.mxu0
      %v1108 = vadd.f32 %v758, %v1107
      %v1109 = vpop.f32.mrf.mxu0
      %v1110 = vpop.f32.mrf.mxu0
      %v1111 = vadd.f32 %v763, %v1110
      %v1112 = vpop.f32.mrf.mxu0
      %1113 = vdwg.mxu0
      %v1114 = vmax.f32 %v1084, 0.0
      %v1115 = vmax.f32 %v1087, 0.0
      %v1116 = vmax.f32 %v1092, 0.0
      %v1117 = vmax.f32 %v1095, 0.0
      %v1118 = vmax.f32 %v1100, 0.0
      %v1119 = vmax.f32 %v1103, 0.0
      %v1120 = vmax.f32 %v1108, 0.0
      %v1121 = vmax.f32 %v1111, 0.0
      %s1122 = scalar_lea.vmem %s1, 192
      %v1123 = vld [vmem:[%s1122] sm:$0xff]
      %v1124 = vld [vmem:[%s1122 + $0x8] sm:$0xff]
      %v1125 = vld [vmem:[%s1122 + $0x10] sm:$0xff]
      %v1126 = vld [vmem:[%s1122 + $0x18] sm:$0xff]
      %v1127 = vld [vmem:[%s1122 + $0x20] sm:$0xff]
      %v1128 = vld [vmem:[%s1122 + $0x28] sm:$0xff]
      %v1129 = vld [vmem:[%s1122 + $0x30] sm:$0xff]
      %v1130 = vld [vmem:[%s1122 + $0x38] sm:$0xff]
      %v1139 = vunpack.c.l.b16 %v1123
      %v1140 = vunpack.c.h.b16 %v1123
      %v1141 = vunpack.c.l.b16 %v1124
      %v1142 = vunpack.c.h.b16 %v1124
      %v1143 = vunpack.c.l.b16 %v1125
      %v1144 = vunpack.c.h.b16 %v1125
      %v1145 = vunpack.c.l.b16 %v1126
      %v1146 = vunpack.c.h.b16 %v1126
      %v1147 = vunpack.c.l.b16 %v1127
      %v1148 = vunpack.c.h.b16 %v1127
      %v1149 = vunpack.c.l.b16 %v1128
      %v1150 = vunpack.c.h.b16 %v1128
      %v1151 = vunpack.c.l.b16 %v1129
      %v1152 = vunpack.c.h.b16 %v1129
      %v1153 = vunpack.c.l.b16 %v1130
      %v1154 = vunpack.c.h.b16 %v1130
      %v1155 = vpack.c.b16 %v1141, %v1139
      %v1156 = vpack.c.b16 %v1142, %v1140
      %v1157 = vpack.c.b16 %v1145, %v1143
      %v1158 = vpack.c.b16 %v1146, %v1144
      %v1159 = vpack.c.b16 %v1149, %v1147
      %v1160 = vpack.c.b16 %v1150, %v1148
      %v1161 = vpack.c.b16 %v1153, %v1151
      %v1162 = vpack.c.b16 %v1154, %v1152
      %1171 = vmatprep.subr.bf16.mxu0 0
      %1172 = vmatpush1.bf16.msra.mxu0 %v602
      %1173 = vmatprep.subr.bf16.mxu0 0
      %1174 = vmatpush1.bf16.msra.mxu0 %v601
      %1175 = vmatprep.subr.bf16.mxu0 0
      %1176 = vmatpush1.bf16.msra.mxu0 %v600
      %1177 = vmatprep.subr.bf16.mxu0 0
      %1178 = vmatpush1.bf16.msra.mxu0 %v599
      %1179 = vmatprep.subr.bf16.mxu0 0
      %1180 = vmatpush1.bf16.msra.mxu0 %v431
      %1181 = vmatprep.subr.bf16.mxu0 0
      %1182 = vmatpush1.bf16.msra.mxu0 %v430
      %1183 = vmatprep.subr.bf16.mxu0 0
      %1184 = vmatpush1.bf16.msra.mxu0 %v429
      %1185 = vmatprep.subr.bf16.mxu0 0
      %1186 = vmatpush1.bf16.msra.mxu0 %v428
      %1187 = vmatprep.subr.bf16.mxu0 0
      %1188 = vmatpush2.bf16.msra.mxu0 %v704
      %1189 = vmatprep.subr.bf16.mxu0 0
      %1190 = vmatpush2.bf16.msra.mxu0 %v703
      %1191 = vmatprep.subr.bf16.mxu0 0
      %1192 = vmatpush2.bf16.msra.mxu0 %v702
      %1193 = vmatprep.subr.bf16.mxu0 0
      %1194 = vmatpush2.bf16.msra.mxu0 %v701
      %1195 = vmatprep.subr.bf16.mxu0 0
      %1196 = vmatpush2.bf16.msra.mxu0 %v670
      %1197 = vmatprep.subr.bf16.mxu0 0
      %1198 = vmatpush2.bf16.msra.mxu0 %v669
      %1199 = vmatprep.subr.bf16.mxu0 0
      %1200 = vmatpush2.bf16.msra.mxu0 %v668
      %1201 = vmatprep.subr.bf16.mxu0 0
      %1202 = vmatpush2.bf16.msra.mxu0 %v667
      %1203 = vmatprep.mubr.bf16.mxu0 %v1156
      %1204 = vmatmul.mubr.bf16.gmra.mxu0 %v1155
      %v1205 = vpop.f32.mrf.mxu0
      %v1206 = vadd.f32 %v728, %v1205
      %v1207 = vpop.f32.mrf.mxu0
      %v1208 = vpop.f32.mrf.mxu0
      %v1209 = vadd.f32 %v733, %v1208
      %v1210 = vpop.f32.mrf.mxu0
      %1211 = vmatprep.mubr.bf16.mxu0 %v1158
      %1212 = vmatmul.mubr.bf16.gmra.mxu0 %v1157
      %v1213 = vpop.f32.mrf.mxu0
      %v1214 = vadd.f32 %v738, %v1213
      %v1215 = vpop.f32.mrf.mxu0
      %v1216 = vpop.f32.mrf.mxu0
      %v1217 = vadd.f32 %v743, %v1216
      %v1218 = vpop.f32.mrf.mxu0
      %1219 = vmatprep.mubr.bf16.mxu0 %v1160
      %1220 = vmatmul.mubr.bf16.gmra.mxu0 %v1159
      %v1221 = vpop.f32.mrf.mxu0
      %v1222 = vadd.f32 %v748, %v1221
      %v1223 = vpop.f32.mrf.mxu0
      %v1224 = vpop.f32.mrf.mxu0
      %v1225 = vadd.f32 %v753, %v1224
      %v1226 = vpop.f32.mrf.mxu0
      %1227 = vmatprep.mubr.bf16.mxu0 %v1162
      %1228 = vmatmul.mubr.bf16.gmra.mxu0 %v1161
      %v1229 = vpop.f32.mrf.mxu0
      %v1230 = vadd.f32 %v758, %v1229
      %v1231 = vpop.f32.mrf.mxu0
      %v1232 = vpop.f32.mrf.mxu0
      %v1233 = vadd.f32 %v763, %v1232
      %v1234 = vpop.f32.mrf.mxu0
      %1235 = vdwg.mxu0
      %v1236 = vmax.f32 %v1206, 0.0
      %v1237 = vmax.f32 %v1209, 0.0
      %v1238 = vmax.f32 %v1214, 0.0
      %v1239 = vmax.f32 %v1217, 0.0
      %v1240 = vmax.f32 %v1222, 0.0
      %v1241 = vmax.f32 %v1225, 0.0
      %v1242 = vmax.f32 %v1230, 0.0
      %v1243 = vmax.f32 %v1233, 0.0
      %v1244 = vpack.c.bf16 %v871, %v870
      %v1245 = vpack.c.bf16 %v873, %v872
      %v1246 = vpack.c.bf16 %v875, %v874
      %v1247 = vpack.c.bf16 %v877, %v876
      %v1248 = vpack.c.bf16 %v993, %v992
      %v1249 = vpack.c.bf16 %v995, %v994
      %v1250 = vpack.c.bf16 %v997, %v996
      %v1251 = vpack.c.bf16 %v999, %v998
      %v1252 = vpack.c.bf16 %v1115, %v1114
      %v1253 = vpack.c.bf16 %v1117, %v1116
      %v1254 = vpack.c.bf16 %v1119, %v1118
      %v1255 = vpack.c.bf16 %v1121, %v1120
      %v1256 = vpack.c.bf16 %v1237, %v1236
      %v1257 = vpack.c.bf16 %v1239, %v1238
      %v1258 = vpack.c.bf16 %v1241, %v1240
      %v1259 = vpack.c.bf16 %v1243, %v1242
      %1264 = vrot.lane.b32.xlu0 %v1248, 16
      %v1265 = vpop.permute.xlu0 %1264
      %1266 = vrot.lane.b32.xlu0 %v1249, 16
      %v1267 = vpop.permute.xlu0 %1266
      %1268 = vrot.lane.b32.xlu0 %v1250, 16
      %v1269 = vpop.permute.xlu0 %1268
      %1270 = vrot.lane.b32.xlu0 %v1251, 16
      %v1271 = vpop.permute.xlu0 %1270
      %1276 = vrot.lane.b32.xlu0 %v1252, 32
      %v1277 = vpop.permute.xlu0 %1276
      %1278 = vrot.lane.b32.xlu0 %v1253, 32
      %v1279 = vpop.permute.xlu0 %1278
      %1280 = vrot.lane.b32.xlu0 %v1254, 32
      %v1281 = vpop.permute.xlu0 %1280
      %1282 = vrot.lane.b32.xlu0 %v1255, 32
      %v1283 = vpop.permute.xlu0 %1282
      %1288 = vrot.lane.b32.xlu0 %v1256, 48
      %v1289 = vpop.permute.xlu0 %1288
      %1290 = vrot.lane.b32.xlu0 %v1257, 48
      %v1291 = vpop.permute.xlu0 %1290
      %1292 = vrot.lane.b32.xlu0 %v1258, 48
      %v1293 = vpop.permute.xlu0 %1292
      %1294 = vrot.lane.b32.xlu0 %v1259, 48
      %v1295 = vpop.permute.xlu0 %1294
      %vm1296 = vcmask 130048
      %v1299 = vsel %vm1296, %v1244, %v1265
      %v1302 = vsel %vm1296, %v1245, %v1267
      %v1305 = vsel %vm1296, %v1246, %v1269
      %v1308 = vsel %vm1296, %v1247, %v1271
      %vm1309 = vcmask 261120
      %v1311 = vsel %vm1309, %v1299, %v1277
      %v1313 = vsel %vm1309, %v1302, %v1279
      %v1315 = vsel %vm1309, %v1305, %v1281
      %v1317 = vsel %vm1309, %v1308, %v1283
      %vm1318 = vcmask 392192
      %v1320 = vsel %vm1318, %v1311, %v1289
      %v1322 = vsel %vm1318, %v1313, %v1291
      %v1324 = vsel %vm1318, %v1315, %v1293
      %v1326 = vsel %vm1318, %v1317, %v1295
      %v1327 = vld [vmem:[%s9] sm:$0xf]
      %v1328 = vld [vmem:[%s9 + $0x4] sm:$0xf]
      %v1329 = vld [vmem:[%s9 + $0x8] sm:$0xf]
      %v1330 = vld [vmem:[%s9 + $0xc] sm:$0xf]
      %v1331 = vld [vmem:[%s9 + $0x10] sm:$0xf]
      %v1332 = vld [vmem:[%s9 + $0x14] sm:$0xf]
      %v1333 = vld [vmem:[%s9 + $0x18] sm:$0xf]
      %v1334 = vld [vmem:[%s9 + $0x1c] sm:$0xf]
      %v1343 = vunpack.c.l.b16 %v1327
      %v1344 = vunpack.c.l.b16 %v1328
      %v1345 = vunpack.c.l.b16 %v1329
      %v1346 = vunpack.c.l.b16 %v1330
      %v1347 = vunpack.c.l.b16 %v1331
      %v1348 = vunpack.c.l.b16 %v1332
      %v1349 = vunpack.c.l.b16 %v1333
      %v1350 = vunpack.c.l.b16 %v1334
      %v1351 = vpack.c.b16 %v1344, %v1343
      %v1352 = vpack.c.b16 %v1346, %v1345
      %v1353 = vpack.c.b16 %v1348, %v1347
      %v1354 = vpack.c.b16 %v1350, %v1349
      %vm1359 = vcmask 523264
      %v1360 = vsel %vm1359, %v1320, 0
      %v1362 = vsel %vm1359, %v1322, 0
      %v1364 = vsel %vm1359, %v1324, 0
      %v1366 = vsel %vm1359, %v1326, 0
      %1368 = vmatprep.subr.bf16.mxu0 0
      %1369 = vmatpush1.bf16.msra.mxu0 0
      %1370 = vmatprep.subr.bf16.mxu0 0
      %1371 = vmatpush1.bf16.msra.mxu0 0
      %1372 = vmatprep.subr.bf16.mxu0 0
      %1373 = vmatpush1.bf16.msra.mxu0 0
      %1374 = vmatprep.subr.bf16.mxu0 0
      %1375 = vmatpush1.bf16.msra.mxu0 0
      %1376 = vmatprep.subr.bf16.mxu0 0
      %1377 = vmatpush1.bf16.msra.mxu0 %v1354
      %1378 = vmatprep.subr.bf16.mxu0 0
      %1379 = vmatpush1.bf16.msra.mxu0 %v1353
      %1380 = vmatprep.subr.bf16.mxu0 0
      %1381 = vmatpush1.bf16.msra.mxu0 %v1352
      %1382 = vmatprep.subr.bf16.mxu0 0
      %1383 = vmatpush1.bf16.msra.mxu0 %v1351
      %1384 = vmatprep.subr.bf16.mxu0 0
      %1385 = vmatpush2.bf16.msra.mxu0 0
      %1386 = vmatprep.subr.bf16.mxu0 0
      %1387 = vmatpush2.bf16.msra.mxu0 0
      %1388 = vmatprep.subr.bf16.mxu0 0
      %1389 = vmatpush2.bf16.msra.mxu0 0
      %1390 = vmatprep.subr.bf16.mxu0 0
      %1391 = vmatpush2.bf16.msra.mxu0 0
      %1392 = vmatprep.subr.bf16.mxu0 0
      %1393 = vmatpush2.bf16.msra.mxu0 0
      %1394 = vmatprep.subr.bf16.mxu0 0
      %1395 = vmatpush2.bf16.msra.mxu0 0
      %1396 = vmatprep.subr.bf16.mxu0 0
      %1397 = vmatpush2.bf16.msra.mxu0 0
      %1398 = vmatprep.subr.bf16.mxu0 0
      %1399 = vmatpush2.bf16.msra.mxu0 0
      %1400 = vmatprep.mubr.bf16.mxu0 0
      %1401 = vmatmul.mubr.bf16.gmra.mxu0 %v1360
      %v1402 = vpop.f32.mrf.mxu0
      %v1403 = vadd.f32 0.0, %v1402
      %v1404 = vpop.f32.mrf.mxu0
      %v1405 = vpop.f32.mrf.mxu0
      %v1406 = vadd.f32 0.0, %v1405
      %v1407 = vpop.f32.mrf.mxu0
      %1408 = vmatprep.mubr.bf16.mxu0 0
      %1409 = vmatmul.mubr.bf16.gmra.mxu0 %v1362
      %v1410 = vpop.f32.mrf.mxu0
      %v1411 = vadd.f32 0.0, %v1410
      %v1412 = vpop.f32.mrf.mxu0
      %v1413 = vpop.f32.mrf.mxu0
      %v1414 = vadd.f32 0.0, %v1413
      %v1415 = vpop.f32.mrf.mxu0
      %1416 = vmatprep.mubr.bf16.mxu0 0
      %1417 = vmatmul.mubr.bf16.gmra.mxu0 %v1364
      %v1418 = vpop.f32.mrf.mxu0
      %v1419 = vadd.f32 0.0, %v1418
      %v1420 = vpop.f32.mrf.mxu0
      %v1421 = vpop.f32.mrf.mxu0
      %v1422 = vadd.f32 0.0, %v1421
      %v1423 = vpop.f32.mrf.mxu0
      %1424 = vmatprep.mubr.bf16.mxu0 0
      %1425 = vmatmul.mubr.bf16.gmra.mxu0 %v1366
      %v1426 = vpop.f32.mrf.mxu0
      %v1427 = vadd.f32 0.0, %v1426
      %v1428 = vpop.f32.mrf.mxu0
      %v1429 = vpop.f32.mrf.mxu0
      %v1430 = vadd.f32 0.0, %v1429
      %v1431 = vpop.f32.mrf.mxu0
      %1432 = vdwg.mxu0
      %v1433 = vpack.c.bf16 %v1406, %v1403
      %v1434 = vpack.c.bf16 %v1414, %v1411
      %v1435 = vpack.c.bf16 %v1422, %v1419
      %v1436 = vpack.c.bf16 %v1430, %v1427
      %v1437 = vand.u32 %v401, 7
      %v1438 = vshra.s32 %v401, 3
      %vm1439 = vcmp.ge.s32.totalorder %v1438, 1
      %vm1440 = vcmp.ge.s32.totalorder %v1437, 1
      %vm1441 = vmand %vm1439, %vm1440
      %vm1442 = vcmp.lt.s32.totalorder %v1437, 7
      %vm1443 = vmand %vm1439, %vm1442
      %vm1444 = vcmp.lt.s32.totalorder %v1438, 7
      %vm1445 = vmand %vm1444, %vm1440
      %vm1446 = vmand %vm1444, %vm1442
      %1451 = vrot.lane.b32.xlu0 %v1433, 9
      %v1452 = vpop.permute.xlu0 %1451
      %1453 = vrot.lane.b32.xlu0 %v1434, 9
      %v1454 = vpop.permute.xlu0 %1453
      %1455 = vrot.lane.b32.xlu0 %v1435, 9
      %v1456 = vpop.permute.xlu0 %1455
      %1457 = vrot.lane.b32.xlu0 %v1436, 9
      %v1458 = vpop.permute.xlu0 %1457
      %vm1459 = vcmask 72704
      %v1461 = vsel %vm1459, 0, %v1452
      %v1464 = vsel %vm1459, 0, %v1454
      %v1467 = vsel %vm1459, 0, %v1456
      %v1470 = vsel %vm1459, 0, %v1458
      %v1472 = vsel %vm1441, 1, 0
      %vm1473 = vcmp.eq.s32.totalorder %v1472, 1
      %vm1474 = vmpackc.low %vm1473, %vm1473
      %v1475 = vsel %vm1474, 65537, 0
      %v1476 = vlaneseq
      %v1477 = vshrl.u32 %v1476, 7
      %v1478 = vsub.s32 0, %v1477
      %v1479 = vrot.slane %v1475, %v1478
      %vm1480 = vcmp.ne.s16.totalorder %v1479, 0
      %v1481 = vsel %vm1480, %v1461, 0
      %v1482 = vsel %vm1480, %v1464, 0
      %v1483 = vsel %vm1480, %v1467, 0
      %v1484 = vsel %vm1480, %v1470, 0
      %1485 = vrot.lane.b32.xlu0 %v1433, 8
      %v1486 = vpop.permute.xlu0 %1485
      %1487 = vrot.lane.b32.xlu0 %v1434, 8
      %v1488 = vpop.permute.xlu0 %1487
      %1489 = vrot.lane.b32.xlu0 %v1435, 8
      %v1490 = vpop.permute.xlu0 %1489
      %1491 = vrot.lane.b32.xlu0 %v1436, 8
      %v1492 = vpop.permute.xlu0 %1491
      %vm1493 = vcmask 64512
      %v1495 = vsel %vm1493, 0, %v1486
      %v1498 = vsel %vm1493, 0, %v1488
      %v1501 = vsel %vm1493, 0, %v1490
      %v1504 = vsel %vm1493, 0, %v1492
      %v1506 = vsel %vm1439, 1, 0
      %vm1507 = vcmp.eq.s32.totalorder %v1506, 1
      %vm1508 = vmpackc.low %vm1507, %vm1507
      %v1509 = vsel %vm1508, 65537, 0
      %v1510 = vlaneseq
      %v1511 = vshrl.u32 %v1510, 7
      %v1512 = vsub.s32 0, %v1511
      %v1513 = vrot.slane %v1509, %v1512
      %vm1514 = vcmp.ne.s16.totalorder %v1513, 0
      %v1515 = vsel %vm1514, %v1495, 0
      %v1516 = vsel %vm1514, %v1498, 0
      %v1517 = vsel %vm1514, %v1501, 0
      %v1518 = vsel %vm1514, %v1504, 0
      %1519 = vrot.lane.b32.xlu0 %v1433, 7
      %v1520 = vpop.permute.xlu0 %1519
      %1521 = vrot.lane.b32.xlu0 %v1434, 7
      %v1522 = vpop.permute.xlu0 %1521
      %1523 = vrot.lane.b32.xlu0 %v1435, 7
      %v1524 = vpop.permute.xlu0 %1523
      %1525 = vrot.lane.b32.xlu0 %v1436, 7
      %v1526 = vpop.permute.xlu0 %1525
      %vm1527 = vcmask 56320
      %v1529 = vsel %vm1527, 0, %v1520
      %v1532 = vsel %vm1527, 0, %v1522
      %v1535 = vsel %vm1527, 0, %v1524
      %v1538 = vsel %vm1527, 0, %v1526
      %v1540 = vsel %vm1443, 1, 0
      %vm1541 = vcmp.eq.s32.totalorder %v1540, 1
      %vm1542 = vmpackc.low %vm1541, %vm1541
      %v1543 = vsel %vm1542, 65537, 0
      %v1544 = vlaneseq
      %v1545 = vshrl.u32 %v1544, 7
      %v1546 = vsub.s32 0, %v1545
      %v1547 = vrot.slane %v1543, %v1546
      %vm1548 = vcmp.ne.s16.totalorder %v1547, 0
      %v1549 = vsel %vm1548, %v1529, 0
      %v1550 = vsel %vm1548, %v1532, 0
      %v1551 = vsel %vm1548, %v1535, 0
      %v1552 = vsel %vm1548, %v1538, 0
      %1553 = vrot.lane.b32.xlu0 %v1433, 1
      %v1554 = vpop.permute.xlu0 %1553
      %1555 = vrot.lane.b32.xlu0 %v1434, 1
      %v1556 = vpop.permute.xlu0 %1555
      %1557 = vrot.lane.b32.xlu0 %v1435, 1
      %v1558 = vpop.permute.xlu0 %1557
      %1559 = vrot.lane.b32.xlu0 %v1436, 1
      %v1560 = vpop.permute.xlu0 %1559
      %v1562 = vsel %vm543, 0, %v1554
      %v1565 = vsel %vm543, 0, %v1556
      %v1568 = vsel %vm543, 0, %v1558
      %v1571 = vsel %vm543, 0, %v1560
      %v1573 = vsel %vm1440, 1, 0
      %vm1574 = vcmp.eq.s32.totalorder %v1573, 1
      %vm1575 = vmpackc.low %vm1574, %vm1574
      %v1576 = vsel %vm1575, 65537, 0
      %v1577 = vlaneseq
      %v1578 = vshrl.u32 %v1577, 7
      %v1579 = vsub.s32 0, %v1578
      %v1580 = vrot.slane %v1576, %v1579
      %vm1581 = vcmp.ne.s16.totalorder %v1580, 0
      %v1582 = vsel %vm1581, %v1562, 0
      %v1583 = vsel %vm1581, %v1565, 0
      %v1584 = vsel %vm1581, %v1568, 0
      %v1585 = vsel %vm1581, %v1571, 0
      %1586 = vrot.lane.b32.xlu0 %v1433, 127
      %v1587 = vpop.permute.xlu0 %1586
      %1588 = vrot.lane.b32.xlu0 %v1434, 127
      %v1589 = vpop.permute.xlu0 %1588
      %1590 = vrot.lane.b32.xlu0 %v1435, 127
      %v1591 = vpop.permute.xlu0 %1590
      %1592 = vrot.lane.b32.xlu0 %v1436, 127
      %v1593 = vpop.permute.xlu0 %1592
      %vm1594 = vcmask 515072
      %v1596 = vsel %vm1594, %v1587, 0
      %v1599 = vsel %vm1594, %v1589, 0
      %v1602 = vsel %vm1594, %v1591, 0
      %v1605 = vsel %vm1594, %v1593, 0
      %v1607 = vsel %vm1442, 1, 0
      %vm1608 = vcmp.eq.s32.totalorder %v1607, 1
      %vm1609 = vmpackc.low %vm1608, %vm1608
      %v1610 = vsel %vm1609, 65537, 0
      %v1611 = vlaneseq
      %v1612 = vshrl.u32 %v1611, 7
      %v1613 = vsub.s32 0, %v1612
      %v1614 = vrot.slane %v1610, %v1613
      %vm1615 = vcmp.ne.s16.totalorder %v1614, 0
      %v1616 = vsel %vm1615, %v1596, 0
      %v1617 = vsel %vm1615, %v1599, 0
      %v1618 = vsel %vm1615, %v1602, 0
      %v1619 = vsel %vm1615, %v1605, 0
      %1620 = vrot.lane.b32.xlu0 %v1433, 121
      %v1621 = vpop.permute.xlu0 %1620
      %1622 = vrot.lane.b32.xlu0 %v1434, 121
      %v1623 = vpop.permute.xlu0 %1622
      %1624 = vrot.lane.b32.xlu0 %v1435, 121
      %v1625 = vpop.permute.xlu0 %1624
      %1626 = vrot.lane.b32.xlu0 %v1436, 121
      %v1627 = vpop.permute.xlu0 %1626
      %vm1628 = vcmask 465920
      %v1630 = vsel %vm1628, %v1621, 0
      %v1633 = vsel %vm1628, %v1623, 0
      %v1636 = vsel %vm1628, %v1625, 0
      %v1639 = vsel %vm1628, %v1627, 0
      %v1641 = vsel %vm1445, 1, 0
      %vm1642 = vcmp.eq.s32.totalorder %v1641, 1
      %vm1643 = vmpackc.low %vm1642, %vm1642
      %v1644 = vsel %vm1643, 65537, 0
      %v1645 = vlaneseq
      %v1646 = vshrl.u32 %v1645, 7
      %v1647 = vsub.s32 0, %v1646
      %v1648 = vrot.slane %v1644, %v1647
      %vm1649 = vcmp.ne.s16.totalorder %v1648, 0
      %v1650 = vsel %vm1649, %v1630, 0
      %v1651 = vsel %vm1649, %v1633, 0
      %v1652 = vsel %vm1649, %v1636, 0
      %v1653 = vsel %vm1649, %v1639, 0
      %1654 = vrot.lane.b32.xlu0 %v1433, 120
      %v1655 = vpop.permute.xlu0 %1654
      %1656 = vrot.lane.b32.xlu0 %v1434, 120
      %v1657 = vpop.permute.xlu0 %1656
      %1658 = vrot.lane.b32.xlu0 %v1435, 120
      %v1659 = vpop.permute.xlu0 %1658
      %1660 = vrot.lane.b32.xlu0 %v1436, 120
      %v1661 = vpop.permute.xlu0 %1660
      %vm1662 = vcmask 457728
      %v1664 = vsel %vm1662, %v1655, 0
      %v1667 = vsel %vm1662, %v1657, 0
      %v1670 = vsel %vm1662, %v1659, 0
      %v1673 = vsel %vm1662, %v1661, 0
      %v1675 = vsel %vm1444, 1, 0
      %vm1676 = vcmp.eq.s32.totalorder %v1675, 1
      %vm1677 = vmpackc.low %vm1676, %vm1676
      %v1678 = vsel %vm1677, 65537, 0
      %v1679 = vlaneseq
      %v1680 = vshrl.u32 %v1679, 7
      %v1681 = vsub.s32 0, %v1680
      %v1682 = vrot.slane %v1678, %v1681
      %vm1683 = vcmp.ne.s16.totalorder %v1682, 0
      %v1684 = vsel %vm1683, %v1664, 0
      %v1685 = vsel %vm1683, %v1667, 0
      %v1686 = vsel %vm1683, %v1670, 0
      %v1687 = vsel %vm1683, %v1673, 0
      %1688 = vrot.lane.b32.xlu0 %v1433, 119
      %v1689 = vpop.permute.xlu0 %1688
      %1690 = vrot.lane.b32.xlu0 %v1434, 119
      %v1691 = vpop.permute.xlu0 %1690
      %1692 = vrot.lane.b32.xlu0 %v1435, 119
      %v1693 = vpop.permute.xlu0 %1692
      %1694 = vrot.lane.b32.xlu0 %v1436, 119
      %v1695 = vpop.permute.xlu0 %1694
      %vm1696 = vcmask 449536
      %v1698 = vsel %vm1696, %v1689, 0
      %v1701 = vsel %vm1696, %v1691, 0
      %v1704 = vsel %vm1696, %v1693, 0
      %v1707 = vsel %vm1696, %v1695, 0
      %v1709 = vsel %vm1446, 1, 0
      %vm1710 = vcmp.eq.s32.totalorder %v1709, 1
      %vm1711 = vmpackc.low %vm1710, %vm1710
      %v1712 = vsel %vm1711, 65537, 0
      %v1713 = vlaneseq
      %v1714 = vshrl.u32 %v1713, 7
      %v1715 = vsub.s32 0, %v1714
      %v1716 = vrot.slane %v1712, %v1715
      %vm1717 = vcmp.ne.s16.totalorder %v1716, 0
      %v1718 = vsel %vm1717, %v1698, 0
      %v1719 = vsel %vm1717, %v1701, 0
      %v1720 = vsel %vm1717, %v1704, 0
      %v1721 = vsel %vm1717, %v1707, 0
      %v1722 = vld [vmem:[%s3] sm:$0xff]
      %v1723 = vld [vmem:[%s3 + $0x8] sm:$0xff]
      %v1724 = vld [vmem:[%s3 + $0x10] sm:$0xff]
      %v1725 = vld [vmem:[%s3 + $0x18] sm:$0xff]
      %v1726 = vld [vmem:[%s4] sm:$0xff]
      %v1727 = vld [vmem:[%s4 + $0x8] sm:$0xff]
      %v1728 = vld [vmem:[%s4 + $0x10] sm:$0xff]
      %v1729 = vld [vmem:[%s4 + $0x18] sm:$0xff]
      %1731 = vset.pattern.permute.xlu0 0
      %1732 = vperm.xlu0 %1731, %v1726
      %v1733 = vpop.permute.xlu0 %1732
      %1736 = vset.pattern.permute.xlu0 0
      %1737 = vperm.xlu0 %1736, %v1727
      %v1738 = vpop.permute.xlu0 %1737
      %1741 = vset.pattern.permute.xlu0 0
      %1742 = vperm.xlu0 %1741, %v1728
      %v1743 = vpop.permute.xlu0 %1742
      %1746 = vset.pattern.permute.xlu0 0
      %1747 = vperm.xlu0 %1746, %v1729
      %v1748 = vpop.permute.xlu0 %1747
      %v1754 = vunpack.c.l.b16 %v1722
      %v1755 = vunpack.c.h.b16 %v1722
      %v1756 = vunpack.c.l.b16 %v1723
      %v1757 = vunpack.c.h.b16 %v1723
      %v1758 = vunpack.c.l.b16 %v1724
      %v1759 = vunpack.c.h.b16 %v1724
      %v1760 = vunpack.c.l.b16 %v1725
      %v1761 = vunpack.c.h.b16 %v1725
      %v1762 = vpack.c.b16 %v1756, %v1754
      %v1763 = vpack.c.b16 %v1757, %v1755
      %v1764 = vpack.c.b16 %v1760, %v1758
      %v1765 = vpack.c.b16 %v1761, %v1759
      %1770 = vmatprep.subr.bf16.mxu0 0
      %1771 = vmatpush1.bf16.msra.mxu0 %v1518
      %1772 = vmatprep.subr.bf16.mxu0 0
      %1773 = vmatpush1.bf16.msra.mxu0 %v1517
      %1774 = vmatprep.subr.bf16.mxu0 0
      %1775 = vmatpush1.bf16.msra.mxu0 %v1516
      %1776 = vmatprep.subr.bf16.mxu0 0
      %1777 = vmatpush1.bf16.msra.mxu0 %v1515
      %1778 = vmatprep.subr.bf16.mxu0 0
      %1779 = vmatpush1.bf16.msra.mxu0 %v1484
      %1780 = vmatprep.subr.bf16.mxu0 0
      %1781 = vmatpush1.bf16.msra.mxu0 %v1483
      %1782 = vmatprep.subr.bf16.mxu0 0
      %1783 = vmatpush1.bf16.msra.mxu0 %v1482
      %1784 = vmatprep.subr.bf16.mxu0 0
      %1785 = vmatpush1.bf16.msra.mxu0 %v1481
      %1786 = vmatprep.subr.bf16.mxu0 0
      %1787 = vmatpush2.bf16.msra.mxu0 %v1436
      %1788 = vmatprep.subr.bf16.mxu0 0
      %1789 = vmatpush2.bf16.msra.mxu0 %v1435
      %1790 = vmatprep.subr.bf16.mxu0 0
      %1791 = vmatpush2.bf16.msra.mxu0 %v1434
      %1792 = vmatprep.subr.bf16.mxu0 0
      %1793 = vmatpush2.bf16.msra.mxu0 %v1433
      %1794 = vmatprep.subr.bf16.mxu0 0
      %1795 = vmatpush2.bf16.msra.mxu0 %v1585
      %1796 = vmatprep.subr.bf16.mxu0 0
      %1797 = vmatpush2.bf16.msra.mxu0 %v1584
      %1798 = vmatprep.subr.bf16.mxu0 0
      %1799 = vmatpush2.bf16.msra.mxu0 %v1583
      %1800 = vmatprep.subr.bf16.mxu0 0
      %1801 = vmatpush2.bf16.msra.mxu0 %v1582
      %1802 = vmatprep.mubr.bf16.mxu0 %v1763
      %1803 = vmatmul.mubr.bf16.gmra.mxu0 %v1762
      %v1804 = vpop.f32.mrf.mxu0
      %v1805 = vadd.f32 %v1733, %v1804
      %v1806 = vpop.f32.mrf.mxu0
      %v1807 = vpop.f32.mrf.mxu0
      %v1808 = vadd.f32 %v1738, %v1807
      %v1809 = vpop.f32.mrf.mxu0
      %1810 = vmatprep.mubr.bf16.mxu0 %v1765
      %1811 = vmatmul.mubr.bf16.gmra.mxu0 %v1764
      %v1812 = vpop.f32.mrf.mxu0
      %v1813 = vadd.f32 %v1743, %v1812
      %v1814 = vpop.f32.mrf.mxu0
      %v1815 = vpop.f32.mrf.mxu0
      %v1816 = vadd.f32 %v1748, %v1815
      %v1817 = vpop.f32.mrf.mxu0
      %1818 = vdwg.mxu0
      %v1819 = vmax.f32 %v1805, 0.0
      %v1820 = vmax.f32 %v1808, 0.0
      %v1821 = vmax.f32 %v1813, 0.0
      %v1822 = vmax.f32 %v1816, 0.0
      %s1823 = scalar_lea.vmem %s3, 32
      %v1824 = vld [vmem:[%s1823] sm:$0xff]
      %v1825 = vld [vmem:[%s1823 + $0x8] sm:$0xff]
      %v1826 = vld [vmem:[%s1823 + $0x10] sm:$0xff]
      %v1827 = vld [vmem:[%s1823 + $0x18] sm:$0xff]
      %v1832 = vunpack.c.l.b16 %v1824
      %v1833 = vunpack.c.h.b16 %v1824
      %v1834 = vunpack.c.l.b16 %v1825
      %v1835 = vunpack.c.h.b16 %v1825
      %v1836 = vunpack.c.l.b16 %v1826
      %v1837 = vunpack.c.h.b16 %v1826
      %v1838 = vunpack.c.l.b16 %v1827
      %v1839 = vunpack.c.h.b16 %v1827
      %v1840 = vpack.c.b16 %v1834, %v1832
      %v1841 = vpack.c.b16 %v1835, %v1833
      %v1842 = vpack.c.b16 %v1838, %v1836
      %v1843 = vpack.c.b16 %v1839, %v1837
      %1848 = vmatprep.subr.bf16.mxu0 0
      %1849 = vmatpush1.bf16.msra.mxu0 %v1552
      %1850 = vmatprep.subr.bf16.mxu0 0
      %1851 = vmatpush1.bf16.msra.mxu0 %v1551
      %1852 = vmatprep.subr.bf16.mxu0 0
      %1853 = vmatpush1.bf16.msra.mxu0 %v1550
      %1854 = vmatprep.subr.bf16.mxu0 0
      %1855 = vmatpush1.bf16.msra.mxu0 %v1549
      %1856 = vmatprep.subr.bf16.mxu0 0
      %1857 = vmatpush1.bf16.msra.mxu0 %v1518
      %1858 = vmatprep.subr.bf16.mxu0 0
      %1859 = vmatpush1.bf16.msra.mxu0 %v1517
      %1860 = vmatprep.subr.bf16.mxu0 0
      %1861 = vmatpush1.bf16.msra.mxu0 %v1516
      %1862 = vmatprep.subr.bf16.mxu0 0
      %1863 = vmatpush1.bf16.msra.mxu0 %v1515
      %1864 = vmatprep.subr.bf16.mxu0 0
      %1865 = vmatpush2.bf16.msra.mxu0 %v1619
      %1866 = vmatprep.subr.bf16.mxu0 0
      %1867 = vmatpush2.bf16.msra.mxu0 %v1618
      %1868 = vmatprep.subr.bf16.mxu0 0
      %1869 = vmatpush2.bf16.msra.mxu0 %v1617
      %1870 = vmatprep.subr.bf16.mxu0 0
      %1871 = vmatpush2.bf16.msra.mxu0 %v1616
      %1872 = vmatprep.subr.bf16.mxu0 0
      %1873 = vmatpush2.bf16.msra.mxu0 %v1436
      %1874 = vmatprep.subr.bf16.mxu0 0
      %1875 = vmatpush2.bf16.msra.mxu0 %v1435
      %1876 = vmatprep.subr.bf16.mxu0 0
      %1877 = vmatpush2.bf16.msra.mxu0 %v1434
      %1878 = vmatprep.subr.bf16.mxu0 0
      %1879 = vmatpush2.bf16.msra.mxu0 %v1433
      %1880 = vmatprep.mubr.bf16.mxu0 %v1841
      %1881 = vmatmul.mubr.bf16.gmra.mxu0 %v1840
      %v1882 = vpop.f32.mrf.mxu0
      %v1883 = vadd.f32 %v1733, %v1882
      %v1884 = vpop.f32.mrf.mxu0
      %v1885 = vpop.f32.mrf.mxu0
      %v1886 = vadd.f32 %v1738, %v1885
      %v1887 = vpop.f32.mrf.mxu0
      %1888 = vmatprep.mubr.bf16.mxu0 %v1843
      %1889 = vmatmul.mubr.bf16.gmra.mxu0 %v1842
      %v1890 = vpop.f32.mrf.mxu0
      %v1891 = vadd.f32 %v1743, %v1890
      %v1892 = vpop.f32.mrf.mxu0
      %v1893 = vpop.f32.mrf.mxu0
      %v1894 = vadd.f32 %v1748, %v1893
      %v1895 = vpop.f32.mrf.mxu0
      %1896 = vdwg.mxu0
      %v1897 = vmax.f32 %v1883, 0.0
      %v1898 = vmax.f32 %v1886, 0.0
      %v1899 = vmax.f32 %v1891, 0.0
      %v1900 = vmax.f32 %v1894, 0.0
      %s1901 = scalar_lea.vmem %s3, 64
      %v1902 = vld [vmem:[%s1901] sm:$0xff]
      %v1903 = vld [vmem:[%s1901 + $0x8] sm:$0xff]
      %v1904 = vld [vmem:[%s1901 + $0x10] sm:$0xff]
      %v1905 = vld [vmem:[%s1901 + $0x18] sm:$0xff]
      %v1910 = vunpack.c.l.b16 %v1902
      %v1911 = vunpack.c.h.b16 %v1902
      %v1912 = vunpack.c.l.b16 %v1903
      %v1913 = vunpack.c.h.b16 %v1903
      %v1914 = vunpack.c.l.b16 %v1904
      %v1915 = vunpack.c.h.b16 %v1904
      %v1916 = vunpack.c.l.b16 %v1905
      %v1917 = vunpack.c.h.b16 %v1905
      %v1918 = vpack.c.b16 %v1912, %v1910
      %v1919 = vpack.c.b16 %v1913, %v1911
      %v1920 = vpack.c.b16 %v1916, %v1914
      %v1921 = vpack.c.b16 %v1917, %v1915
      %1926 = vmatprep.subr.bf16.mxu0 0
      %1927 = vmatpush1.bf16.msra.mxu0 %v1436
      %1928 = vmatprep.subr.bf16.mxu0 0
      %1929 = vmatpush1.bf16.msra.mxu0 %v1435
      %1930 = vmatprep.subr.bf16.mxu0 0
      %1931 = vmatpush1.bf16.msra.mxu0 %v1434
      %1932 = vmatprep.subr.bf16.mxu0 0
      %1933 = vmatpush1.bf16.msra.mxu0 %v1433
      %1934 = vmatprep.subr.bf16.mxu0 0
      %1935 = vmatpush1.bf16.msra.mxu0 %v1585
      %1936 = vmatprep.subr.bf16.mxu0 0
      %1937 = vmatpush1.bf16.msra.mxu0 %v1584
      %1938 = vmatprep.subr.bf16.mxu0 0
      %1939 = vmatpush1.bf16.msra.mxu0 %v1583
      %1940 = vmatprep.subr.bf16.mxu0 0
      %1941 = vmatpush1.bf16.msra.mxu0 %v1582
      %1942 = vmatprep.subr.bf16.mxu0 0
      %1943 = vmatpush2.bf16.msra.mxu0 %v1687
      %1944 = vmatprep.subr.bf16.mxu0 0
      %1945 = vmatpush2.bf16.msra.mxu0 %v1686
      %1946 = vmatprep.subr.bf16.mxu0 0
      %1947 = vmatpush2.bf16.msra.mxu0 %v1685
      %1948 = vmatprep.subr.bf16.mxu0 0
      %1949 = vmatpush2.bf16.msra.mxu0 %v1684
      %1950 = vmatprep.subr.bf16.mxu0 0
      %1951 = vmatpush2.bf16.msra.mxu0 %v1653
      %1952 = vmatprep.subr.bf16.mxu0 0
      %1953 = vmatpush2.bf16.msra.mxu0 %v1652
      %1954 = vmatprep.subr.bf16.mxu0 0
      %1955 = vmatpush2.bf16.msra.mxu0 %v1651
      %1956 = vmatprep.subr.bf16.mxu0 0
      %1957 = vmatpush2.bf16.msra.mxu0 %v1650
      %1958 = vmatprep.mubr.bf16.mxu0 %v1919
      %1959 = vmatmul.mubr.bf16.gmra.mxu0 %v1918
      %v1960 = vpop.f32.mrf.mxu0
      %v1961 = vadd.f32 %v1733, %v1960
      %v1962 = vpop.f32.mrf.mxu0
      %v1963 = vpop.f32.mrf.mxu0
      %v1964 = vadd.f32 %v1738, %v1963
      %v1965 = vpop.f32.mrf.mxu0
      %1966 = vmatprep.mubr.bf16.mxu0 %v1921
      %1967 = vmatmul.mubr.bf16.gmra.mxu0 %v1920
      %v1968 = vpop.f32.mrf.mxu0
      %v1969 = vadd.f32 %v1743, %v1968
      %v1970 = vpop.f32.mrf.mxu0
      %v1971 = vpop.f32.mrf.mxu0
      %v1972 = vadd.f32 %v1748, %v1971
      %v1973 = vpop.f32.mrf.mxu0
      %1974 = vdwg.mxu0
      %v1975 = vmax.f32 %v1961, 0.0
      %v1976 = vmax.f32 %v1964, 0.0
      %v1977 = vmax.f32 %v1969, 0.0
      %v1978 = vmax.f32 %v1972, 0.0
      %s1979 = scalar_lea.vmem %s3, 96
      %v1980 = vld [vmem:[%s1979] sm:$0xff]
      %v1981 = vld [vmem:[%s1979 + $0x8] sm:$0xff]
      %v1982 = vld [vmem:[%s1979 + $0x10] sm:$0xff]
      %v1983 = vld [vmem:[%s1979 + $0x18] sm:$0xff]
      %v1988 = vunpack.c.l.b16 %v1980
      %v1989 = vunpack.c.h.b16 %v1980
      %v1990 = vunpack.c.l.b16 %v1981
      %v1991 = vunpack.c.h.b16 %v1981
      %v1992 = vunpack.c.l.b16 %v1982
      %v1993 = vunpack.c.h.b16 %v1982
      %v1994 = vunpack.c.l.b16 %v1983
      %v1995 = vunpack.c.h.b16 %v1983
      %v1996 = vpack.c.b16 %v1990, %v1988
      %v1997 = vpack.c.b16 %v1991, %v1989
      %v1998 = vpack.c.b16 %v1994, %v1992
      %v1999 = vpack.c.b16 %v1995, %v1993
      %2004 = vmatprep.subr.bf16.mxu0 0
      %2005 = vmatpush1.bf16.msra.mxu0 %v1619
      %2006 = vmatprep.subr.bf16.mxu0 0
      %2007 = vmatpush1.bf16.msra.mxu0 %v1618
      %2008 = vmatprep.subr.bf16.mxu0 0
      %2009 = vmatpush1.bf16.msra.mxu0 %v1617
      %2010 = vmatprep.subr.bf16.mxu0 0
      %2011 = vmatpush1.bf16.msra.mxu0 %v1616
      %2012 = vmatprep.subr.bf16.mxu0 0
      %2013 = vmatpush1.bf16.msra.mxu0 %v1436
      %2014 = vmatprep.subr.bf16.mxu0 0
      %2015 = vmatpush1.bf16.msra.mxu0 %v1435
      %2016 = vmatprep.subr.bf16.mxu0 0
      %2017 = vmatpush1.bf16.msra.mxu0 %v1434
      %2018 = vmatprep.subr.bf16.mxu0 0
      %2019 = vmatpush1.bf16.msra.mxu0 %v1433
      %2020 = vmatprep.subr.bf16.mxu0 0
      %2021 = vmatpush2.bf16.msra.mxu0 %v1721
      %2022 = vmatprep.subr.bf16.mxu0 0
      %2023 = vmatpush2.bf16.msra.mxu0 %v1720
      %2024 = vmatprep.subr.bf16.mxu0 0
      %2025 = vmatpush2.bf16.msra.mxu0 %v1719
      %2026 = vmatprep.subr.bf16.mxu0 0
      %2027 = vmatpush2.bf16.msra.mxu0 %v1718
      %2028 = vmatprep.subr.bf16.mxu0 0
      %2029 = vmatpush2.bf16.msra.mxu0 %v1687
      %2030 = vmatprep.subr.bf16.mxu0 0
      %2031 = vmatpush2.bf16.msra.mxu0 %v1686
      %2032 = vmatprep.subr.bf16.mxu0 0
      %2033 = vmatpush2.bf16.msra.mxu0 %v1685
      %2034 = vmatprep.subr.bf16.mxu0 0
      %2035 = vmatpush2.bf16.msra.mxu0 %v1684
      %2036 = vmatprep.mubr.bf16.mxu0 %v1997
      %2037 = vmatmul.mubr.bf16.gmra.mxu0 %v1996
      %v2038 = vpop.f32.mrf.mxu0
      %v2039 = vadd.f32 %v1733, %v2038
      %v2040 = vpop.f32.mrf.mxu0
      %v2041 = vpop.f32.mrf.mxu0
      %v2042 = vadd.f32 %v1738, %v2041
      %v2043 = vpop.f32.mrf.mxu0
      %2044 = vmatprep.mubr.bf16.mxu0 %v1999
      %2045 = vmatmul.mubr.bf16.gmra.mxu0 %v1998
      %v2046 = vpop.f32.mrf.mxu0
      %v2047 = vadd.f32 %v1743, %v2046
      %v2048 = vpop.f32.mrf.mxu0
      %v2049 = vpop.f32.mrf.mxu0
      %v2050 = vadd.f32 %v1748, %v2049
      %v2051 = vpop.f32.mrf.mxu0
      %2052 = vdwg.mxu0
      %v2053 = vmax.f32 %v2039, 0.0
      %v2054 = vmax.f32 %v2042, 0.0
      %v2055 = vmax.f32 %v2047, 0.0
      %v2056 = vmax.f32 %v2050, 0.0
      %v2057 = vpack.c.bf16 %v1820, %v1819
      %v2058 = vpack.c.bf16 %v1822, %v1821
      %v2059 = vpack.c.bf16 %v1898, %v1897
      %v2060 = vpack.c.bf16 %v1900, %v1899
      %v2061 = vpack.c.bf16 %v1976, %v1975
      %v2062 = vpack.c.bf16 %v1978, %v1977
      %v2063 = vpack.c.bf16 %v2054, %v2053
      %v2064 = vpack.c.bf16 %v2056, %v2055
      %2067 = vrot.lane.b32.xlu0 %v2059, 64
      %v2068 = vpop.permute.xlu0 %2067
      %2069 = vrot.lane.b32.xlu0 %v2060, 64
      %v2070 = vpop.permute.xlu0 %2069
      %2073 = vrot.lane.b32.xlu0 %v2063, 64
      %v2074 = vpop.permute.xlu0 %2073
      %2075 = vrot.lane.b32.xlu0 %v2064, 64
      %v2076 = vpop.permute.xlu0 %2075
      %v2079 = vsel %vm1359, %v2057, %v2068
      %v2083 = vsel %vm1359, %v2058, %v2070
      %v2087 = vsel %vm1359, %v2061, %v2074
      %v2091 = vsel %vm1359, %v2062, %v2076
      %v2093 = vld [vmem:[%s10] sm:$0xff]
      %v2094 = vld [vmem:[%s10 + $0x8] sm:$0xff]
      %v2095 = vld [vmem:[%s10 + $0x10] sm:$0xff]
      %v2096 = vld [vmem:[%s10 + $0x18] sm:$0xff]
      %v2097 = vld [vmem:[%s10 + $0x20] sm:$0xff]
      %v2098 = vld [vmem:[%s10 + $0x28] sm:$0xff]
      %v2099 = vld [vmem:[%s10 + $0x30] sm:$0xff]
      %v2100 = vld [vmem:[%s10 + $0x38] sm:$0xff]
      %v2101 = vld [vmem:[%s10 + $0x40] sm:$0xff]
      %v2102 = vld [vmem:[%s10 + $0x48] sm:$0xff]
      %v2103 = vld [vmem:[%s10 + $0x50] sm:$0xff]
      %v2104 = vld [vmem:[%s10 + $0x58] sm:$0xff]
      %v2105 = vld [vmem:[%s10 + $0x60] sm:$0xff]
      %v2106 = vld [vmem:[%s10 + $0x68] sm:$0xff]
      %v2107 = vld [vmem:[%s10 + $0x70] sm:$0xff]
      %v2108 = vld [vmem:[%s10 + $0x78] sm:$0xff]
      %v2109 = vld [vmem:[%s10 + $0x80] sm:$0xff]
      %v2110 = vld [vmem:[%s10 + $0x88] sm:$0xff]
      %v2111 = vld [vmem:[%s10 + $0x90] sm:$0xff]
      %v2112 = vld [vmem:[%s10 + $0x98] sm:$0xff]
      %v2113 = vld [vmem:[%s10 + $0xa0] sm:$0xff]
      %v2114 = vld [vmem:[%s10 + $0xa8] sm:$0xff]
      %v2115 = vld [vmem:[%s10 + $0xb0] sm:$0xff]
      %v2116 = vld [vmem:[%s10 + $0xb8] sm:$0xff]
      %v2117 = vld [vmem:[%s10 + $0xc0] sm:$0xff]
      %v2118 = vld [vmem:[%s10 + $0xc8] sm:$0xff]
      %v2119 = vld [vmem:[%s10 + $0xd0] sm:$0xff]
      %v2120 = vld [vmem:[%s10 + $0xd8] sm:$0xff]
      %v2121 = vld [vmem:[%s10 + $0xe0] sm:$0xff]
      %v2122 = vld [vmem:[%s10 + $0xe8] sm:$0xff]
      %v2123 = vld [vmem:[%s10 + $0xf0] sm:$0xff]
      %v2124 = vld [vmem:[%s10 + $0xf8] sm:$0xff]
      %v2157 = vunpack.c.l.b16 %v2093
      %v2158 = vunpack.c.h.b16 %v2093
      %v2159 = vunpack.c.l.b16 %v2094
      %v2160 = vunpack.c.h.b16 %v2094
      %v2161 = vunpack.c.l.b16 %v2095
      %v2162 = vunpack.c.h.b16 %v2095
      %v2163 = vunpack.c.l.b16 %v2096
      %v2164 = vunpack.c.h.b16 %v2096
      %v2165 = vunpack.c.l.b16 %v2097
      %v2166 = vunpack.c.h.b16 %v2097
      %v2167 = vunpack.c.l.b16 %v2098
      %v2168 = vunpack.c.h.b16 %v2098
      %v2169 = vunpack.c.l.b16 %v2099
      %v2170 = vunpack.c.h.b16 %v2099
      %v2171 = vunpack.c.l.b16 %v2100
      %v2172 = vunpack.c.h.b16 %v2100
      %v2173 = vunpack.c.l.b16 %v2101
      %v2174 = vunpack.c.h.b16 %v2101
      %v2175 = vunpack.c.l.b16 %v2102
      %v2176 = vunpack.c.h.b16 %v2102
      %v2177 = vunpack.c.l.b16 %v2103
      %v2178 = vunpack.c.h.b16 %v2103
      %v2179 = vunpack.c.l.b16 %v2104
      %v2180 = vunpack.c.h.b16 %v2104
      %v2181 = vunpack.c.l.b16 %v2105
      %v2182 = vunpack.c.h.b16 %v2105
      %v2183 = vunpack.c.l.b16 %v2106
      %v2184 = vunpack.c.h.b16 %v2106
      %v2185 = vunpack.c.l.b16 %v2107
      %v2186 = vunpack.c.h.b16 %v2107
      %v2187 = vunpack.c.l.b16 %v2108
      %v2188 = vunpack.c.h.b16 %v2108
      %v2189 = vunpack.c.l.b16 %v2109
      %v2190 = vunpack.c.h.b16 %v2109
      %v2191 = vunpack.c.l.b16 %v2110
      %v2192 = vunpack.c.h.b16 %v2110
      %v2193 = vunpack.c.l.b16 %v2111
      %v2194 = vunpack.c.h.b16 %v2111
      %v2195 = vunpack.c.l.b16 %v2112
      %v2196 = vunpack.c.h.b16 %v2112
      %v2197 = vunpack.c.l.b16 %v2113
      %v2198 = vunpack.c.h.b16 %v2113
      %v2199 = vunpack.c.l.b16 %v2114
      %v2200 = vunpack.c.h.b16 %v2114
      %v2201 = vunpack.c.l.b16 %v2115
      %v2202 = vunpack.c.h.b16 %v2115
      %v2203 = vunpack.c.l.b16 %v2116
      %v2204 = vunpack.c.h.b16 %v2116
      %v2205 = vunpack.c.l.b16 %v2117
      %v2206 = vunpack.c.h.b16 %v2117
      %v2207 = vunpack.c.l.b16 %v2118
      %v2208 = vunpack.c.h.b16 %v2118
      %v2209 = vunpack.c.l.b16 %v2119
      %v2210 = vunpack.c.h.b16 %v2119
      %v2211 = vunpack.c.l.b16 %v2120
      %v2212 = vunpack.c.h.b16 %v2120
      %v2213 = vunpack.c.l.b16 %v2121
      %v2214 = vunpack.c.h.b16 %v2121
      %v2215 = vunpack.c.l.b16 %v2122
      %v2216 = vunpack.c.h.b16 %v2122
      %v2217 = vunpack.c.l.b16 %v2123
      %v2218 = vunpack.c.h.b16 %v2123
      %v2219 = vunpack.c.l.b16 %v2124
      %v2220 = vunpack.c.h.b16 %v2124
      %v2221 = vpack.c.b16 %v2159, %v2157
      %v2222 = vpack.c.b16 %v2160, %v2158
      %v2223 = vpack.c.b16 %v2163, %v2161
      %v2224 = vpack.c.b16 %v2164, %v2162
      %v2225 = vpack.c.b16 %v2167, %v2165
      %v2226 = vpack.c.b16 %v2168, %v2166
      %v2227 = vpack.c.b16 %v2171, %v2169
      %v2228 = vpack.c.b16 %v2172, %v2170
      %v2229 = vpack.c.b16 %v2175, %v2173
      %v2230 = vpack.c.b16 %v2176, %v2174
      %v2231 = vpack.c.b16 %v2179, %v2177
      %v2232 = vpack.c.b16 %v2180, %v2178
      %v2233 = vpack.c.b16 %v2183, %v2181
      %v2234 = vpack.c.b16 %v2184, %v2182
      %v2235 = vpack.c.b16 %v2187, %v2185
      %v2236 = vpack.c.b16 %v2188, %v2186
      %v2237 = vpack.c.b16 %v2191, %v2189
      %v2238 = vpack.c.b16 %v2192, %v2190
      %v2239 = vpack.c.b16 %v2195, %v2193
      %v2240 = vpack.c.b16 %v2196, %v2194
      %v2241 = vpack.c.b16 %v2199, %v2197
      %v2242 = vpack.c.b16 %v2200, %v2198
      %v2243 = vpack.c.b16 %v2203, %v2201
      %v2244 = vpack.c.b16 %v2204, %v2202
      %v2245 = vpack.c.b16 %v2207, %v2205
      %v2246 = vpack.c.b16 %v2208, %v2206
      %v2247 = vpack.c.b16 %v2211, %v2209
      %v2248 = vpack.c.b16 %v2212, %v2210
      %v2249 = vpack.c.b16 %v2215, %v2213
      %v2250 = vpack.c.b16 %v2216, %v2214
      %v2251 = vpack.c.b16 %v2219, %v2217
      %v2252 = vpack.c.b16 %v2220, %v2218
      %2285 = vmatprep.subr.bf16.mxu0 %v2236
      %2286 = vmatpush1.bf16.msra.mxu0 %v2235
      %2287 = vmatprep.subr.bf16.mxu0 %v2234
      %2288 = vmatpush1.bf16.msra.mxu0 %v2233
      %2289 = vmatprep.subr.bf16.mxu0 %v2232
      %2290 = vmatpush1.bf16.msra.mxu0 %v2231
      %2291 = vmatprep.subr.bf16.mxu0 %v2230
      %2292 = vmatpush1.bf16.msra.mxu0 %v2229
      %2293 = vmatprep.subr.bf16.mxu0 %v2228
      %2294 = vmatpush1.bf16.msra.mxu0 %v2227
      %2295 = vmatprep.subr.bf16.mxu0 %v2226
      %2296 = vmatpush1.bf16.msra.mxu0 %v2225
      %2297 = vmatprep.subr.bf16.mxu0 %v2224
      %2298 = vmatpush1.bf16.msra.mxu0 %v2223
      %2299 = vmatprep.subr.bf16.mxu0 %v2222
      %2300 = vmatpush1.bf16.msra.mxu0 %v2221
      %2301 = vmatprep.subr.bf16.mxu0 %v2252
      %2302 = vmatpush2.bf16.msra.mxu0 %v2251
      %2303 = vmatprep.subr.bf16.mxu0 %v2250
      %2304 = vmatpush2.bf16.msra.mxu0 %v2249
      %2305 = vmatprep.subr.bf16.mxu0 %v2248
      %2306 = vmatpush2.bf16.msra.mxu0 %v2247
      %2307 = vmatprep.subr.bf16.mxu0 %v2246
      %2308 = vmatpush2.bf16.msra.mxu0 %v2245
      %2309 = vmatprep.subr.bf16.mxu0 %v2244
      %2310 = vmatpush2.bf16.msra.mxu0 %v2243
      %2311 = vmatprep.subr.bf16.mxu0 %v2242
      %2312 = vmatpush2.bf16.msra.mxu0 %v2241
      %2313 = vmatprep.subr.bf16.mxu0 %v2240
      %2314 = vmatpush2.bf16.msra.mxu0 %v2239
      %2315 = vmatprep.subr.bf16.mxu0 %v2238
      %2316 = vmatpush2.bf16.msra.mxu0 %v2237
      %2317 = vmatprep.mubr.bf16.mxu0 %v2087
      %2318 = vmatmul.mubr.bf16.gmra.mxu0 %v2079
      %v2319 = vpop.f32.mrf.mxu0
      %v2320 = vadd.f32 0.0, %v2319
      %v2321 = vpop.f32.mrf.mxu0
      %v2322 = vadd.f32 0.0, %v2321
      %v2323 = vpop.f32.mrf.mxu0
      %v2324 = vadd.f32 0.0, %v2323
      %v2325 = vpop.f32.mrf.mxu0
      %v2326 = vadd.f32 0.0, %v2325
      %2327 = vmatprep.mubr.bf16.mxu0 %v2091
      %2328 = vmatmul.mubr.bf16.gmra.mxu0 %v2083
      %v2329 = vpop.f32.mrf.mxu0
      %v2330 = vadd.f32 0.0, %v2329
      %v2331 = vpop.f32.mrf.mxu0
      %v2332 = vadd.f32 0.0, %v2331
      %v2333 = vpop.f32.mrf.mxu0
      %v2334 = vadd.f32 0.0, %v2333
      %v2335 = vpop.f32.mrf.mxu0
      %v2336 = vadd.f32 0.0, %v2335
      %2337 = vdwg.mxu0
      %v2338 = vpack.c.bf16 %v2324, %v2320
      %v2339 = vpack.c.bf16 %v2326, %v2322
      %v2340 = vpack.c.bf16 %v2334, %v2330
      %v2341 = vpack.c.bf16 %v2336, %v2332
      %v2342 = vadd.s32 %v401, 128
      %v2343 = vand.u32 %v401, 15
      %v2344 = vand.u32 %v2342, 15
      %v2345 = vshra.s32 %v401, 4
      %v2346 = vshra.s32 %v2342, 4
      %vm2347 = vcmp.ge.s32.totalorder %v2345, 1
      %vm2348 = vcmp.ge.s32.totalorder %v2346, 1
      %vm2349 = vcmp.ge.s32.totalorder %v2343, 1
      %vm2350 = vcmp.ge.s32.totalorder %v2344, 1
      %vm2351 = vmand %vm2347, %vm2349
      %vm2352 = vmand %vm2348, %vm2350
      %vm2353 = vcmp.lt.s32.totalorder %v2343, 15
      %vm2354 = vcmp.lt.s32.totalorder %v2344, 15
      %vm2355 = vmand %vm2347, %vm2353
      %vm2356 = vmand %vm2348, %vm2354
      %vm2357 = vcmp.lt.s32.totalorder %v2345, 15
      %vm2358 = vcmp.lt.s32.totalorder %v2346, 15
      %vm2359 = vmand %vm2357, %vm2349
      %vm2360 = vmand %vm2358, %vm2350
      %vm2361 = vmand %vm2357, %vm2353
      %vm2362 = vmand %vm2358, %vm2354
      %2367 = vrot.lane.b32.xlu0 %v2338, 17
      %v2368 = vpop.permute.xlu0 %2367
      %2369 = vrot.lane.b32.xlu0 %v2339, 17
      %v2370 = vpop.permute.xlu0 %2369
      %2371 = vrot.lane.b32.xlu0 %v2340, 17
      %v2372 = vpop.permute.xlu0 %2371
      %2373 = vrot.lane.b32.xlu0 %v2341, 17
      %v2374 = vpop.permute.xlu0 %2373
      %vm2375 = vcmask 138240
      %v2376 = vsel %vm2375, %v2368, %v2370
      %v2377 = vsel %vm2375, %v2372, %v2374
      %vm2380 = vcmask 138240
      %v2382 = vsel %vm2380, 0, %v2368
      %v2385 = vsel %vm2380, 0, %v2372
      %v2387 = vsel %vm2351, 1, 0
      %v2388 = vsel %vm2352, 1, 0
      %vm2389 = vcmp.eq.s32.totalorder %v2387, 1
      %vm2390 = vcmp.eq.s32.totalorder %v2388, 1
      %vm2391 = vmpackc.low %vm2390, %vm2389
      %v2392 = vsel %vm2391, 65537, 0
      %v2393 = vlaneseq
      %v2394 = vshrl.u32 %v2393, 7
      %v2395 = vsub.s32 0, %v2394
      %v2396 = vrot.slane %v2392, %v2395
      %v2397 = vlaneseq
      %v2398 = vshrl.u32 %v2397, 7
      %v2399 = vsub.s32 4, %v2398
      %v2400 = vrot.slane %v2392, %v2399
      %vm2401 = vcmp.ne.s16.totalorder %v2396, 0
      %vm2402 = vcmp.ne.s16.totalorder %v2400, 0
      %v2403 = vsel %vm2401, %v2382, 0
      %v2404 = vsel %vm2402, %v2376, 0
      %v2405 = vsel %vm2401, %v2385, 0
      %v2406 = vsel %vm2402, %v2377, 0
      %2407 = vrot.lane.b32.xlu0 %v2338, 16
      %v2408 = vpop.permute.xlu0 %2407
      %2409 = vrot.lane.b32.xlu0 %v2339, 16
      %v2410 = vpop.permute.xlu0 %2409
      %2411 = vrot.lane.b32.xlu0 %v2340, 16
      %v2412 = vpop.permute.xlu0 %2411
      %2413 = vrot.lane.b32.xlu0 %v2341, 16
      %v2414 = vpop.permute.xlu0 %2413
      %vm2415 = vcmask 130048
      %v2416 = vsel %vm2415, %v2408, %v2410
      %v2417 = vsel %vm2415, %v2412, %v2414
      %v2421 = vsel %vm1296, 0, %v2408
      %v2424 = vsel %vm1296, 0, %v2412
      %v2426 = vsel %vm2347, 1, 0
      %v2427 = vsel %vm2348, 1, 0
      %vm2428 = vcmp.eq.s32.totalorder %v2426, 1
      %vm2429 = vcmp.eq.s32.totalorder %v2427, 1
      %vm2430 = vmpackc.low %vm2429, %vm2428
      %v2431 = vsel %vm2430, 65537, 0
      %v2432 = vlaneseq
      %v2433 = vshrl.u32 %v2432, 7
      %v2434 = vsub.s32 0, %v2433
      %v2435 = vrot.slane %v2431, %v2434
      %v2436 = vlaneseq
      %v2437 = vshrl.u32 %v2436, 7
      %v2438 = vsub.s32 4, %v2437
      %v2439 = vrot.slane %v2431, %v2438
      %vm2440 = vcmp.ne.s16.totalorder %v2435, 0
      %vm2441 = vcmp.ne.s16.totalorder %v2439, 0
      %v2442 = vsel %vm2440, %v2421, 0
      %v2443 = vsel %vm2441, %v2416, 0
      %v2444 = vsel %vm2440, %v2424, 0
      %v2445 = vsel %vm2441, %v2417, 0
      %2446 = vrot.lane.b32.xlu0 %v2338, 15
      %v2447 = vpop.permute.xlu0 %2446
      %2448 = vrot.lane.b32.xlu0 %v2339, 15
      %v2449 = vpop.permute.xlu0 %2448
      %2450 = vrot.lane.b32.xlu0 %v2340, 15
      %v2451 = vpop.permute.xlu0 %2450
      %2452 = vrot.lane.b32.xlu0 %v2341, 15
      %v2453 = vpop.permute.xlu0 %2452
      %vm2454 = vcmask 121856
      %v2455 = vsel %vm2454, %v2447, %v2449
      %v2456 = vsel %vm2454, %v2451, %v2453
      %v2460 = vsel %vm577, 0, %v2447
      %v2463 = vsel %vm577, 0, %v2451
      %v2465 = vsel %vm2355, 1, 0
      %v2466 = vsel %vm2356, 1, 0
      %vm2467 = vcmp.eq.s32.totalorder %v2465, 1
      %vm2468 = vcmp.eq.s32.totalorder %v2466, 1
      %vm2469 = vmpackc.low %vm2468, %vm2467
      %v2470 = vsel %vm2469, 65537, 0
      %v2471 = vlaneseq
      %v2472 = vshrl.u32 %v2471, 7
      %v2473 = vsub.s32 0, %v2472
      %v2474 = vrot.slane %v2470, %v2473
      %v2475 = vlaneseq
      %v2476 = vshrl.u32 %v2475, 7
      %v2477 = vsub.s32 4, %v2476
      %v2478 = vrot.slane %v2470, %v2477
      %vm2479 = vcmp.ne.s16.totalorder %v2474, 0
      %vm2480 = vcmp.ne.s16.totalorder %v2478, 0
      %v2481 = vsel %vm2479, %v2460, 0
      %v2482 = vsel %vm2480, %v2455, 0
      %v2483 = vsel %vm2479, %v2463, 0
      %v2484 = vsel %vm2480, %v2456, 0
      %2485 = vrot.lane.b32.xlu0 %v2338, 1
      %v2486 = vpop.permute.xlu0 %2485
      %2487 = vrot.lane.b32.xlu0 %v2339, 1
      %v2488 = vpop.permute.xlu0 %2487
      %2489 = vrot.lane.b32.xlu0 %v2340, 1
      %v2490 = vpop.permute.xlu0 %2489
      %2491 = vrot.lane.b32.xlu0 %v2341, 1
      %v2492 = vpop.permute.xlu0 %2491
      %vm2493 = vcmask 7168
      %v2494 = vsel %vm2493, %v2486, %v2488
      %v2495 = vsel %vm2493, %v2490, %v2492
      %v2499 = vsel %vm543, 0, %v2486
      %v2502 = vsel %vm543, 0, %v2490
      %v2504 = vsel %vm2349, 1, 0
      %v2505 = vsel %vm2350, 1, 0
      %vm2506 = vcmp.eq.s32.totalorder %v2504, 1
      %vm2507 = vcmp.eq.s32.totalorder %v2505, 1
      %vm2508 = vmpackc.low %vm2507, %vm2506
      %v2509 = vsel %vm2508, 65537, 0
      %v2510 = vlaneseq
      %v2511 = vshrl.u32 %v2510, 7
      %v2512 = vsub.s32 0, %v2511
      %v2513 = vrot.slane %v2509, %v2512
      %v2514 = vlaneseq
      %v2515 = vshrl.u32 %v2514, 7
      %v2516 = vsub.s32 4, %v2515
      %v2517 = vrot.slane %v2509, %v2516
      %vm2518 = vcmp.ne.s16.totalorder %v2513, 0
      %vm2519 = vcmp.ne.s16.totalorder %v2517, 0
      %v2520 = vsel %vm2518, %v2499, 0
      %v2521 = vsel %vm2519, %v2494, 0
      %v2522 = vsel %vm2518, %v2502, 0
      %v2523 = vsel %vm2519, %v2495, 0
      %2524 = vrot.lane.b32.xlu0 %v2338, 127
      %v2525 = vpop.permute.xlu0 %2524
      %2526 = vrot.lane.b32.xlu0 %v2339, 127
      %v2527 = vpop.permute.xlu0 %2526
      %2528 = vrot.lane.b32.xlu0 %v2340, 127
      %v2529 = vpop.permute.xlu0 %2528
      %2530 = vrot.lane.b32.xlu0 %v2341, 127
      %v2531 = vpop.permute.xlu0 %2530
      %vm2532 = vcmask 1039360
      %v2533 = vsel %vm2532, %v2525, %v2527
      %v2534 = vsel %vm2532, %v2529, %v2531
      %vm2537 = vcmask 1039360
      %v2539 = vsel %vm2537, %v2527, 0
      %v2542 = vsel %vm2537, %v2531, 0
      %v2544 = vsel %vm2353, 1, 0
      %v2545 = vsel %vm2354, 1, 0
      %vm2546 = vcmp.eq.s32.totalorder %v2544, 1
      %vm2547 = vcmp.eq.s32.totalorder %v2545, 1
      %vm2548 = vmpackc.low %vm2547, %vm2546
      %v2549 = vsel %vm2548, 65537, 0
      %v2550 = vlaneseq
      %v2551 = vshrl.u32 %v2550, 7
      %v2552 = vsub.s32 0, %v2551
      %v2553 = vrot.slane %v2549, %v2552
      %v2554 = vlaneseq
      %v2555 = vshrl.u32 %v2554, 7
      %v2556 = vsub.s32 4, %v2555
      %v2557 = vrot.slane %v2549, %v2556
      %vm2558 = vcmp.ne.s16.totalorder %v2553, 0
      %vm2559 = vcmp.ne.s16.totalorder %v2557, 0
      %v2560 = vsel %vm2558, %v2533, 0
      %v2561 = vsel %vm2559, %v2539, 0
      %v2562 = vsel %vm2558, %v2534, 0
      %v2563 = vsel %vm2559, %v2542, 0
      %2564 = vrot.lane.b32.xlu0 %v2338, 113
      %v2565 = vpop.permute.xlu0 %2564
      %2566 = vrot.lane.b32.xlu0 %v2339, 113
      %v2567 = vpop.permute.xlu0 %2566
      %2568 = vrot.lane.b32.xlu0 %v2340, 113
      %v2569 = vpop.permute.xlu0 %2568
      %2570 = vrot.lane.b32.xlu0 %v2341, 113
      %v2571 = vpop.permute.xlu0 %2570
      %vm2572 = vcmask 924672
      %v2573 = vsel %vm2572, %v2565, %v2567
      %v2574 = vsel %vm2572, %v2569, %v2571
      %vm2577 = vcmask 924672
      %v2579 = vsel %vm2577, %v2567, 0
      %v2582 = vsel %vm2577, %v2571, 0
      %v2584 = vsel %vm2359, 1, 0
      %v2585 = vsel %vm2360, 1, 0
      %vm2586 = vcmp.eq.s32.totalorder %v2584, 1
      %vm2587 = vcmp.eq.s32.totalorder %v2585, 1
      %vm2588 = vmpackc.low %vm2587, %vm2586
      %v2589 = vsel %vm2588, 65537, 0
      %v2590 = vlaneseq
      %v2591 = vshrl.u32 %v2590, 7
      %v2592 = vsub.s32 0, %v2591
      %v2593 = vrot.slane %v2589, %v2592
      %v2594 = vlaneseq
      %v2595 = vshrl.u32 %v2594, 7
      %v2596 = vsub.s32 4, %v2595
      %v2597 = vrot.slane %v2589, %v2596
      %vm2598 = vcmp.ne.s16.totalorder %v2593, 0
      %vm2599 = vcmp.ne.s16.totalorder %v2597, 0
      %v2600 = vsel %vm2598, %v2573, 0
      %v2601 = vsel %vm2599, %v2579, 0
      %v2602 = vsel %vm2598, %v2574, 0
      %v2603 = vsel %vm2599, %v2582, 0
      %2604 = vrot.lane.b32.xlu0 %v2338, 112
      %v2605 = vpop.permute.xlu0 %2604
      %2606 = vrot.lane.b32.xlu0 %v2339, 112
      %v2607 = vpop.permute.xlu0 %2606
      %2608 = vrot.lane.b32.xlu0 %v2340, 112
      %v2609 = vpop.permute.xlu0 %2608
      %2610 = vrot.lane.b32.xlu0 %v2341, 112
      %v2611 = vpop.permute.xlu0 %2610
      %vm2612 = vcmask 916480
      %v2613 = vsel %vm2612, %v2605, %v2607
      %v2614 = vsel %vm2612, %v2609, %v2611
      %vm2617 = vcmask 916480
      %v2619 = vsel %vm2617, %v2607, 0
      %v2622 = vsel %vm2617, %v2611, 0
      %v2624 = vsel %vm2357, 1, 0
      %v2625 = vsel %vm2358, 1, 0
      %vm2626 = vcmp.eq.s32.totalorder %v2624, 1
      %vm2627 = vcmp.eq.s32.totalorder %v2625, 1
      %vm2628 = vmpackc.low %vm2627, %vm2626
      %v2629 = vsel %vm2628, 65537, 0
      %v2630 = vlaneseq
      %v2631 = vshrl.u32 %v2630, 7
      %v2632 = vsub.s32 0, %v2631
      %v2633 = vrot.slane %v2629, %v2632
      %v2634 = vlaneseq
      %v2635 = vshrl.u32 %v2634, 7
      %v2636 = vsub.s32 4, %v2635
      %v2637 = vrot.slane %v2629, %v2636
      %vm2638 = vcmp.ne.s16.totalorder %v2633, 0
      %vm2639 = vcmp.ne.s16.totalorder %v2637, 0
      %v2640 = vsel %vm2638, %v2613, 0
      %v2641 = vsel %vm2639, %v2619, 0
      %v2642 = vsel %vm2638, %v2614, 0
      %v2643 = vsel %vm2639, %v2622, 0
      %2644 = vrot.lane.b32.xlu0 %v2338, 111
      %v2645 = vpop.permute.xlu0 %2644
      %2646 = vrot.lane.b32.xlu0 %v2339, 111
      %v2647 = vpop.permute.xlu0 %2646
      %2648 = vrot.lane.b32.xlu0 %v2340, 111
      %v2649 = vpop.permute.xlu0 %2648
      %2650 = vrot.lane.b32.xlu0 %v2341, 111
      %v2651 = vpop.permute.xlu0 %2650
      %vm2652 = vcmask 908288
      %v2653 = vsel %vm2652, %v2645, %v2647
      %v2654 = vsel %vm2652, %v2649, %v2651
      %vm2657 = vcmask 908288
      %v2659 = vsel %vm2657, %v2647, 0
      %v2662 = vsel %vm2657, %v2651, 0
      %v2664 = vsel %vm2361, 1, 0
      %v2665 = vsel %vm2362, 1, 0
      %vm2666 = vcmp.eq.s32.totalorder %v2664, 1
      %vm2667 = vcmp.eq.s32.totalorder %v2665, 1
      %vm2668 = vmpackc.low %vm2667, %vm2666
      %v2669 = vsel %vm2668, 65537, 0
      %v2670 = vlaneseq
      %v2671 = vshrl.u32 %v2670, 7
      %v2672 = vsub.s32 0, %v2671
      %v2673 = vrot.slane %v2669, %v2672
      %v2674 = vlaneseq
      %v2675 = vshrl.u32 %v2674, 7
      %v2676 = vsub.s32 4, %v2675
      %v2677 = vrot.slane %v2669, %v2676
      %vm2678 = vcmp.ne.s16.totalorder %v2673, 0
      %vm2679 = vcmp.ne.s16.totalorder %v2677, 0
      %v2680 = vsel %vm2678, %v2653, 0
      %v2681 = vsel %vm2679, %v2659, 0
      %v2682 = vsel %vm2678, %v2654, 0
      %v2683 = vsel %vm2679, %v2662, 0
      %v2684 = vld [vmem:[%s5] sm:$0xf]
      %v2685 = vld [vmem:[%s5 + $0x4] sm:$0xf]
      %v2686 = vld [vmem:[%s5 + $0x8] sm:$0xf]
      %v2687 = vld [vmem:[%s5 + $0xc] sm:$0xf]
      %v2688 = vld [vmem:[%s6] sm:$0xff]
      %v2689 = vld [vmem:[%s6 + $0x8] sm:$0xff]
      %v2690 = vld [vmem:[%s6 + $0x10] sm:$0xff]
      %v2691 = vld [vmem:[%s6 + $0x18] sm:$0xff]
      %2693 = vset.pattern.permute.xlu0 0
      %2694 = vperm.xlu0 %2693, %v2688
      %v2695 = vpop.permute.xlu0 %2694
      %2698 = vset.pattern.permute.xlu0 0
      %2699 = vperm.xlu0 %2698, %v2689
      %v2700 = vpop.permute.xlu0 %2699
      %2703 = vset.pattern.permute.xlu0 0
      %2704 = vperm.xlu0 %2703, %v2690
      %v2705 = vpop.permute.xlu0 %2704
      %2708 = vset.pattern.permute.xlu0 0
      %2709 = vperm.xlu0 %2708, %v2691
      %v2710 = vpop.permute.xlu0 %2709
      %v2716 = vunpack.c.l.b16 %v2684
      %v2717 = vunpack.c.l.b16 %v2685
      %v2718 = vunpack.c.l.b16 %v2686
      %v2719 = vunpack.c.l.b16 %v2687
      %v2720 = vpack.c.b16 %v2717, %v2716
      %v2721 = vpack.c.b16 %v2719, %v2718
      %2724 = vmatprep.subr.bf16.mxu0 %v2341
      %2725 = vmatpush1.bf16.msra.mxu0 %v2340
      %2726 = vmatprep.subr.bf16.mxu0 %v2339
      %2727 = vmatpush1.bf16.msra.mxu0 %v2338
      %2728 = vmatprep.subr.bf16.mxu0 %v2523
      %2729 = vmatpush1.bf16.msra.mxu0 %v2522
      %2730 = vmatprep.subr.bf16.mxu0 %v2521
      %2731 = vmatpush1.bf16.msra.mxu0 %v2520
      %2732 = vmatprep.subr.bf16.mxu0 %v2445
      %2733 = vmatpush1.bf16.msra.mxu0 %v2444
      %2734 = vmatprep.subr.bf16.mxu0 %v2443
      %2735 = vmatpush1.bf16.msra.mxu0 %v2442
      %2736 = vmatprep.subr.bf16.mxu0 %v2406
      %2737 = vmatpush1.bf16.msra.mxu0 %v2405
      %2738 = vmatprep.subr.bf16.mxu0 %v2404
      %2739 = vmatpush1.bf16.msra.mxu0 %v2403
      %2740 = vmatprep.subr.bf16.mxu0 0
      %2741 = vmatpush2.bf16.msra.mxu0 0
      %2742 = vmatprep.subr.bf16.mxu0 0
      %2743 = vmatpush2.bf16.msra.mxu0 0
      %2744 = vmatprep.subr.bf16.mxu0 0
      %2745 = vmatpush2.bf16.msra.mxu0 0
      %2746 = vmatprep.subr.bf16.mxu0 0
      %2747 = vmatpush2.bf16.msra.mxu0 0
      %2748 = vmatprep.subr.bf16.mxu0 0
      %2749 = vmatpush2.bf16.msra.mxu0 0
      %2750 = vmatprep.subr.bf16.mxu0 0
      %2751 = vmatpush2.bf16.msra.mxu0 0
      %2752 = vmatprep.subr.bf16.mxu0 0
      %2753 = vmatpush2.bf16.msra.mxu0 0
      %2754 = vmatprep.subr.bf16.mxu0 0
      %2755 = vmatpush2.bf16.msra.mxu0 0
      %2756 = vmatprep.mubr.bf16.mxu0 0
      %2757 = vmatmul.mubr.bf16.gmra.mxu0 %v2720
      %v2758 = vpop.f32.mrf.mxu0
      %v2759 = vadd.f32 %v2695, %v2758
      %v2760 = vpop.f32.mrf.mxu0
      %v2761 = vadd.f32 %v2695, %v2760
      %v2762 = vpop.f32.mrf.mxu0
      %v2763 = vadd.f32 %v2700, %v2762
      %v2764 = vpop.f32.mrf.mxu0
      %v2765 = vadd.f32 %v2700, %v2764
      %2766 = vmatprep.mubr.bf16.mxu0 0
      %2767 = vmatmul.mubr.bf16.gmra.mxu0 %v2721
      %v2768 = vpop.f32.mrf.mxu0
      %v2769 = vadd.f32 %v2705, %v2768
      %v2770 = vpop.f32.mrf.mxu0
      %v2771 = vadd.f32 %v2705, %v2770
      %v2772 = vpop.f32.mrf.mxu0
      %v2773 = vadd.f32 %v2710, %v2772
      %v2774 = vpop.f32.mrf.mxu0
      %v2775 = vadd.f32 %v2710, %v2774
      %2776 = vdwg.mxu0
      %v2777 = vmax.f32 %v2759, 0.0
      %v2778 = vmax.f32 %v2761, 0.0
      %v2779 = vmax.f32 %v2763, 0.0
      %v2780 = vmax.f32 %v2765, 0.0
      %v2781 = vmax.f32 %v2769, 0.0
      %v2782 = vmax.f32 %v2771, 0.0
      %v2783 = vmax.f32 %v2773, 0.0
      %v2784 = vmax.f32 %v2775, 0.0
      %s2785 = scalar_lea.vmem %s5, 16
      %v2786 = vld [vmem:[%s2785] sm:$0xf]
      %v2787 = vld [vmem:[%s2785 + $0x4] sm:$0xf]
      %v2788 = vld [vmem:[%s2785 + $0x8] sm:$0xf]
      %v2789 = vld [vmem:[%s2785 + $0xc] sm:$0xf]
      %v2794 = vunpack.c.l.b16 %v2786
      %v2795 = vunpack.c.l.b16 %v2787
      %v2796 = vunpack.c.l.b16 %v2788
      %v2797 = vunpack.c.l.b16 %v2789
      %v2798 = vpack.c.b16 %v2795, %v2794
      %v2799 = vpack.c.b16 %v2797, %v2796
      %2802 = vmatprep.subr.bf16.mxu0 %v2563
      %2803 = vmatpush1.bf16.msra.mxu0 %v2562
      %2804 = vmatprep.subr.bf16.mxu0 %v2561
      %2805 = vmatpush1.bf16.msra.mxu0 %v2560
      %2806 = vmatprep.subr.bf16.mxu0 %v2341
      %2807 = vmatpush1.bf16.msra.mxu0 %v2340
      %2808 = vmatprep.subr.bf16.mxu0 %v2339
      %2809 = vmatpush1.bf16.msra.mxu0 %v2338
      %2810 = vmatprep.subr.bf16.mxu0 %v2484
      %2811 = vmatpush1.bf16.msra.mxu0 %v2483
      %2812 = vmatprep.subr.bf16.mxu0 %v2482
      %2813 = vmatpush1.bf16.msra.mxu0 %v2481
      %2814 = vmatprep.subr.bf16.mxu0 %v2445
      %2815 = vmatpush1.bf16.msra.mxu0 %v2444
      %2816 = vmatprep.subr.bf16.mxu0 %v2443
      %2817 = vmatpush1.bf16.msra.mxu0 %v2442
      %2818 = vmatprep.subr.bf16.mxu0 0
      %2819 = vmatpush2.bf16.msra.mxu0 0
      %2820 = vmatprep.subr.bf16.mxu0 0
      %2821 = vmatpush2.bf16.msra.mxu0 0
      %2822 = vmatprep.subr.bf16.mxu0 0
      %2823 = vmatpush2.bf16.msra.mxu0 0
      %2824 = vmatprep.subr.bf16.mxu0 0
      %2825 = vmatpush2.bf16.msra.mxu0 0
      %2826 = vmatprep.subr.bf16.mxu0 0
      %2827 = vmatpush2.bf16.msra.mxu0 0
      %2828 = vmatprep.subr.bf16.mxu0 0
      %2829 = vmatpush2.bf16.msra.mxu0 0
      %2830 = vmatprep.subr.bf16.mxu0 0
      %2831 = vmatpush2.bf16.msra.mxu0 0
      %2832 = vmatprep.subr.bf16.mxu0 0
      %2833 = vmatpush2.bf16.msra.mxu0 0
      %2834 = vmatprep.mubr.bf16.mxu0 0
      %2835 = vmatmul.mubr.bf16.gmra.mxu0 %v2798
      %v2836 = vpop.f32.mrf.mxu0
      %v2837 = vadd.f32 %v2695, %v2836
      %v2838 = vpop.f32.mrf.mxu0
      %v2839 = vadd.f32 %v2695, %v2838
      %v2840 = vpop.f32.mrf.mxu0
      %v2841 = vadd.f32 %v2700, %v2840
      %v2842 = vpop.f32.mrf.mxu0
      %v2843 = vadd.f32 %v2700, %v2842
      %2844 = vmatprep.mubr.bf16.mxu0 0
      %2845 = vmatmul.mubr.bf16.gmra.mxu0 %v2799
      %v2846 = vpop.f32.mrf.mxu0
      %v2847 = vadd.f32 %v2705, %v2846
      %v2848 = vpop.f32.mrf.mxu0
      %v2849 = vadd.f32 %v2705, %v2848
      %v2850 = vpop.f32.mrf.mxu0
      %v2851 = vadd.f32 %v2710, %v2850
      %v2852 = vpop.f32.mrf.mxu0
      %v2853 = vadd.f32 %v2710, %v2852
      %2854 = vdwg.mxu0
      %v2855 = vmax.f32 %v2837, 0.0
      %v2856 = vmax.f32 %v2839, 0.0
      %v2857 = vmax.f32 %v2841, 0.0
      %v2858 = vmax.f32 %v2843, 0.0
      %v2859 = vmax.f32 %v2847, 0.0
      %v2860 = vmax.f32 %v2849, 0.0
      %v2861 = vmax.f32 %v2851, 0.0
      %v2862 = vmax.f32 %v2853, 0.0
      %s2863 = scalar_lea.vmem %s5, 32
      %v2864 = vld [vmem:[%s2863] sm:$0xf]
      %v2865 = vld [vmem:[%s2863 + $0x4] sm:$0xf]
      %v2866 = vld [vmem:[%s2863 + $0x8] sm:$0xf]
      %v2867 = vld [vmem:[%s2863 + $0xc] sm:$0xf]
      %v2872 = vunpack.c.l.b16 %v2864
      %v2873 = vunpack.c.l.b16 %v2865
      %v2874 = vunpack.c.l.b16 %v2866
      %v2875 = vunpack.c.l.b16 %v2867
      %v2876 = vpack.c.b16 %v2873, %v2872
      %v2877 = vpack.c.b16 %v2875, %v2874
      %2880 = vmatprep.subr.bf16.mxu0 %v2643
      %2881 = vmatpush1.bf16.msra.mxu0 %v2642
      %2882 = vmatprep.subr.bf16.mxu0 %v2641
      %2883 = vmatpush1.bf16.msra.mxu0 %v2640
      %2884 = vmatprep.subr.bf16.mxu0 %v2603
      %2885 = vmatpush1.bf16.msra.mxu0 %v2602
      %2886 = vmatprep.subr.bf16.mxu0 %v2601
      %2887 = vmatpush1.bf16.msra.mxu0 %v2600
      %2888 = vmatprep.subr.bf16.mxu0 %v2341
      %2889 = vmatpush1.bf16.msra.mxu0 %v2340
      %2890 = vmatprep.subr.bf16.mxu0 %v2339
      %2891 = vmatpush1.bf16.msra.mxu0 %v2338
      %2892 = vmatprep.subr.bf16.mxu0 %v2523
      %2893 = vmatpush1.bf16.msra.mxu0 %v2522
      %2894 = vmatprep.subr.bf16.mxu0 %v2521
      %2895 = vmatpush1.bf16.msra.mxu0 %v2520
      %2896 = vmatprep.subr.bf16.mxu0 0
      %2897 = vmatpush2.bf16.msra.mxu0 0
      %2898 = vmatprep.subr.bf16.mxu0 0
      %2899 = vmatpush2.bf16.msra.mxu0 0
      %2900 = vmatprep.subr.bf16.mxu0 0
      %2901 = vmatpush2.bf16.msra.mxu0 0
      %2902 = vmatprep.subr.bf16.mxu0 0
      %2903 = vmatpush2.bf16.msra.mxu0 0
      %2904 = vmatprep.subr.bf16.mxu0 0
      %2905 = vmatpush2.bf16.msra.mxu0 0
      %2906 = vmatprep.subr.bf16.mxu0 0
      %2907 = vmatpush2.bf16.msra.mxu0 0
      %2908 = vmatprep.subr.bf16.mxu0 0
      %2909 = vmatpush2.bf16.msra.mxu0 0
      %2910 = vmatprep.subr.bf16.mxu0 0
      %2911 = vmatpush2.bf16.msra.mxu0 0
      %2912 = vmatprep.mubr.bf16.mxu0 0
      %2913 = vmatmul.mubr.bf16.gmra.mxu0 %v2876
      %v2914 = vpop.f32.mrf.mxu0
      %v2915 = vadd.f32 %v2695, %v2914
      %v2916 = vpop.f32.mrf.mxu0
      %v2917 = vadd.f32 %v2695, %v2916
      %v2918 = vpop.f32.mrf.mxu0
      %v2919 = vadd.f32 %v2700, %v2918
      %v2920 = vpop.f32.mrf.mxu0
      %v2921 = vadd.f32 %v2700, %v2920
      %2922 = vmatprep.mubr.bf16.mxu0 0
      %2923 = vmatmul.mubr.bf16.gmra.mxu0 %v2877
      %v2924 = vpop.f32.mrf.mxu0
      %v2925 = vadd.f32 %v2705, %v2924
      %v2926 = vpop.f32.mrf.mxu0
      %v2927 = vadd.f32 %v2705, %v2926
      %v2928 = vpop.f32.mrf.mxu0
      %v2929 = vadd.f32 %v2710, %v2928
      %v2930 = vpop.f32.mrf.mxu0
      %v2931 = vadd.f32 %v2710, %v2930
      %2932 = vdwg.mxu0
      %v2933 = vmax.f32 %v2915, 0.0
      %v2934 = vmax.f32 %v2917, 0.0
      %v2935 = vmax.f32 %v2919, 0.0
      %v2936 = vmax.f32 %v2921, 0.0
      %v2937 = vmax.f32 %v2925, 0.0
      %v2938 = vmax.f32 %v2927, 0.0
      %v2939 = vmax.f32 %v2929, 0.0
      %v2940 = vmax.f32 %v2931, 0.0
      %s2941 = scalar_lea.vmem %s5, 48
      %v2942 = vld [vmem:[%s2941] sm:$0xf]
      %v2943 = vld [vmem:[%s2941 + $0x4] sm:$0xf]
      %v2944 = vld [vmem:[%s2941 + $0x8] sm:$0xf]
      %v2945 = vld [vmem:[%s2941 + $0xc] sm:$0xf]
      %v2950 = vunpack.c.l.b16 %v2942
      %v2951 = vunpack.c.l.b16 %v2943
      %v2952 = vunpack.c.l.b16 %v2944
      %v2953 = vunpack.c.l.b16 %v2945
      %v2954 = vpack.c.b16 %v2951, %v2950
      %v2955 = vpack.c.b16 %v2953, %v2952
      %2958 = vmatprep.subr.bf16.mxu0 %v2683
      %2959 = vmatpush1.bf16.msra.mxu0 %v2682
      %2960 = vmatprep.subr.bf16.mxu0 %v2681
      %2961 = vmatpush1.bf16.msra.mxu0 %v2680
      %2962 = vmatprep.subr.bf16.mxu0 %v2643
      %2963 = vmatpush1.bf16.msra.mxu0 %v2642
      %2964 = vmatprep.subr.bf16.mxu0 %v2641
      %2965 = vmatpush1.bf16.msra.mxu0 %v2640
      %2966 = vmatprep.subr.bf16.mxu0 %v2563
      %2967 = vmatpush1.bf16.msra.mxu0 %v2562
      %2968 = vmatprep.subr.bf16.mxu0 %v2561
      %2969 = vmatpush1.bf16.msra.mxu0 %v2560
      %2970 = vmatprep.subr.bf16.mxu0 %v2341
      %2971 = vmatpush1.bf16.msra.mxu0 %v2340
      %2972 = vmatprep.subr.bf16.mxu0 %v2339
      %2973 = vmatpush1.bf16.msra.mxu0 %v2338
      %2974 = vmatprep.subr.bf16.mxu0 0
      %2975 = vmatpush2.bf16.msra.mxu0 0
      %2976 = vmatprep.subr.bf16.mxu0 0
      %2977 = vmatpush2.bf16.msra.mxu0 0
      %2978 = vmatprep.subr.bf16.mxu0 0
      %2979 = vmatpush2.bf16.msra.mxu0 0
      %2980 = vmatprep.subr.bf16.mxu0 0
      %2981 = vmatpush2.bf16.msra.mxu0 0
      %2982 = vmatprep.subr.bf16.mxu0 0
      %2983 = vmatpush2.bf16.msra.mxu0 0
      %2984 = vmatprep.subr.bf16.mxu0 0
      %2985 = vmatpush2.bf16.msra.mxu0 0
      %2986 = vmatprep.subr.bf16.mxu0 0
      %2987 = vmatpush2.bf16.msra.mxu0 0
      %2988 = vmatprep.subr.bf16.mxu0 0
      %2989 = vmatpush2.bf16.msra.mxu0 0
      %2990 = vmatprep.mubr.bf16.mxu0 0
      %2991 = vmatmul.mubr.bf16.gmra.mxu0 %v2954
      %v2992 = vpop.f32.mrf.mxu0
      %v2993 = vadd.f32 %v2695, %v2992
      %v2994 = vpop.f32.mrf.mxu0
      %v2995 = vadd.f32 %v2695, %v2994
      %v2996 = vpop.f32.mrf.mxu0
      %v2997 = vadd.f32 %v2700, %v2996
      %v2998 = vpop.f32.mrf.mxu0
      %v2999 = vadd.f32 %v2700, %v2998
      %3000 = vmatprep.mubr.bf16.mxu0 0
      %3001 = vmatmul.mubr.bf16.gmra.mxu0 %v2955
      %v3002 = vpop.f32.mrf.mxu0
      %v3003 = vadd.f32 %v2705, %v3002
      %v3004 = vpop.f32.mrf.mxu0
      %v3005 = vadd.f32 %v2705, %v3004
      %v3006 = vpop.f32.mrf.mxu0
      %v3007 = vadd.f32 %v2710, %v3006
      %v3008 = vpop.f32.mrf.mxu0
      %v3009 = vadd.f32 %v2710, %v3008
      %3010 = vdwg.mxu0
      %v3011 = vmax.f32 %v2993, 0.0
      %v3012 = vmax.f32 %v2995, 0.0
      %v3013 = vmax.f32 %v2997, 0.0
      %v3014 = vmax.f32 %v2999, 0.0
      %v3015 = vmax.f32 %v3003, 0.0
      %v3016 = vmax.f32 %v3005, 0.0
      %v3017 = vmax.f32 %v3007, 0.0
      %v3018 = vmax.f32 %v3009, 0.0
      %v3019 = vpack.c.bf16 %v2779, %v2777
      %v3020 = vpack.c.bf16 %v2780, %v2778
      %v3021 = vpack.c.bf16 %v2783, %v2781
      %v3022 = vpack.c.bf16 %v2784, %v2782
      %v3023 = vpack.c.bf16 %v2857, %v2855
      %v3024 = vpack.c.bf16 %v2858, %v2856
      %v3025 = vpack.c.bf16 %v2861, %v2859
      %v3026 = vpack.c.bf16 %v2862, %v2860
      %v3027 = vpack.c.bf16 %v2935, %v2933
      %v3028 = vpack.c.bf16 %v2936, %v2934
      %v3029 = vpack.c.bf16 %v2939, %v2937
      %v3030 = vpack.c.bf16 %v2940, %v2938
      %v3031 = vpack.c.bf16 %v3013, %v3011
      %v3032 = vpack.c.bf16 %v3014, %v3012
      %v3033 = vpack.c.bf16 %v3017, %v3015
      %v3034 = vpack.c.bf16 %v3018, %v3016
      %v3035 = vld [vmem:[%s7] sm:$0x1]
      %3040 = vrot.lane.b32.xlu0 %v3031, 17
      %v3041 = vpop.permute.xlu0 %3040
      %3042 = vrot.lane.b32.xlu0 %v3032, 17
      %v3043 = vpop.permute.xlu0 %3042
      %3044 = vrot.lane.b32.xlu0 %v3033, 17
      %v3045 = vpop.permute.xlu0 %3044
      %3046 = vrot.lane.b32.xlu0 %v3034, 17
      %v3047 = vpop.permute.xlu0 %3046
      %v3048 = vsel %vm2375, %v3041, %v3043
      %v3049 = vsel %vm2375, %v3045, %v3047
      %v3053 = vsel %vm2380, 0, %v3041
      %v3056 = vsel %vm2380, 0, %v3045
      %v3058 = vsel %vm2401, %v3053, 0
      %v3059 = vsel %vm2402, %v3048, 0
      %v3060 = vsel %vm2401, %v3056, 0
      %v3061 = vsel %vm2402, %v3049, 0
      %3066 = vrot.lane.b32.xlu0 %v3027, 16
      %v3067 = vpop.permute.xlu0 %3066
      %3068 = vrot.lane.b32.xlu0 %v3028, 16
      %v3069 = vpop.permute.xlu0 %3068
      %3070 = vrot.lane.b32.xlu0 %v3029, 16
      %v3071 = vpop.permute.xlu0 %3070
      %3072 = vrot.lane.b32.xlu0 %v3030, 16
      %v3073 = vpop.permute.xlu0 %3072
      %v3074 = vsel %vm2415, %v3067, %v3069
      %v3075 = vsel %vm2415, %v3071, %v3073
      %v3079 = vsel %vm1296, 0, %v3067
      %v3082 = vsel %vm1296, 0, %v3071
      %v3084 = vsel %vm2440, %v3079, 0
      %v3085 = vsel %vm2441, %v3074, 0
      %v3086 = vsel %vm2440, %v3082, 0
      %v3087 = vsel %vm2441, %v3075, 0
      %3092 = vrot.lane.b32.xlu0 %v3023, 1
      %v3093 = vpop.permute.xlu0 %3092
      %3094 = vrot.lane.b32.xlu0 %v3024, 1
      %v3095 = vpop.permute.xlu0 %3094
      %3096 = vrot.lane.b32.xlu0 %v3025, 1
      %v3097 = vpop.permute.xlu0 %3096
      %3098 = vrot.lane.b32.xlu0 %v3026, 1
      %v3099 = vpop.permute.xlu0 %3098
      %v3100 = vsel %vm2493, %v3093, %v3095
      %v3101 = vsel %vm2493, %v3097, %v3099
      %v3105 = vsel %vm543, 0, %v3093
      %v3108 = vsel %vm543, 0, %v3097
      %v3110 = vsel %vm2518, %v3105, 0
      %v3111 = vsel %vm2519, %v3100, 0
      %v3112 = vsel %vm2518, %v3108, 0
      %v3113 = vsel %vm2519, %v3101, 0
      %v3114 = vld [vmem:[#allocation2] sm:$0x1]
      %3116 = vset.pattern.permute.xlu0 0
      %3117 = vperm.xlu0 %3116, %v3114
      %v3118 = vpop.permute.xlu0 %3117
      %v3120 = vlaneseq
      %v3121 = vshrl.u32 %v3120, 7
      %v3122 = vsub.s32 0, %v3121
      %v3123 = vrot.slane %v3118, %v3122
      %3124 = vmatprep.subr.bf16.mxu0 %v3022
      %3125 = vmatpush1.bf16.msra.mxu0 %v3021
      %3126 = vmatprep.subr.bf16.mxu0 %v3020
      %3127 = vmatpush1.bf16.msra.mxu0 %v3019
      %3128 = vmatprep.subr.bf16.mxu0 %v3113
      %3129 = vmatpush1.bf16.msra.mxu0 %v3112
      %3130 = vmatprep.subr.bf16.mxu0 %v3111
      %3131 = vmatpush1.bf16.msra.mxu0 %v3110
      %3132 = vmatprep.subr.bf16.mxu0 %v3087
      %3133 = vmatpush1.bf16.msra.mxu0 %v3086
      %3134 = vmatprep.subr.bf16.mxu0 %v3085
      %3135 = vmatpush1.bf16.msra.mxu0 %v3084
      %3136 = vmatprep.subr.bf16.mxu0 %v3061
      %3137 = vmatpush1.bf16.msra.mxu0 %v3060
      %3138 = vmatprep.subr.bf16.mxu0 %v3059
      %3139 = vmatpush1.bf16.msra.mxu0 %v3058
      %3140 = vmatprep.subr.bf16.mxu0 0
      %3141 = vmatpush2.bf16.msra.mxu0 0
      %3142 = vmatprep.subr.bf16.mxu0 0
      %3143 = vmatpush2.bf16.msra.mxu0 0
      %3144 = vmatprep.subr.bf16.mxu0 0
      %3145 = vmatpush2.bf16.msra.mxu0 0
      %3146 = vmatprep.subr.bf16.mxu0 0
      %3147 = vmatpush2.bf16.msra.mxu0 0
      %3148 = vmatprep.subr.bf16.mxu0 0
      %3149 = vmatpush2.bf16.msra.mxu0 0
      %3150 = vmatprep.subr.bf16.mxu0 0
      %3151 = vmatpush2.bf16.msra.mxu0 0
      %3152 = vmatprep.subr.bf16.mxu0 0
      %3153 = vmatpush2.bf16.msra.mxu0 0
      %3154 = vmatprep.subr.bf16.mxu0 0
      %3155 = vmatpush2.bf16.msra.mxu0 0
      %3156 = vmatprep.mubr.bf16.mxu0 0
      %3157 = vmatmul.mubr.bf16.gmra.mxu0 %v3035
      %v3158 = vpop.f32.mrf.mxu0
      %v3159 = vadd.f32 %v3123, %v3158
      %v3160 = vpop.f32.mrf.mxu0
      %v3161 = vadd.f32 %v3123, %v3160
      %v3162 = vpop.f32.mrf.mxu0
      %v3163 = vpop.f32.mrf.mxu0
      %3164 = vdwg.mxu0
      %v3165 = vxor.u32 %v3159, 2147483648
      %v3166 = vxor.u32 %v3161, 2147483648
      %v3167 = vmul.f32 %v3165, 1.442695
      %v3168 = vpow.pop %v3167
      %v3169 = vmul.f32 %v3166, 1.442695
      %v3170 = vpow.pop %v3169
      %v3171 = vadd.f32 %v3168, 1.0
      %v3172 = vadd.f32 %v3170, 1.0
      %v3173 = vrcp.pop %v3171
      %v3174 = vmul.f32 1.0, %v3173
      %v3175 = vrcp.pop %v3172
      %v3176 = vmul.f32 1.0, %v3175
      %3177 = vrot.lane.b32.xlu0 %v3031, 16
      %v3178 = vpop.permute.xlu0 %3177
      %3179 = vrot.lane.b32.xlu0 %v3032, 16
      %v3180 = vpop.permute.xlu0 %3179
      %3181 = vrot.lane.b32.xlu0 %v3033, 16
      %v3182 = vpop.permute.xlu0 %3181
      %3183 = vrot.lane.b32.xlu0 %v3034, 16
      %v3184 = vpop.permute.xlu0 %3183
      %v3185 = vsel %vm2415, %v3178, %v3180
      %v3186 = vsel %vm2415, %v3182, %v3184
      %v3190 = vsel %vm1296, 0, %v3178
      %v3193 = vsel %vm1296, 0, %v3182
      %v3195 = vsel %vm2440, %v3190, 0
      %v3196 = vsel %vm2441, %v3185, 0
      %v3197 = vsel %vm2440, %v3193, 0
      %v3198 = vsel %vm2441, %v3186, 0
      %3199 = vmatprep.subr.bf16.mxu0 %v3026
      %3200 = vmatpush1.bf16.msra.mxu0 %v3025
      %3201 = vmatprep.subr.bf16.mxu0 %v3024
      %3202 = vmatpush1.bf16.msra.mxu0 %v3023
      %3203 = vmatprep.subr.bf16.mxu0 %v3022
      %3204 = vmatpush1.bf16.msra.mxu0 %v3021
      %3205 = vmatprep.subr.bf16.mxu0 %v3020
      %3206 = vmatpush1.bf16.msra.mxu0 %v3019
      %3207 = vmatprep.subr.bf16.mxu0 %v3198
      %3208 = vmatpush1.bf16.msra.mxu0 %v3197
      %3209 = vmatprep.subr.bf16.mxu0 %v3196
      %3210 = vmatpush1.bf16.msra.mxu0 %v3195
      %3211 = vmatprep.subr.bf16.mxu0 %v3087
      %3212 = vmatpush1.bf16.msra.mxu0 %v3086
      %3213 = vmatprep.subr.bf16.mxu0 %v3085
      %3214 = vmatpush1.bf16.msra.mxu0 %v3084
      %3215 = vmatprep.subr.bf16.mxu0 0
      %3216 = vmatpush2.bf16.msra.mxu0 0
      %3217 = vmatprep.subr.bf16.mxu0 0
      %3218 = vmatpush2.bf16.msra.mxu0 0
      %3219 = vmatprep.subr.bf16.mxu0 0
      %3220 = vmatpush2.bf16.msra.mxu0 0
      %3221 = vmatprep.subr.bf16.mxu0 0
      %3222 = vmatpush2.bf16.msra.mxu0 0
      %3223 = vmatprep.subr.bf16.mxu0 0
      %3224 = vmatpush2.bf16.msra.mxu0 0
      %3225 = vmatprep.subr.bf16.mxu0 0
      %3226 = vmatpush2.bf16.msra.mxu0 0
      %3227 = vmatprep.subr.bf16.mxu0 0
      %3228 = vmatpush2.bf16.msra.mxu0 0
      %3229 = vmatprep.subr.bf16.mxu0 0
      %3230 = vmatpush2.bf16.msra.mxu0 0
      %3231 = vmatprep.mubr.bf16.mxu0 0
      %3232 = vmatmul.mubr.bf16.gmra.mxu0 %v3035
      %v3233 = vpop.f32.mrf.mxu0
      %v3234 = vadd.f32 %v3123, %v3233
      %v3235 = vpop.f32.mrf.mxu0
      %v3236 = vadd.f32 %v3123, %v3235
      %v3237 = vpop.f32.mrf.mxu0
      %v3238 = vpop.f32.mrf.mxu0
      %3239 = vdwg.mxu0
      %v3240 = vxor.u32 %v3234, 2147483648
      %v3241 = vxor.u32 %v3236, 2147483648
      %v3242 = vmul.f32 %v3240, 1.442695
      %v3243 = vpow.pop %v3242
      %v3244 = vmul.f32 %v3241, 1.442695
      %v3245 = vpow.pop %v3244
      %v3246 = vadd.f32 %v3243, 1.0
      %v3247 = vadd.f32 %v3245, 1.0
      %v3248 = vrcp.pop %v3246
      %v3249 = vmul.f32 1.0, %v3248
      %v3250 = vrcp.pop %v3247
      %v3251 = vmul.f32 1.0, %v3250
      %3252 = vrot.lane.b32.xlu0 %v3031, 1
      %v3253 = vpop.permute.xlu0 %3252
      %3254 = vrot.lane.b32.xlu0 %v3032, 1
      %v3255 = vpop.permute.xlu0 %3254
      %3256 = vrot.lane.b32.xlu0 %v3033, 1
      %v3257 = vpop.permute.xlu0 %3256
      %3258 = vrot.lane.b32.xlu0 %v3034, 1
      %v3259 = vpop.permute.xlu0 %3258
      %v3260 = vsel %vm2493, %v3253, %v3255
      %v3261 = vsel %vm2493, %v3257, %v3259
      %v3265 = vsel %vm543, 0, %v3253
      %v3268 = vsel %vm543, 0, %v3257
      %v3270 = vsel %vm2518, %v3265, 0
      %v3271 = vsel %vm2519, %v3260, 0
      %v3272 = vsel %vm2518, %v3268, 0
      %v3273 = vsel %vm2519, %v3261, 0
      %3274 = vmatprep.subr.bf16.mxu0 %v3030
      %3275 = vmatpush1.bf16.msra.mxu0 %v3029
      %3276 = vmatprep.subr.bf16.mxu0 %v3028
      %3277 = vmatpush1.bf16.msra.mxu0 %v3027
      %3278 = vmatprep.subr.bf16.mxu0 %v3273
      %3279 = vmatpush1.bf16.msra.mxu0 %v3272
      %3280 = vmatprep.subr.bf16.mxu0 %v3271
      %3281 = vmatpush1.bf16.msra.mxu0 %v3270
      %3282 = vmatprep.subr.bf16.mxu0 %v3022
      %3283 = vmatpush1.bf16.msra.mxu0 %v3021
      %3284 = vmatprep.subr.bf16.mxu0 %v3020
      %3285 = vmatpush1.bf16.msra.mxu0 %v3019
      %3286 = vmatprep.subr.bf16.mxu0 %v3113
      %3287 = vmatpush1.bf16.msra.mxu0 %v3112
      %3288 = vmatprep.subr.bf16.mxu0 %v3111
      %3289 = vmatpush1.bf16.msra.mxu0 %v3110
      %3290 = vmatprep.subr.bf16.mxu0 0
      %3291 = vmatpush2.bf16.msra.mxu0 0
      %3292 = vmatprep.subr.bf16.mxu0 0
      %3293 = vmatpush2.bf16.msra.mxu0 0
      %3294 = vmatprep.subr.bf16.mxu0 0
      %3295 = vmatpush2.bf16.msra.mxu0 0
      %3296 = vmatprep.subr.bf16.mxu0 0
      %3297 = vmatpush2.bf16.msra.mxu0 0
      %3298 = vmatprep.subr.bf16.mxu0 0
      %3299 = vmatpush2.bf16.msra.mxu0 0
      %3300 = vmatprep.subr.bf16.mxu0 0
      %3301 = vmatpush2.bf16.msra.mxu0 0
      %3302 = vmatprep.subr.bf16.mxu0 0
      %3303 = vmatpush2.bf16.msra.mxu0 0
      %3304 = vmatprep.subr.bf16.mxu0 0
      %3305 = vmatpush2.bf16.msra.mxu0 0
      %3306 = vmatprep.mubr.bf16.mxu0 0
      %3307 = vmatmul.mubr.bf16.gmra.mxu0 %v3035
      %v3308 = vpop.f32.mrf.mxu0
      %v3309 = vadd.f32 %v3123, %v3308
      %v3310 = vpop.f32.mrf.mxu0
      %v3311 = vadd.f32 %v3123, %v3310
      %v3312 = vpop.f32.mrf.mxu0
      %v3313 = vpop.f32.mrf.mxu0
      %3314 = vdwg.mxu0
      %v3315 = vxor.u32 %v3309, 2147483648
      %v3316 = vxor.u32 %v3311, 2147483648
      %v3317 = vmul.f32 %v3315, 1.442695
      %v3318 = vpow.pop %v3317
      %v3319 = vmul.f32 %v3316, 1.442695
      %v3320 = vpow.pop %v3319
      %v3321 = vadd.f32 %v3318, 1.0
      %v3322 = vadd.f32 %v3320, 1.0
      %v3323 = vrcp.pop %v3321
      %v3324 = vmul.f32 1.0, %v3323
      %v3325 = vrcp.pop %v3322
      %v3326 = vmul.f32 1.0, %v3325
      %3327 = vmatprep.subr.bf16.mxu0 %v3034
      %3328 = vmatpush1.bf16.msra.mxu0 %v3033
      %3329 = vmatprep.subr.bf16.mxu0 %v3032
      %3330 = vmatpush1.bf16.msra.mxu0 %v3031
      %3331 = vmatprep.subr.bf16.mxu0 %v3030
      %3332 = vmatpush1.bf16.msra.mxu0 %v3029
      %3333 = vmatprep.subr.bf16.mxu0 %v3028
      %3334 = vmatpush1.bf16.msra.mxu0 %v3027
      %3335 = vmatprep.subr.bf16.mxu0 %v3026
      %3336 = vmatpush1.bf16.msra.mxu0 %v3025
      %3337 = vmatprep.subr.bf16.mxu0 %v3024
      %3338 = vmatpush1.bf16.msra.mxu0 %v3023
      %3339 = vmatprep.subr.bf16.mxu0 %v3022
      %3340 = vmatpush1.bf16.msra.mxu0 %v3021
      %3341 = vmatprep.subr.bf16.mxu0 %v3020
      %3342 = vmatpush1.bf16.msra.mxu0 %v3019
      %3343 = vmatprep.subr.bf16.mxu0 0
      %3344 = vmatpush2.bf16.msra.mxu0 0
      %3345 = vmatprep.subr.bf16.mxu0 0
      %3346 = vmatpush2.bf16.msra.mxu0 0
      %3347 = vmatprep.subr.bf16.mxu0 0
      %3348 = vmatpush2.bf16.msra.mxu0 0
      %3349 = vmatprep.subr.bf16.mxu0 0
      %3350 = vmatpush2.bf16.msra.mxu0 0
      %3351 = vmatprep.subr.bf16.mxu0 0
      %3352 = vmatpush2.bf16.msra.mxu0 0
      %3353 = vmatprep.subr.bf16.mxu0 0
      %3354 = vmatpush2.bf16.msra.mxu0 0
      %3355 = vmatprep.subr.bf16.mxu0 0
      %3356 = vmatpush2.bf16.msra.mxu0 0
      %3357 = vmatprep.subr.bf16.mxu0 0
      %3358 = vmatpush2.bf16.msra.mxu0 0
      %3359 = vmatprep.mubr.bf16.mxu0 0
      %3360 = vmatmul.mubr.bf16.gmra.mxu0 %v3035
      %v3361 = vpop.f32.mrf.mxu0
      %v3362 = vadd.f32 %v3123, %v3361
      %v3363 = vpop.f32.mrf.mxu0
      %v3364 = vadd.f32 %v3123, %v3363
      %v3365 = vpop.f32.mrf.mxu0
      %v3366 = vpop.f32.mrf.mxu0
      %3367 = vdwg.mxu0
      %v3368 = vxor.u32 %v3362, 2147483648
      %v3369 = vxor.u32 %v3364, 2147483648
      %v3370 = vmul.f32 %v3368, 1.442695
      %v3371 = vpow.pop %v3370
      %v3372 = vmul.f32 %v3369, 1.442695
      %v3373 = vpow.pop %v3372
      %v3374 = vadd.f32 %v3371, 1.0
      %v3375 = vadd.f32 %v3373, 1.0
      %v3376 = vrcp.pop %v3374
      %v3377 = vmul.f32 1.0, %v3376
      %v3378 = vrcp.pop %v3375
      %v3379 = vmul.f32 1.0, %v3378
      %s3380 = scalar_lea.vmem %s7, 1
      %v3381 = vld [vmem:[%s3380] sm:$0x1]
      %3382 = vmatprep.subr.bf16.mxu0 %v3026
      %3383 = vmatpush1.bf16.msra.mxu0 %v3025
      %3384 = vmatprep.subr.bf16.mxu0 %v3024
      %3385 = vmatpush1.bf16.msra.mxu0 %v3023
      %3386 = vmatprep.subr.bf16.mxu0 %v3022
      %3387 = vmatpush1.bf16.msra.mxu0 %v3021
      %3388 = vmatprep.subr.bf16.mxu0 %v3020
      %3389 = vmatpush1.bf16.msra.mxu0 %v3019
      %3390 = vmatprep.subr.bf16.mxu0 %v3198
      %3391 = vmatpush1.bf16.msra.mxu0 %v3197
      %3392 = vmatprep.subr.bf16.mxu0 %v3196
      %3393 = vmatpush1.bf16.msra.mxu0 %v3195
      %3394 = vmatprep.subr.bf16.mxu0 %v3087
      %3395 = vmatpush1.bf16.msra.mxu0 %v3086
      %3396 = vmatprep.subr.bf16.mxu0 %v3085
      %3397 = vmatpush1.bf16.msra.mxu0 %v3084
      %3398 = vmatprep.subr.bf16.mxu0 0
      %3399 = vmatpush2.bf16.msra.mxu0 0
      %3400 = vmatprep.subr.bf16.mxu0 0
      %3401 = vmatpush2.bf16.msra.mxu0 0
      %3402 = vmatprep.subr.bf16.mxu0 0
      %3403 = vmatpush2.bf16.msra.mxu0 0
      %3404 = vmatprep.subr.bf16.mxu0 0
      %3405 = vmatpush2.bf16.msra.mxu0 0
      %3406 = vmatprep.subr.bf16.mxu0 0
      %3407 = vmatpush2.bf16.msra.mxu0 0
      %3408 = vmatprep.subr.bf16.mxu0 0
      %3409 = vmatpush2.bf16.msra.mxu0 0
      %3410 = vmatprep.subr.bf16.mxu0 0
      %3411 = vmatpush2.bf16.msra.mxu0 0
      %3412 = vmatprep.subr.bf16.mxu0 0
      %3413 = vmatpush2.bf16.msra.mxu0 0
      %3414 = vmatprep.mubr.bf16.mxu0 0
      %3415 = vmatmul.mubr.bf16.gmra.mxu0 %v3381
      %v3416 = vpop.f32.mrf.mxu0
      %v3417 = vadd.f32 %v3123, %v3416
      %v3418 = vpop.f32.mrf.mxu0
      %v3419 = vadd.f32 %v3123, %v3418
      %v3420 = vpop.f32.mrf.mxu0
      %v3421 = vpop.f32.mrf.mxu0
      %3422 = vdwg.mxu0
      %v3423 = vxor.u32 %v3417, 2147483648
      %v3424 = vxor.u32 %v3419, 2147483648
      %v3425 = vmul.f32 %v3423, 1.442695
      %v3426 = vpow.pop %v3425
      %v3427 = vmul.f32 %v3424, 1.442695
      %v3428 = vpow.pop %v3427
      %v3429 = vadd.f32 %v3426, 1.0
      %v3430 = vadd.f32 %v3428, 1.0
      %v3431 = vrcp.pop %v3429
      %v3432 = vmul.f32 1.0, %v3431
      %v3433 = vrcp.pop %v3430
      %v3434 = vmul.f32 1.0, %v3433
      %3435 = vrot.lane.b32.xlu0 %v3027, 15
      %v3436 = vpop.permute.xlu0 %3435
      %3437 = vrot.lane.b32.xlu0 %v3028, 15
      %v3438 = vpop.permute.xlu0 %3437
      %3439 = vrot.lane.b32.xlu0 %v3029, 15
      %v3440 = vpop.permute.xlu0 %3439
      %3441 = vrot.lane.b32.xlu0 %v3030, 15
      %v3442 = vpop.permute.xlu0 %3441
      %v3443 = vsel %vm2454, %v3436, %v3438
      %v3444 = vsel %vm2454, %v3440, %v3442
      %v3448 = vsel %vm577, 0, %v3436
      %v3451 = vsel %vm577, 0, %v3440
      %v3453 = vsel %vm2479, %v3448, 0
      %v3454 = vsel %vm2480, %v3443, 0
      %v3455 = vsel %vm2479, %v3451, 0
      %v3456 = vsel %vm2480, %v3444, 0
      %3461 = vrot.lane.b32.xlu0 %v3019, 127
      %v3462 = vpop.permute.xlu0 %3461
      %3463 = vrot.lane.b32.xlu0 %v3020, 127
      %v3464 = vpop.permute.xlu0 %3463
      %3465 = vrot.lane.b32.xlu0 %v3021, 127
      %v3466 = vpop.permute.xlu0 %3465
      %3467 = vrot.lane.b32.xlu0 %v3022, 127
      %v3468 = vpop.permute.xlu0 %3467
      %v3469 = vsel %vm2532, %v3462, %v3464
      %v3470 = vsel %vm2532, %v3466, %v3468
      %v3474 = vsel %vm2537, %v3464, 0
      %v3477 = vsel %vm2537, %v3468, 0
      %v3479 = vsel %vm2558, %v3469, 0
      %v3480 = vsel %vm2559, %v3474, 0
      %v3481 = vsel %vm2558, %v3470, 0
      %v3482 = vsel %vm2559, %v3477, 0
      %3483 = vmatprep.subr.bf16.mxu0 %v3482
      %3484 = vmatpush1.bf16.msra.mxu0 %v3481
      %3485 = vmatprep.subr.bf16.mxu0 %v3480
      %3486 = vmatpush1.bf16.msra.mxu0 %v3479
      %3487 = vmatprep.subr.bf16.mxu0 %v3026
      %3488 = vmatpush1.bf16.msra.mxu0 %v3025
      %3489 = vmatprep.subr.bf16.mxu0 %v3024
      %3490 = vmatpush1.bf16.msra.mxu0 %v3023
      %3491 = vmatprep.subr.bf16.mxu0 %v3456
      %3492 = vmatpush1.bf16.msra.mxu0 %v3455
      %3493 = vmatprep.subr.bf16.mxu0 %v3454
      %3494 = vmatpush1.bf16.msra.mxu0 %v3453
      %3495 = vmatprep.subr.bf16.mxu0 %v3198
      %3496 = vmatpush1.bf16.msra.mxu0 %v3197
      %3497 = vmatprep.subr.bf16.mxu0 %v3196
      %3498 = vmatpush1.bf16.msra.mxu0 %v3195
      %3499 = vmatprep.subr.bf16.mxu0 0
      %3500 = vmatpush2.bf16.msra.mxu0 0
      %3501 = vmatprep.subr.bf16.mxu0 0
      %3502 = vmatpush2.bf16.msra.mxu0 0
      %3503 = vmatprep.subr.bf16.mxu0 0
      %3504 = vmatpush2.bf16.msra.mxu0 0
      %3505 = vmatprep.subr.bf16.mxu0 0
      %3506 = vmatpush2.bf16.msra.mxu0 0
      %3507 = vmatprep.subr.bf16.mxu0 0
      %3508 = vmatpush2.bf16.msra.mxu0 0
      %3509 = vmatprep.subr.bf16.mxu0 0
      %3510 = vmatpush2.bf16.msra.mxu0 0
      %3511 = vmatprep.subr.bf16.mxu0 0
      %3512 = vmatpush2.bf16.msra.mxu0 0
      %3513 = vmatprep.subr.bf16.mxu0 0
      %3514 = vmatpush2.bf16.msra.mxu0 0
      %3515 = vmatprep.mubr.bf16.mxu0 0
      %3516 = vmatmul.mubr.bf16.gmra.mxu0 %v3381
      %v3517 = vpop.f32.mrf.mxu0
      %v3518 = vadd.f32 %v3123, %v3517
      %v3519 = vpop.f32.mrf.mxu0
      %v3520 = vadd.f32 %v3123, %v3519
      %v3521 = vpop.f32.mrf.mxu0
      %v3522 = vpop.f32.mrf.mxu0
      %3523 = vdwg.mxu0
      %v3524 = vxor.u32 %v3518, 2147483648
      %v3525 = vxor.u32 %v3520, 2147483648
      %v3526 = vmul.f32 %v3524, 1.442695
      %v3527 = vpow.pop %v3526
      %v3528 = vmul.f32 %v3525, 1.442695
      %v3529 = vpow.pop %v3528
      %v3530 = vadd.f32 %v3527, 1.0
      %v3531 = vadd.f32 %v3529, 1.0
      %v3532 = vrcp.pop %v3530
      %v3533 = vmul.f32 1.0, %v3532
      %v3534 = vrcp.pop %v3531
      %v3535 = vmul.f32 1.0, %v3534
      %3536 = vmatprep.subr.bf16.mxu0 %v3034
      %3537 = vmatpush1.bf16.msra.mxu0 %v3033
      %3538 = vmatprep.subr.bf16.mxu0 %v3032
      %3539 = vmatpush1.bf16.msra.mxu0 %v3031
      %3540 = vmatprep.subr.bf16.mxu0 %v3030
      %3541 = vmatpush1.bf16.msra.mxu0 %v3029
      %3542 = vmatprep.subr.bf16.mxu0 %v3028
      %3543 = vmatpush1.bf16.msra.mxu0 %v3027
      %3544 = vmatprep.subr.bf16.mxu0 %v3026
      %3545 = vmatpush1.bf16.msra.mxu0 %v3025
      %3546 = vmatprep.subr.bf16.mxu0 %v3024
      %3547 = vmatpush1.bf16.msra.mxu0 %v3023
      %3548 = vmatprep.subr.bf16.mxu0 %v3022
      %3549 = vmatpush1.bf16.msra.mxu0 %v3021
      %3550 = vmatprep.subr.bf16.mxu0 %v3020
      %3551 = vmatpush1.bf16.msra.mxu0 %v3019
      %3552 = vmatprep.subr.bf16.mxu0 0
      %3553 = vmatpush2.bf16.msra.mxu0 0
      %3554 = vmatprep.subr.bf16.mxu0 0
      %3555 = vmatpush2.bf16.msra.mxu0 0
      %3556 = vmatprep.subr.bf16.mxu0 0
      %3557 = vmatpush2.bf16.msra.mxu0 0
      %3558 = vmatprep.subr.bf16.mxu0 0
      %3559 = vmatpush2.bf16.msra.mxu0 0
      %3560 = vmatprep.subr.bf16.mxu0 0
      %3561 = vmatpush2.bf16.msra.mxu0 0
      %3562 = vmatprep.subr.bf16.mxu0 0
      %3563 = vmatpush2.bf16.msra.mxu0 0
      %3564 = vmatprep.subr.bf16.mxu0 0
      %3565 = vmatpush2.bf16.msra.mxu0 0
      %3566 = vmatprep.subr.bf16.mxu0 0
      %3567 = vmatpush2.bf16.msra.mxu0 0
      %3568 = vmatprep.mubr.bf16.mxu0 0
      %3569 = vmatmul.mubr.bf16.gmra.mxu0 %v3381
      %v3570 = vpop.f32.mrf.mxu0
      %v3571 = vadd.f32 %v3123, %v3570
      %v3572 = vpop.f32.mrf.mxu0
      %v3573 = vadd.f32 %v3123, %v3572
      %v3574 = vpop.f32.mrf.mxu0
      %v3575 = vpop.f32.mrf.mxu0
      %3576 = vdwg.mxu0
      %v3577 = vxor.u32 %v3571, 2147483648
      %v3578 = vxor.u32 %v3573, 2147483648
      %v3579 = vmul.f32 %v3577, 1.442695
      %v3580 = vpow.pop %v3579
      %v3581 = vmul.f32 %v3578, 1.442695
      %v3582 = vpow.pop %v3581
      %v3583 = vadd.f32 %v3580, 1.0
      %v3584 = vadd.f32 %v3582, 1.0
      %v3585 = vrcp.pop %v3583
      %v3586 = vmul.f32 1.0, %v3585
      %v3587 = vrcp.pop %v3584
      %v3588 = vmul.f32 1.0, %v3587
      %3589 = vrot.lane.b32.xlu0 %v3027, 127
      %v3590 = vpop.permute.xlu0 %3589
      %3591 = vrot.lane.b32.xlu0 %v3028, 127
      %v3592 = vpop.permute.xlu0 %3591
      %3593 = vrot.lane.b32.xlu0 %v3029, 127
      %v3594 = vpop.permute.xlu0 %3593
      %3595 = vrot.lane.b32.xlu0 %v3030, 127
      %v3596 = vpop.permute.xlu0 %3595
      %v3597 = vsel %vm2532, %v3590, %v3592
      %v3598 = vsel %vm2532, %v3594, %v3596
      %v3602 = vsel %vm2537, %v3592, 0
      %v3605 = vsel %vm2537, %v3596, 0
      %v3607 = vsel %vm2558, %v3597, 0
      %v3608 = vsel %vm2559, %v3602, 0
      %v3609 = vsel %vm2558, %v3598, 0
      %v3610 = vsel %vm2559, %v3605, 0
      %3611 = vmatprep.subr.bf16.mxu0 %v3610
      %3612 = vmatpush1.bf16.msra.mxu0 %v3609
      %3613 = vmatprep.subr.bf16.mxu0 %v3608
      %3614 = vmatpush1.bf16.msra.mxu0 %v3607
      %3615 = vmatprep.subr.bf16.mxu0 %v3034
      %3616 = vmatpush1.bf16.msra.mxu0 %v3033
      %3617 = vmatprep.subr.bf16.mxu0 %v3032
      %3618 = vmatpush1.bf16.msra.mxu0 %v3031
      %3619 = vmatprep.subr.bf16.mxu0 %v3482
      %3620 = vmatpush1.bf16.msra.mxu0 %v3481
      %3621 = vmatprep.subr.bf16.mxu0 %v3480
      %3622 = vmatpush1.bf16.msra.mxu0 %v3479
      %3623 = vmatprep.subr.bf16.mxu0 %v3026
      %3624 = vmatpush1.bf16.msra.mxu0 %v3025
      %3625 = vmatprep.subr.bf16.mxu0 %v3024
      %3626 = vmatpush1.bf16.msra.mxu0 %v3023
      %3627 = vmatprep.subr.bf16.mxu0 0
      %3628 = vmatpush2.bf16.msra.mxu0 0
      %3629 = vmatprep.subr.bf16.mxu0 0
      %3630 = vmatpush2.bf16.msra.mxu0 0
      %3631 = vmatprep.subr.bf16.mxu0 0
      %3632 = vmatpush2.bf16.msra.mxu0 0
      %3633 = vmatprep.subr.bf16.mxu0 0
      %3634 = vmatpush2.bf16.msra.mxu0 0
      %3635 = vmatprep.subr.bf16.mxu0 0
      %3636 = vmatpush2.bf16.msra.mxu0 0
      %3637 = vmatprep.subr.bf16.mxu0 0
      %3638 = vmatpush2.bf16.msra.mxu0 0
      %3639 = vmatprep.subr.bf16.mxu0 0
      %3640 = vmatpush2.bf16.msra.mxu0 0
      %3641 = vmatprep.subr.bf16.mxu0 0
      %3642 = vmatpush2.bf16.msra.mxu0 0
      %3643 = vmatprep.mubr.bf16.mxu0 0
      %3644 = vmatmul.mubr.bf16.gmra.mxu0 %v3381
      %v3645 = vpop.f32.mrf.mxu0
      %v3646 = vadd.f32 %v3123, %v3645
      %v3647 = vpop.f32.mrf.mxu0
      %v3648 = vadd.f32 %v3123, %v3647
      %v3649 = vpop.f32.mrf.mxu0
      %v3650 = vpop.f32.mrf.mxu0
      %3651 = vdwg.mxu0
      %v3652 = vxor.u32 %v3646, 2147483648
      %v3653 = vxor.u32 %v3648, 2147483648
      %v3654 = vmul.f32 %v3652, 1.442695
      %v3655 = vpow.pop %v3654
      %v3656 = vmul.f32 %v3653, 1.442695
      %v3657 = vpow.pop %v3656
      %v3658 = vadd.f32 %v3655, 1.0
      %v3659 = vadd.f32 %v3657, 1.0
      %v3660 = vrcp.pop %v3658
      %v3661 = vmul.f32 1.0, %v3660
      %v3662 = vrcp.pop %v3659
      %v3663 = vmul.f32 1.0, %v3662
      %s3664 = scalar_lea.vmem %s7, 2
      %v3665 = vld [vmem:[%s3664] sm:$0x1]
      %3666 = vmatprep.subr.bf16.mxu0 %v3030
      %3667 = vmatpush1.bf16.msra.mxu0 %v3029
      %3668 = vmatprep.subr.bf16.mxu0 %v3028
      %3669 = vmatpush1.bf16.msra.mxu0 %v3027
      %3670 = vmatprep.subr.bf16.mxu0 %v3273
      %3671 = vmatpush1.bf16.msra.mxu0 %v3272
      %3672 = vmatprep.subr.bf16.mxu0 %v3271
      %3673 = vmatpush1.bf16.msra.mxu0 %v3270
      %3674 = vmatprep.subr.bf16.mxu0 %v3022
      %3675 = vmatpush1.bf16.msra.mxu0 %v3021
      %3676 = vmatprep.subr.bf16.mxu0 %v3020
      %3677 = vmatpush1.bf16.msra.mxu0 %v3019
      %3678 = vmatprep.subr.bf16.mxu0 %v3113
      %3679 = vmatpush1.bf16.msra.mxu0 %v3112
      %3680 = vmatprep.subr.bf16.mxu0 %v3111
      %3681 = vmatpush1.bf16.msra.mxu0 %v3110
      %3682 = vmatprep.subr.bf16.mxu0 0
      %3683 = vmatpush2.bf16.msra.mxu0 0
      %3684 = vmatprep.subr.bf16.mxu0 0
      %3685 = vmatpush2.bf16.msra.mxu0 0
      %3686 = vmatprep.subr.bf16.mxu0 0
      %3687 = vmatpush2.bf16.msra.mxu0 0
      %3688 = vmatprep.subr.bf16.mxu0 0
      %3689 = vmatpush2.bf16.msra.mxu0 0
      %3690 = vmatprep.subr.bf16.mxu0 0
      %3691 = vmatpush2.bf16.msra.mxu0 0
      %3692 = vmatprep.subr.bf16.mxu0 0
      %3693 = vmatpush2.bf16.msra.mxu0 0
      %3694 = vmatprep.subr.bf16.mxu0 0
      %3695 = vmatpush2.bf16.msra.mxu0 0
      %3696 = vmatprep.subr.bf16.mxu0 0
      %3697 = vmatpush2.bf16.msra.mxu0 0
      %3698 = vmatprep.mubr.bf16.mxu0 0
      %3699 = vmatmul.mubr.bf16.gmra.mxu0 %v3665
      %v3700 = vpop.f32.mrf.mxu0
      %v3701 = vadd.f32 %v3123, %v3700
      %v3702 = vpop.f32.mrf.mxu0
      %v3703 = vadd.f32 %v3123, %v3702
      %v3704 = vpop.f32.mrf.mxu0
      %v3705 = vpop.f32.mrf.mxu0
      %3706 = vdwg.mxu0
      %v3707 = vxor.u32 %v3701, 2147483648
      %v3708 = vxor.u32 %v3703, 2147483648
      %v3709 = vmul.f32 %v3707, 1.442695
      %v3710 = vpow.pop %v3709
      %v3711 = vmul.f32 %v3708, 1.442695
      %v3712 = vpow.pop %v3711
      %v3713 = vadd.f32 %v3710, 1.0
      %v3714 = vadd.f32 %v3712, 1.0
      %v3715 = vrcp.pop %v3713
      %v3716 = vmul.f32 1.0, %v3715
      %v3717 = vrcp.pop %v3714
      %v3718 = vmul.f32 1.0, %v3717
      %3719 = vmatprep.subr.bf16.mxu0 %v3034
      %3720 = vmatpush1.bf16.msra.mxu0 %v3033
      %3721 = vmatprep.subr.bf16.mxu0 %v3032
      %3722 = vmatpush1.bf16.msra.mxu0 %v3031
      %3723 = vmatprep.subr.bf16.mxu0 %v3030
      %3724 = vmatpush1.bf16.msra.mxu0 %v3029
      %3725 = vmatprep.subr.bf16.mxu0 %v3028
      %3726 = vmatpush1.bf16.msra.mxu0 %v3027
      %3727 = vmatprep.subr.bf16.mxu0 %v3026
      %3728 = vmatpush1.bf16.msra.mxu0 %v3025
      %3729 = vmatprep.subr.bf16.mxu0 %v3024
      %3730 = vmatpush1.bf16.msra.mxu0 %v3023
      %3731 = vmatprep.subr.bf16.mxu0 %v3022
      %3732 = vmatpush1.bf16.msra.mxu0 %v3021
      %3733 = vmatprep.subr.bf16.mxu0 %v3020
      %3734 = vmatpush1.bf16.msra.mxu0 %v3019
      %3735 = vmatprep.subr.bf16.mxu0 0
      %3736 = vmatpush2.bf16.msra.mxu0 0
      %3737 = vmatprep.subr.bf16.mxu0 0
      %3738 = vmatpush2.bf16.msra.mxu0 0
      %3739 = vmatprep.subr.bf16.mxu0 0
      %3740 = vmatpush2.bf16.msra.mxu0 0
      %3741 = vmatprep.subr.bf16.mxu0 0
      %3742 = vmatpush2.bf16.msra.mxu0 0
      %3743 = vmatprep.subr.bf16.mxu0 0
      %3744 = vmatpush2.bf16.msra.mxu0 0
      %3745 = vmatprep.subr.bf16.mxu0 0
      %3746 = vmatpush2.bf16.msra.mxu0 0
      %3747 = vmatprep.subr.bf16.mxu0 0
      %3748 = vmatpush2.bf16.msra.mxu0 0
      %3749 = vmatprep.subr.bf16.mxu0 0
      %3750 = vmatpush2.bf16.msra.mxu0 0
      %3751 = vmatprep.mubr.bf16.mxu0 0
      %3752 = vmatmul.mubr.bf16.gmra.mxu0 %v3665
      %v3753 = vpop.f32.mrf.mxu0
      %v3754 = vadd.f32 %v3123, %v3753
      %v3755 = vpop.f32.mrf.mxu0
      %v3756 = vadd.f32 %v3123, %v3755
      %v3757 = vpop.f32.mrf.mxu0
      %v3758 = vpop.f32.mrf.mxu0
      %3759 = vdwg.mxu0
      %v3760 = vxor.u32 %v3754, 2147483648
      %v3761 = vxor.u32 %v3756, 2147483648
      %v3762 = vmul.f32 %v3760, 1.442695
      %v3763 = vpow.pop %v3762
      %v3764 = vmul.f32 %v3761, 1.442695
      %v3765 = vpow.pop %v3764
      %v3766 = vadd.f32 %v3763, 1.0
      %v3767 = vadd.f32 %v3765, 1.0
      %v3768 = vrcp.pop %v3766
      %v3769 = vmul.f32 1.0, %v3768
      %v3770 = vrcp.pop %v3767
      %v3771 = vmul.f32 1.0, %v3770
      %3772 = vrot.lane.b32.xlu0 %v3023, 113
      %v3773 = vpop.permute.xlu0 %3772
      %3774 = vrot.lane.b32.xlu0 %v3024, 113
      %v3775 = vpop.permute.xlu0 %3774
      %3776 = vrot.lane.b32.xlu0 %v3025, 113
      %v3777 = vpop.permute.xlu0 %3776
      %3778 = vrot.lane.b32.xlu0 %v3026, 113
      %v3779 = vpop.permute.xlu0 %3778
      %v3780 = vsel %vm2572, %v3773, %v3775
      %v3781 = vsel %vm2572, %v3777, %v3779
      %v3785 = vsel %vm2577, %v3775, 0
      %v3788 = vsel %vm2577, %v3779, 0
      %v3790 = vsel %vm2598, %v3780, 0
      %v3791 = vsel %vm2599, %v3785, 0
      %v3792 = vsel %vm2598, %v3781, 0
      %v3793 = vsel %vm2599, %v3788, 0
      %3794 = vrot.lane.b32.xlu0 %v3019, 112
      %v3795 = vpop.permute.xlu0 %3794
      %3796 = vrot.lane.b32.xlu0 %v3020, 112
      %v3797 = vpop.permute.xlu0 %3796
      %3798 = vrot.lane.b32.xlu0 %v3021, 112
      %v3799 = vpop.permute.xlu0 %3798
      %3800 = vrot.lane.b32.xlu0 %v3022, 112
      %v3801 = vpop.permute.xlu0 %3800
      %v3802 = vsel %vm2612, %v3795, %v3797
      %v3803 = vsel %vm2612, %v3799, %v3801
      %v3807 = vsel %vm2617, %v3797, 0
      %v3810 = vsel %vm2617, %v3801, 0
      %v3812 = vsel %vm2638, %v3802, 0
      %v3813 = vsel %vm2639, %v3807, 0
      %v3814 = vsel %vm2638, %v3803, 0
      %v3815 = vsel %vm2639, %v3810, 0
      %3816 = vmatprep.subr.bf16.mxu0 %v3815
      %3817 = vmatpush1.bf16.msra.mxu0 %v3814
      %3818 = vmatprep.subr.bf16.mxu0 %v3813
      %3819 = vmatpush1.bf16.msra.mxu0 %v3812
      %3820 = vmatprep.subr.bf16.mxu0 %v3793
      %3821 = vmatpush1.bf16.msra.mxu0 %v3792
      %3822 = vmatprep.subr.bf16.mxu0 %v3791
      %3823 = vmatpush1.bf16.msra.mxu0 %v3790
      %3824 = vmatprep.subr.bf16.mxu0 %v3030
      %3825 = vmatpush1.bf16.msra.mxu0 %v3029
      %3826 = vmatprep.subr.bf16.mxu0 %v3028
      %3827 = vmatpush1.bf16.msra.mxu0 %v3027
      %3828 = vmatprep.subr.bf16.mxu0 %v3273
      %3829 = vmatpush1.bf16.msra.mxu0 %v3272
      %3830 = vmatprep.subr.bf16.mxu0 %v3271
      %3831 = vmatpush1.bf16.msra.mxu0 %v3270
      %3832 = vmatprep.subr.bf16.mxu0 0
      %3833 = vmatpush2.bf16.msra.mxu0 0
      %3834 = vmatprep.subr.bf16.mxu0 0
      %3835 = vmatpush2.bf16.msra.mxu0 0
      %3836 = vmatprep.subr.bf16.mxu0 0
      %3837 = vmatpush2.bf16.msra.mxu0 0
      %3838 = vmatprep.subr.bf16.mxu0 0
      %3839 = vmatpush2.bf16.msra.mxu0 0
      %3840 = vmatprep.subr.bf16.mxu0 0
      %3841 = vmatpush2.bf16.msra.mxu0 0
      %3842 = vmatprep.subr.bf16.mxu0 0
      %3843 = vmatpush2.bf16.msra.mxu0 0
      %3844 = vmatprep.subr.bf16.mxu0 0
      %3845 = vmatpush2.bf16.msra.mxu0 0
      %3846 = vmatprep.subr.bf16.mxu0 0
      %3847 = vmatpush2.bf16.msra.mxu0 0
      %3848 = vmatprep.mubr.bf16.mxu0 0
      %3849 = vmatmul.mubr.bf16.gmra.mxu0 %v3665
      %v3850 = vpop.f32.mrf.mxu0
      %v3851 = vadd.f32 %v3123, %v3850
      %v3852 = vpop.f32.mrf.mxu0
      %v3853 = vadd.f32 %v3123, %v3852
      %v3854 = vpop.f32.mrf.mxu0
      %v3855 = vpop.f32.mrf.mxu0
      %3856 = vdwg.mxu0
      %v3857 = vxor.u32 %v3851, 2147483648
      %v3858 = vxor.u32 %v3853, 2147483648
      %v3859 = vmul.f32 %v3857, 1.442695
      %v3860 = vpow.pop %v3859
      %v3861 = vmul.f32 %v3858, 1.442695
      %v3862 = vpow.pop %v3861
      %v3863 = vadd.f32 %v3860, 1.0
      %v3864 = vadd.f32 %v3862, 1.0
      %v3865 = vrcp.pop %v3863
      %v3866 = vmul.f32 1.0, %v3865
      %v3867 = vrcp.pop %v3864
      %v3868 = vmul.f32 1.0, %v3867
      %3869 = vrot.lane.b32.xlu0 %v3023, 112
      %v3870 = vpop.permute.xlu0 %3869
      %3871 = vrot.lane.b32.xlu0 %v3024, 112
      %v3872 = vpop.permute.xlu0 %3871
      %3873 = vrot.lane.b32.xlu0 %v3025, 112
      %v3874 = vpop.permute.xlu0 %3873
      %3875 = vrot.lane.b32.xlu0 %v3026, 112
      %v3876 = vpop.permute.xlu0 %3875
      %v3877 = vsel %vm2612, %v3870, %v3872
      %v3878 = vsel %vm2612, %v3874, %v3876
      %v3882 = vsel %vm2617, %v3872, 0
      %v3885 = vsel %vm2617, %v3876, 0
      %v3887 = vsel %vm2638, %v3877, 0
      %v3888 = vsel %vm2639, %v3882, 0
      %v3889 = vsel %vm2638, %v3878, 0
      %v3890 = vsel %vm2639, %v3885, 0
      %3891 = vmatprep.subr.bf16.mxu0 %v3890
      %3892 = vmatpush1.bf16.msra.mxu0 %v3889
      %3893 = vmatprep.subr.bf16.mxu0 %v3888
      %3894 = vmatpush1.bf16.msra.mxu0 %v3887
      %3895 = vmatprep.subr.bf16.mxu0 %v3815
      %3896 = vmatpush1.bf16.msra.mxu0 %v3814
      %3897 = vmatprep.subr.bf16.mxu0 %v3813
      %3898 = vmatpush1.bf16.msra.mxu0 %v3812
      %3899 = vmatprep.subr.bf16.mxu0 %v3034
      %3900 = vmatpush1.bf16.msra.mxu0 %v3033
      %3901 = vmatprep.subr.bf16.mxu0 %v3032
      %3902 = vmatpush1.bf16.msra.mxu0 %v3031
      %3903 = vmatprep.subr.bf16.mxu0 %v3030
      %3904 = vmatpush1.bf16.msra.mxu0 %v3029
      %3905 = vmatprep.subr.bf16.mxu0 %v3028
      %3906 = vmatpush1.bf16.msra.mxu0 %v3027
      %3907 = vmatprep.subr.bf16.mxu0 0
      %3908 = vmatpush2.bf16.msra.mxu0 0
      %3909 = vmatprep.subr.bf16.mxu0 0
      %3910 = vmatpush2.bf16.msra.mxu0 0
      %3911 = vmatprep.subr.bf16.mxu0 0
      %3912 = vmatpush2.bf16.msra.mxu0 0
      %3913 = vmatprep.subr.bf16.mxu0 0
      %3914 = vmatpush2.bf16.msra.mxu0 0
      %3915 = vmatprep.subr.bf16.mxu0 0
      %3916 = vmatpush2.bf16.msra.mxu0 0
      %3917 = vmatprep.subr.bf16.mxu0 0
      %3918 = vmatpush2.bf16.msra.mxu0 0
      %3919 = vmatprep.subr.bf16.mxu0 0
      %3920 = vmatpush2.bf16.msra.mxu0 0
      %3921 = vmatprep.subr.bf16.mxu0 0
      %3922 = vmatpush2.bf16.msra.mxu0 0
      %3923 = vmatprep.mubr.bf16.mxu0 0
      %3924 = vmatmul.mubr.bf16.gmra.mxu0 %v3665
      %v3925 = vpop.f32.mrf.mxu0
      %v3926 = vadd.f32 %v3123, %v3925
      %v3927 = vpop.f32.mrf.mxu0
      %v3928 = vadd.f32 %v3123, %v3927
      %v3929 = vpop.f32.mrf.mxu0
      %v3930 = vpop.f32.mrf.mxu0
      %3931 = vdwg.mxu0
      %v3932 = vxor.u32 %v3926, 2147483648
      %v3933 = vxor.u32 %v3928, 2147483648
      %v3934 = vmul.f32 %v3932, 1.442695
      %v3935 = vpow.pop %v3934
      %v3936 = vmul.f32 %v3933, 1.442695
      %v3937 = vpow.pop %v3936
      %v3938 = vadd.f32 %v3935, 1.0
      %v3939 = vadd.f32 %v3937, 1.0
      %v3940 = vrcp.pop %v3938
      %v3941 = vmul.f32 1.0, %v3940
      %v3942 = vrcp.pop %v3939
      %v3943 = vmul.f32 1.0, %v3942
      %s3944 = scalar_lea.vmem %s7, 3
      %v3945 = vld [vmem:[%s3944] sm:$0x1]
      %3946 = vmatprep.subr.bf16.mxu0 %v3034
      %3947 = vmatpush1.bf16.msra.mxu0 %v3033
      %3948 = vmatprep.subr.bf16.mxu0 %v3032
      %3949 = vmatpush1.bf16.msra.mxu0 %v3031
      %3950 = vmatprep.subr.bf16.mxu0 %v3030
      %3951 = vmatpush1.bf16.msra.mxu0 %v3029
      %3952 = vmatprep.subr.bf16.mxu0 %v3028
      %3953 = vmatpush1.bf16.msra.mxu0 %v3027
      %3954 = vmatprep.subr.bf16.mxu0 %v3026
      %3955 = vmatpush1.bf16.msra.mxu0 %v3025
      %3956 = vmatprep.subr.bf16.mxu0 %v3024
      %3957 = vmatpush1.bf16.msra.mxu0 %v3023
      %3958 = vmatprep.subr.bf16.mxu0 %v3022
      %3959 = vmatpush1.bf16.msra.mxu0 %v3021
      %3960 = vmatprep.subr.bf16.mxu0 %v3020
      %3961 = vmatpush1.bf16.msra.mxu0 %v3019
      %3962 = vmatprep.subr.bf16.mxu0 0
      %3963 = vmatpush2.bf16.msra.mxu0 0
      %3964 = vmatprep.subr.bf16.mxu0 0
      %3965 = vmatpush2.bf16.msra.mxu0 0
      %3966 = vmatprep.subr.bf16.mxu0 0
      %3967 = vmatpush2.bf16.msra.mxu0 0
      %3968 = vmatprep.subr.bf16.mxu0 0
      %3969 = vmatpush2.bf16.msra.mxu0 0
      %3970 = vmatprep.subr.bf16.mxu0 0
      %3971 = vmatpush2.bf16.msra.mxu0 0
      %3972 = vmatprep.subr.bf16.mxu0 0
      %3973 = vmatpush2.bf16.msra.mxu0 0
      %3974 = vmatprep.subr.bf16.mxu0 0
      %3975 = vmatpush2.bf16.msra.mxu0 0
      %3976 = vmatprep.subr.bf16.mxu0 0
      %3977 = vmatpush2.bf16.msra.mxu0 0
      %3978 = vmatprep.mubr.bf16.mxu0 0
      %3979 = vmatmul.mubr.bf16.gmra.mxu0 %v3945
      %v3980 = vpop.f32.mrf.mxu0
      %v3981 = vadd.f32 %v3123, %v3980
      %v3982 = vpop.f32.mrf.mxu0
      %v3983 = vadd.f32 %v3123, %v3982
      %v3984 = vpop.f32.mrf.mxu0
      %v3985 = vpop.f32.mrf.mxu0
      %3986 = vdwg.mxu0
      %v3987 = vxor.u32 %v3981, 2147483648
      %v3988 = vxor.u32 %v3983, 2147483648
      %v3989 = vmul.f32 %v3987, 1.442695
      %v3990 = vpow.pop %v3989
      %v3991 = vmul.f32 %v3988, 1.442695
      %v3992 = vpow.pop %v3991
      %v3993 = vadd.f32 %v3990, 1.0
      %v3994 = vadd.f32 %v3992, 1.0
      %v3995 = vrcp.pop %v3993
      %v3996 = vmul.f32 1.0, %v3995
      %v3997 = vrcp.pop %v3994
      %v3998 = vmul.f32 1.0, %v3997
      %3999 = vmatprep.subr.bf16.mxu0 %v3610
      %4000 = vmatpush1.bf16.msra.mxu0 %v3609
      %4001 = vmatprep.subr.bf16.mxu0 %v3608
      %4002 = vmatpush1.bf16.msra.mxu0 %v3607
      %4003 = vmatprep.subr.bf16.mxu0 %v3034
      %4004 = vmatpush1.bf16.msra.mxu0 %v3033
      %4005 = vmatprep.subr.bf16.mxu0 %v3032
      %4006 = vmatpush1.bf16.msra.mxu0 %v3031
      %4007 = vmatprep.subr.bf16.mxu0 %v3482
      %4008 = vmatpush1.bf16.msra.mxu0 %v3481
      %4009 = vmatprep.subr.bf16.mxu0 %v3480
      %4010 = vmatpush1.bf16.msra.mxu0 %v3479
      %4011 = vmatprep.subr.bf16.mxu0 %v3026
      %4012 = vmatpush1.bf16.msra.mxu0 %v3025
      %4013 = vmatprep.subr.bf16.mxu0 %v3024
      %4014 = vmatpush1.bf16.msra.mxu0 %v3023
      %4015 = vmatprep.subr.bf16.mxu0 0
      %4016 = vmatpush2.bf16.msra.mxu0 0
      %4017 = vmatprep.subr.bf16.mxu0 0
      %4018 = vmatpush2.bf16.msra.mxu0 0
      %4019 = vmatprep.subr.bf16.mxu0 0
      %4020 = vmatpush2.bf16.msra.mxu0 0
      %4021 = vmatprep.subr.bf16.mxu0 0
      %4022 = vmatpush2.bf16.msra.mxu0 0
      %4023 = vmatprep.subr.bf16.mxu0 0
      %4024 = vmatpush2.bf16.msra.mxu0 0
      %4025 = vmatprep.subr.bf16.mxu0 0
      %4026 = vmatpush2.bf16.msra.mxu0 0
      %4027 = vmatprep.subr.bf16.mxu0 0
      %4028 = vmatpush2.bf16.msra.mxu0 0
      %4029 = vmatprep.subr.bf16.mxu0 0
      %4030 = vmatpush2.bf16.msra.mxu0 0
      %4031 = vmatprep.mubr.bf16.mxu0 0
      %4032 = vmatmul.mubr.bf16.gmra.mxu0 %v3945
      %v4033 = vpop.f32.mrf.mxu0
      %v4034 = vadd.f32 %v3123, %v4033
      %v4035 = vpop.f32.mrf.mxu0
      %v4036 = vadd.f32 %v3123, %v4035
      %v4037 = vpop.f32.mrf.mxu0
      %v4038 = vpop.f32.mrf.mxu0
      %4039 = vdwg.mxu0
      %v4040 = vxor.u32 %v4034, 2147483648
      %v4041 = vxor.u32 %v4036, 2147483648
      %v4042 = vmul.f32 %v4040, 1.442695
      %v4043 = vpow.pop %v4042
      %v4044 = vmul.f32 %v4041, 1.442695
      %v4045 = vpow.pop %v4044
      %v4046 = vadd.f32 %v4043, 1.0
      %v4047 = vadd.f32 %v4045, 1.0
      %v4048 = vrcp.pop %v4046
      %v4049 = vmul.f32 1.0, %v4048
      %v4050 = vrcp.pop %v4047
      %v4051 = vmul.f32 1.0, %v4050
      %4052 = vmatprep.subr.bf16.mxu0 %v3890
      %4053 = vmatpush1.bf16.msra.mxu0 %v3889
      %4054 = vmatprep.subr.bf16.mxu0 %v3888
      %4055 = vmatpush1.bf16.msra.mxu0 %v3887
      %4056 = vmatprep.subr.bf16.mxu0 %v3815
      %4057 = vmatpush1.bf16.msra.mxu0 %v3814
      %4058 = vmatprep.subr.bf16.mxu0 %v3813
      %4059 = vmatpush1.bf16.msra.mxu0 %v3812
      %4060 = vmatprep.subr.bf16.mxu0 %v3034
      %4061 = vmatpush1.bf16.msra.mxu0 %v3033
      %4062 = vmatprep.subr.bf16.mxu0 %v3032
      %4063 = vmatpush1.bf16.msra.mxu0 %v3031
      %4064 = vmatprep.subr.bf16.mxu0 %v3030
      %4065 = vmatpush1.bf16.msra.mxu0 %v3029
      %4066 = vmatprep.subr.bf16.mxu0 %v3028
      %4067 = vmatpush1.bf16.msra.mxu0 %v3027
      %4068 = vmatprep.subr.bf16.mxu0 0
      %4069 = vmatpush2.bf16.msra.mxu0 0
      %4070 = vmatprep.subr.bf16.mxu0 0
      %4071 = vmatpush2.bf16.msra.mxu0 0
      %4072 = vmatprep.subr.bf16.mxu0 0
      %4073 = vmatpush2.bf16.msra.mxu0 0
      %4074 = vmatprep.subr.bf16.mxu0 0
      %4075 = vmatpush2.bf16.msra.mxu0 0
      %4076 = vmatprep.subr.bf16.mxu0 0
      %4077 = vmatpush2.bf16.msra.mxu0 0
      %4078 = vmatprep.subr.bf16.mxu0 0
      %4079 = vmatpush2.bf16.msra.mxu0 0
      %4080 = vmatprep.subr.bf16.mxu0 0
      %4081 = vmatpush2.bf16.msra.mxu0 0
      %4082 = vmatprep.subr.bf16.mxu0 0
      %4083 = vmatpush2.bf16.msra.mxu0 0
      %4084 = vmatprep.mubr.bf16.mxu0 0
      %4085 = vmatmul.mubr.bf16.gmra.mxu0 %v3945
      %v4086 = vpop.f32.mrf.mxu0
      %v4087 = vadd.f32 %v3123, %v4086
      %v4088 = vpop.f32.mrf.mxu0
      %v4089 = vadd.f32 %v3123, %v4088
      %v4090 = vpop.f32.mrf.mxu0
      %v4091 = vpop.f32.mrf.mxu0
      %4092 = vdwg.mxu0
      %v4093 = vxor.u32 %v4087, 2147483648
      %v4094 = vxor.u32 %v4089, 2147483648
      %v4095 = vmul.f32 %v4093, 1.442695
      %v4096 = vpow.pop %v4095
      %v4097 = vmul.f32 %v4094, 1.442695
      %v4098 = vpow.pop %v4097
      %v4099 = vadd.f32 %v4096, 1.0
      %v4100 = vadd.f32 %v4098, 1.0
      %v4101 = vrcp.pop %v4099
      %v4102 = vmul.f32 1.0, %v4101
      %v4103 = vrcp.pop %v4100
      %v4104 = vmul.f32 1.0, %v4103
      %4105 = vrot.lane.b32.xlu0 %v3019, 111
      %v4106 = vpop.permute.xlu0 %4105
      %4107 = vrot.lane.b32.xlu0 %v3020, 111
      %v4108 = vpop.permute.xlu0 %4107
      %4109 = vrot.lane.b32.xlu0 %v3021, 111
      %v4110 = vpop.permute.xlu0 %4109
      %4111 = vrot.lane.b32.xlu0 %v3022, 111
      %v4112 = vpop.permute.xlu0 %4111
      %v4113 = vsel %vm2652, %v4106, %v4108
      %v4114 = vsel %vm2652, %v4110, %v4112
      %v4118 = vsel %vm2657, %v4108, 0
      %v4121 = vsel %vm2657, %v4112, 0
      %v4123 = vsel %vm2678, %v4113, 0
      %v4124 = vsel %vm2679, %v4118, 0
      %v4125 = vsel %vm2678, %v4114, 0
      %v4126 = vsel %vm2679, %v4121, 0
      %4127 = vmatprep.subr.bf16.mxu0 %v4126
      %4128 = vmatpush1.bf16.msra.mxu0 %v4125
      %4129 = vmatprep.subr.bf16.mxu0 %v4124
      %4130 = vmatpush1.bf16.msra.mxu0 %v4123
      %4131 = vmatprep.subr.bf16.mxu0 %v3890
      %4132 = vmatpush1.bf16.msra.mxu0 %v3889
      %4133 = vmatprep.subr.bf16.mxu0 %v3888
      %4134 = vmatpush1.bf16.msra.mxu0 %v3887
      %4135 = vmatprep.subr.bf16.mxu0 %v3610
      %4136 = vmatpush1.bf16.msra.mxu0 %v3609
      %4137 = vmatprep.subr.bf16.mxu0 %v3608
      %4138 = vmatpush1.bf16.msra.mxu0 %v3607
      %4139 = vmatprep.subr.bf16.mxu0 %v3034
      %4140 = vmatpush1.bf16.msra.mxu0 %v3033
      %4141 = vmatprep.subr.bf16.mxu0 %v3032
      %4142 = vmatpush1.bf16.msra.mxu0 %v3031
      %4143 = vmatprep.subr.bf16.mxu0 0
      %4144 = vmatpush2.bf16.msra.mxu0 0
      %4145 = vmatprep.subr.bf16.mxu0 0
      %4146 = vmatpush2.bf16.msra.mxu0 0
      %4147 = vmatprep.subr.bf16.mxu0 0
      %4148 = vmatpush2.bf16.msra.mxu0 0
      %4149 = vmatprep.subr.bf16.mxu0 0
      %4150 = vmatpush2.bf16.msra.mxu0 0
      %4151 = vmatprep.subr.bf16.mxu0 0
      %4152 = vmatpush2.bf16.msra.mxu0 0
      %4153 = vmatprep.subr.bf16.mxu0 0
      %4154 = vmatpush2.bf16.msra.mxu0 0
      %4155 = vmatprep.subr.bf16.mxu0 0
      %4156 = vmatpush2.bf16.msra.mxu0 0
      %4157 = vmatprep.subr.bf16.mxu0 0
      %4158 = vmatpush2.bf16.msra.mxu0 0
      %4159 = vmatprep.mubr.bf16.mxu0 0
      %4160 = vmatmul.mubr.bf16.gmra.mxu0 %v3945
      %v4161 = vpop.f32.mrf.mxu0
      %v4162 = vadd.f32 %v3123, %v4161
      %v4163 = vpop.f32.mrf.mxu0
      %v4164 = vadd.f32 %v3123, %v4163
      %v4165 = vpop.f32.mrf.mxu0
      %v4166 = vpop.f32.mrf.mxu0
      %4167 = vdwg.mxu0
      %v4168 = vxor.u32 %v4162, 2147483648
      %v4169 = vxor.u32 %v4164, 2147483648
      %v4170 = vmul.f32 %v4168, 1.442695
      %v4171 = vpow.pop %v4170
      %v4172 = vmul.f32 %v4169, 1.442695
      %v4173 = vpow.pop %v4172
      %v4174 = vadd.f32 %v4171, 1.0
      %v4175 = vadd.f32 %v4173, 1.0
      %v4176 = vrcp.pop %v4174
      %v4177 = vmul.f32 1.0, %v4176
      %v4178 = vrcp.pop %v4175
      %v4179 = vmul.f32 1.0, %v4178
      %v4182 = vrot.slane %v3432, 7
      %v4183 = vrot.slane %v3434, 7
      %v4188 = vrot.slane %v3249, 6
      %v4189 = vrot.slane %v3251, 6
      %v4194 = vrot.slane %v3533, 5
      %v4195 = vrot.slane %v3535, 5
      %v4200 = vrot.slane %v3716, 4
      %v4201 = vrot.slane %v3718, 4
      %v4206 = vrot.slane %v3996, 3
      %v4207 = vrot.slane %v3998, 3
      %v4212 = vrot.slane %v3769, 2
      %v4213 = vrot.slane %v3771, 2
      %v4218 = vrot.slane %v4049, 1
      %v4219 = vrot.slane %v4051, 1
      %v4224 = vrot.slane %v3586, 7
      %v4225 = vrot.slane %v3588, 7
      %v4230 = vrot.slane %v3377, 6
      %v4231 = vrot.slane %v3379, 6
      %v4236 = vrot.slane %v3661, 5
      %v4237 = vrot.slane %v3663, 5
      %v4242 = vrot.slane %v3866, 4
      %v4243 = vrot.slane %v3868, 4
      %v4248 = vrot.slane %v4102, 3
      %v4249 = vrot.slane %v4104, 3
      %v4254 = vrot.slane %v3941, 2
      %v4255 = vrot.slane %v3943, 2
      %v4260 = vrot.slane %v4177, 1
      %v4261 = vrot.slane %v4179, 1
      %vm4264 = vcmask 1040384
      %v4265 = vsel %vm4264, %v3174, %v4182
      %v4266 = vsel %vm4264, %v3176, %v4183
      %vm4267 = vcmask 1041408
      %v4268 = vsel %vm4267, %v4265, %v4188
      %v4269 = vsel %vm4267, %v4266, %v4189
      %vm4270 = vcmask 1042432
      %v4271 = vsel %vm4270, %v4268, %v4194
      %v4272 = vsel %vm4270, %v4269, %v4195
      %vm4273 = vcmask 1043456
      %v4274 = vsel %vm4273, %v4271, %v4200
      %v4275 = vsel %vm4273, %v4272, %v4201
      %vm4276 = vcmask 1044480
      %v4277 = vsel %vm4276, %v4274, %v4206
      %v4278 = vsel %vm4276, %v4275, %v4207
      %vm4279 = vcmask 1045504
      %v4280 = vsel %vm4279, %v4277, %v4212
      %v4281 = vsel %vm4279, %v4278, %v4213
      %vm4282 = vcmask 1046528
      %v4283 = vsel %vm4282, %v4280, %v4218
      %v4284 = vsel %vm4282, %v4281, %v4219
      %v4285 = vsel %vm4264, %v3324, %v4224
      %v4286 = vsel %vm4264, %v3326, %v4225
      %v4287 = vsel %vm4267, %v4285, %v4230
      %v4288 = vsel %vm4267, %v4286, %v4231
      %v4289 = vsel %vm4270, %v4287, %v4236
      %v4290 = vsel %vm4270, %v4288, %v4237
      %v4291 = vsel %vm4273, %v4289, %v4242
      %v4292 = vsel %vm4273, %v4290, %v4243
      %v4293 = vsel %vm4276, %v4291, %v4248
      %v4294 = vsel %vm4276, %v4292, %v4249
      %v4295 = vsel %vm4279, %v4293, %v4254
      %v4296 = vsel %vm4279, %v4294, %v4255
      %v4297 = vsel %vm4282, %v4295, %v4260
      %v4298 = vsel %vm4282, %v4296, %v4261
      %4299 = vst [vmem:[%s388] sm:$0xff] %v4283
      %4300 = vst [vmem:[%s388 + $0x8] sm:$0xff] %v4284
      %4301 = vst [vmem:[%s388 + $0x10] sm:$0xff] %v4297
      %4302 = vst [vmem:[%s388 + $0x18] sm:$0xff] %v4298
      %p4303 = scmp.lt.s32.totalorder %s24, 1
      %s4304 = scalar_select %p4303, %s24, 1
      %s4305 = smul.addr %s4304, 4
      %s4306 = smul.addr %s4305, 8
      %s4307 = scalar_lea.vmem %s11, %s4306
      // Predicated region
      $region65: #{decoder_forward.3} parent=63 // pred_check
        %p4308 = pneg %p278
      $region66: #{decoder_forward.3} parent=63 // pred_check_branch
        %4310 = sbr.rel (%p4308) target = $region68
      $region67: #{decoder_forward.3} parent=63 // pred_region
        _
      $region68: #{decoder_forward.3} parent=63 // pred_fallthru
        _
    $region64: #{decoder_forward.3} parent=5 // pred_fallthru
      _
    %p4311 = scmp.le.s32.totalorder 2, %s19
    // Predicated region
    $region69: #{decoder_forward.3} parent=5 // pred_check
      %p4312 = pneg %p4311
    $region70: #{decoder_forward.3} parent=5 // pred_check_branch
      %4314 = sbr.rel (%p4312) target = $region72
    $region71: #{decoder_forward.3} parent=5 // pred_region
      %s4315 = ssub.s32 %s19, 2
      // Predicated region
      $region73: #{decoder_forward.3} parent=71 // pred_check
        %p4316 = pneg %p284
      $region74: #{decoder_forward.3} parent=71 // pred_check_branch
        %4318 = sbr.rel (%p4316) target = $region76
      $region75: #{decoder_forward.3} parent=71 // pred_region
        %p4319 = scmp.lt.s32.totalorder %s25, 1
        %s4320 = scalar_select %p4319, %s25, 1
        %s4321 = smul.addr %s4320, 4
        %s4322 = smul.addr %s4321, 8
        %s4323 = scalar_lea.vmem %s11, %s4322
      $region76: #{decoder_forward.3} parent=71 // pred_fallthru
        _
    $region72: #{decoder_forward.3} parent=5 // pred_fallthru
      _
  $region6: #{decoder_forward.3} parent=0 // loop_footer
    %s23 = sadd.s32 1, %s19
  $region7: #{decoder_forward.3} parent=0 // loop_footer_branch
    %18 = sbr.rel target = $region3
  $region8: #{decoder_forward.3} parent=0 // loop_exit
    _

</llo_original>
